<compile_context>
chip_gen: v7x
topology: tpu7x:2x2x1
jax: 0.10.0
libtpu: 0.0.40
codegen_flags: <defaults>
</compile_context>

<pallas_src>
from functools import partial

import numpy as np
import jax
import jax.numpy as jnp
from jax import lax
from jax.experimental import pallas as pl
from jax.experimental.pallas import tpu as pltpu


# ============================================================================
# Host-side constant builders (tiny 0/1 selection matrices, built once).
# ============================================================================

_POOL_CORNERS = ((0, 0), (0, 1), (1, 0), (1, 1))


def _pool_select(h_in, w_in, src_len, src_idx, dst_len, dst_idx):
    """4 one-hot matrices (4, src_len, dst_len).

    Column d of matrix k carries a 1 at the flat source index of the k-th corner
    of the 2x2 pooling window whose pooled value lands in destination column d.
    Columns never written by dst_idx stay all-zero -> they become the zero
    padding ring / margin of the next conv's canvas.
    """
    ho, wo = h_in // 2, w_in // 2
    m = np.zeros((4, src_len, dst_len), np.float32)
    for r in range(ho):
        for c in range(wo):
            d = dst_idx(r, c)
            for k, (dr, dc) in enumerate(_POOL_CORNERS):
                m[k, src_idx(2 * r + dr, 2 * c + dc), d] = 1.0
    return m


def _conv_stage_geometry(h, w, ksize):
    """Geometry of a 'same' conv (stride 1, pad k//2) on a flattened canvas with
    extra zero margin so every shifted tap read stays in-bounds."""
    pad = ksize // 2
    hp, wp = h + 2 * pad, w + 2 * pad
    canvas = hp * wp
    margin = pad * wp + pad          # max |flat offset| of any conv tap
    return dict(pad=pad, hp=hp, wp=wp, canvas=canvas, margin=margin,
                ext=canvas + 2 * margin)


def _build_localization_constants(input_size, ksize=5):
    s = input_size
    assert s % 8 == 0, "stn localization path needs input_size divisible by 8"
    s1 = s // 2          # spatial size fed to conv1 (after first pool)
    s2 = s1 // 2         # spatial size fed to conv2
    s3 = s2 // 2         # spatial size fed to fc
    g1 = _conv_stage_geometry(s1, s1, ksize)
    g2 = _conv_stage_geometry(s2, s2, ksize)

    # pool1: raw (s, s) plain flat  ->  conv1 padded/margined canvas
    p1 = _pool_select(
        s, s, s * s,
        lambda i, j: i * s + j,
        g1['ext'],
        lambda r, c: g1['margin'] + (r + g1['pad']) * g1['wp'] + (c + g1['pad']))
    # pool2: conv1 output on canvas-1  ->  conv2 padded/margined canvas
    p2 = _pool_select(
        s1, s1, g1['canvas'],
        lambda i, j: (i + g1['pad']) * g1['wp'] + (j + g1['pad']),
        g2['ext'],
        lambda r, c: g2['margin'] + (r + g2['pad']) * g2['wp'] + (c + g2['pad']))
    # pool3: conv2 output on canvas-2  ->  plain flat (s3*s3,)
    p3 = _pool_select(
        s2, s2, g2['canvas'],
        lambda i, j: (i + g2['pad']) * g2['wp'] + (j + g2['pad']),
        s3 * s3,
        lambda r, c: r * s3 + c)
    return g1, g2, s3, jnp.asarray(p1), jnp.asarray(p2), jnp.asarray(p3)


# ============================================================================
# Fused localization kernel: pool -> conv5x5+ReLU -> pool -> conv5x5+ReLU
#                            -> pool -> Linear+ReLU -> Linear(theta)
# One grid step per batch element; every intermediate lives in VMEM/vregs.
# ============================================================================
def _localization_kernel(x_ref, p1_ref, w1_ref, b1_ref, p2_ref, w2_ref, b2_ref,
                         p3_ref, wfc_ref, bfc_ref, wcls_ref, bcls_ref, o_ref,
                         *, g1, g2, ksize, n_pos):
    f32 = jnp.float32
    x = x_ref[0].astype(f32)                              # (Cin, S*S), pixels on lanes

    def pool(act, sel_ref):
        # MaxPool2d(2,2): elementwise max of four one-hot selection matmuls.
        out = jnp.dot(act, sel_ref[0], preferred_element_type=f32)
        for k in range(1, 4):
            out = jnp.maximum(out, jnp.dot(act, sel_ref[k],
                                           preferred_element_type=f32))
        return out

    def conv_relu(act_ext, w_ref, b_ref, geo):
        # In-kernel im2col: 25 shifted static slices of the zero-margined flat
        # canvas, each contracted with the matching (Cout, Cin) tap on the MXU.
        cout = w_ref.shape[1]
        pad, wp, margin, canvas = geo['pad'], geo['wp'], geo['margin'], geo['canvas']
        acc = jnp.zeros((cout, canvas), f32)
        for t in range(ksize * ksize):
            kh, kw = divmod(t, ksize)
            start = margin + (kh - pad) * wp + (kw - pad)
            acc = acc + jnp.dot(w_ref[t], act_ext[:, start:start + canvas],
                                preferred_element_type=f32)
        return jnp.maximum(acc + b_ref[...], 0.0)

    h = pool(x, p1_ref)                                   # (Cin, g1.ext)
    h = conv_relu(h, w1_ref, b1_ref, g1)                  # (P0,  g1.canvas)
    h = pool(h, p2_ref)                                   # (P0,  g2.ext)
    h = conv_relu(h, w2_ref, b2_ref, g2)                  # (P1,  g2.canvas)
    h = pool(h, p3_ref)                                   # (P1,  n_pos)

    # fc (View + Linear + ReLU): accumulate over the n_pos spatial columns so no
    # in-kernel reshape of the (P1, n_pos) activation is needed.
    y = bfc_ref[...]                                      # (P2, 1)
    for s in range(n_pos):
        y = y + jnp.dot(wfc_ref[s], h[:, s:s + 1], preferred_element_type=f32)
    y = jnp.maximum(y, 0.0)

    theta = jnp.dot(wcls_ref[...], y, preferred_element_type=f32) + bcls_ref[...]
    o_ref[0] = theta.astype(o_ref.dtype)                  # (6, 1)


def localization_theta(x, params):
    B, cin, H, W = x.shape
    assert H == W, "stn assumes square inputs"
    ksize = params['conv1_w'].shape[-1]
    g1, g2, s3, p1, p2, p3 = _build_localization_constants(H, ksize)
    P0 = params['conv1_w'].shape[0]
    P1 = params['conv2_w'].shape[0]
    P2 = params['fc_w'].shape[0]
    n_pos = s3 * s3
    assert params['fc_w'].shape[1] == P1 * n_pos

    # One-off host-side weight re-layouts (match torch Conv2d / View ordering).
    w1 = jnp.transpose(params['conv1_w'], (2, 3, 0, 1)).reshape(ksize * ksize, P0, cin)
    w2 = jnp.transpose(params['conv2_w'], (2, 3, 0, 1)).reshape(ksize * ksize, P1, P0)
    b1 = params['conv1_b'].reshape(P0, 1)
    b2 = params['conv2_b'].reshape(P1, 1)
    wfc = jnp.transpose(params['fc_w'].reshape(P2, P1, n_pos), (2, 0, 1))  # (n_pos, P2, P1)
    bfc = params['fc_b'].reshape(P2, 1)
    wcls = params['cls_w']
    bcls = params['cls_b'].reshape(6, 1)

    x_flat = x.reshape(B, cin, H * W)

    def c3(shape):
        return pl.BlockSpec(shape, lambda b: (0, 0, 0))

    def c2(shape):
        return pl.BlockSpec(shape, lambda b: (0, 0))

    theta = pl.pallas_call(
        partial(_localization_kernel, g1=g1, g2=g2, ksize=ksize, n_pos=n_pos),
        out_shape=jax.ShapeDtypeStruct((B, 6, 1), jnp.float32),
        grid=(B,),
        in_specs=[
            pl.BlockSpec((1, cin, H * W), lambda b: (b, 0, 0)),
            c3(p1.shape), c3(w1.shape), c2(b1.shape),
            c3(p2.shape), c3(w2.shape), c2(b2.shape),
            c3(p3.shape), c3(wfc.shape), c2(bfc.shape),
            c2(wcls.shape), c2(bcls.shape),
        ],
        out_specs=pl.BlockSpec((1, 6, 1), lambda b: (b, 0, 0)),
        compiler_params=pltpu.CompilerParams(dimension_semantics=("parallel",)),
    )(x_flat, p1, w1, b1, p2, w2, b2, p3, wfc, bfc, wcls, bcls)
    return theta.reshape(B, 2, 3)


# ============================================================================
# Fused affine_grid + bilinear grid_sample (zeros padding, align_corners=False).
# grid = (B, n_out_tiles); coords are lane-dense, iota hoisted, selection matrix
# built transposed as (n_in, tile) and contracted on the MXU.
# ============================================================================
def _grid_sample_kernel(theta_ref, base_ref, x_ref, o_ref, *, Hin, Win):
    f32 = jnp.float32
    n_in = x_ref.shape[2]

    # affine_grid fused in-kernel: (2,3) @ (3,T) basis -> sampling coords.
    g = jnp.dot(theta_ref[0].astype(f32), base_ref[...],
                preferred_element_type=f32)               # (2, T)
    ix = (g[0:1, :] + 1.0) * (Win * 0.5) - 0.5            # unnormalize, a_c=False
    iy = (g[1:2, :] + 1.0) * (Hin * 0.5) - 0.5
    x0 = jnp.floor(ix)
    y0 = jnp.floor(iy)
    wx1 = ix - x0
    wy1 = iy - y0
    wx0 = 1.0 - wx1
    wy0 = 1.0 - wy1
    x0i = x0.astype(jnp.int32)
    y0i = y0.astype(jnp.int32)
    x1i = x0i + 1
    y1i = y0i + 1

    t = ix.shape[1]
    row_iota = lax.broadcasted_iota(jnp.int32, (n_in, t), 0)   # hoisted once

    def corner(yi, xi, w):
        valid = (xi >= 0) & (xi < Win) & (yi >= 0) & (yi < Hin)
        w = jnp.where(valid, w, 0.0)                       # zeros padding
        idx = yi * Win + xi                                # (1, T) flat input idx
        return jnp.where(row_iota == idx, w, 0.0)          # (n_in, T)

    s_t = (corner(y0i, x0i, wy0 * wx0) + corner(y0i, x1i, wy0 * wx1)
           + corner(y1i, x0i, wy1 * wx0) + corner(y1i, x1i, wy1 * wx1))

    out = jnp.dot(x_ref[0].astype(f32), s_t, preferred_element_type=f32)  # (C, T)
    o_ref[0] = out.astype(o_ref.dtype)


def grid_sample_affine(x, theta):
    B, C, H, W = x.shape
    n = H * W
    tile = n
    for cand in (512, 256, 128):
        if n % cand == 0:
            tile = cand
            break
    n_tiles = n // tile

    # pixel-centre basis [x; y; 1] (align_corners=False), row-major over (h, w)
    xs = 2.0 * (np.arange(W, dtype=np.float32) + 0.5) / W - 1.0
    ys = 2.0 * (np.arange(H, dtype=np.float32) + 0.5) / H - 1.0
    base = np.stack([np.tile(xs, H), np.repeat(ys, W), np.ones(n, np.float32)], 0)
    base = jnp.asarray(base, jnp.float32)                  # (3, n)

    x_flat = x.reshape(B, C, n)
    out = pl.pallas_call(
        partial(_grid_sample_kernel, Hin=H, Win=W),
        out_shape=jax.ShapeDtypeStruct((B, C, n), x.dtype),
        grid=(B, n_tiles),
        in_specs=[
            pl.BlockSpec((1, 2, 3), lambda b, t: (b, 0, 0)),
            pl.BlockSpec((3, tile), lambda b, t: (0, t)),
            pl.BlockSpec((1, C, n), lambda b, t: (b, 0, 0)),
        ],
        out_specs=pl.BlockSpec((1, C, tile), lambda b, t: (b, 0, t)),
        compiler_params=pltpu.CompilerParams(
            dimension_semantics=("parallel", "parallel")),
    )(theta.astype(jnp.float32), base, x_flat)
    return out.reshape(B, C, H, W)


# ============================================================================
# Full stn.forward
# ============================================================================
def stn_forward(x, params):
    theta = localization_theta(x, params)
    return grid_sample_affine(x, theta)


# ============================================================================
# Pure-JAX reference of the whole module (for correctness cross-check).
# ============================================================================
def _stn_reference(x, params):
    prec = lax.Precision.HIGHEST
    B, C, H, W = x.shape

    def pool(z):
        return lax.reduce_window(z, -jnp.inf, lax.max,
                                 (1, 1, 2, 2), (1, 1, 2, 2), 'VALID')

    def conv(z, w, b):
        o = lax.conv_general_dilated(z, w, (1, 1), ((2, 2), (2, 2)),
                                     dimension_numbers=('NCHW', 'OIHW', 'NCHW'),
                                     precision=prec)
        return o + b[None, :, None, None]

    h = pool(x)
    h = pool(jax.nn.relu(conv(h, params['conv1_w'], params['conv1_b'])))
    h = pool(jax.nn.relu(conv(h, params['conv2_w'], params['conv2_b'])))
    hf = h.reshape(B, -1)
    hf = jax.nn.relu(jnp.dot(hf, params['fc_w'].T, precision=prec) + params['fc_b'])
    theta = (jnp.dot(hf, params['cls_w'].T, precision=prec)
             + params['cls_b']).reshape(B, 2, 3)

    xs = 2.0 * (jnp.arange(W, dtype=jnp.float32) + 0.5) / W - 1.0
    ys = 2.0 * (jnp.arange(H, dtype=jnp.float32) + 0.5) / H - 1.0
    gx, gy = jnp.meshgrid(xs, ys)
    base = jnp.stack([gx, gy, jnp.ones_like(gx)], -1)           # (H, W, 3)
    grid = jnp.einsum('nij,hwj->nhwi', theta, base, precision=prec)

    ix = (grid[..., 0] + 1.0) * (W * 0.5) - 0.5
    iy = (grid[..., 1] + 1.0) * (H * 0.5) - 0.5
    x0 = jnp.floor(ix); y0 = jnp.floor(iy)
    wx1 = ix - x0; wx0 = 1.0 - wx1
    wy1 = iy - y0; wy0 = 1.0 - wy1
    x0i = x0.astype(jnp.int32); y0i = y0.astype(jnp.int32)
    x1i = x0i + 1; y1i = y0i + 1
    bidx = jnp.arange(B)[:, None, None, None]
    cidx = jnp.arange(C)[None, :, None, None]

    def tap(yi, xi, w):
        valid = ((xi >= 0) & (xi < W) & (yi >= 0) & (yi < H)).astype(x.dtype)
        yc = jnp.clip(yi, 0, H - 1)[:, None]
        xc = jnp.clip(xi, 0, W - 1)[:, None]
        return x[bidx, cidx, yc, xc] * (w * valid)[:, None]

    out = (tap(y0i, x0i, wy0 * wx0) + tap(y0i, x1i, wy0 * wx1)
           + tap(y1i, x0i, wy1 * wx0) + tap(y1i, x1i, wy1 * wx1))
    return out, theta


if __name__ == "__main__":
    B, Cin, S = 2, 4, 16
    P0, P1, P2 = 8, 8, 32                         # params = [8, 8, 32]
    s_out = ((S // 2) // 2) // 2
    out_numel = P1 * s_out * s_out                # matches convNoutput -> 32

    key = jax.random.PRNGKey(0)
    ks = jax.random.split(key, 9)
    params = dict(
        conv1_w=0.1 * jax.random.normal(ks[0], (P0, Cin, 5, 5), jnp.float32),
        conv1_b=0.1 * jax.random.normal(ks[1], (P0,), jnp.float32),
        conv2_w=0.1 * jax.random.normal(ks[2], (P1, P0, 5, 5), jnp.float32),
        conv2_b=0.1 * jax.random.normal(ks[3], (P1,), jnp.float32),
        fc_w=0.1 * jax.random.normal(ks[4], (P2, out_numel), jnp.float32),
        fc_b=0.1 * jax.random.normal(ks[5], (P2,), jnp.float32),
        # module init: classifier weight = 0, bias = identity theta
        cls_w=jnp.zeros((6, P2), jnp.float32),
        cls_b=jnp.array([1, 0, 0, 0, 1, 0], jnp.float32),
    )
    x = jax.random.normal(ks[6], (B, Cin, S, S), jnp.float32)

    fwd = jax.jit(stn_forward)
    out = jax.block_until_ready(fwd(x, params))
    assert out.shape == x.shape, out.shape
    # With the module's init (zero classifier weight, identity bias) theta is the
    # identity transform, so grid_sample must reproduce the input.
    assert jnp.allclose(out, x, atol=1e-4), float(jnp.abs(out - x).max())

    # Cross-check the full pipeline (incl. the fused localization net) against a
    # pure-JAX reference with non-trivial classifier weights.
    params2 = dict(params)
    params2['cls_w'] = 0.2 * jax.random.normal(ks[7], (6, P2), jnp.float32)
    params2['cls_b'] = params['cls_b'] + 0.3 * jax.random.normal(ks[8], (6,), jnp.float32)
    out2 = jax.block_until_ready(fwd(x, params2))
    theta2 = localization_theta(x, params2)
    ref_out, ref_theta = _stn_reference(x, params2)
    assert jnp.allclose(theta2, ref_theta, atol=5e-3, rtol=5e-3), \
        float(jnp.abs(theta2 - ref_theta).max())
    assert jnp.allclose(out2, ref_out, atol=5e-3, rtol=5e-3), \
        float(jnp.abs(out2 - ref_out).max())
    print("KERNEL_OK")
</pallas_src>

<mosaic_0001>
module attributes {stable_mosaic.version = 11 : i64} {
  func.func @_grid_sample_kernel(%arg0: i32, %arg1: i32, %arg2: memref<1x2x3xf32, #tpu.memory_space<vmem>>, %arg3: memref<3x256xf32, #tpu.memory_space<vmem>>, %arg4: memref<1x4x256xf32, #tpu.memory_space<vmem>>, %arg5: memref<1x4x256xf32, #tpu.memory_space<vmem>>) attributes {dimension_semantics = [#tpu.dimension_semantics<parallel>, #tpu.dimension_semantics<parallel>], iteration_bounds = array<i64: 2, 1>, scalar_prefetch = 0 : i64, scratch_operands = 0 : i64, tpu.core_type = #tpu.core_type<tc>, window_params = [{transform_indices = @transform_0, window_bounds = array<i64: 1, 2, 3>}, {transform_indices = @transform_1, window_bounds = array<i64: 3, 256>}, {transform_indices = @transform_2, window_bounds = array<i64: 1, 4, 256>}, {transform_indices = @transform_3, window_bounds = array<i64: 1, 4, 256>}]} {
    %c0 = arith.constant 0 : index
    %c0_0 = arith.constant 0 : index
    %c0_1 = arith.constant 0 : index
    %0 = vector.load %arg2[%c0, %c0_0, %c0_1] : memref<1x2x3xf32, #tpu.memory_space<vmem>>, vector<1x2x3xf32>
    %1 = vector.shape_cast %0 : vector<1x2x3xf32> to vector<2x3xf32>
    %c0_2 = arith.constant 0 : index
    %c0_3 = arith.constant 0 : index
    %2 = vector.load %arg3[%c0_2, %c0_3] : memref<3x256xf32, #tpu.memory_space<vmem>>, vector<3x256xf32>
    %cst = arith.constant dense<0.000000e+00> : vector<2x256xf32>
    %3 = tpu.matmul %1, %2, %cst {dimension_numbers = #tpu.dot_dimension_numbers<[1], [0], [0], [1], [0, 0, 1, 1], [], []>} : vector<2x3xf32>, vector<3x256xf32>, vector<2x256xf32> -> vector<2x256xf32>
    %4 = vector.extract_strided_slice %3 {offsets = [0, 0], sizes = [1, 256], strides = [1, 1]} : vector<2x256xf32> to vector<1x256xf32>
    %cst_4 = arith.constant 1.000000e+00 : f32
    %5 = vector.broadcast %cst_4 : f32 to vector<1x256xf32>
    %6 = arith.addf %4, %5 : vector<1x256xf32>
    %cst_5 = arith.constant 8.000000e+00 : f32
    %7 = vector.broadcast %cst_5 : f32 to vector<1x256xf32>
    %8 = arith.mulf %6, %7 : vector<1x256xf32>
    %cst_6 = arith.constant 5.000000e-01 : f32
    %9 = vector.broadcast %cst_6 : f32 to vector<1x256xf32>
    %10 = arith.subf %8, %9 : vector<1x256xf32>
    %11 = vector.extract_strided_slice %3 {offsets = [1, 0], sizes = [1, 256], strides = [1, 1]} : vector<2x256xf32> to vector<1x256xf32>
    %cst_7 = arith.constant 1.000000e+00 : f32
    %12 = vector.broadcast %cst_7 : f32 to vector<1x256xf32>
    %13 = arith.addf %11, %12 : vector<1x256xf32>
    %cst_8 = arith.constant 8.000000e+00 : f32
    %14 = vector.broadcast %cst_8 : f32 to vector<1x256xf32>
    %15 = arith.mulf %13, %14 : vector<1x256xf32>
    %cst_9 = arith.constant 5.000000e-01 : f32
    %16 = vector.broadcast %cst_9 : f32 to vector<1x256xf32>
    %17 = arith.subf %15, %16 : vector<1x256xf32>
    %18 = math.floor %10 : vector<1x256xf32>
    %19 = math.floor %17 : vector<1x256xf32>
    %20 = arith.subf %10, %18 : vector<1x256xf32>
    %21 = arith.subf %17, %19 : vector<1x256xf32>
    %cst_10 = arith.constant 1.000000e+00 : f32
    %22 = vector.broadcast %cst_10 : f32 to vector<1x256xf32>
    %23 = arith.subf %22, %20 : vector<1x256xf32>
    %cst_11 = arith.constant 1.000000e+00 : f32
    %24 = vector.broadcast %cst_11 : f32 to vector<1x256xf32>
    %25 = arith.subf %24, %21 : vector<1x256xf32>
    %26 = arith.fptosi %18 : vector<1x256xf32> to vector<1x256xi32>
    %27 = arith.fptosi %19 : vector<1x256xf32> to vector<1x256xi32>
    %c1_i32 = arith.constant 1 : i32
    %28 = vector.broadcast %c1_i32 : i32 to vector<1x256xi32>
    %29 = arith.addi %26, %28 : vector<1x256xi32>
    %c1_i32_12 = arith.constant 1 : i32
    %30 = vector.broadcast %c1_i32_12 : i32 to vector<1x256xi32>
    %31 = arith.addi %27, %30 : vector<1x256xi32>
    %32 = tpu.iota {dimensions = array<i32: 0>} : vector<256x256xi32>
    %33 = arith.mulf %25, %23 : vector<1x256xf32>
    %c0_i32 = arith.constant 0 : i32
    %34 = vector.broadcast %c0_i32 : i32 to vector<1x256xi32>
    %35 = arith.cmpi sge, %26, %34 : vector<1x256xi32>
    %c16_i32 = arith.constant 16 : i32
    %36 = vector.broadcast %c16_i32 : i32 to vector<1x256xi32>
    %37 = arith.cmpi slt, %26, %36 : vector<1x256xi32>
    %38 = arith.andi %35, %37 : vector<1x256xi1>
    %c0_i32_13 = arith.constant 0 : i32
    %39 = vector.broadcast %c0_i32_13 : i32 to vector<1x256xi32>
    %40 = arith.cmpi sge, %27, %39 : vector<1x256xi32>
    %41 = arith.andi %38, %40 : vector<1x256xi1>
    %c16_i32_14 = arith.constant 16 : i32
    %42 = vector.broadcast %c16_i32_14 : i32 to vector<1x256xi32>
    %43 = arith.cmpi slt, %27, %42 : vector<1x256xi32>
    %44 = arith.andi %41, %43 : vector<1x256xi1>
    %cst_15 = arith.constant 0.000000e+00 : f32
    %45 = vector.broadcast %cst_15 : f32 to vector<1x256xf32>
    %46 = arith.select %44, %33, %45 : vector<1x256xi1>, vector<1x256xf32>
    %c16_i32_16 = arith.constant 16 : i32
    %47 = vector.broadcast %c16_i32_16 : i32 to vector<1x256xi32>
    %48 = arith.muli %27, %47 : vector<1x256xi32>
    %49 = arith.addi %48, %26 : vector<1x256xi32>
    %50 = vector.broadcast %49 : vector<1x256xi32> to vector<256x256xi32>
    %51 = arith.cmpi eq, %32, %50 : vector<256x256xi32>
    %cst_17 = arith.constant 0.000000e+00 : f32
    %52 = vector.shape_cast %46 : vector<1x256xf32> to vector<1x256xf32>
    %53 = vector.broadcast %52 : vector<1x256xf32> to vector<256x256xf32>
    %54 = vector.broadcast %cst_17 : f32 to vector<256x256xf32>
    %55 = arith.select %51, %53, %54 : vector<256x256xi1>, vector<256x256xf32>
    %56 = arith.mulf %25, %20 : vector<1x256xf32>
    %c0_i32_18 = arith.constant 0 : i32
    %57 = vector.broadcast %c0_i32_18 : i32 to vector<1x256xi32>
    %58 = arith.cmpi sge, %29, %57 : vector<1x256xi32>
    %c16_i32_19 = arith.constant 16 : i32
    %59 = vector.broadcast %c16_i32_19 : i32 to vector<1x256xi32>
    %60 = arith.cmpi slt, %29, %59 : vector<1x256xi32>
    %61 = arith.andi %58, %60 : vector<1x256xi1>
    %c0_i32_20 = arith.constant 0 : i32
    %62 = vector.broadcast %c0_i32_20 : i32 to vector<1x256xi32>
    %63 = arith.cmpi sge, %27, %62 : vector<1x256xi32>
    %64 = arith.andi %61, %63 : vector<1x256xi1>
    %c16_i32_21 = arith.constant 16 : i32
    %65 = vector.broadcast %c16_i32_21 : i32 to vector<1x256xi32>
    %66 = arith.cmpi slt, %27, %65 : vector<1x256xi32>
    %67 = arith.andi %64, %66 : vector<1x256xi1>
    %cst_22 = arith.constant 0.000000e+00 : f32
    %68 = vector.broadcast %cst_22 : f32 to vector<1x256xf32>
    %69 = arith.select %67, %56, %68 : vector<1x256xi1>, vector<1x256xf32>
    %c16_i32_23 = arith.constant 16 : i32
    %70 = vector.broadcast %c16_i32_23 : i32 to vector<1x256xi32>
    %71 = arith.muli %27, %70 : vector<1x256xi32>
    %72 = arith.addi %71, %29 : vector<1x256xi32>
    %73 = vector.broadcast %72 : vector<1x256xi32> to vector<256x256xi32>
    %74 = arith.cmpi eq, %32, %73 : vector<256x256xi32>
    %cst_24 = arith.constant 0.000000e+00 : f32
    %75 = vector.shape_cast %69 : vector<1x256xf32> to vector<1x256xf32>
    %76 = vector.broadcast %75 : vector<1x256xf32> to vector<256x256xf32>
    %77 = vector.broadcast %cst_24 : f32 to vector<256x256xf32>
    %78 = arith.select %74, %76, %77 : vector<256x256xi1>, vector<256x256xf32>
    %79 = arith.addf %55, %78 : vector<256x256xf32>
    %80 = arith.mulf %21, %23 : vector<1x256xf32>
    %c0_i32_25 = arith.constant 0 : i32
    %81 = vector.broadcast %c0_i32_25 : i32 to vector<1x256xi32>
    %82 = arith.cmpi sge, %26, %81 : vector<1x256xi32>
    %c16_i32_26 = arith.constant 16 : i32
    %83 = vector.broadcast %c16_i32_26 : i32 to vector<1x256xi32>
    %84 = arith.cmpi slt, %26, %83 : vector<1x256xi32>
    %85 = arith.andi %82, %84 : vector<1x256xi1>
    %c0_i32_27 = arith.constant 0 : i32
    %86 = vector.broadcast %c0_i32_27 : i32 to vector<1x256xi32>
    %87 = arith.cmpi sge, %31, %86 : vector<1x256xi32>
    %88 = arith.andi %85, %87 : vector<1x256xi1>
    %c16_i32_28 = arith.constant 16 : i32
    %89 = vector.broadcast %c16_i32_28 : i32 to vector<1x256xi32>
    %90 = arith.cmpi slt, %31, %89 : vector<1x256xi32>
    %91 = arith.andi %88, %90 : vector<1x256xi1>
    %cst_29 = arith.constant 0.000000e+00 : f32
    %92 = vector.broadcast %cst_29 : f32 to vector<1x256xf32>
    %93 = arith.select %91, %80, %92 : vector<1x256xi1>, vector<1x256xf32>
    %c16_i32_30 = arith.constant 16 : i32
    %94 = vector.broadcast %c16_i32_30 : i32 to vector<1x256xi32>
    %95 = arith.muli %31, %94 : vector<1x256xi32>
    %96 = arith.addi %95, %26 : vector<1x256xi32>
    %97 = vector.broadcast %96 : vector<1x256xi32> to vector<256x256xi32>
    %98 = arith.cmpi eq, %32, %97 : vector<256x256xi32>
    %cst_31 = arith.constant 0.000000e+00 : f32
    %99 = vector.shape_cast %93 : vector<1x256xf32> to vector<1x256xf32>
    %100 = vector.broadcast %99 : vector<1x256xf32> to vector<256x256xf32>
    %101 = vector.broadcast %cst_31 : f32 to vector<256x256xf32>
    %102 = arith.select %98, %100, %101 : vector<256x256xi1>, vector<256x256xf32>
    %103 = arith.addf %79, %102 : vector<256x256xf32>
    %104 = arith.mulf %21, %20 : vector<1x256xf32>
    %c0_i32_32 = arith.constant 0 : i32
    %105 = vector.broadcast %c0_i32_32 : i32 to vector<1x256xi32>
    %106 = arith.cmpi sge, %29, %105 : vector<1x256xi32>
    %c16_i32_33 = arith.constant 16 : i32
    %107 = vector.broadcast %c16_i32_33 : i32 to vector<1x256xi32>
    %108 = arith.cmpi slt, %29, %107 : vector<1x256xi32>
    %109 = arith.andi %106, %108 : vector<1x256xi1>
    %c0_i32_34 = arith.constant 0 : i32
    %110 = vector.broadcast %c0_i32_34 : i32 to vector<1x256xi32>
    %111 = arith.cmpi sge, %31, %110 : vector<1x256xi32>
    %112 = arith.andi %109, %111 : vector<1x256xi1>
    %c16_i32_35 = arith.constant 16 : i32
    %113 = vector.broadcast %c16_i32_35 : i32 to vector<1x256xi32>
    %114 = arith.cmpi slt, %31, %113 : vector<1x256xi32>
    %115 = arith.andi %112, %114 : vector<1x256xi1>
    %cst_36 = arith.constant 0.000000e+00 : f32
    %116 = vector.broadcast %cst_36 : f32 to vector<1x256xf32>
    %117 = arith.select %115, %104, %116 : vector<1x256xi1>, vector<1x256xf32>
    %c16_i32_37 = arith.constant 16 : i32
    %118 = vector.broadcast %c16_i32_37 : i32 to vector<1x256xi32>
    %119 = arith.muli %31, %118 : vector<1x256xi32>
    %120 = arith.addi %119, %29 : vector<1x256xi32>
    %121 = vector.broadcast %120 : vector<1x256xi32> to vector<256x256xi32>
    %122 = arith.cmpi eq, %32, %121 : vector<256x256xi32>
    %cst_38 = arith.constant 0.000000e+00 : f32
    %123 = vector.shape_cast %117 : vector<1x256xf32> to vector<1x256xf32>
    %124 = vector.broadcast %123 : vector<1x256xf32> to vector<256x256xf32>
    %125 = vector.broadcast %cst_38 : f32 to vector<256x256xf32>
    %126 = arith.select %122, %124, %125 : vector<256x256xi1>, vector<256x256xf32>
    %127 = arith.addf %103, %126 : vector<256x256xf32>
    %c0_39 = arith.constant 0 : index
    %c0_40 = arith.constant 0 : index
    %c0_41 = arith.constant 0 : index
    %128 = vector.load %arg4[%c0_39, %c0_40, %c0_41] : memref<1x4x256xf32, #tpu.memory_space<vmem>>, vector<1x4x256xf32>
    %129 = vector.shape_cast %128 : vector<1x4x256xf32> to vector<4x256xf32>
    %cst_42 = arith.constant dense<0.000000e+00> : vector<4x256xf32>
    %130 = tpu.matmul %129, %127, %cst_42 {dimension_numbers = #tpu.dot_dimension_numbers<[1], [0], [0], [1], [0, 0, 1, 1], [], []>} : vector<4x256xf32>, vector<256x256xf32>, vector<4x256xf32> -> vector<4x256xf32>
    %c0_43 = arith.constant 0 : index
    %c0_44 = arith.constant 0 : index
    %c0_45 = arith.constant 0 : index
    %131 = vector.load %arg5[%c0_43, %c0_44, %c0_45] : memref<1x4x256xf32, #tpu.memory_space<vmem>>, vector<1x4x256xf32>
    %132 = vector.shape_cast %131 : vector<1x4x256xf32> to vector<4x256xf32>
    %133 = vector.shape_cast %130 : vector<4x256xf32> to vector<1x4x256xf32>
    tpu.vector_store %arg5[%c0_43, %c0_44, %c0_45], %133 {strides = array<i32>} : memref<1x4x256xf32, #tpu.memory_space<vmem>>, vector<1x4x256xf32>,
    return
  }
  func.func @transform_0(%arg0: i32, %arg1: i32) -> (i32, i32, i32) {
    %c0_i32 = arith.constant 0 : i32
    %c0_i32_0 = arith.constant 0 : i32
    %c0_i32_1 = arith.constant 0 : i32
    return %arg0, %c0_i32, %c0_i32_0 : i32, i32, i32
  }
  func.func @transform_1(%arg0: i32, %arg1: i32) -> (i32, i32) {
    %c0_i32 = arith.constant 0 : i32
    %c0_i32_0 = arith.constant 0 : i32
    return %c0_i32, %arg1 : i32, i32
  }
  func.func @transform_2(%arg0: i32, %arg1: i32) -> (i32, i32, i32) {
    %c0_i32 = arith.constant 0 : i32
    %c0_i32_0 = arith.constant 0 : i32
    %c0_i32_1 = arith.constant 0 : i32
    return %arg0, %c0_i32, %c0_i32_0 : i32, i32, i32
  }
  func.func @transform_3(%arg0: i32, %arg1: i32) -> (i32, i32, i32) {
    %c0_i32 = arith.constant 0 : i32
    %c0_i32_0 = arith.constant 0 : i32
    return %arg0, %c0_i32, %arg1 : i32, i32, i32
  }
}

module attributes {stable_mosaic.version = 11 : i64} {
  func.func @_localization_kernel(%arg0: i32, %arg1: memref<1x4x256xf32, #tpu.memory_space<vmem>>, %arg2: memref<4x256x196xf32, #tpu.memory_space<vmem>>, %arg3: memref<25x8x4xf32, #tpu.memory_space<vmem>>, %arg4: memref<8x1xf32, #tpu.memory_space<vmem>>, %arg5: memref<4x144x100xf32, #tpu.memory_space<vmem>>, %arg6: memref<25x8x8xf32, #tpu.memory_space<vmem>>, %arg7: memref<8x1xf32, #tpu.memory_space<vmem>>, %arg8: memref<4x64x4xf32, #tpu.memory_space<vmem>>, %arg9: memref<4x32x8xf32, #tpu.memory_space<vmem>>, %arg10: memref<32x1xf32, #tpu.memory_space<vmem>>, %arg11: memref<6x32xf32, #tpu.memory_space<vmem>>, %arg12: memref<6x1xf32, #tpu.memory_space<vmem>>, %arg13: memref<1x6x1xf32, #tpu.memory_space<vmem>>) attributes {dimension_semantics = [#tpu.dimension_semantics<parallel>], iteration_bounds = array<i64: 2>, scalar_prefetch = 0 : i64, scratch_operands = 0 : i64, tpu.core_type = #tpu.core_type<tc>, window_params = [{transform_indices = @transform_0, window_bounds = array<i64: 1, 4, 256>}, {pipeline_mode = #tpu.pipeline_mode<synchronous>, transform_indices = @transform_1, window_bounds = array<i64: 4, 256, 196>}, {pipeline_mode = #tpu.pipeline_mode<synchronous>, transform_indices = @transform_2, window_bounds = array<i64: 25, 8, 4>}, {pipeline_mode = #tpu.pipeline_mode<synchronous>, transform_indices = @transform_3, window_bounds = array<i64: 8, 1>}, {pipeline_mode = #tpu.pipeline_mode<synchronous>, transform_indices = @transform_4, window_bounds = array<i64: 4, 144, 100>}, {pipeline_mode = #tpu.pipeline_mode<synchronous>, transform_indices = @transform_5, window_bounds = array<i64: 25, 8, 8>}, {pipeline_mode = #tpu.pipeline_mode<synchronous>, transform_indices = @transform_6, window_bounds = array<i64: 8, 1>}, {pipeline_mode = #tpu.pipeline_mode<synchronous>, transform_indices = @transform_7, window_bounds = array<i64: 4, 64, 4>}, {pipeline_mode = #tpu.pipeline_mode<synchronous>, transform_indices = @transform_8, window_bounds = array<i64: 4, 32, 8>}, {pipeline_mode = #tpu.pipeline_mode<synchronous>, transform_indices = @transform_9, window_bounds = array<i64: 32, 1>}, {pipeline_mode = #tpu.pipeline_mode<synchronous>, transform_indices = @transform_10, window_bounds = array<i64: 6, 32>}, {pipeline_mode = #tpu.pipeline_mode<synchronous>, transform_indices = @transform_11, window_bounds = array<i64: 6, 1>}, {transform_indices = @transform_12, window_bounds = array<i64: 1, 6, 1>}]} {
    %c0 = arith.constant 0 : index
    %c0_0 = arith.constant 0 : index
    %c0_1 = arith.constant 0 : index
    %0 = vector.load %arg1[%c0, %c0_0, %c0_1] : memref<1x4x256xf32, #tpu.memory_space<vmem>>, vector<1x4x256xf32>
    %1 = vector.shape_cast %0 : vector<1x4x256xf32> to vector<4x256xf32>
    %c0_2 = arith.constant 0 : index
    %c0_3 = arith.constant 0 : index
    %c0_4 = arith.constant 0 : index
    %2 = vector.load %arg2[%c0_2, %c0_3, %c0_4] : memref<4x256x196xf32, #tpu.memory_space<vmem>>, vector<1x256x196xf32>
    %3 = vector.shape_cast %2 : vector<1x256x196xf32> to vector<256x196xf32>
    %cst = arith.constant dense<0.000000e+00> : vector<4x196xf32>
    %4 = tpu.matmul %1, %3, %cst {dimension_numbers = #tpu.dot_dimension_numbers<[1], [0], [0], [1], [0, 0, 1, 1], [], []>} : vector<4x256xf32>, vector<256x196xf32>, vector<4x196xf32> -> vector<4x196xf32>
    %c1 = arith.constant 1 : index
    %c0_5 = arith.constant 0 : index
    %c0_6 = arith.constant 0 : index
    %5 = vector.load %arg2[%c1, %c0_5, %c0_6] : memref<4x256x196xf32, #tpu.memory_space<vmem>>, vector<1x256x196xf32>
    %6 = vector.shape_cast %5 : vector<1x256x196xf32> to vector<256x196xf32>
    %cst_7 = arith.constant dense<0.000000e+00> : vector<4x196xf32>
    %7 = tpu.matmul %1, %6, %cst_7 {dimension_numbers = #tpu.dot_dimension_numbers<[1], [0], [0], [1], [0, 0, 1, 1], [], []>} : vector<4x256xf32>, vector<256x196xf32>, vector<4x196xf32> -> vector<4x196xf32>
    %8 = arith.maximumf %4, %7 : vector<4x196xf32>
    %c2 = arith.constant 2 : index
    %c0_8 = arith.constant 0 : index
    %c0_9 = arith.constant 0 : index
    %9 = vector.load %arg2[%c2, %c0_8, %c0_9] : memref<4x256x196xf32, #tpu.memory_space<vmem>>, vector<1x256x196xf32>
    %10 = vector.shape_cast %9 : vector<1x256x196xf32> to vector<256x196xf32>
    %cst_10 = arith.constant dense<0.000000e+00> : vector<4x196xf32>
    %11 = tpu.matmul %1, %10, %cst_10 {dimension_numbers = #tpu.dot_dimension_numbers<[1], [0], [0], [1], [0, 0, 1, 1], [], []>} : vector<4x256xf32>, vector<256x196xf32>, vector<4x196xf32> -> vector<4x196xf32>
    %12 = arith.maximumf %8, %11 : vector<4x196xf32>
    %c3 = arith.constant 3 : index
    %c0_11 = arith.constant 0 : index
    %c0_12 = arith.constant 0 : index
    %13 = vector.load %arg2[%c3, %c0_11, %c0_12] : memref<4x256x196xf32, #tpu.memory_space<vmem>>, vector<1x256x196xf32>
    %14 = vector.shape_cast %13 : vector<1x256x196xf32> to vector<256x196xf32>
    %cst_13 = arith.constant dense<0.000000e+00> : vector<4x196xf32>
    %15 = tpu.matmul %1, %14, %cst_13 {dimension_numbers = #tpu.dot_dimension_numbers<[1], [0], [0], [1], [0, 0, 1, 1], [], []>} : vector<4x256xf32>, vector<256x196xf32>, vector<4x196xf32> -> vector<4x196xf32>
    %16 = arith.maximumf %12, %15 : vector<4x196xf32>
    %cst_14 = arith.constant 0.000000e+00 : f32
    %17 = vector.broadcast %cst_14 : f32 to vector<8x144xf32>
    %c0_15 = arith.constant 0 : index
    %c0_16 = arith.constant 0 : index
    %c0_17 = arith.constant 0 : index
    %18 = vector.load %arg3[%c0_15, %c0_16, %c0_17] : memref<25x8x4xf32, #tpu.memory_space<vmem>>, vector<1x8x4xf32>
    %19 = vector.shape_cast %18 : vector<1x8x4xf32> to vector<8x4xf32>
    %20 = vector.extract_strided_slice %16 {offsets = [0, 0], sizes = [4, 144], strides = [1, 1]} : vector<4x196xf32> to vector<4x144xf32>
    %cst_18 = arith.constant dense<0.000000e+00> : vector<8x144xf32>
    %21 = tpu.matmul %19, %20, %cst_18 {dimension_numbers = #tpu.dot_dimension_numbers<[1], [0], [0], [1], [0, 0, 1, 1], [], []>} : vector<8x4xf32>, vector<4x144xf32>, vector<8x144xf32> -> vector<8x144xf32>
    %22 = arith.addf %17, %21 : vector<8x144xf32>
    %c1_19 = arith.constant 1 : index
    %c0_20 = arith.constant 0 : index
    %c0_21 = arith.constant 0 : index
    %23 = vector.load %arg3[%c1_19, %c0_20, %c0_21] : memref<25x8x4xf32, #tpu.memory_space<vmem>>, vector<1x8x4xf32>
    %24 = vector.shape_cast %23 : vector<1x8x4xf32> to vector<8x4xf32>
    %25 = vector.extract_strided_slice %16 {offsets = [0, 1], sizes = [4, 144], strides = [1, 1]} : vector<4x196xf32> to vector<4x144xf32>
    %cst_22 = arith.constant dense<0.000000e+00> : vector<8x144xf32>
    %26 = tpu.matmul %24, %25, %cst_22 {dimension_numbers = #tpu.dot_dimension_numbers<[1], [0], [0], [1], [0, 0, 1, 1], [], []>} : vector<8x4xf32>, vector<4x144xf32>, vector<8x144xf32> -> vector<8x144xf32>
    %27 = arith.addf %22, %26 : vector<8x144xf32>
    %c2_23 = arith.constant 2 : index
    %c0_24 = arith.constant 0 : index
    %c0_25 = arith.constant 0 : index
    %28 = vector.load %arg3[%c2_23, %c0_24, %c0_25] : memref<25x8x4xf32, #tpu.memory_space<vmem>>, vector<1x8x4xf32>
    %29 = vector.shape_cast %28 : vector<1x8x4xf32> to vector<8x4xf32>
    %30 = vector.extract_strided_slice %16 {offsets = [0, 2], sizes = [4, 144], strides = [1, 1]} : vector<4x196xf32> to vector<4x144xf32>
    %cst_26 = arith.constant dense<0.000000e+00> : vector<8x144xf32>
    %31 = tpu.matmul %29, %30, %cst_26 {dimension_numbers = #tpu.dot_dimension_numbers<[1], [0], [0], [1], [0, 0, 1, 1], [], []>} : vector<8x4xf32>, vector<4x144xf32>, vector<8x144xf32> -> vector<8x144xf32>
    %32 = arith.addf %27, %31 : vector<8x144xf32>
    %c3_27 = arith.constant 3 : index
    %c0_28 = arith.constant 0 : index
    %c0_29 = arith.constant 0 : index
    %33 = vector.load %arg3[%c3_27, %c0_28, %c0_29] : memref<25x8x4xf32, #tpu.memory_space<vmem>>, vector<1x8x4xf32>
    %34 = vector.shape_cast %33 : vector<1x8x4xf32> to vector<8x4xf32>
    %35 = vector.extract_strided_slice %16 {offsets = [0, 3], sizes = [4, 144], strides = [1, 1]} : vector<4x196xf32> to vector<4x144xf32>
    %cst_30 = arith.constant dense<0.000000e+00> : vector<8x144xf32>
    %36 = tpu.matmul %34, %35, %cst_30 {dimension_numbers = #tpu.dot_dimension_numbers<[1], [0], [0], [1], [0, 0, 1, 1], [], []>} : vector<8x4xf32>, vector<4x144xf32>, vector<8x144xf32> -> vector<8x144xf32>
    %37 = arith.addf %32, %36 : vector<8x144xf32>
    %c4 = arith.constant 4 : index
    %c0_31 = arith.constant 0 : index
    %c0_32 = arith.constant 0 : index
    %38 = vector.load %arg3[%c4, %c0_31, %c0_32] : memref<25x8x4xf32, #tpu.memory_space<vmem>>, vector<1x8x4xf32>
    %39 = vector.shape_cast %38 : vector<1x8x4xf32> to vector<8x4xf32>
    %40 = vector.extract_strided_slice %16 {offsets = [0, 4], sizes = [4, 144], strides = [1, 1]} : vector<4x196xf32> to vector<4x144xf32>
    %cst_33 = arith.constant dense<0.000000e+00> : vector<8x144xf32>
    %41 = tpu.matmul %39, %40, %cst_33 {dimension_numbers = #tpu.dot_dimension_numbers<[1], [0], [0], [1], [0, 0, 1, 1], [], []>} : vector<8x4xf32>, vector<4x144xf32>, vector<8x144xf32> -> vector<8x144xf32>
    %42 = arith.addf %37, %41 : vector<8x144xf32>
    %c5 = arith.constant 5 : index
    %c0_34 = arith.constant 0 : index
    %c0_35 = arith.constant 0 : index
    %43 = vector.load %arg3[%c5, %c0_34, %c0_35] : memref<25x8x4xf32, #tpu.memory_space<vmem>>, vector<1x8x4xf32>
    %44 = vector.shape_cast %43 : vector<1x8x4xf32> to vector<8x4xf32>
    %45 = vector.extract_strided_slice %16 {offsets = [0, 12], sizes = [4, 144], strides = [1, 1]} : vector<4x196xf32> to vector<4x144xf32>
    %cst_36 = arith.constant dense<0.000000e+00> : vector<8x144xf32>
    %46 = tpu.matmul %44, %45, %cst_36 {dimension_numbers = #tpu.dot_dimension_numbers<[1], [0], [0], [1], [0, 0, 1, 1], [], []>} : vector<8x4xf32>, vector<4x144xf32>, vector<8x144xf32> -> vector<8x144xf32>
    %47 = arith.addf %42, %46 : vector<8x144xf32>
    %c6 = arith.constant 6 : index
    %c0_37 = arith.constant 0 : index
    %c0_38 = arith.constant 0 : index
    %48 = vector.load %arg3[%c6, %c0_37, %c0_38] : memref<25x8x4xf32, #tpu.memory_space<vmem>>, vector<1x8x4xf32>
    %49 = vector.shape_cast %48 : vector<1x8x4xf32> to vector<8x4xf32>
    %50 = vector.extract_strided_slice %16 {offsets = [0, 13], sizes = [4, 144], strides = [1, 1]} : vector<4x196xf32> to vector<4x144xf32>
    %cst_39 = arith.constant dense<0.000000e+00> : vector<8x144xf32>
    %51 = tpu.matmul %49, %50, %cst_39 {dimension_numbers = #tpu.dot_dimension_numbers<[1], [0], [0], [1], [0, 0, 1, 1], [], []>} : vector<8x4xf32>, vector<4x144xf32>, vector<8x144xf32> -> vector<8x144xf32>
    %52 = arith.addf %47, %51 : vector<8x144xf32>
    %c7 = arith.constant 7 : index
    %c0_40 = arith.constant 0 : index
    %c0_41 = arith.constant 0 : index
    %53 = vector.load %arg3[%c7, %c0_40, %c0_41] : memref<25x8x4xf32, #tpu.memory_space<vmem>>, vector<1x8x4xf32>
    %54 = vector.shape_cast %53 : vector<1x8x4xf32> to vector<8x4xf32>
    %55 = vector.extract_strided_slice %16 {offsets = [0, 14], sizes = [4, 144], strides = [1, 1]} : vector<4x196xf32> to vector<4x144xf32>
    %cst_42 = arith.constant dense<0.000000e+00> : vector<8x144xf32>
    %56 = tpu.matmul %54, %55, %cst_42 {dimension_numbers = #tpu.dot_dimension_numbers<[1], [0], [0], [1], [0, 0, 1, 1], [], []>} : vector<8x4xf32>, vector<4x144xf32>, vector<8x144xf32> -> vector<8x144xf32>
    %57 = arith.addf %52, %56 : vector<8x144xf32>
    %c8 = arith.constant 8 : index
    %c0_43 = arith.constant 0 : index
    %c0_44 = arith.constant 0 : index
    %58 = vector.load %arg3[%c8, %c0_43, %c0_44] : memref<25x8x4xf32, #tpu.memory_space<vmem>>, vector<1x8x4xf32>
    %59 = vector.shape_cast %58 : vector<1x8x4xf32> to vector<8x4xf32>
    %60 = vector.extract_strided_slice %16 {offsets = [0, 15], sizes = [4, 144], strides = [1, 1]} : vector<4x196xf32> to vector<4x144xf32>
    %cst_45 = arith.constant dense<0.000000e+00> : vector<8x144xf32>
    %61 = tpu.matmul %59, %60, %cst_45 {dimension_numbers = #tpu.dot_dimension_numbers<[1], [0], [0], [1], [0, 0, 1, 1], [], []>} : vector<8x4xf32>, vector<4x144xf32>, vector<8x144xf32> -> vector<8x144xf32>
    %62 = arith.addf %57, %61 : vector<8x144xf32>
    %c9 = arith.constant 9 : index
    %c0_46 = arith.constant 0 : index
    %c0_47 = arith.constant 0 : index
    %63 = vector.load %arg3[%c9, %c0_46, %c0_47] : memref<25x8x4xf32, #tpu.memory_space<vmem>>, vector<1x8x4xf32>
    %64 = vector.shape_cast %63 : vector<1x8x4xf32> to vector<8x4xf32>
    %65 = vector.extract_strided_slice %16 {offsets = [0, 16], sizes = [4, 144], strides = [1, 1]} : vector<4x196xf32> to vector<4x144xf32>
    %cst_48 = arith.constant dense<0.000000e+00> : vector<8x144xf32>
    %66 = tpu.matmul %64, %65, %cst_48 {dimension_numbers = #tpu.dot_dimension_numbers<[1], [0], [0], [1], [0, 0, 1, 1], [], []>} : vector<8x4xf32>, vector<4x144xf32>, vector<8x144xf32> -> vector<8x144xf32>
    %67 = arith.addf %62, %66 : vector<8x144xf32>
    %c10 = arith.constant 10 : index
    %c0_49 = arith.constant 0 : index
    %c0_50 = arith.constant 0 : index
    %68 = vector.load %arg3[%c10, %c0_49, %c0_50] : memref<25x8x4xf32, #tpu.memory_space<vmem>>, vector<1x8x4xf32>
    %69 = vector.shape_cast %68 : vector<1x8x4xf32> to vector<8x4xf32>
    %70 = vector.extract_strided_slice %16 {offsets = [0, 24], sizes = [4, 144], strides = [1, 1]} : vector<4x196xf32> to vector<4x144xf32>
    %cst_51 = arith.constant dense<0.000000e+00> : vector<8x144xf32>
    %71 = tpu.matmul %69, %70, %cst_51 {dimension_numbers = #tpu.dot_dimension_numbers<[1], [0], [0], [1], [0, 0, 1, 1], [], []>} : vector<8x4xf32>, vector<4x144xf32>, vector<8x144xf32> -> vector<8x144xf32>
    %72 = arith.addf %67, %71 : vector<8x144xf32>
    %c11 = arith.constant 11 : index
    %c0_52 = arith.constant 0 : index
    %c0_53 = arith.constant 0 : index
    %73 = vector.load %arg3[%c11, %c0_52, %c0_53] : memref<25x8x4xf32, #tpu.memory_space<vmem>>, vector<1x8x4xf32>
    %74 = vector.shape_cast %73 : vector<1x8x4xf32> to vector<8x4xf32>
    %75 = vector.extract_strided_slice %16 {offsets = [0, 25], sizes = [4, 144], strides = [1, 1]} : vector<4x196xf32> to vector<4x144xf32>
    %cst_54 = arith.constant dense<0.000000e+00> : vector<8x144xf32>
    %76 = tpu.matmul %74, %75, %cst_54 {dimension_numbers = #tpu.dot_dimension_numbers<[1], [0], [0], [1], [0, 0, 1, 1], [], []>} : vector<8x4xf32>, vector<4x144xf32>, vector<8x144xf32> -> vector<8x144xf32>
    %77 = arith.addf %72, %76 : vector<8x144xf32>
    %c12 = arith.constant 12 : index
    %c0_55 = arith.constant 0 : index
    %c0_56 = arith.constant 0 : index
    %78 = vector.load %arg3[%c12, %c0_55, %c0_56] : memref<25x8x4xf32, #tpu.memory_space<vmem>>, vector<1x8x4xf32>
    %79 = vector.shape_cast %78 : vector<1x8x4xf32> to vector<8x4xf32>
    %80 = vector.extract_strided_slice %16 {offsets = [0, 26], sizes = [4, 144], strides = [1, 1]} : vector<4x196xf32> to vector<4x144xf32>
    %cst_57 = arith.constant dense<0.000000e+00> : vector<8x144xf32>
    %81 = tpu.matmul %79, %80, %cst_57 {dimension_numbers = #tpu.dot_dimension_numbers<[1], [0], [0], [1], [0, 0, 1, 1], [], []>} : vector<8x4xf32>, vector<4x144xf32>, vector<8x144xf32> -> vector<8x144xf32>
    %82 = arith.addf %77, %81 : vector<8x144xf32>
    %c13 = arith.constant 13 : index
    %c0_58 = arith.constant 0 : index
    %c0_59 = arith.constant 0 : index
    %83 = vector.load %arg3[%c13, %c0_58, %c0_59] : memref<25x8x4xf32, #tpu.memory_space<vmem>>, vector<1x8x4xf32>
    %84 = vector.shape_cast %83 : vector<1x8x4xf32> to vector<8x4xf32>
    %85 = vector.extract_strided_slice %16 {offsets = [0, 27], sizes = [4, 144], strides = [1, 1]} : vector<4x196xf32> to vector<4x144xf32>
    %cst_60 = arith.constant dense<0.000000e+00> : vector<8x144xf32>
    %86 = tpu.matmul %84, %85, %cst_60 {dimension_numbers = #tpu.dot_dimension_numbers<[1], [0], [0], [1], [0, 0, 1, 1], [], []>} : vector<8x4xf32>, vector<4x144xf32>, vector<8x144xf32> -> vector<8x144xf32>
    %87 = arith.addf %82, %86 : vector<8x144xf32>
    %c14 = arith.constant 14 : index
    %c0_61 = arith.constant 0 : index
    %c0_62 = arith.constant 0 : index
    %88 = vector.load %arg3[%c14, %c0_61, %c0_62] : memref<25x8x4xf32, #tpu.memory_space<vmem>>, vector<1x8x4xf32>
    %89 = vector.shape_cast %88 : vector<1x8x4xf32> to vector<8x4xf32>
    %90 = vector.extract_strided_slice %16 {offsets = [0, 28], sizes = [4, 144], strides = [1, 1]} : vector<4x196xf32> to vector<4x144xf32>
    %cst_63 = arith.constant dense<0.000000e+00> : vector<8x144xf32>
    %91 = tpu.matmul %89, %90, %cst_63 {dimension_numbers = #tpu.dot_dimension_numbers<[1], [0], [0], [1], [0, 0, 1, 1], [], []>} : vector<8x4xf32>, vector<4x144xf32>, vector<8x144xf32> -> vector<8x144xf32>
    %92 = arith.addf %87, %91 : vector<8x144xf32>
    %c15 = arith.constant 15 : index
    %c0_64 = arith.constant 0 : index
    %c0_65 = arith.constant 0 : index
    %93 = vector.load %arg3[%c15, %c0_64, %c0_65] : memref<25x8x4xf32, #tpu.memory_space<vmem>>, vector<1x8x4xf32>
    %94 = vector.shape_cast %93 : vector<1x8x4xf32> to vector<8x4xf32>
    %95 = vector.extract_strided_slice %16 {offsets = [0, 36], sizes = [4, 144], strides = [1, 1]} : vector<4x196xf32> to vector<4x144xf32>
    %cst_66 = arith.constant dense<0.000000e+00> : vector<8x144xf32>
    %96 = tpu.matmul %94, %95, %cst_66 {dimension_numbers = #tpu.dot_dimension_numbers<[1], [0], [0], [1], [0, 0, 1, 1], [], []>} : vector<8x4xf32>, vector<4x144xf32>, vector<8x144xf32> -> vector<8x144xf32>
    %97 = arith.addf %92, %96 : vector<8x144xf32>
    %c16 = arith.constant 16 : index
    %c0_67 = arith.constant 0 : index
    %c0_68 = arith.constant 0 : index
    %98 = vector.load %arg3[%c16, %c0_67, %c0_68] : memref<25x8x4xf32, #tpu.memory_space<vmem>>, vector<1x8x4xf32>
    %99 = vector.shape_cast %98 : vector<1x8x4xf32> to vector<8x4xf32>
    %100 = vector.extract_strided_slice %16 {offsets = [0, 37], sizes = [4, 144], strides = [1, 1]} : vector<4x196xf32> to vector<4x144xf32>
    %cst_69 = arith.constant dense<0.000000e+00> : vector<8x144xf32>
    %101 = tpu.matmul %99, %100, %cst_69 {dimension_numbers = #tpu.dot_dimension_numbers<[1], [0], [0], [1], [0, 0, 1, 1], [], []>} : vector<8x4xf32>, vector<4x144xf32>, vector<8x144xf32> -> vector<8x144xf32>
    %102 = arith.addf %97, %101 : vector<8x144xf32>
    %c17 = arith.constant 17 : index
    %c0_70 = arith.constant 0 : index
    %c0_71 = arith.constant 0 : index
    %103 = vector.load %arg3[%c17, %c0_70, %c0_71] : memref<25x8x4xf32, #tpu.memory_space<vmem>>, vector<1x8x4xf32>
    %104 = vector.shape_cast %103 : vector<1x8x4xf32> to vector<8x4xf32>
    %105 = vector.extract_strided_slice %16 {offsets = [0, 38], sizes = [4, 144], strides = [1, 1]} : vector<4x196xf32> to vector<4x144xf32>
    %cst_72 = arith.constant dense<0.000000e+00> : vector<8x144xf32>
    %106 = tpu.matmul %104, %105, %cst_72 {dimension_numbers = #tpu.dot_dimension_numbers<[1], [0], [0], [1], [0, 0, 1, 1], [], []>} : vector<8x4xf32>, vector<4x144xf32>, vector<8x144xf32> -> vector<8x144xf32>
    %107 = arith.addf %102, %106 : vector<8x144xf32>
    %c18 = arith.constant 18 : index
    %c0_73 = arith.constant 0 : index
    %c0_74 = arith.constant 0 : index
    %108 = vector.load %arg3[%c18, %c0_73, %c0_74] : memref<25x8x4xf32, #tpu.memory_space<vmem>>, vector<1x8x4xf32>
    %109 = vector.shape_cast %108 : vector<1x8x4xf32> to vector<8x4xf32>
    %110 = vector.extract_strided_slice %16 {offsets = [0, 39], sizes = [4, 144], strides = [1, 1]} : vector<4x196xf32> to vector<4x144xf32>
    %cst_75 = arith.constant dense<0.000000e+00> : vector<8x144xf32>
    %111 = tpu.matmul %109, %110, %cst_75 {dimension_numbers = #tpu.dot_dimension_numbers<[1], [0], [0], [1], [0, 0, 1, 1], [], []>} : vector<8x4xf32>, vector<4x144xf32>, vector<8x144xf32> -> vector<8x144xf32>
    %112 = arith.addf %107, %111 : vector<8x144xf32>
    %c19 = arith.constant 19 : index
    %c0_76 = arith.constant 0 : index
    %c0_77 = arith.constant 0 : index
    %113 = vector.load %arg3[%c19, %c0_76, %c0_77] : memref<25x8x4xf32, #tpu.memory_space<vmem>>, vector<1x8x4xf32>
    %114 = vector.shape_cast %113 : vector<1x8x4xf32> to vector<8x4xf32>
    %115 = vector.extract_strided_slice %16 {offsets = [0, 40], sizes = [4, 144], strides = [1, 1]} : vector<4x196xf32> to vector<4x144xf32>
    %cst_78 = arith.constant dense<0.000000e+00> : vector<8x144xf32>
    %116 = tpu.matmul %114, %115, %cst_78 {dimension_numbers = #tpu.dot_dimension_numbers<[1], [0], [0], [1], [0, 0, 1, 1], [], []>} : vector<8x4xf32>, vector<4x144xf32>, vector<8x144xf32> -> vector<8x144xf32>
    %117 = arith.addf %112, %116 : vector<8x144xf32>
    %c20 = arith.constant 20 : index
    %c0_79 = arith.constant 0 : index
    %c0_80 = arith.constant 0 : index
    %118 = vector.load %arg3[%c20, %c0_79, %c0_80] : memref<25x8x4xf32, #tpu.memory_space<vmem>>, vector<1x8x4xf32>
    %119 = vector.shape_cast %118 : vector<1x8x4xf32> to vector<8x4xf32>
    %120 = vector.extract_strided_slice %16 {offsets = [0, 48], sizes = [4, 144], strides = [1, 1]} : vector<4x196xf32> to vector<4x144xf32>
    %cst_81 = arith.constant dense<0.000000e+00> : vector<8x144xf32>
    %121 = tpu.matmul %119, %120, %cst_81 {dimension_numbers = #tpu.dot_dimension_numbers<[1], [0], [0], [1], [0, 0, 1, 1], [], []>} : vector<8x4xf32>, vector<4x144xf32>, vector<8x144xf32> -> vector<8x144xf32>
    %122 = arith.addf %117, %121 : vector<8x144xf32>
    %c21 = arith.constant 21 : index
    %c0_82 = arith.constant 0 : index
    %c0_83 = arith.constant 0 : index
    %123 = vector.load %arg3[%c21, %c0_82, %c0_83] : memref<25x8x4xf32, #tpu.memory_space<vmem>>, vector<1x8x4xf32>
    %124 = vector.shape_cast %123 : vector<1x8x4xf32> to vector<8x4xf32>
    %125 = vector.extract_strided_slice %16 {offsets = [0, 49], sizes = [4, 144], strides = [1, 1]} : vector<4x196xf32> to vector<4x144xf32>
    %cst_84 = arith.constant dense<0.000000e+00> : vector<8x144xf32>
    %126 = tpu.matmul %124, %125, %cst_84 {dimension_numbers = #tpu.dot_dimension_numbers<[1], [0], [0], [1], [0, 0, 1, 1], [], []>} : vector<8x4xf32>, vector<4x144xf32>, vector<8x144xf32> -> vector<8x144xf32>
    %127 = arith.addf %122, %126 : vector<8x144xf32>
    %c22 = arith.constant 22 : index
    %c0_85 = arith.constant 0 : index
    %c0_86 = arith.constant 0 : index
    %128 = vector.load %arg3[%c22, %c0_85, %c0_86] : memref<25x8x4xf32, #tpu.memory_space<vmem>>, vector<1x8x4xf32>
    %129 = vector.shape_cast %128 : vector<1x8x4xf32> to vector<8x4xf32>
    %130 = vector.extract_strided_slice %16 {offsets = [0, 50], sizes = [4, 144], strides = [1, 1]} : vector<4x196xf32> to vector<4x144xf32>
    %cst_87 = arith.constant dense<0.000000e+00> : vector<8x144xf32>
    %131 = tpu.matmul %129, %130, %cst_87 {dimension_numbers = #tpu.dot_dimension_numbers<[1], [0], [0], [1], [0, 0, 1, 1], [], []>} : vector<8x4xf32>, vector<4x144xf32>, vector<8x144xf32> -> vector<8x144xf32>
    %132 = arith.addf %127, %131 : vector<8x144xf32>
    %c23 = arith.constant 23 : index
    %c0_88 = arith.constant 0 : index
    %c0_89 = arith.constant 0 : index
    %133 = vector.load %arg3[%c23, %c0_88, %c0_89] : memref<25x8x4xf32, #tpu.memory_space<vmem>>, vector<1x8x4xf32>
    %134 = vector.shape_cast %133 : vector<1x8x4xf32> to vector<8x4xf32>
    %135 = vector.extract_strided_slice %16 {offsets = [0, 51], sizes = [4, 144], strides = [1, 1]} : vector<4x196xf32> to vector<4x144xf32>
    %cst_90 = arith.constant dense<0.000000e+00> : vector<8x144xf32>
    %136 = tpu.matmul %134, %135, %cst_90 {dimension_numbers = #tpu.dot_dimension_numbers<[1], [0], [0], [1], [0, 0, 1, 1], [], []>} : vector<8x4xf32>, vector<4x144xf32>, vector<8x144xf32> -> vector<8x144xf32>
    %137 = arith.addf %132, %136 : vector<8x144xf32>
    %c24 = arith.constant 24 : index
    %c0_91 = arith.constant 0 : index
    %c0_92 = arith.constant 0 : index
    %138 = vector.load %arg3[%c24, %c0_91, %c0_92] : memref<25x8x4xf32, #tpu.memory_space<vmem>>, vector<1x8x4xf32>
    %139 = vector.shape_cast %138 : vector<1x8x4xf32> to vector<8x4xf32>
    %140 = vector.extract_strided_slice %16 {offsets = [0, 52], sizes = [4, 144], strides = [1, 1]} : vector<4x196xf32> to vector<4x144xf32>
    %cst_93 = arith.constant dense<0.000000e+00> : vector<8x144xf32>
    %141 = tpu.matmul %139, %140, %cst_93 {dimension_numbers = #tpu.dot_dimension_numbers<[1], [0], [0], [1], [0, 0, 1, 1], [], []>} : vector<8x4xf32>, vector<4x144xf32>, vector<8x144xf32> -> vector<8x144xf32>
    %142 = arith.addf %137, %141 : vector<8x144xf32>
    %c0_94 = arith.constant 0 : index
    %c0_95 = arith.constant 0 : index
    %143 = vector.load %arg4[%c0_94, %c0_95] : memref<8x1xf32, #tpu.memory_space<vmem>>, vector<8x1xf32>
    %144 = vector.broadcast %143 : vector<8x1xf32> to vector<8x144xf32>
    %145 = arith.addf %142, %144 : vector<8x144xf32>
    %cst_96 = arith.constant 0.000000e+00 : f32
    %146 = vector.broadcast %cst_96 : f32 to vector<8x144xf32>
    %147 = arith.maximumf %145, %146 : vector<8x144xf32>
    %c0_97 = arith.constant 0 : index
    %c0_98 = arith.constant 0 : index
    %c0_99 = arith.constant 0 : index
    %148 = vector.load %arg5[%c0_97, %c0_98, %c0_99] : memref<4x144x100xf32, #tpu.memory_space<vmem>>, vector<1x144x100xf32>
    %149 = vector.shape_cast %148 : vector<1x144x100xf32> to vector<144x100xf32>
    %cst_100 = arith.constant dense<0.000000e+00> : vector<8x100xf32>
    %150 = tpu.matmul %147, %149, %cst_100 {dimension_numbers = #tpu.dot_dimension_numbers<[1], [0], [0], [1], [0, 0, 1, 1], [], []>} : vector<8x144xf32>, vector<144x100xf32>, vector<8x100xf32> -> vector<8x100xf32>
    %c1_101 = arith.constant 1 : index
    %c0_102 = arith.constant 0 : index
    %c0_103 = arith.constant 0 : index
    %151 = vector.load %arg5[%c1_101, %c0_102, %c0_103] : memref<4x144x100xf32, #tpu.memory_space<vmem>>, vector<1x144x100xf32>
    %152 = vector.shape_cast %151 : vector<1x144x100xf32> to vector<144x100xf32>
    %cst_104 = arith.constant dense<0.000000e+00> : vector<8x100xf32>
    %153 = tpu.matmul %147, %152, %cst_104 {dimension_numbers = #tpu.dot_dimension_numbers<[1], [0], [0], [1], [0, 0, 1, 1], [], []>} : vector<8x144xf32>, vector<144x100xf32>, vector<8x100xf32> -> vector<8x100xf32>
    %154 = arith.maximumf %150, %153 : vector<8x100xf32>
    %c2_105 = arith.constant 2 : index
    %c0_106 = arith.constant 0 : index
    %c0_107 = arith.constant 0 : index
    %155 = vector.load %arg5[%c2_105, %c0_106, %c0_107] : memref<4x144x100xf32, #tpu.memory_space<vmem>>, vector<1x144x100xf32>
    %156 = vector.shape_cast %155 : vector<1x144x100xf32> to vector<144x100xf32>
    %cst_108 = arith.constant dense<0.000000e+00> : vector<8x100xf32>
    %157 = tpu.matmul %147, %156, %cst_108 {dimension_numbers = #tpu.dot_dimension_numbers<[1], [0], [0], [1], [0, 0, 1, 1], [], []>} : vector<8x144xf32>, vector<144x100xf32>, vector<8x100xf32> -> vector<8x100xf32>
    %158 = arith.maximumf %154, %157 : vector<8x100xf32>
    %c3_109 = arith.constant 3 : index
    %c0_110 = arith.constant 0 : index
    %c0_111 = arith.constant 0 : index
    %159 = vector.load %arg5[%c3_109, %c0_110, %c0_111] : memref<4x144x100xf32, #tpu.memory_space<vmem>>, vector<1x144x100xf32>
    %160 = vector.shape_cast %159 : vector<1x144x100xf32> to vector<144x100xf32>
    %cst_112 = arith.constant dense<0.000000e+00> : vector<8x100xf32>
    %161 = tpu.matmul %147, %160, %cst_112 {dimension_numbers = #tpu.dot_dimension_numbers<[1], [0], [0], [1], [0, 0, 1, 1], [], []>} : vector<8x144xf32>, vector<144x100xf32>, vector<8x100xf32> -> vector<8x100xf32>
    %162 = arith.maximumf %158, %161 : vector<8x100xf32>
    %cst_113 = arith.constant 0.000000e+00 : f32
    %163 = vector.broadcast %cst_113 : f32 to vector<8x64xf32>
    %c0_114 = arith.constant 0 : index
    %c0_115 = arith.constant 0 : index
    %c0_116 = arith.constant 0 : index
    %164 = vector.load %arg6[%c0_114, %c0_115, %c0_116] : memref<25x8x8xf32, #tpu.memory_space<vmem>>, vector<1x8x8xf32>
    %165 = vector.shape_cast %164 : vector<1x8x8xf32> to vector<8x8xf32>
    %166 = vector.extract_strided_slice %162 {offsets = [0, 0], sizes = [8, 64], strides = [1, 1]} : vector<8x100xf32> to vector<8x64xf32>
    %cst_117 = arith.constant dense<0.000000e+00> : vector<8x64xf32>
    %167 = tpu.matmul %165, %166, %cst_117 {dimension_numbers = #tpu.dot_dimension_numbers<[1], [0], [0], [1], [0, 0, 1, 1], [], []>} : vector<8x8xf32>, vector<8x64xf32>, vector<8x64xf32> -> vector<8x64xf32>
    %168 = arith.addf %163, %167 : vector<8x64xf32>
    %c1_118 = arith.constant 1 : index
    %c0_119 = arith.constant 0 : index
    %c0_120 = arith.constant 0 : index
    %169 = vector.load %arg6[%c1_118, %c0_119, %c0_120] : memref<25x8x8xf32, #tpu.memory_space<vmem>>, vector<1x8x8xf32>
    %170 = vector.shape_cast %169 : vector<1x8x8xf32> to vector<8x8xf32>
    %171 = vector.extract_strided_slice %162 {offsets = [0, 1], sizes = [8, 64], strides = [1, 1]} : vector<8x100xf32> to vector<8x64xf32>
    %cst_121 = arith.constant dense<0.000000e+00> : vector<8x64xf32>
    %172 = tpu.matmul %170, %171, %cst_121 {dimension_numbers = #tpu.dot_dimension_numbers<[1], [0], [0], [1], [0, 0, 1, 1], [], []>} : vector<8x8xf32>, vector<8x64xf32>, vector<8x64xf32> -> vector<8x64xf32>
    %173 = arith.addf %168, %172 : vector<8x64xf32>
    %c2_122 = arith.constant 2 : index
    %c0_123 = arith.constant 0 : index
    %c0_124 = arith.constant 0 : index
    %174 = vector.load %arg6[%c2_122, %c0_123, %c0_124] : memref<25x8x8xf32, #tpu.memory_space<vmem>>, vector<1x8x8xf32>
    %175 = vector.shape_cast %174 : vector<1x8x8xf32> to vector<8x8xf32>
    %176 = vector.extract_strided_slice %162 {offsets = [0, 2], sizes = [8, 64], strides = [1, 1]} : vector<8x100xf32> to vector<8x64xf32>
    %cst_125 = arith.constant dense<0.000000e+00> : vector<8x64xf32>
    %177 = tpu.matmul %175, %176, %cst_125 {dimension_numbers = #tpu.dot_dimension_numbers<[1], [0], [0], [1], [0, 0, 1, 1], [], []>} : vector<8x8xf32>, vector<8x64xf32>, vector<8x64xf32> -> vector<8x64xf32>
    %178 = arith.addf %173, %177 : vector<8x64xf32>
    %c3_126 = arith.constant 3 : index
    %c0_127 = arith.constant 0 : index
    %c0_128 = arith.constant 0 : index
    %179 = vector.load %arg6[%c3_126, %c0_127, %c0_128] : memref<25x8x8xf32, #tpu.memory_space<vmem>>, vector<1x8x8xf32>
    %180 = vector.shape_cast %179 : vector<1x8x8xf32> to vector<8x8xf32>
    %181 = vector.extract_strided_slice %162 {offsets = [0, 3], sizes = [8, 64], strides = [1, 1]} : vector<8x100xf32> to vector<8x64xf32>
    %cst_129 = arith.constant dense<0.000000e+00> : vector<8x64xf32>
    %182 = tpu.matmul %180, %181, %cst_129 {dimension_numbers = #tpu.dot_dimension_numbers<[1], [0], [0], [1], [0, 0, 1, 1], [], []>} : vector<8x8xf32>, vector<8x64xf32>, vector<8x64xf32> -> vector<8x64xf32>
    %183 = arith.addf %178, %182 : vector<8x64xf32>
    %c4_130 = arith.constant 4 : index
    %c0_131 = arith.constant 0 : index
    %c0_132 = arith.constant 0 : index
    %184 = vector.load %arg6[%c4_130, %c0_131, %c0_132] : memref<25x8x8xf32, #tpu.memory_space<vmem>>, vector<1x8x8xf32>
    %185 = vector.shape_cast %184 : vector<1x8x8xf32> to vector<8x8xf32>
    %186 = vector.extract_strided_slice %162 {offsets = [0, 4], sizes = [8, 64], strides = [1, 1]} : vector<8x100xf32> to vector<8x64xf32>
    %cst_133 = arith.constant dense<0.000000e+00> : vector<8x64xf32>
    %187 = tpu.matmul %185, %186, %cst_133 {dimension_numbers = #tpu.dot_dimension_numbers<[1], [0], [0], [1], [0, 0, 1, 1], [], []>} : vector<8x8xf32>, vector<8x64xf32>, vector<8x64xf32> -> vector<8x64xf32>
    %188 = arith.addf %183, %187 : vector<8x64xf32>
    %c5_134 = arith.constant 5 : index
    %c0_135 = arith.constant 0 : index
    %c0_136 = arith.constant 0 : index
    %189 = vector.load %arg6[%c5_134, %c0_135, %c0_136] : memref<25x8x8xf32, #tpu.memory_space<vmem>>, vector<1x8x8xf32>
    %190 = vector.shape_cast %189 : vector<1x8x8xf32> to vector<8x8xf32>
    %191 = vector.extract_strided_slice %162 {offsets = [0, 8], sizes = [8, 64], strides = [1, 1]} : vector<8x100xf32> to vector<8x64xf32>
    %cst_137 = arith.constant dense<0.000000e+00> : vector<8x64xf32>
    %192 = tpu.matmul %190, %191, %cst_137 {dimension_numbers = #tpu.dot_dimension_numbers<[1], [0], [0], [1], [0, 0, 1, 1], [], []>} : vector<8x8xf32>, vector<8x64xf32>, vector<8x64xf32> -> vector<8x64xf32>
    %193 = arith.addf %188, %192 : vector<8x64xf32>
    %c6_138 = arith.constant 6 : index
    %c0_139 = arith.constant 0 : index
    %c0_140 = arith.constant 0 : index
    %194 = vector.load %arg6[%c6_138, %c0_139, %c0_140] : memref<25x8x8xf32, #tpu.memory_space<vmem>>, vector<1x8x8xf32>
    %195 = vector.shape_cast %194 : vector<1x8x8xf32> to vector<8x8xf32>
    %196 = vector.extract_strided_slice %162 {offsets = [0, 9], sizes = [8, 64], strides = [1, 1]} : vector<8x100xf32> to vector<8x64xf32>
    %cst_141 = arith.constant dense<0.000000e+00> : vector<8x64xf32>
    %197 = tpu.matmul %195, %196, %cst_141 {dimension_numbers = #tpu.dot_dimension_numbers<[1], [0], [0], [1], [0, 0, 1, 1], [], []>} : vector<8x8xf32>, vector<8x64xf32>, vector<8x64xf32> -> vector<8x64xf32>
    %198 = arith.addf %193, %197 : vector<8x64xf32>
    %c7_142 = arith.constant 7 : index
    %c0_143 = arith.constant 0 : index
    %c0_144 = arith.constant 0 : index
    %199 = vector.load %arg6[%c7_142, %c0_143, %c0_144] : memref<25x8x8xf32, #tpu.memory_space<vmem>>, vector<1x8x8xf32>
    %200 = vector.shape_cast %199 : vector<1x8x8xf32> to vector<8x8xf32>
    %201 = vector.extract_strided_slice %162 {offsets = [0, 10], sizes = [8, 64], strides = [1, 1]} : vector<8x100xf32> to vector<8x64xf32>
    %cst_145 = arith.constant dense<0.000000e+00> : vector<8x64xf32>
    %202 = tpu.matmul %200, %201, %cst_145 {dimension_numbers = #tpu.dot_dimension_numbers<[1], [0], [0], [1], [0, 0, 1, 1], [], []>} : vector<8x8xf32>, vector<8x64xf32>, vector<8x64xf32> -> vector<8x64xf32>
    %203 = arith.addf %198, %202 : vector<8x64xf32>
    %c8_146 = arith.constant 8 : index
    %c0_147 = arith.constant 0 : index
    %c0_148 = arith.constant 0 : index
    %204 = vector.load %arg6[%c8_146, %c0_147, %c0_148] : memref<25x8x8xf32, #tpu.memory_space<vmem>>, vector<1x8x8xf32>
    %205 = vector.shape_cast %204 : vector<1x8x8xf32> to vector<8x8xf32>
    %206 = vector.extract_strided_slice %162 {offsets = [0, 11], sizes = [8, 64], strides = [1, 1]} : vector<8x100xf32> to vector<8x64xf32>
    %cst_149 = arith.constant dense<0.000000e+00> : vector<8x64xf32>
    %207 = tpu.matmul %205, %206, %cst_149 {dimension_numbers = #tpu.dot_dimension_numbers<[1], [0], [0], [1], [0, 0, 1, 1], [], []>} : vector<8x8xf32>, vector<8x64xf32>, vector<8x64xf32> -> vector<8x64xf32>
    %208 = arith.addf %203, %207 : vector<8x64xf32>
    %c9_150 = arith.constant 9 : index
    %c0_151 = arith.constant 0 : index
    %c0_152 = arith.constant 0 : index
    %209 = vector.load %arg6[%c9_150, %c0_151, %c0_152] : memref<25x8x8xf32, #tpu.memory_space<vmem>>, vector<1x8x8xf32>
    %210 = vector.shape_cast %209 : vector<1x8x8xf32> to vector<8x8xf32>
    %211 = vector.extract_strided_slice %162 {offsets = [0, 12], sizes = [8, 64], strides = [1, 1]} : vector<8x100xf32> to vector<8x64xf32>
    %cst_153 = arith.constant dense<0.000000e+00> : vector<8x64xf32>
    %212 = tpu.matmul %210, %211, %cst_153 {dimension_numbers = #tpu.dot_dimension_numbers<[1], [0], [0], [1], [0, 0, 1, 1], [], []>} : vector<8x8xf32>, vector<8x64xf32>, vector<8x64xf32> -> vector<8x64xf32>
    %213 = arith.addf %208, %212 : vector<8x64xf32>
    %c10_154 = arith.constant 10 : index
    %c0_155 = arith.constant 0 : index
    %c0_156 = arith.constant 0 : index
    %214 = vector.load %arg6[%c10_154, %c0_155, %c0_156] : memref<25x8x8xf32, #tpu.memory_space<vmem>>, vector<1x8x8xf32>
    %215 = vector.shape_cast %214 : vector<1x8x8xf32> to vector<8x8xf32>
    %216 = vector.extract_strided_slice %162 {offsets = [0, 16], sizes = [8, 64], strides = [1, 1]} : vector<8x100xf32> to vector<8x64xf32>
    %cst_157 = arith.constant dense<0.000000e+00> : vector<8x64xf32>
    %217 = tpu.matmul %215, %216, %cst_157 {dimension_numbers = #tpu.dot_dimension_numbers<[1], [0], [0], [1], [0, 0, 1, 1], [], []>} : vector<8x8xf32>, vector<8x64xf32>, vector<8x64xf32> -> vector<8x64xf32>
    %218 = arith.addf %213, %217 : vector<8x64xf32>
    %c11_158 = arith.constant 11 : index
    %c0_159 = arith.constant 0 : index
    %c0_160 = arith.constant 0 : index
    %219 = vector.load %arg6[%c11_158, %c0_159, %c0_160] : memref<25x8x8xf32, #tpu.memory_space<vmem>>, vector<1x8x8xf32>
    %220 = vector.shape_cast %219 : vector<1x8x8xf32> to vector<8x8xf32>
    %221 = vector.extract_strided_slice %162 {offsets = [0, 17], sizes = [8, 64], strides = [1, 1]} : vector<8x100xf32> to vector<8x64xf32>
    %cst_161 = arith.constant dense<0.000000e+00> : vector<8x64xf32>
    %222 = tpu.matmul %220, %221, %cst_161 {dimension_numbers = #tpu.dot_dimension_numbers<[1], [0], [0], [1], [0, 0, 1, 1], [], []>} : vector<8x8xf32>, vector<8x64xf32>, vector<8x64xf32> -> vector<8x64xf32>
    %223 = arith.addf %218, %222 : vector<8x64xf32>
    %c12_162 = arith.constant 12 : index
    %c0_163 = arith.constant 0 : index
    %c0_164 = arith.constant 0 : index
    %224 = vector.load %arg6[%c12_162, %c0_163, %c0_164] : memref<25x8x8xf32, #tpu.memory_space<vmem>>, vector<1x8x8xf32>
    %225 = vector.shape_cast %224 : vector<1x8x8xf32> to vector<8x8xf32>
    %226 = vector.extract_strided_slice %162 {offsets = [0, 18], sizes = [8, 64], strides = [1, 1]} : vector<8x100xf32> to vector<8x64xf32>
    %cst_165 = arith.constant dense<0.000000e+00> : vector<8x64xf32>
    %227 = tpu.matmul %225, %226, %cst_165 {dimension_numbers = #tpu.dot_dimension_numbers<[1], [0], [0], [1], [0, 0, 1, 1], [], []>} : vector<8x8xf32>, vector<8x64xf32>, vector<8x64xf32> -> vector<8x64xf32>
    %228 = arith.addf %223, %227 : vector<8x64xf32>
    %c13_166 = arith.constant 13 : index
    %c0_167 = arith.constant 0 : index
    %c0_168 = arith.constant 0 : index
    %229 = vector.load %arg6[%c13_166, %c0_167, %c0_168] : memref<25x8x8xf32, #tpu.memory_space<vmem>>, vector<1x8x8xf32>
    %230 = vector.shape_cast %229 : vector<1x8x8xf32> to vector<8x8xf32>
    %231 = vector.extract_strided_slice %162 {offsets = [0, 19], sizes = [8, 64], strides = [1, 1]} : vector<8x100xf32> to vector<8x64xf32>
    %cst_169 = arith.constant dense<0.000000e+00> : vector<8x64xf32>
    %232 = tpu.matmul %230, %231, %cst_169 {dimension_numbers = #tpu.dot_dimension_numbers<[1], [0], [0], [1], [0, 0, 1, 1], [], []>} : vector<8x8xf32>, vector<8x64xf32>, vector<8x64xf32> -> vector<8x64xf32>
    %233 = arith.addf %228, %232 : vector<8x64xf32>
    %c14_170 = arith.constant 14 : index
    %c0_171 = arith.constant 0 : index
    %c0_172 = arith.constant 0 : index
    %234 = vector.load %arg6[%c14_170, %c0_171, %c0_172] : memref<25x8x8xf32, #tpu.memory_space<vmem>>, vector<1x8x8xf32>
    %235 = vector.shape_cast %234 : vector<1x8x8xf32> to vector<8x8xf32>
    %236 = vector.extract_strided_slice %162 {offsets = [0, 20], sizes = [8, 64], strides = [1, 1]} : vector<8x100xf32> to vector<8x64xf32>
    %cst_173 = arith.constant dense<0.000000e+00> : vector<8x64xf32>
    %237 = tpu.matmul %235, %236, %cst_173 {dimension_numbers = #tpu.dot_dimension_numbers<[1], [0], [0], [1], [0, 0, 1, 1], [], []>} : vector<8x8xf32>, vector<8x64xf32>, vector<8x64xf32> -> vector<8x64xf32>
    %238 = arith.addf %233, %237 : vector<8x64xf32>
    %c15_174 = arith.constant 15 : index
    %c0_175 = arith.constant 0 : index
    %c0_176 = arith.constant 0 : index
    %239 = vector.load %arg6[%c15_174, %c0_175, %c0_176] : memref<25x8x8xf32, #tpu.memory_space<vmem>>, vector<1x8x8xf32>
    %240 = vector.shape_cast %239 : vector<1x8x8xf32> to vector<8x8xf32>
    %241 = vector.extract_strided_slice %162 {offsets = [0, 24], sizes = [8, 64], strides = [1, 1]} : vector<8x100xf32> to vector<8x64xf32>
    %cst_177 = arith.constant dense<0.000000e+00> : vector<8x64xf32>
    %242 = tpu.matmul %240, %241, %cst_177 {dimension_numbers = #tpu.dot_dimension_numbers<[1], [0], [0], [1], [0, 0, 1, 1], [], []>} : vector<8x8xf32>, vector<8x64xf32>, vector<8x64xf32> -> vector<8x64xf32>
    %243 = arith.addf %238, %242 : vector<8x64xf32>
    %c16_178 = arith.constant 16 : index
    %c0_179 = arith.constant 0 : index
    %c0_180 = arith.constant 0 : index
    %244 = vector.load %arg6[%c16_178, %c0_179, %c0_180] : memref<25x8x8xf32, #tpu.memory_space<vmem>>, vector<1x8x8xf32>
    %245 = vector.shape_cast %244 : vector<1x8x8xf32> to vector<8x8xf32>
    %246 = vector.extract_strided_slice %162 {offsets = [0, 25], sizes = [8, 64], strides = [1, 1]} : vector<8x100xf32> to vector<8x64xf32>
    %cst_181 = arith.constant dense<0.000000e+00> : vector<8x64xf32>
    %247 = tpu.matmul %245, %246, %cst_181 {dimension_numbers = #tpu.dot_dimension_numbers<[1], [0], [0], [1], [0, 0, 1, 1], [], []>} : vector<8x8xf32>, vector<8x64xf32>, vector<8x64xf32> -> vector<8x64xf32>
    %248 = arith.addf %243, %247 : vector<8x64xf32>
    %c17_182 = arith.constant 17 : index
    %c0_183 = arith.constant 0 : index
    %c0_184 = arith.constant 0 : index
    %249 = vector.load %arg6[%c17_182, %c0_183, %c0_184] : memref<25x8x8xf32, #tpu.memory_space<vmem>>, vector<1x8x8xf32>
    %250 = vector.shape_cast %249 : vector<1x8x8xf32> to vector<8x8xf32>
    %251 = vector.extract_strided_slice %162 {offsets = [0, 26], sizes = [8, 64], strides = [1, 1]} : vector<8x100xf32> to vector<8x64xf32>
    %cst_185 = arith.constant dense<0.000000e+00> : vector<8x64xf32>
    %252 = tpu.matmul %250, %251, %cst_185 {dimension_numbers = #tpu.dot_dimension_numbers<[1], [0], [0], [1], [0, 0, 1, 1], [], []>} : vector<8x8xf32>, vector<8x64xf32>, vector<8x64xf32> -> vector<8x64xf32>
    %253 = arith.addf %248, %252 : vector<8x64xf32>
    %c18_186 = arith.constant 18 : index
    %c0_187 = arith.constant 0 : index
    %c0_188 = arith.constant 0 : index
    %254 = vector.load %arg6[%c18_186, %c0_187, %c0_188] : memref<25x8x8xf32, #tpu.memory_space<vmem>>, vector<1x8x8xf32>
    %255 = vector.shape_cast %254 : vector<1x8x8xf32> to vector<8x8xf32>
    %256 = vector.extract_strided_slice %162 {offsets = [0, 27], sizes = [8, 64], strides = [1, 1]} : vector<8x100xf32> to vector<8x64xf32>
    %cst_189 = arith.constant dense<0.000000e+00> : vector<8x64xf32>
    %257 = tpu.matmul %255, %256, %cst_189 {dimension_numbers = #tpu.dot_dimension_numbers<[1], [0], [0], [1], [0, 0, 1, 1], [], []>} : vector<8x8xf32>, vector<8x64xf32>, vector<8x64xf32> -> vector<8x64xf32>
    %258 = arith.addf %253, %257 : vector<8x64xf32>
    %c19_190 = arith.constant 19 : index
    %c0_191 = arith.constant 0 : index
    %c0_192 = arith.constant 0 : index
    %259 = vector.load %arg6[%c19_190, %c0_191, %c0_192] : memref<25x8x8xf32, #tpu.memory_space<vmem>>, vector<1x8x8xf32>
    %260 = vector.shape_cast %259 : vector<1x8x8xf32> to vector<8x8xf32>
    %261 = vector.extract_strided_slice %162 {offsets = [0, 28], sizes = [8, 64], strides = [1, 1]} : vector<8x100xf32> to vector<8x64xf32>
    %cst_193 = arith.constant dense<0.000000e+00> : vector<8x64xf32>
    %262 = tpu.matmul %260, %261, %cst_193 {dimension_numbers = #tpu.dot_dimension_numbers<[1], [0], [0], [1], [0, 0, 1, 1], [], []>} : vector<8x8xf32>, vector<8x64xf32>, vector<8x64xf32> -> vector<8x64xf32>
    %263 = arith.addf %258, %262 : vector<8x64xf32>
    %c20_194 = arith.constant 20 : index
    %c0_195 = arith.constant 0 : index
    %c0_196 = arith.constant 0 : index
    %264 = vector.load %arg6[%c20_194, %c0_195, %c0_196] : memref<25x8x8xf32, #tpu.memory_space<vmem>>, vector<1x8x8xf32>
    %265 = vector.shape_cast %264 : vector<1x8x8xf32> to vector<8x8xf32>
    %266 = vector.extract_strided_slice %162 {offsets = [0, 32], sizes = [8, 64], strides = [1, 1]} : vector<8x100xf32> to vector<8x64xf32>
    %cst_197 = arith.constant dense<0.000000e+00> : vector<8x64xf32>
    %267 = tpu.matmul %265, %266, %cst_197 {dimension_numbers = #tpu.dot_dimension_numbers<[1], [0], [0], [1], [0, 0, 1, 1], [], []>} : vector<8x8xf32>, vector<8x64xf32>, vector<8x64xf32> -> vector<8x64xf32>
    %268 = arith.addf %263, %267 : vector<8x64xf32>
    %c21_198 = arith.constant 21 : index
    %c0_199 = arith.constant 0 : index
    %c0_200 = arith.constant 0 : index
    %269 = vector.load %arg6[%c21_198, %c0_199, %c0_200] : memref<25x8x8xf32, #tpu.memory_space<vmem>>, vector<1x8x8xf32>
    %270 = vector.shape_cast %269 : vector<1x8x8xf32> to vector<8x8xf32>
    %271 = vector.extract_strided_slice %162 {offsets = [0, 33], sizes = [8, 64], strides = [1, 1]} : vector<8x100xf32> to vector<8x64xf32>
    %cst_201 = arith.constant dense<0.000000e+00> : vector<8x64xf32>
    %272 = tpu.matmul %270, %271, %cst_201 {dimension_numbers = #tpu.dot_dimension_numbers<[1], [0], [0], [1], [0, 0, 1, 1], [], []>} : vector<8x8xf32>, vector<8x64xf32>, vector<8x64xf32> -> vector<8x64xf32>
    %273 = arith.addf %268, %272 : vector<8x64xf32>
    %c22_202 = arith.constant 22 : index
    %c0_203 = arith.constant 0 : index
    %c0_204 = arith.constant 0 : index
    %274 = vector.load %arg6[%c22_202, %c0_203, %c0_204] : memref<25x8x8xf32, #tpu.memory_space<vmem>>, vector<1x8x8xf32>
    %275 = vector.shape_cast %274 : vector<1x8x8xf32> to vector<8x8xf32>
    %276 = vector.extract_strided_slice %162 {offsets = [0, 34], sizes = [8, 64], strides = [1, 1]} : vector<8x100xf32> to vector<8x64xf32>
    %cst_205 = arith.constant dense<0.000000e+00> : vector<8x64xf32>
    %277 = tpu.matmul %275, %276, %cst_205 {dimension_numbers = #tpu.dot_dimension_numbers<[1], [0], [0], [1], [0, 0, 1, 1], [], []>} : vector<8x8xf32>, vector<8x64xf32>, vector<8x64xf32> -> vector<8x64xf32>
    %278 = arith.addf %273, %277 : vector<8x64xf32>
    %c23_206 = arith.constant 23 : index
    %c0_207 = arith.constant 0 : index
    %c0_208 = arith.constant 0 : index
    %279 = vector.load %arg6[%c23_206, %c0_207, %c0_208] : memref<25x8x8xf32, #tpu.memory_space<vmem>>, vector<1x8x8xf32>
    %280 = vector.shape_cast %279 : vector<1x8x8xf32> to vector<8x8xf32>
    %281 = vector.extract_strided_slice %162 {offsets = [0, 35], sizes = [8, 64], strides = [1, 1]} : vector<8x100xf32> to vector<8x64xf32>
    %cst_209 = arith.constant dense<0.000000e+00> : vector<8x64xf32>
    %282 = tpu.matmul %280, %281, %cst_209 {dimension_numbers = #tpu.dot_dimension_numbers<[1], [0], [0], [1], [0, 0, 1, 1], [], []>} : vector<8x8xf32>, vector<8x64xf32>, vector<8x64xf32> -> vector<8x64xf32>
    %283 = arith.addf %278, %282 : vector<8x64xf32>
    %c24_210 = arith.constant 24 : index
    %c0_211 = arith.constant 0 : index
    %c0_212 = arith.constant 0 : index
    %284 = vector.load %arg6[%c24_210, %c0_211, %c0_212] : memref<25x8x8xf32, #tpu.memory_space<vmem>>, vector<1x8x8xf32>
    %285 = vector.shape_cast %284 : vector<1x8x8xf32> to vector<8x8xf32>
    %286 = vector.extract_strided_slice %162 {offsets = [0, 36], sizes = [8, 64], strides = [1, 1]} : vector<8x100xf32> to vector<8x64xf32>
    %cst_213 = arith.constant dense<0.000000e+00> : vector<8x64xf32>
    %287 = tpu.matmul %285, %286, %cst_213 {dimension_numbers = #tpu.dot_dimension_numbers<[1], [0], [0], [1], [0, 0, 1, 1], [], []>} : vector<8x8xf32>, vector<8x64xf32>, vector<8x64xf32> -> vector<8x64xf32>
    %288 = arith.addf %283, %287 : vector<8x64xf32>
    %c0_214 = arith.constant 0 : index
    %c0_215 = arith.constant 0 : index
    %289 = vector.load %arg7[%c0_214, %c0_215] : memref<8x1xf32, #tpu.memory_space<vmem>>, vector<8x1xf32>
    %290 = vector.broadcast %289 : vector<8x1xf32> to vector<8x64xf32>
    %291 = arith.addf %288, %290 : vector<8x64xf32>
    %cst_216 = arith.constant 0.000000e+00 : f32
    %292 = vector.broadcast %cst_216 : f32 to vector<8x64xf32>
    %293 = arith.maximumf %291, %292 : vector<8x64xf32>
    %c0_217 = arith.constant 0 : index
    %c0_218 = arith.constant 0 : index
    %c0_219 = arith.constant 0 : index
    %294 = vector.load %arg8[%c0_217, %c0_218, %c0_219] : memref<4x64x4xf32, #tpu.memory_space<vmem>>, vector<1x64x4xf32>
    %295 = vector.shape_cast %294 : vector<1x64x4xf32> to vector<64x4xf32>
    %cst_220 = arith.constant dense<0.000000e+00> : vector<8x4xf32>
    %296 = tpu.matmul %293, %295, %cst_220 {dimension_numbers = #tpu.dot_dimension_numbers<[1], [0], [0], [1], [0, 0, 1, 1], [], []>} : vector<8x64xf32>, vector<64x4xf32>, vector<8x4xf32> -> vector<8x4xf32>
    %c1_221 = arith.constant 1 : index
    %c0_222 = arith.constant 0 : index
    %c0_223 = arith.constant 0 : index
    %297 = vector.load %arg8[%c1_221, %c0_222, %c0_223] : memref<4x64x4xf32, #tpu.memory_space<vmem>>, vector<1x64x4xf32>
    %298 = vector.shape_cast %297 : vector<1x64x4xf32> to vector<64x4xf32>
    %cst_224 = arith.constant dense<0.000000e+00> : vector<8x4xf32>
    %299 = tpu.matmul %293, %298, %cst_224 {dimension_numbers = #tpu.dot_dimension_numbers<[1], [0], [0], [1], [0, 0, 1, 1], [], []>} : vector<8x64xf32>, vector<64x4xf32>, vector<8x4xf32> -> vector<8x4xf32>
    %300 = arith.maximumf %296, %299 : vector<8x4xf32>
    %c2_225 = arith.constant 2 : index
    %c0_226 = arith.constant 0 : index
    %c0_227 = arith.constant 0 : index
    %301 = vector.load %arg8[%c2_225, %c0_226, %c0_227] : memref<4x64x4xf32, #tpu.memory_space<vmem>>, vector<1x64x4xf32>
    %302 = vector.shape_cast %301 : vector<1x64x4xf32> to vector<64x4xf32>
    %cst_228 = arith.constant dense<0.000000e+00> : vector<8x4xf32>
    %303 = tpu.matmul %293, %302, %cst_228 {dimension_numbers = #tpu.dot_dimension_numbers<[1], [0], [0], [1], [0, 0, 1, 1], [], []>} : vector<8x64xf32>, vector<64x4xf32>, vector<8x4xf32> -> vector<8x4xf32>
    %304 = arith.maximumf %300, %303 : vector<8x4xf32>
    %c3_229 = arith.constant 3 : index
    %c0_230 = arith.constant 0 : index
    %c0_231 = arith.constant 0 : index
    %305 = vector.load %arg8[%c3_229, %c0_230, %c0_231] : memref<4x64x4xf32, #tpu.memory_space<vmem>>, vector<1x64x4xf32>
    %306 = vector.shape_cast %305 : vector<1x64x4xf32> to vector<64x4xf32>
    %cst_232 = arith.constant dense<0.000000e+00> : vector<8x4xf32>
    %307 = tpu.matmul %293, %306, %cst_232 {dimension_numbers = #tpu.dot_dimension_numbers<[1], [0], [0], [1], [0, 0, 1, 1], [], []>} : vector<8x64xf32>, vector<64x4xf32>, vector<8x4xf32> -> vector<8x4xf32>
    %308 = arith.maximumf %304, %307 : vector<8x4xf32>
    %c0_233 = arith.constant 0 : index
    %c0_234 = arith.constant 0 : index
    %309 = vector.load %arg10[%c0_233, %c0_234] : memref<32x1xf32, #tpu.memory_space<vmem>>, vector<32x1xf32>
    %c0_235 = arith.constant 0 : index
    %c0_236 = arith.constant 0 : index
    %c0_237 = arith.constant 0 : index
    %310 = vector.load %arg9[%c0_235, %c0_236, %c0_237] : memref<4x32x8xf32, #tpu.memory_space<vmem>>, vector<1x32x8xf32>
    %311 = vector.shape_cast %310 : vector<1x32x8xf32> to vector<32x8xf32>
    %312 = vector.extract_strided_slice %308 {offsets = [0, 0], sizes = [8, 1], strides = [1, 1]} : vector<8x4xf32> to vector<8x1xf32>
    %cst_238 = arith.constant dense<0.000000e+00> : vector<32x1xf32>
    %313 = tpu.matmul %311, %312, %cst_238 {dimension_numbers = #tpu.dot_dimension_numbers<[1], [0], [0], [1], [0, 0, 1, 1], [], []>} : vector<32x8xf32>, vector<8x1xf32>, vector<32x1xf32> -> vector<32x1xf32>
    %314 = arith.addf %309, %313 : vector<32x1xf32>
    %c1_239 = arith.constant 1 : index
    %c0_240 = arith.constant 0 : index
    %c0_241 = arith.constant 0 : index
    %315 = vector.load %arg9[%c1_239, %c0_240, %c0_241] : memref<4x32x8xf32, #tpu.memory_space<vmem>>, vector<1x32x8xf32>
    %316 = vector.shape_cast %315 : vector<1x32x8xf32> to vector<32x8xf32>
    %317 = vector.extract_strided_slice %308 {offsets = [0, 1], sizes = [8, 1], strides = [1, 1]} : vector<8x4xf32> to vector<8x1xf32>
    %cst_242 = arith.constant dense<0.000000e+00> : vector<32x1xf32>
    %318 = tpu.matmul %316, %317, %cst_242 {dimension_numbers = #tpu.dot_dimension_numbers<[1], [0], [0], [1], [0, 0, 1, 1], [], []>} : vector<32x8xf32>, vector<8x1xf32>, vector<32x1xf32> -> vector<32x1xf32>
    %319 = arith.addf %314, %318 : vector<32x1xf32>
    %c2_243 = arith.constant 2 : index
    %c0_244 = arith.constant 0 : index
    %c0_245 = arith.constant 0 : index
    %320 = vector.load %arg9[%c2_243, %c0_244, %c0_245] : memref<4x32x8xf32, #tpu.memory_space<vmem>>, vector<1x32x8xf32>
    %321 = vector.shape_cast %320 : vector<1x32x8xf32> to vector<32x8xf32>
    %322 = vector.extract_strided_slice %308 {offsets = [0, 2], sizes = [8, 1], strides = [1, 1]} : vector<8x4xf32> to vector<8x1xf32>
    %cst_246 = arith.constant dense<0.000000e+00> : vector<32x1xf32>
    %323 = tpu.matmul %321, %322, %cst_246 {dimension_numbers = #tpu.dot_dimension_numbers<[1], [0], [0], [1], [0, 0, 1, 1], [], []>} : vector<32x8xf32>, vector<8x1xf32>, vector<32x1xf32> -> vector<32x1xf32>
    %324 = arith.addf %319, %323 : vector<32x1xf32>
    %c3_247 = arith.constant 3 : index
    %c0_248 = arith.constant 0 : index
    %c0_249 = arith.constant 0 : index
    %325 = vector.load %arg9[%c3_247, %c0_248, %c0_249] : memref<4x32x8xf32, #tpu.memory_space<vmem>>, vector<1x32x8xf32>
    %326 = vector.shape_cast %325 : vector<1x32x8xf32> to vector<32x8xf32>
    %327 = vector.extract_strided_slice %308 {offsets = [0, 3], sizes = [8, 1], strides = [1, 1]} : vector<8x4xf32> to vector<8x1xf32>
    %cst_250 = arith.constant dense<0.000000e+00> : vector<32x1xf32>
    %328 = tpu.matmul %326, %327, %cst_250 {dimension_numbers = #tpu.dot_dimension_numbers<[1], [0], [0], [1], [0, 0, 1, 1], [], []>} : vector<32x8xf32>, vector<8x1xf32>, vector<32x1xf32> -> vector<32x1xf32>
    %329 = arith.addf %324, %328 : vector<32x1xf32>
    %cst_251 = arith.constant 0.000000e+00 : f32
    %330 = vector.broadcast %cst_251 : f32 to vector<32x1xf32>
    %331 = arith.maximumf %329, %330 : vector<32x1xf32>
    %c0_252 = arith.constant 0 : index
    %c0_253 = arith.constant 0 : index
    %332 = vector.load %arg11[%c0_252, %c0_253] : memref<6x32xf32, #tpu.memory_space<vmem>>, vector<6x32xf32>
    %cst_254 = arith.constant dense<0.000000e+00> : vector<6x1xf32>
    %333 = tpu.matmul %332, %331, %cst_254 {dimension_numbers = #tpu.dot_dimension_numbers<[1], [0], [0], [1], [0, 0, 1, 1], [], []>} : vector<6x32xf32>, vector<32x1xf32>, vector<6x1xf32> -> vector<6x1xf32>
    %c0_255 = arith.constant 0 : index
    %c0_256 = arith.constant 0 : index
    %334 = vector.load %arg12[%c0_255, %c0_256] : memref<6x1xf32, #tpu.memory_space<vmem>>, vector<6x1xf32>
    %335 = arith.addf %333, %334 : vector<6x1xf32>
    %c0_257 = arith.constant 0 : index
    %c0_258 = arith.constant 0 : index
    %c0_259 = arith.constant 0 : index
    %336 = vector.load %arg13[%c0_257, %c0_258, %c0_259] : memref<1x6x1xf32, #tpu.memory_space<vmem>>, vector<1x6x1xf32>
    %337 = vector.shape_cast %336 : vector<1x6x1xf32> to vector<6x1xf32>
    %338 = vector.shape_cast %335 : vector<6x1xf32> to vector<1x6x1xf32>
    tpu.vector_store %arg13[%c0_257, %c0_258, %c0_259], %338 {strides = array<i32>} : memref<1x6x1xf32, #tpu.memory_space<vmem>>, vector<1x6x1xf32>,
    return
  }
  func.func @transform_0(%arg0: i32) -> (i32, i32, i32) {
    %c0_i32 = arith.constant 0 : i32
    %c0_i32_0 = arith.constant 0 : i32
    %c0_i32_1 = arith.constant 0 : i32
    return %arg0, %c0_i32, %c0_i32_0 : i32, i32, i32
  }
  func.func @transform_1(%arg0: i32) -> (i32, i32, i32) {
    %c0_i32 = arith.constant 0 : i32
    %c0_i32_0 = arith.constant 0 : i32
    %c0_i32_1 = arith.constant 0 : i32
    %c0_i32_2 = arith.constant 0 : i32
    return %c0_i32, %c0_i32_0, %c0_i32_1 : i32, i32, i32
  }
  func.func @transform_2(%arg0: i32) -> (i32, i32, i32) {
    %c0_i32 = arith.constant 0 : i32
    %c0_i32_0 = arith.constant 0 : i32
    %c0_i32_1 = arith.constant 0 : i32
    %c0_i32_2 = arith.constant 0 : i32
    return %c0_i32, %c0_i32_0, %c0_i32_1 : i32, i32, i32
  }
  func.func @transform_3(%arg0: i32) -> (i32, i32) {
    %c0_i32 = arith.constant 0 : i32
    %c0_i32_0 = arith.constant 0 : i32
    %c0_i32_1 = arith.constant 0 : i32
    return %c0_i32, %c0_i32_0 : i32, i32
  }
  func.func @transform_4(%arg0: i32) -> (i32, i32, i32) {
    %c0_i32 = arith.constant 0 : i32
    %c0_i32_0 = arith.constant 0 : i32
    %c0_i32_1 = arith.constant 0 : i32
    %c0_i32_2 = arith.constant 0 : i32
    return %c0_i32, %c0_i32_0, %c0_i32_1 : i32, i32, i32
  }
  func.func @transform_5(%arg0: i32) -> (i32, i32, i32) {
    %c0_i32 = arith.constant 0 : i32
    %c0_i32_0 = arith.constant 0 : i32
    %c0_i32_1 = arith.constant 0 : i32
    %c0_i32_2 = arith.constant 0 : i32
    return %c0_i32, %c0_i32_0, %c0_i32_1 : i32, i32, i32
  }
  func.func @transform_6(%arg0: i32) -> (i32, i32) {
    %c0_i32 = arith.constant 0 : i32
    %c0_i32_0 = arith.constant 0 : i32
    %c0_i32_1 = arith.constant 0 : i32
    return %c0_i32, %c0_i32_0 : i32, i32
  }
  func.func @transform_7(%arg0: i32) -> (i32, i32, i32) {
    %c0_i32 = arith.constant 0 : i32
    %c0_i32_0 = arith.constant 0 : i32
    %c0_i32_1 = arith.constant 0 : i32
    %c0_i32_2 = arith.constant 0 : i32
    return %c0_i32, %c0_i32_0, %c0_i32_1 : i32, i32, i32
  }
  func.func @transform_8(%arg0: i32) -> (i32, i32, i32) {
    %c0_i32 = arith.constant 0 : i32
    %c0_i32_0 = arith.constant 0 : i32
    %c0_i32_1 = arith.constant 0 : i32
    %c0_i32_2 = arith.constant 0 : i32
    return %c0_i32, %c0_i32_0, %c0_i32_1 : i32, i32, i32
  }
  func.func @transform_9(%arg0: i32) -> (i32, i32) {
    %c0_i32 = arith.constant 0 : i32
    %c0_i32_0 = arith.constant 0 : i32
    %c0_i32_1 = arith.constant 0 : i32
    return %c0_i32, %c0_i32_0 : i32, i32
  }
  func.func @transform_10(%arg0: i32) -> (i32, i32) {
    %c0_i32 = arith.constant 0 : i32
    %c0_i32_0 = arith.constant 0 : i32
    %c0_i32_1 = arith.constant 0 : i32
    return %c0_i32, %c0_i32_0 : i32, i32
  }
  func.func @transform_11(%arg0: i32) -> (i32, i32) {
    %c0_i32 = arith.constant 0 : i32
    %c0_i32_0 = arith.constant 0 : i32
    %c0_i32_1 = arith.constant 0 : i32
    return %c0_i32, %c0_i32_0 : i32, i32
  }
  func.func @transform_12(%arg0: i32) -> (i32, i32, i32) {
    %c0_i32 = arith.constant 0 : i32
    %c0_i32_0 = arith.constant 0 : i32
    %c0_i32_1 = arith.constant 0 : i32
    return %arg0, %c0_i32, %c0_i32_0 : i32, i32, i32
  }
}

</mosaic_0001>

<llo_original>
// kernel: stn_forward.3
$region0: #{stn_forward.3}
  #allocation0 [shape = 'u32[]', space=smem, size = 0x4, offset = 0x4, fixed_abs, tag = 'smem constant byte address 0x4 - core index']
  #allocation1 [shape = 'u32[144,128]{1,0:T(1,128)}', space=vmem, size = 0x12000, scoped, tag = 'internal scratch']
  %s0 = inlined_call_operand.vmem [shape: f32[2,2,3], index: 0, kind: input, shape index: {}]
  %s1 = inlined_call_operand.vmem [shape: f32[3,256], index: 1, kind: input, shape index: {}]
  %s2 = inlined_call_operand.vmem [shape: f32[2,4,256], index: 2, kind: input, shape index: {}]
  %s3 = inlined_call_operand.vmem [shape: f32[2,4,256], index: 3, kind: output, shape index: {}]
  %s4 = sld [smem:[#allocation0]]
  $region45: #{stn_forward.3} parent=0
    _
  %s6 = ssub.s32 1, %s4
  %s7 = scalar_select 0, %s6, %s4
  loop: start=0, step=1, limit=4
  $region2: #{stn_forward.3} parent=0 // loop_pre_header
    _
  $region3: #{stn_forward.3} parent=0 // loop_header
    %s9 = sphi 0, %s13
    %p10 = scmp.ge.s32.totalorder %s9, 4
    %s16 = sphi 0, %s28
    %s17 = sphi 0, %s24
    %s18 = sphi 0, %s16
    %s19 = sphi 0, %s17
    %s20 = sphi 0, %s18
    %s21 = sphi 0, %s19
    %s31 = sphi 0, %s33
    %s34 = sphi 0, %s31
    %s35 = sphi 0, %s34
    %s51 = sphi 0, %s35
    %s57 = sphi 0, %s59
    %s60 = sphi 0, %s57
    %s61 = sphi 0, %s60
    %s77 = sphi 0, %s61
    %s83 = sphi 0, %s85
    %s86 = sphi 0, %s83
    %s87 = sphi 0, %s86
    %s103 = sphi 0, %s87
    %s111 = sphi 0, %s113
    %s114 = sphi 0, %s111
    %s115 = sphi 0, %s114
    %s131 = sphi 0, %s115
  $region4: #{stn_forward.3} parent=0 // loop_header_branch
    %12 = sbr.rel (%p10) target = $region8
  $region5: #{stn_forward.3} parent=0 // loop_body
    %s14 = ssub.s32 %s9, 1
    %s15 = ssub.s32 %s9, 2
    %s22 = sadd.s32 1, %s17
    %p23 = scmp.ge.s32.totalorder %s22, 1
    %s24 = scalar_select %p23, 0, %s22
    %s25 = sadd.s32 1, %s16
    %s26 = scalar_select %p23, %s25, %s16
    %p27 = scmp.ge.s32.totalorder %s26, 2
    %s28 = scalar_select %p27, 0, %s26
    %s29 = ssub.s32 %s16, %s28
    %p30 = scmp.eq.s32.totalorder %s29, 0
    %s32 = sadd.s32 %s31, 1
    %s33 = scalar_select %p30, %s31, %s32
    %p36 = pneg %p30
    %p37 = scmp.eq.s32.totalorder %s9, 1
    %p38 = por %p36, %p37
    %p39 = scmp.ne.s32.totalorder %s31, %s34
    %p40 = scmp.eq.s32.totalorder %s9, 0
    %p41 = por %p39, %p40
    %p42 = scmp.ne.s32.totalorder %s31, %s34
    %p43 = scmp.eq.s32.totalorder %s14, 1
    %p44 = por %p42, %p43
    %p45 = scmp.ne.s32.totalorder %s34, %s35
    %p46 = scmp.eq.s32.totalorder %s14, 0
    %p47 = por %p45, %p46
    %p48 = scmp.ne.s32.totalorder %s34, %s35
    %p49 = scmp.eq.s32.totalorder %s15, 1
    %p50 = por %p48, %p49
    %p52 = scmp.ne.s32.totalorder %s35, %s51
    %p53 = scmp.eq.s32.totalorder %s15, 0
    %p54 = por %p52, %p53
    %s55 = ssub.s32 %s17, %s24
    %p56 = scmp.eq.s32.totalorder %s55, 0
    %s58 = sadd.s32 %s57, 1
    %s59 = scalar_select %p56, %s57, %s58
    %p62 = pneg %p56
    %p63 = scmp.eq.s32.totalorder %s9, 1
    %p64 = por %p62, %p63
    %p65 = scmp.ne.s32.totalorder %s57, %s60
    %p66 = scmp.eq.s32.totalorder %s9, 0
    %p67 = por %p65, %p66
    %p68 = scmp.ne.s32.totalorder %s57, %s60
    %p69 = scmp.eq.s32.totalorder %s14, 1
    %p70 = por %p68, %p69
    %p71 = scmp.ne.s32.totalorder %s60, %s61
    %p72 = scmp.eq.s32.totalorder %s14, 0
    %p73 = por %p71, %p72
    %p74 = scmp.ne.s32.totalorder %s60, %s61
    %p75 = scmp.eq.s32.totalorder %s15, 1
    %p76 = por %p74, %p75
    %p78 = scmp.ne.s32.totalorder %s61, %s77
    %p79 = scmp.eq.s32.totalorder %s15, 0
    %p80 = por %p78, %p79
    %s81 = ssub.s32 %s16, %s28
    %p82 = scmp.eq.s32.totalorder %s81, 0
    %s84 = sadd.s32 %s83, 1
    %s85 = scalar_select %p82, %s83, %s84
    %p88 = pneg %p82
    %p89 = scmp.eq.s32.totalorder %s9, 1
    %p90 = por %p88, %p89
    %p91 = scmp.ne.s32.totalorder %s83, %s86
    %p92 = scmp.eq.s32.totalorder %s9, 0
    %p93 = por %p91, %p92
    %p94 = scmp.ne.s32.totalorder %s83, %s86
    %p95 = scmp.eq.s32.totalorder %s14, 1
    %p96 = por %p94, %p95
    %p97 = scmp.ne.s32.totalorder %s86, %s87
    %p98 = scmp.eq.s32.totalorder %s14, 0
    %p99 = por %p97, %p98
    %p100 = scmp.ne.s32.totalorder %s86, %s87
    %p101 = scmp.eq.s32.totalorder %s15, 1
    %p102 = por %p100, %p101
    %p104 = scmp.ne.s32.totalorder %s87, %s103
    %p105 = scmp.eq.s32.totalorder %s15, 0
    %p106 = por %p104, %p105
    %s107 = ssub.s32 %s16, %s28
    %s108 = ssub.s32 %s17, %s24
    %s109 = sor.u32 %s107, %s108
    %p110 = scmp.eq.s32.totalorder %s109, 0
    %s112 = sadd.s32 %s111, 1
    %s113 = scalar_select %p110, %s111, %s112
    %p116 = pneg %p110
    %p117 = scmp.eq.s32.totalorder %s9, 1
    %p118 = por %p116, %p117
    %p119 = scmp.ne.s32.totalorder %s111, %s114
    %p120 = scmp.eq.s32.totalorder %s9, 0
    %p121 = por %p119, %p120
    %p122 = scmp.ne.s32.totalorder %s111, %s114
    %p123 = scmp.eq.s32.totalorder %s14, 1
    %p124 = por %p122, %p123
    %p125 = scmp.ne.s32.totalorder %s114, %s115
    %p126 = scmp.eq.s32.totalorder %s14, 0
    %p127 = por %p125, %p126
    %p128 = scmp.ne.s32.totalorder %s114, %s115
    %p129 = scmp.eq.s32.totalorder %s15, 1
    %p130 = por %p128, %p129
    %p132 = scmp.ne.s32.totalorder %s115, %s131
    %p133 = scmp.eq.s32.totalorder %s15, 0
    %p134 = por %p132, %p133
    %p135 = scmp.le.s32.totalorder 1, %s9
    %p136 = scmp.lt.s32.totalorder %s9, 3
    %p137 = pnand %p135, %p136
    %p138 = pneg %p137
    // Predicated region
    $region9: #{stn_forward.3} parent=5 // pred_check
      _
    $region10: #{stn_forward.3} parent=5 // pred_check_branch
      %140 = sbr.rel (%p137) target = $region12
    $region11: #{stn_forward.3} parent=5 // pred_region
      %s141 = ssub.s32 %s9, 1
      // Predicated region
      $region13: #{stn_forward.3} parent=11 // pred_check
        %p142 = pneg %p73
      $region14: #{stn_forward.3} parent=11 // pred_check_branch
        %144 = sbr.rel (%p142) target = $region16
      $region15: #{stn_forward.3} parent=11 // pred_region
        %s145 = smul.u32 2, %s19
        %p146 = scmp.lt.s32.totalorder %s145, 1
        %s147 = scalar_select %p146, %s145, 1
        %s148 = smul.addr %s147, 4
        %s149 = scalar_lea.vmem %s1, %s148
        %s150 = smul.u32 2, %s19
      $region16: #{stn_forward.3} parent=11 // pred_fallthru
        _
    $region12: #{stn_forward.3} parent=5 // pred_fallthru
      _
    %p151 = scmp.lt.s32.totalorder %s9, 2
    // Predicated region
    $region17: #{stn_forward.3} parent=5 // pred_check
      %p152 = pneg %p151
    $region18: #{stn_forward.3} parent=5 // pred_check_branch
      %154 = sbr.rel (%p152) target = $region20
    $region19: #{stn_forward.3} parent=5 // pred_region
      // Predicated region
      $region21: #{stn_forward.3} parent=19 // pred_check
        %p155 = pneg %p41
      $region22: #{stn_forward.3} parent=19 // pred_check_branch
        %157 = sbr.rel (%p155) target = $region24
      $region23: #{stn_forward.3} parent=19 // pred_region
        %p158 = scmp.lt.s32.totalorder %s16, 1
        %s159 = scalar_select %p158, %s16, 1
        %s160 = smul.addr %s159, 2
        %s161 = scalar_lea.vmem %s0, %s160
      $region24: #{stn_forward.3} parent=19 // pred_fallthru
        _
      // Predicated region
      $region25: #{stn_forward.3} parent=19 // pred_check
        %p162 = pneg %p93
      $region26: #{stn_forward.3} parent=19 // pred_check_branch
        %164 = sbr.rel (%p162) target = $region28
      $region27: #{stn_forward.3} parent=19 // pred_region
        %p165 = scmp.lt.s32.totalorder %s16, 1
        %s166 = scalar_select %p165, %s16, 1
        %s167 = smul.addr %s166, 2
        %s168 = smul.addr %s167, 4
        %s169 = scalar_lea.vmem %s2, %s168
      $region28: #{stn_forward.3} parent=19 // pred_fallthru
        _
    $region20: #{stn_forward.3} parent=5 // pred_fallthru
      _
    %p170 = scmp.le.s32.totalorder 1, %s9
    %p171 = scmp.lt.s32.totalorder %s9, 3
    %p172 = pnand %p170, %p171
    %p173 = pneg %p172
    // Predicated region
    $region29: #{stn_forward.3} parent=5 // pred_check
      _
    $region30: #{stn_forward.3} parent=5 // pred_check_branch
      %175 = sbr.rel (%p172) target = $region32
    $region31: #{stn_forward.3} parent=5 // pred_region
      %s176 = ssub.s32 %s9, 1
      %p177 = scmp.lt.s32.totalorder %s18, 1
      %s178 = scalar_select %p177, %s18, 1
      %s179 = smul.addr %s178, 2
      %s180 = scalar_lea.vmem %s0, %s179
      %p181 = pneg %p47
      %p182 = pneg %p44
      %s183 = smul.u32 2, %s19
      %p184 = scmp.lt.s32.totalorder %s183, 1
      %s185 = scalar_select %p184, %s183, 1
      %s186 = smul.addr %s185, 4
      %s187 = scalar_lea.vmem %s1, %s186
      %p188 = pneg %p73
      %p189 = pneg %p70
      %p190 = scmp.lt.s32.totalorder %s18, 1
      %s191 = scalar_select %p190, %s18, 1
      %s192 = smul.addr %s191, 2
      %s193 = smul.addr %s192, 4
      %s194 = scalar_lea.vmem %s2, %s193
      %p195 = pneg %p99
      %p196 = pneg %p96
      %p197 = pneg %p127
      %p198 = pneg %p124
      %s199 = smul.u32 2, %s19
      %p200 = scmp.lt.s32.totalorder %s18, 1
      %s201 = scalar_select %p200, %s18, 1
      %p202 = scmp.lt.s32.totalorder %s199, 1
      %s203 = scalar_select %p202, %s199, 1
      %s204 = smul.addr %s201, 2
      %s205 = sadd.s32 %s203, %s204
      %s206 = smul.addr %s205, 4
      %s207 = scalar_lea.vmem %s3, %s206
      %p208 = scmp.lt.s32.totalorder %s18, 1
      %s209 = scalar_select %p208, %s18, 1
      %s210 = smul.addr %s209, 2
      %s211 = scalar_lea.vmem %s0, %s210
      %s212 = smul.u32 2, %s19
      %p213 = scmp.lt.s32.totalorder %s212, 1
      %s214 = scalar_select %p213, %s212, 1
      %s215 = smul.addr %s214, 4
      %s216 = scalar_lea.vmem %s1, %s215
      %s217 = smul.u32 2, %s19
      %p218 = scmp.lt.s32.totalorder %s18, 1
      %s219 = scalar_select %p218, %s18, 1
      %s220 = smul.addr %s219, 2
      %s221 = smul.addr %s220, 4
      %s222 = scalar_lea.vmem %s2, %s221
      %s223 = smul.u32 2, %s19
      %p224 = scmp.lt.s32.totalorder %s18, 1
      %s225 = scalar_select %p224, %s18, 1
      %p226 = scmp.lt.s32.totalorder %s223, 1
      %s227 = scalar_select %p226, %s223, 1
      %s228 = smul.addr %s225, 2
      %s229 = sadd.s32 %s227, %s228
      %s230 = smul.addr %s229, 4
      %s231 = scalar_lea.vmem %s3, %s230
      %s232 = smul.u32 2, %s19
      %v233 = vld [vmem:[%s211] sm:$0x3]
      %v234 = vld [vmem:[%s216] sm:$0x77]
      %v236 = vcombine.high %v234, %v234
      %vm237 = vcmask 23552
      %v239 = vsel %vm237, %v233, 0
      %vm241 = vcmask 1042432
      %v242 = vsel %vm241, %v234, 0
      %v244 = vsel %vm241, %v236, 0
      %246 = vmatprep.subr.mxu0 %v244
      %247 = vmatpush1.msra.mxu0 %v242
      %248 = vmatprep.subr.mxu0 0.0
      %249 = vmatpush1.msra.mxu0 0.0
      %250 = vmatprep.subr.mxu0 0.0
      %251 = vmatpush1.msra.mxu0 0.0
      %252 = vmatprep.subr.mxu0 0.0
      %253 = vmatpush1.msra.mxu0 0.0
      %254 = vmatprep.subr.mxu0 0.0
      %255 = vmatpush1.msra.mxu0 0.0
      %256 = vmatprep.subr.mxu0 0.0
      %257 = vmatpush1.msra.mxu0 0.0
      %258 = vmatprep.subr.mxu0 0.0
      %259 = vmatpush1.msra.mxu0 0.0
      %260 = vmatprep.subr.mxu0 0.0
      %261 = vmatpush1.msra.mxu0 0.0
      %262 = vmatprep.subr.mxu0 0.0
      %263 = vmatpush1.msra.mxu0 0.0
      %264 = vmatprep.subr.mxu0 0.0
      %265 = vmatpush1.msra.mxu0 0.0
      %266 = vmatprep.subr.mxu0 0.0
      %267 = vmatpush1.msra.mxu0 0.0
      %268 = vmatprep.subr.mxu0 0.0
      %269 = vmatpush1.msra.mxu0 0.0
      %270 = vmatprep.subr.mxu0 0.0
      %271 = vmatpush1.msra.mxu0 0.0
      %272 = vmatprep.subr.mxu0 0.0
      %273 = vmatpush1.msra.mxu0 0.0
      %274 = vmatprep.subr.mxu0 0.0
      %275 = vmatpush1.msra.mxu0 0.0
      %276 = vmatprep.subr.mxu0 0.0
      %277 = vmatpush1.msra.mxu0 0.0
      %278 = vmatprep.subr.mxu0 0.0
      %279 = vmatpush1.msra.mxu0 0.0
      %280 = vmatprep.subr.mxu0 0.0
      %281 = vmatpush1.msra.mxu0 0.0
      %282 = vmatprep.subr.mxu0 0.0
      %283 = vmatpush1.msra.mxu0 0.0
      %284 = vmatprep.subr.mxu0 0.0
      %285 = vmatpush1.msra.mxu0 0.0
      %286 = vmatprep.subr.mxu0 0.0
      %287 = vmatpush1.msra.mxu0 0.0
      %288 = vmatprep.subr.mxu0 0.0
      %289 = vmatpush1.msra.mxu0 0.0
      %290 = vmatprep.subr.mxu0 0.0
      %291 = vmatpush1.msra.mxu0 0.0
      %292 = vmatprep.subr.mxu0 0.0
      %293 = vmatpush1.msra.mxu0 0.0
      %294 = vmatprep.subr.mxu0 0.0
      %295 = vmatpush1.msra.mxu0 0.0
      %296 = vmatprep.subr.mxu0 0.0
      %297 = vmatpush1.msra.mxu0 0.0
      %298 = vmatprep.subr.mxu0 0.0
      %299 = vmatpush1.msra.mxu0 0.0
      %300 = vmatprep.subr.mxu0 0.0
      %301 = vmatpush1.msra.mxu0 0.0
      %302 = vmatprep.subr.mxu0 0.0
      %303 = vmatpush1.msra.mxu0 0.0
      %304 = vmatprep.subr.mxu0 0.0
      %305 = vmatpush1.msra.mxu0 0.0
      %306 = vmatprep.subr.mxu0 0.0
      %307 = vmatpush1.msra.mxu0 0.0
      %308 = vmatprep.subr.mxu0 0.0
      %309 = vmatpush1.msra.mxu0 0.0
      %310 = vmatprep.mubr.f32.mxu0 0.0
      %311 = vmatmul.mubr.f32.gmra.mrb[0].mxu0 %v239
      %v312 = vpop.f32.mrb[0].mxu0
      %v313 = vadd.f32 0.0, %v312
      %v314 = vpop.f32.mrb[0].mxu0
      %v315 = vadd.f32 0.0, %v314
      %316 = vdwg.mxu0
      %v317 = vadd.f32 %v313, 1.0
      %v318 = vadd.f32 %v315, 1.0
      %v319 = vmul.f32 %v317, 8.0
      %v320 = vmul.f32 %v318, 8.0
      %v321 = vsub.f32 %v319, 0.5
      %v322 = vsub.f32 %v320, 0.5
      %v323 = vfloor.f32 %v321
      %v324 = vfloor.f32 %v322
      %v325 = vsub.f32 %v321, %v323
      %v326 = vsub.f32 %v322, %v324
      %v327 = vsub.f32 1.0, %v325
      %v328 = vsub.f32 1.0, %v326
      %v329 = vcvt.f32.s32.to.zero.pseudo %v323
      %v330 = vcvt.f32.s32.to.zero.pseudo %v324
      %v331 = vadd.s32 %v329, 1
      %v332 = vadd.s32 %v330, 1
      %v333 = vlaneseq
      %v334 = vshrl.u32 %v333, 7
      %v335 = vadd.s32 %v334, 8
      %v336 = vadd.s32 %v334, 16
      %v337 = vadd.s32 %v334, 24
      %v338 = vadd.s32 %v334, 32
      %v339 = vadd.s32 %v334, 40
      %v340 = vadd.s32 %v334, 48
      %v341 = vadd.s32 %v334, 56
      %v342 = vadd.s32 %v334, 64
      %v343 = vadd.s32 %v334, 72
      %v344 = vadd.s32 %v334, 80
      %v345 = vadd.s32 %v334, 88
      %v346 = vadd.s32 %v334, 96
      %v347 = vadd.s32 %v334, 104
      %v348 = vadd.s32 %v334, 112
      %v349 = vadd.s32 %v334, 120
      %v350 = vadd.s32 %v334, 128
      %v351 = vadd.s32 %v334, 136
      %v352 = vadd.s32 %v334, 144
      %v353 = vadd.s32 %v334, 152
      %v354 = vadd.s32 %v334, 160
      %v355 = vadd.s32 %v334, 168
      %v356 = vadd.s32 %v334, 176
      %v357 = vadd.s32 %v334, 184
      %v358 = vadd.s32 %v334, 192
      %v359 = vadd.s32 %v334, 200
      %v360 = vadd.s32 %v334, 208
      %v361 = vadd.s32 %v334, 216
      %v362 = vadd.s32 %v334, 224
      %v363 = vadd.s32 %v334, 232
      %v364 = vadd.s32 %v334, 240
      %v365 = vadd.s32 %v334, 248
      %v368 = vrot.slane %v327, 7
      %v369 = vrot.slane %v328, 7
      %v372 = vmul.f32 %v327, %v368
      %v373 = vmul.f32 %v328, %v369
      %vm374 = vcmp.ge.s32.totalorder %v329, 0
      %vm375 = vcmp.ge.s32.totalorder %v330, 0
      %vm376 = vcmp.lt.s32.totalorder %v329, 16
      %vm377 = vcmp.lt.s32.totalorder %v330, 16
      %vm378 = vmand %vm374, %vm376
      %vm379 = vmand %vm375, %vm377
      %v380 = vsel %vm374, 1, 0
      %v381 = vsel %vm375, 1, 0
      %v382 = vrot.slane %v380, 1
      %v383 = vrot.slane %v381, 1
      %vm384 = vcmp.ne.s32.totalorder %v382, 0
      %vm385 = vcmp.ne.s32.totalorder %v383, 0
      %vm386 = vmand %vm378, %vm384
      %vm387 = vmand %vm379, %vm385
      %v388 = vsel %vm376, 1, 0
      %v389 = vsel %vm377, 1, 0
      %v390 = vrot.slane %v388, 1
      %v391 = vrot.slane %v389, 1
      %vm392 = vcmp.ne.s32.totalorder %v390, 0
      %vm393 = vcmp.ne.s32.totalorder %v391, 0
      %vm394 = vmand %vm386, %vm392
      %vm395 = vmand %vm387, %vm393
      %v398 = vrot.slane %v372, 1
      %v399 = vrot.slane %v373, 1
      %v402 = vsel %vm394, %v398, 0.0
      %v403 = vsel %vm395, %v399, 0.0
      %v404 = vmul.u32 %v329, 16
      %v405 = vmul.u32 %v330, 16
      %v406 = vrot.slane %v329, 7
      %v407 = vrot.slane %v330, 7
      %v408 = vadd.s32 %v404, %v406
      %v409 = vadd.s32 %v405, %v407
      %v410 = vlaneseq
      %v411 = vshrl.u32 %v410, 7
      %v412 = vsub.s32 1, %v411
      %v413 = vrot.slane %v408, %v412
      %v414 = vlaneseq
      %v415 = vshrl.u32 %v414, 7
      %v416 = vsub.s32 1, %v415
      %v417 = vrot.slane %v409, %v416
      %vm418 = vcmp.eq.s32.totalorder %v334, %v413
      %vm419 = vcmp.eq.s32.totalorder %v334, %v417
      %vm420 = vcmp.eq.s32.totalorder %v335, %v413
      %vm421 = vcmp.eq.s32.totalorder %v335, %v417
      %vm422 = vcmp.eq.s32.totalorder %v336, %v413
      %vm423 = vcmp.eq.s32.totalorder %v336, %v417
      %vm424 = vcmp.eq.s32.totalorder %v337, %v413
      %vm425 = vcmp.eq.s32.totalorder %v337, %v417
      %vm426 = vcmp.eq.s32.totalorder %v338, %v413
      %vm427 = vcmp.eq.s32.totalorder %v338, %v417
      %vm428 = vcmp.eq.s32.totalorder %v339, %v413
      %vm429 = vcmp.eq.s32.totalorder %v339, %v417
      %vm430 = vcmp.eq.s32.totalorder %v340, %v413
      %vm431 = vcmp.eq.s32.totalorder %v340, %v417
      %vm432 = vcmp.eq.s32.totalorder %v341, %v413
      %vm433 = vcmp.eq.s32.totalorder %v341, %v417
      %vm434 = vcmp.eq.s32.totalorder %v342, %v413
      %vm435 = vcmp.eq.s32.totalorder %v342, %v417
      %vm436 = vcmp.eq.s32.totalorder %v343, %v413
      %vm437 = vcmp.eq.s32.totalorder %v343, %v417
      %vm438 = vcmp.eq.s32.totalorder %v344, %v413
      %vm439 = vcmp.eq.s32.totalorder %v344, %v417
      %vm440 = vcmp.eq.s32.totalorder %v345, %v413
      %vm441 = vcmp.eq.s32.totalorder %v345, %v417
      %vm442 = vcmp.eq.s32.totalorder %v346, %v413
      %vm443 = vcmp.eq.s32.totalorder %v346, %v417
      %vm444 = vcmp.eq.s32.totalorder %v347, %v413
      %vm445 = vcmp.eq.s32.totalorder %v347, %v417
      %vm446 = vcmp.eq.s32.totalorder %v348, %v413
      %vm447 = vcmp.eq.s32.totalorder %v348, %v417
      %vm448 = vcmp.eq.s32.totalorder %v349, %v413
      %vm449 = vcmp.eq.s32.totalorder %v349, %v417
      %vm450 = vcmp.eq.s32.totalorder %v350, %v413
      %vm451 = vcmp.eq.s32.totalorder %v350, %v417
      %vm452 = vcmp.eq.s32.totalorder %v351, %v413
      %vm453 = vcmp.eq.s32.totalorder %v351, %v417
      %vm454 = vcmp.eq.s32.totalorder %v352, %v413
      %vm455 = vcmp.eq.s32.totalorder %v352, %v417
      %vm456 = vcmp.eq.s32.totalorder %v353, %v413
      %vm457 = vcmp.eq.s32.totalorder %v353, %v417
      %vm458 = vcmp.eq.s32.totalorder %v354, %v413
      %vm459 = vcmp.eq.s32.totalorder %v354, %v417
      %vm460 = vcmp.eq.s32.totalorder %v355, %v413
      %vm461 = vcmp.eq.s32.totalorder %v355, %v417
      %vm462 = vcmp.eq.s32.totalorder %v356, %v413
      %vm463 = vcmp.eq.s32.totalorder %v356, %v417
      %vm464 = vcmp.eq.s32.totalorder %v357, %v413
      %vm465 = vcmp.eq.s32.totalorder %v357, %v417
      %vm466 = vcmp.eq.s32.totalorder %v358, %v413
      %vm467 = vcmp.eq.s32.totalorder %v358, %v417
      %vm468 = vcmp.eq.s32.totalorder %v359, %v413
      %vm469 = vcmp.eq.s32.totalorder %v359, %v417
      %vm470 = vcmp.eq.s32.totalorder %v360, %v413
      %vm471 = vcmp.eq.s32.totalorder %v360, %v417
      %vm472 = vcmp.eq.s32.totalorder %v361, %v413
      %vm473 = vcmp.eq.s32.totalorder %v361, %v417
      %vm474 = vcmp.eq.s32.totalorder %v362, %v413
      %vm475 = vcmp.eq.s32.totalorder %v362, %v417
      %vm476 = vcmp.eq.s32.totalorder %v363, %v413
      %vm477 = vcmp.eq.s32.totalorder %v363, %v417
      %vm478 = vcmp.eq.s32.totalorder %v364, %v413
      %vm479 = vcmp.eq.s32.totalorder %v364, %v417
      %vm480 = vcmp.eq.s32.totalorder %v365, %v413
      %vm481 = vcmp.eq.s32.totalorder %v365, %v417
      %v482 = vlaneseq
      %v483 = vshrl.u32 %v482, 7
      %v484 = vsub.s32 0, %v483
      %v485 = vrot.slane %v402, %v484
      %v486 = vlaneseq
      %v487 = vshrl.u32 %v486, 7
      %v488 = vsub.s32 0, %v487
      %v489 = vrot.slane %v403, %v488
      %v490 = vsel %vm418, %v485, 0.0
      %v491 = vsel %vm419, %v489, 0.0
      %v492 = vsel %vm420, %v485, 0.0
      %v493 = vsel %vm421, %v489, 0.0
      %v494 = vsel %vm422, %v485, 0.0
      %v495 = vsel %vm423, %v489, 0.0
      %v496 = vsel %vm424, %v485, 0.0
      %v497 = vsel %vm425, %v489, 0.0
      %v498 = vsel %vm426, %v485, 0.0
      %v499 = vsel %vm427, %v489, 0.0
      %v500 = vsel %vm428, %v485, 0.0
      %v501 = vsel %vm429, %v489, 0.0
      %v502 = vsel %vm430, %v485, 0.0
      %v503 = vsel %vm431, %v489, 0.0
      %v504 = vsel %vm432, %v485, 0.0
      %v505 = vsel %vm433, %v489, 0.0
      %v506 = vsel %vm434, %v485, 0.0
      %v507 = vsel %vm435, %v489, 0.0
      %v508 = vsel %vm436, %v485, 0.0
      %v509 = vsel %vm437, %v489, 0.0
      %v510 = vsel %vm438, %v485, 0.0
      %v511 = vsel %vm439, %v489, 0.0
      %v512 = vsel %vm440, %v485, 0.0
      %v513 = vsel %vm441, %v489, 0.0
      %v514 = vsel %vm442, %v485, 0.0
      %v515 = vsel %vm443, %v489, 0.0
      %v516 = vsel %vm444, %v485, 0.0
      %v517 = vsel %vm445, %v489, 0.0
      %v518 = vsel %vm446, %v485, 0.0
      %v519 = vsel %vm447, %v489, 0.0
      %v520 = vsel %vm448, %v485, 0.0
      %v521 = vsel %vm449, %v489, 0.0
      %v522 = vsel %vm450, %v485, 0.0
      %v523 = vsel %vm451, %v489, 0.0
      %v524 = vsel %vm452, %v485, 0.0
      %v525 = vsel %vm453, %v489, 0.0
      %v526 = vsel %vm454, %v485, 0.0
      %v527 = vsel %vm455, %v489, 0.0
      %v528 = vsel %vm456, %v485, 0.0
      %v529 = vsel %vm457, %v489, 0.0
      %v530 = vsel %vm458, %v485, 0.0
      %v531 = vsel %vm459, %v489, 0.0
      %v532 = vsel %vm460, %v485, 0.0
      %v533 = vsel %vm461, %v489, 0.0
      %v534 = vsel %vm462, %v485, 0.0
      %v535 = vsel %vm463, %v489, 0.0
      %v536 = vsel %vm464, %v485, 0.0
      %v537 = vsel %vm465, %v489, 0.0
      %v538 = vsel %vm466, %v485, 0.0
      %v539 = vsel %vm467, %v489, 0.0
      %v540 = vsel %vm468, %v485, 0.0
      %v541 = vsel %vm469, %v489, 0.0
      %v542 = vsel %vm470, %v485, 0.0
      %v543 = vsel %vm471, %v489, 0.0
      %v544 = vsel %vm472, %v485, 0.0
      %v545 = vsel %vm473, %v489, 0.0
      %v546 = vsel %vm474, %v485, 0.0
      %v547 = vsel %vm475, %v489, 0.0
      %v548 = vsel %vm476, %v485, 0.0
      %v549 = vsel %vm477, %v489, 0.0
      %v550 = vsel %vm478, %v485, 0.0
      %v551 = vsel %vm479, %v489, 0.0
      %v552 = vsel %vm480, %v485, 0.0
      %v553 = vsel %vm481, %v489, 0.0
      %v556 = vrot.slane %v325, 7
      %v557 = vrot.slane %v326, 7
      %v560 = vmul.f32 %v327, %v556
      %v561 = vmul.f32 %v328, %v557
      %vm562 = vcmp.ge.s32.totalorder %v331, 0
      %vm563 = vcmp.ge.s32.totalorder %v332, 0
      %vm564 = vcmp.lt.s32.totalorder %v331, 16
      %vm565 = vcmp.lt.s32.totalorder %v332, 16
      %vm566 = vmand %vm562, %vm564
      %vm567 = vmand %vm563, %vm565
      %vm568 = vmand %vm566, %vm384
      %vm569 = vmand %vm567, %vm385
      %vm570 = vmand %vm568, %vm392
      %vm571 = vmand %vm569, %vm393
      %v574 = vrot.slane %v560, 1
      %v575 = vrot.slane %v561, 1
      %v578 = vsel %vm570, %v574, 0.0
      %v579 = vsel %vm571, %v575, 0.0
      %v580 = vrot.slane %v331, 7
      %v581 = vrot.slane %v332, 7
      %v582 = vadd.s32 %v404, %v580
      %v583 = vadd.s32 %v405, %v581
      %v584 = vlaneseq
      %v585 = vshrl.u32 %v584, 7
      %v586 = vsub.s32 1, %v585
      %v587 = vrot.slane %v582, %v586
      %v588 = vlaneseq
      %v589 = vshrl.u32 %v588, 7
      %v590 = vsub.s32 1, %v589
      %v591 = vrot.slane %v583, %v590
      %vm592 = vcmp.eq.s32.totalorder %v334, %v587
      %vm593 = vcmp.eq.s32.totalorder %v334, %v591
      %vm594 = vcmp.eq.s32.totalorder %v335, %v587
      %vm595 = vcmp.eq.s32.totalorder %v335, %v591
      %vm596 = vcmp.eq.s32.totalorder %v336, %v587
      %vm597 = vcmp.eq.s32.totalorder %v336, %v591
      %vm598 = vcmp.eq.s32.totalorder %v337, %v587
      %vm599 = vcmp.eq.s32.totalorder %v337, %v591
      %vm600 = vcmp.eq.s32.totalorder %v338, %v587
      %vm601 = vcmp.eq.s32.totalorder %v338, %v591
      %vm602 = vcmp.eq.s32.totalorder %v339, %v587
      %vm603 = vcmp.eq.s32.totalorder %v339, %v591
      %vm604 = vcmp.eq.s32.totalorder %v340, %v587
      %vm605 = vcmp.eq.s32.totalorder %v340, %v591
      %vm606 = vcmp.eq.s32.totalorder %v341, %v587
      %vm607 = vcmp.eq.s32.totalorder %v341, %v591
      %vm608 = vcmp.eq.s32.totalorder %v342, %v587
      %vm609 = vcmp.eq.s32.totalorder %v342, %v591
      %vm610 = vcmp.eq.s32.totalorder %v343, %v587
      %vm611 = vcmp.eq.s32.totalorder %v343, %v591
      %vm612 = vcmp.eq.s32.totalorder %v344, %v587
      %vm613 = vcmp.eq.s32.totalorder %v344, %v591
      %vm614 = vcmp.eq.s32.totalorder %v345, %v587
      %vm615 = vcmp.eq.s32.totalorder %v345, %v591
      %vm616 = vcmp.eq.s32.totalorder %v346, %v587
      %vm617 = vcmp.eq.s32.totalorder %v346, %v591
      %vm618 = vcmp.eq.s32.totalorder %v347, %v587
      %vm619 = vcmp.eq.s32.totalorder %v347, %v591
      %vm620 = vcmp.eq.s32.totalorder %v348, %v587
      %vm621 = vcmp.eq.s32.totalorder %v348, %v591
      %vm622 = vcmp.eq.s32.totalorder %v349, %v587
      %vm623 = vcmp.eq.s32.totalorder %v349, %v591
      %vm624 = vcmp.eq.s32.totalorder %v350, %v587
      %vm625 = vcmp.eq.s32.totalorder %v350, %v591
      %vm626 = vcmp.eq.s32.totalorder %v351, %v587
      %vm627 = vcmp.eq.s32.totalorder %v351, %v591
      %vm628 = vcmp.eq.s32.totalorder %v352, %v587
      %vm629 = vcmp.eq.s32.totalorder %v352, %v591
      %vm630 = vcmp.eq.s32.totalorder %v353, %v587
      %vm631 = vcmp.eq.s32.totalorder %v353, %v591
      %vm632 = vcmp.eq.s32.totalorder %v354, %v587
      %vm633 = vcmp.eq.s32.totalorder %v354, %v591
      %vm634 = vcmp.eq.s32.totalorder %v355, %v587
      %vm635 = vcmp.eq.s32.totalorder %v355, %v591
      %vm636 = vcmp.eq.s32.totalorder %v356, %v587
      %vm637 = vcmp.eq.s32.totalorder %v356, %v591
      %vm638 = vcmp.eq.s32.totalorder %v357, %v587
      %vm639 = vcmp.eq.s32.totalorder %v357, %v591
      %vm640 = vcmp.eq.s32.totalorder %v358, %v587
      %vm641 = vcmp.eq.s32.totalorder %v358, %v591
      %vm642 = vcmp.eq.s32.totalorder %v359, %v587
      %vm643 = vcmp.eq.s32.totalorder %v359, %v591
      %vm644 = vcmp.eq.s32.totalorder %v360, %v587
      %vm645 = vcmp.eq.s32.totalorder %v360, %v591
      %vm646 = vcmp.eq.s32.totalorder %v361, %v587
      %vm647 = vcmp.eq.s32.totalorder %v361, %v591
      %vm648 = vcmp.eq.s32.totalorder %v362, %v587
      %vm649 = vcmp.eq.s32.totalorder %v362, %v591
      %vm650 = vcmp.eq.s32.totalorder %v363, %v587
      %vm651 = vcmp.eq.s32.totalorder %v363, %v591
      %vm652 = vcmp.eq.s32.totalorder %v364, %v587
      %vm653 = vcmp.eq.s32.totalorder %v364, %v591
      %vm654 = vcmp.eq.s32.totalorder %v365, %v587
      %vm655 = vcmp.eq.s32.totalorder %v365, %v591
      %v656 = vlaneseq
      %v657 = vshrl.u32 %v656, 7
      %v658 = vsub.s32 0, %v657
      %v659 = vrot.slane %v578, %v658
      %v660 = vlaneseq
      %v661 = vshrl.u32 %v660, 7
      %v662 = vsub.s32 0, %v661
      %v663 = vrot.slane %v579, %v662
      %v664 = vsel %vm592, %v659, 0.0
      %v665 = vsel %vm593, %v663, 0.0
      %v666 = vsel %vm594, %v659, 0.0
      %v667 = vsel %vm595, %v663, 0.0
      %v668 = vsel %vm596, %v659, 0.0
      %v669 = vsel %vm597, %v663, 0.0
      %v670 = vsel %vm598, %v659, 0.0
      %v671 = vsel %vm599, %v663, 0.0
      %v672 = vsel %vm600, %v659, 0.0
      %v673 = vsel %vm601, %v663, 0.0
      %v674 = vsel %vm602, %v659, 0.0
      %v675 = vsel %vm603, %v663, 0.0
      %v676 = vsel %vm604, %v659, 0.0
      %v677 = vsel %vm605, %v663, 0.0
      %v678 = vsel %vm606, %v659, 0.0
      %v679 = vsel %vm607, %v663, 0.0
      %v680 = vsel %vm608, %v659, 0.0
      %v681 = vsel %vm609, %v663, 0.0
      %v682 = vsel %vm610, %v659, 0.0
      %v683 = vsel %vm611, %v663, 0.0
      %v684 = vsel %vm612, %v659, 0.0
      %v685 = vsel %vm613, %v663, 0.0
      %v686 = vsel %vm614, %v659, 0.0
      %v687 = vsel %vm615, %v663, 0.0
      %v688 = vsel %vm616, %v659, 0.0
      %v689 = vsel %vm617, %v663, 0.0
      %v690 = vsel %vm618, %v659, 0.0
      %v691 = vsel %vm619, %v663, 0.0
      %v692 = vsel %vm620, %v659, 0.0
      %v693 = vsel %vm621, %v663, 0.0
      %v694 = vsel %vm622, %v659, 0.0
      %v695 = vsel %vm623, %v663, 0.0
      %v696 = vsel %vm624, %v659, 0.0
      %v697 = vsel %vm625, %v663, 0.0
      %v698 = vsel %vm626, %v659, 0.0
      %v699 = vsel %vm627, %v663, 0.0
      %v700 = vsel %vm628, %v659, 0.0
      %v701 = vsel %vm629, %v663, 0.0
      %v702 = vsel %vm630, %v659, 0.0
      %v703 = vsel %vm631, %v663, 0.0
      %v704 = vsel %vm632, %v659, 0.0
      %v705 = vsel %vm633, %v663, 0.0
      %v706 = vsel %vm634, %v659, 0.0
      %v707 = vsel %vm635, %v663, 0.0
      %v708 = vsel %vm636, %v659, 0.0
      %v709 = vsel %vm637, %v663, 0.0
      %v710 = vsel %vm638, %v659, 0.0
      %v711 = vsel %vm639, %v663, 0.0
      %v712 = vsel %vm640, %v659, 0.0
      %v713 = vsel %vm641, %v663, 0.0
      %v714 = vsel %vm642, %v659, 0.0
      %v715 = vsel %vm643, %v663, 0.0
      %v716 = vsel %vm644, %v659, 0.0
      %v717 = vsel %vm645, %v663, 0.0
      %v718 = vsel %vm646, %v659, 0.0
      %v719 = vsel %vm647, %v663, 0.0
      %v720 = vsel %vm648, %v659, 0.0
      %v721 = vsel %vm649, %v663, 0.0
      %v722 = vsel %vm650, %v659, 0.0
      %v723 = vsel %vm651, %v663, 0.0
      %v724 = vsel %vm652, %v659, 0.0
      %v725 = vsel %vm653, %v663, 0.0
      %v726 = vsel %vm654, %v659, 0.0
      %v727 = vsel %vm655, %v663, 0.0
      %v728 = vadd.f32 %v490, %v664
      %v729 = vadd.f32 %v491, %v665
      %v730 = vadd.f32 %v492, %v666
      %v731 = vadd.f32 %v493, %v667
      %v732 = vadd.f32 %v494, %v668
      %v733 = vadd.f32 %v495, %v669
      %v734 = vadd.f32 %v496, %v670
      %v735 = vadd.f32 %v497, %v671
      %v736 = vadd.f32 %v498, %v672
      %v737 = vadd.f32 %v499, %v673
      %v738 = vadd.f32 %v500, %v674
      %v739 = vadd.f32 %v501, %v675
      %v740 = vadd.f32 %v502, %v676
      %v741 = vadd.f32 %v503, %v677
      %v742 = vadd.f32 %v504, %v678
      %v743 = vadd.f32 %v505, %v679
      %v744 = vadd.f32 %v506, %v680
      %v745 = vadd.f32 %v507, %v681
      %v746 = vadd.f32 %v508, %v682
      %v747 = vadd.f32 %v509, %v683
      %v748 = vadd.f32 %v510, %v684
      %v749 = vadd.f32 %v511, %v685
      %v750 = vadd.f32 %v512, %v686
      %v751 = vadd.f32 %v513, %v687
      %v752 = vadd.f32 %v514, %v688
      %v753 = vadd.f32 %v515, %v689
      %v754 = vadd.f32 %v516, %v690
      %v755 = vadd.f32 %v517, %v691
      %v756 = vadd.f32 %v518, %v692
      %v757 = vadd.f32 %v519, %v693
      %v758 = vadd.f32 %v520, %v694
      %v759 = vadd.f32 %v521, %v695
      %v760 = vadd.f32 %v522, %v696
      %v761 = vadd.f32 %v523, %v697
      %v762 = vadd.f32 %v524, %v698
      %v763 = vadd.f32 %v525, %v699
      %v764 = vadd.f32 %v526, %v700
      %v765 = vadd.f32 %v527, %v701
      %v766 = vadd.f32 %v528, %v702
      %v767 = vadd.f32 %v529, %v703
      %v768 = vadd.f32 %v530, %v704
      %v769 = vadd.f32 %v531, %v705
      %v770 = vadd.f32 %v532, %v706
      %v771 = vadd.f32 %v533, %v707
      %v772 = vadd.f32 %v534, %v708
      %v773 = vadd.f32 %v535, %v709
      %v774 = vadd.f32 %v536, %v710
      %v775 = vadd.f32 %v537, %v711
      %v776 = vadd.f32 %v538, %v712
      %v777 = vadd.f32 %v539, %v713
      %v778 = vadd.f32 %v540, %v714
      %v779 = vadd.f32 %v541, %v715
      %v780 = vadd.f32 %v542, %v716
      %v781 = vadd.f32 %v543, %v717
      %v782 = vadd.f32 %v544, %v718
      %v783 = vadd.f32 %v545, %v719
      %v784 = vadd.f32 %v546, %v720
      %v785 = vadd.f32 %v547, %v721
      %v786 = vadd.f32 %v548, %v722
      %v787 = vadd.f32 %v549, %v723
      %v788 = vadd.f32 %v550, %v724
      %v789 = vadd.f32 %v551, %v725
      %v790 = vadd.f32 %v552, %v726
      %v791 = vadd.f32 %v553, %v727
      %v792 = vmul.f32 %v325, %v368
      %v793 = vmul.f32 %v326, %v369
      %v794 = vsel %vm562, 1, 0
      %v795 = vsel %vm563, 1, 0
      %v796 = vrot.slane %v794, 1
      %v797 = vrot.slane %v795, 1
      %vm798 = vcmp.ne.s32.totalorder %v796, 0
      %vm799 = vcmp.ne.s32.totalorder %v797, 0
      %vm800 = vmand %vm378, %vm798
      %vm801 = vmand %vm379, %vm799
      %v802 = vsel %vm564, 1, 0
      %v803 = vsel %vm565, 1, 0
      %v804 = vrot.slane %v802, 1
      %v805 = vrot.slane %v803, 1
      %vm806 = vcmp.ne.s32.totalorder %v804, 0
      %vm807 = vcmp.ne.s32.totalorder %v805, 0
      %vm808 = vmand %vm800, %vm806
      %vm809 = vmand %vm801, %vm807
      %v812 = vrot.slane %v792, 1
      %v813 = vrot.slane %v793, 1
      %v816 = vsel %vm808, %v812, 0.0
      %v817 = vsel %vm809, %v813, 0.0
      %v818 = vmul.u32 %v331, 16
      %v819 = vmul.u32 %v332, 16
      %v820 = vadd.s32 %v818, %v406
      %v821 = vadd.s32 %v819, %v407
      %v822 = vlaneseq
      %v823 = vshrl.u32 %v822, 7
      %v824 = vsub.s32 1, %v823
      %v825 = vrot.slane %v820, %v824
      %v826 = vlaneseq
      %v827 = vshrl.u32 %v826, 7
      %v828 = vsub.s32 1, %v827
      %v829 = vrot.slane %v821, %v828
      %vm830 = vcmp.eq.s32.totalorder %v334, %v825
      %vm831 = vcmp.eq.s32.totalorder %v334, %v829
      %vm832 = vcmp.eq.s32.totalorder %v335, %v825
      %vm833 = vcmp.eq.s32.totalorder %v335, %v829
      %vm834 = vcmp.eq.s32.totalorder %v336, %v825
      %vm835 = vcmp.eq.s32.totalorder %v336, %v829
      %vm836 = vcmp.eq.s32.totalorder %v337, %v825
      %vm837 = vcmp.eq.s32.totalorder %v337, %v829
      %vm838 = vcmp.eq.s32.totalorder %v338, %v825
      %vm839 = vcmp.eq.s32.totalorder %v338, %v829
      %vm840 = vcmp.eq.s32.totalorder %v339, %v825
      %vm841 = vcmp.eq.s32.totalorder %v339, %v829
      %vm842 = vcmp.eq.s32.totalorder %v340, %v825
      %vm843 = vcmp.eq.s32.totalorder %v340, %v829
      %vm844 = vcmp.eq.s32.totalorder %v341, %v825
      %vm845 = vcmp.eq.s32.totalorder %v341, %v829
      %vm846 = vcmp.eq.s32.totalorder %v342, %v825
      %vm847 = vcmp.eq.s32.totalorder %v342, %v829
      %vm848 = vcmp.eq.s32.totalorder %v343, %v825
      %vm849 = vcmp.eq.s32.totalorder %v343, %v829
      %vm850 = vcmp.eq.s32.totalorder %v344, %v825
      %vm851 = vcmp.eq.s32.totalorder %v344, %v829
      %vm852 = vcmp.eq.s32.totalorder %v345, %v825
      %vm853 = vcmp.eq.s32.totalorder %v345, %v829
      %vm854 = vcmp.eq.s32.totalorder %v346, %v825
      %vm855 = vcmp.eq.s32.totalorder %v346, %v829
      %vm856 = vcmp.eq.s32.totalorder %v347, %v825
      %vm857 = vcmp.eq.s32.totalorder %v347, %v829
      %vm858 = vcmp.eq.s32.totalorder %v348, %v825
      %vm859 = vcmp.eq.s32.totalorder %v348, %v829
      %vm860 = vcmp.eq.s32.totalorder %v349, %v825
      %vm861 = vcmp.eq.s32.totalorder %v349, %v829
      %vm862 = vcmp.eq.s32.totalorder %v350, %v825
      %vm863 = vcmp.eq.s32.totalorder %v350, %v829
      %vm864 = vcmp.eq.s32.totalorder %v351, %v825
      %vm865 = vcmp.eq.s32.totalorder %v351, %v829
      %vm866 = vcmp.eq.s32.totalorder %v352, %v825
      %vm867 = vcmp.eq.s32.totalorder %v352, %v829
      %vm868 = vcmp.eq.s32.totalorder %v353, %v825
      %vm869 = vcmp.eq.s32.totalorder %v353, %v829
      %vm870 = vcmp.eq.s32.totalorder %v354, %v825
      %vm871 = vcmp.eq.s32.totalorder %v354, %v829
      %vm872 = vcmp.eq.s32.totalorder %v355, %v825
      %vm873 = vcmp.eq.s32.totalorder %v355, %v829
      %vm874 = vcmp.eq.s32.totalorder %v356, %v825
      %vm875 = vcmp.eq.s32.totalorder %v356, %v829
      %vm876 = vcmp.eq.s32.totalorder %v357, %v825
      %vm877 = vcmp.eq.s32.totalorder %v357, %v829
      %vm878 = vcmp.eq.s32.totalorder %v358, %v825
      %vm879 = vcmp.eq.s32.totalorder %v358, %v829
      %vm880 = vcmp.eq.s32.totalorder %v359, %v825
      %vm881 = vcmp.eq.s32.totalorder %v359, %v829
      %vm882 = vcmp.eq.s32.totalorder %v360, %v825
      %vm883 = vcmp.eq.s32.totalorder %v360, %v829
      %vm884 = vcmp.eq.s32.totalorder %v361, %v825
      %vm885 = vcmp.eq.s32.totalorder %v361, %v829
      %vm886 = vcmp.eq.s32.totalorder %v362, %v825
      %vm887 = vcmp.eq.s32.totalorder %v362, %v829
      %vm888 = vcmp.eq.s32.totalorder %v363, %v825
      %vm889 = vcmp.eq.s32.totalorder %v363, %v829
      %vm890 = vcmp.eq.s32.totalorder %v364, %v825
      %vm891 = vcmp.eq.s32.totalorder %v364, %v829
      %vm892 = vcmp.eq.s32.totalorder %v365, %v825
      %vm893 = vcmp.eq.s32.totalorder %v365, %v829
      %v894 = vlaneseq
      %v895 = vshrl.u32 %v894, 7
      %v896 = vsub.s32 0, %v895
      %v897 = vrot.slane %v816, %v896
      %v898 = vlaneseq
      %v899 = vshrl.u32 %v898, 7
      %v900 = vsub.s32 0, %v899
      %v901 = vrot.slane %v817, %v900
      %v902 = vsel %vm830, %v897, 0.0
      %v903 = vsel %vm831, %v901, 0.0
      %v904 = vsel %vm832, %v897, 0.0
      %v905 = vsel %vm833, %v901, 0.0
      %v906 = vsel %vm834, %v897, 0.0
      %v907 = vsel %vm835, %v901, 0.0
      %v908 = vsel %vm836, %v897, 0.0
      %v909 = vsel %vm837, %v901, 0.0
      %v910 = vsel %vm838, %v897, 0.0
      %v911 = vsel %vm839, %v901, 0.0
      %v912 = vsel %vm840, %v897, 0.0
      %v913 = vsel %vm841, %v901, 0.0
      %v914 = vsel %vm842, %v897, 0.0
      %v915 = vsel %vm843, %v901, 0.0
      %v916 = vsel %vm844, %v897, 0.0
      %v917 = vsel %vm845, %v901, 0.0
      %v918 = vsel %vm846, %v897, 0.0
      %v919 = vsel %vm847, %v901, 0.0
      %v920 = vsel %vm848, %v897, 0.0
      %v921 = vsel %vm849, %v901, 0.0
      %v922 = vsel %vm850, %v897, 0.0
      %v923 = vsel %vm851, %v901, 0.0
      %v924 = vsel %vm852, %v897, 0.0
      %v925 = vsel %vm853, %v901, 0.0
      %v926 = vsel %vm854, %v897, 0.0
      %v927 = vsel %vm855, %v901, 0.0
      %v928 = vsel %vm856, %v897, 0.0
      %v929 = vsel %vm857, %v901, 0.0
      %v930 = vsel %vm858, %v897, 0.0
      %v931 = vsel %vm859, %v901, 0.0
      %v932 = vsel %vm860, %v897, 0.0
      %v933 = vsel %vm861, %v901, 0.0
      %v934 = vsel %vm862, %v897, 0.0
      %v935 = vsel %vm863, %v901, 0.0
      %v936 = vsel %vm864, %v897, 0.0
      %v937 = vsel %vm865, %v901, 0.0
      %v938 = vsel %vm866, %v897, 0.0
      %v939 = vsel %vm867, %v901, 0.0
      %v940 = vsel %vm868, %v897, 0.0
      %v941 = vsel %vm869, %v901, 0.0
      %v942 = vsel %vm870, %v897, 0.0
      %v943 = vsel %vm871, %v901, 0.0
      %v944 = vsel %vm872, %v897, 0.0
      %v945 = vsel %vm873, %v901, 0.0
      %v946 = vsel %vm874, %v897, 0.0
      %v947 = vsel %vm875, %v901, 0.0
      %v948 = vsel %vm876, %v897, 0.0
      %v949 = vsel %vm877, %v901, 0.0
      %v950 = vsel %vm878, %v897, 0.0
      %v951 = vsel %vm879, %v901, 0.0
      %v952 = vsel %vm880, %v897, 0.0
      %v953 = vsel %vm881, %v901, 0.0
      %v954 = vsel %vm882, %v897, 0.0
      %v955 = vsel %vm883, %v901, 0.0
      %v956 = vsel %vm884, %v897, 0.0
      %v957 = vsel %vm885, %v901, 0.0
      %v958 = vsel %vm886, %v897, 0.0
      %v959 = vsel %vm887, %v901, 0.0
      %v960 = vsel %vm888, %v897, 0.0
      %v961 = vsel %vm889, %v901, 0.0
      %v962 = vsel %vm890, %v897, 0.0
      %v963 = vsel %vm891, %v901, 0.0
      %v964 = vsel %vm892, %v897, 0.0
      %v965 = vsel %vm893, %v901, 0.0
      %v966 = vadd.f32 %v728, %v902
      %v967 = vadd.f32 %v729, %v903
      %v968 = vadd.f32 %v730, %v904
      %v969 = vadd.f32 %v731, %v905
      %v970 = vadd.f32 %v732, %v906
      %v971 = vadd.f32 %v733, %v907
      %v972 = vadd.f32 %v734, %v908
      %v973 = vadd.f32 %v735, %v909
      %v974 = vadd.f32 %v736, %v910
      %v975 = vadd.f32 %v737, %v911
      %v976 = vadd.f32 %v738, %v912
      %v977 = vadd.f32 %v739, %v913
      %v978 = vadd.f32 %v740, %v914
      %v979 = vadd.f32 %v741, %v915
      %v980 = vadd.f32 %v742, %v916
      %v981 = vadd.f32 %v743, %v917
      %v982 = vadd.f32 %v744, %v918
      %v983 = vadd.f32 %v745, %v919
      %v984 = vadd.f32 %v746, %v920
      %v985 = vadd.f32 %v747, %v921
      %v986 = vadd.f32 %v748, %v922
      %v987 = vadd.f32 %v749, %v923
      %v988 = vadd.f32 %v750, %v924
      %v989 = vadd.f32 %v751, %v925
      %v990 = vadd.f32 %v752, %v926
      %v991 = vadd.f32 %v753, %v927
      %v992 = vadd.f32 %v754, %v928
      %v993 = vadd.f32 %v755, %v929
      %v994 = vadd.f32 %v756, %v930
      %v995 = vadd.f32 %v757, %v931
      %v996 = vadd.f32 %v758, %v932
      %v997 = vadd.f32 %v759, %v933
      %v998 = vadd.f32 %v760, %v934
      %v999 = vadd.f32 %v761, %v935
      %v1000 = vadd.f32 %v762, %v936
      %v1001 = vadd.f32 %v763, %v937
      %v1002 = vadd.f32 %v764, %v938
      %v1003 = vadd.f32 %v765, %v939
      %v1004 = vadd.f32 %v766, %v940
      %v1005 = vadd.f32 %v767, %v941
      %v1006 = vadd.f32 %v768, %v942
      %v1007 = vadd.f32 %v769, %v943
      %v1008 = vadd.f32 %v770, %v944
      %v1009 = vadd.f32 %v771, %v945
      %v1010 = vadd.f32 %v772, %v946
      %v1011 = vadd.f32 %v773, %v947
      %v1012 = vadd.f32 %v774, %v948
      %v1013 = vadd.f32 %v775, %v949
      %v1014 = vadd.f32 %v776, %v950
      %v1015 = vadd.f32 %v777, %v951
      %v1016 = vadd.f32 %v778, %v952
      %v1017 = vadd.f32 %v779, %v953
      %v1018 = vadd.f32 %v780, %v954
      %v1019 = vadd.f32 %v781, %v955
      %v1020 = vadd.f32 %v782, %v956
      %v1021 = vadd.f32 %v783, %v957
      %v1022 = vadd.f32 %v784, %v958
      %v1023 = vadd.f32 %v785, %v959
      %v1024 = vadd.f32 %v786, %v960
      %v1025 = vadd.f32 %v787, %v961
      %v1026 = vadd.f32 %v788, %v962
      %v1027 = vadd.f32 %v789, %v963
      %v1028 = vadd.f32 %v790, %v964
      %v1029 = vadd.f32 %v791, %v965
      %v1030 = vmul.f32 %v325, %v556
      %v1031 = vmul.f32 %v326, %v557
      %vm1032 = vmand %vm566, %vm798
      %vm1033 = vmand %vm567, %vm799
      %vm1034 = vmand %vm1032, %vm806
      %vm1035 = vmand %vm1033, %vm807
      %v1038 = vrot.slane %v1030, 1
      %v1039 = vrot.slane %v1031, 1
      %v1042 = vsel %vm1034, %v1038, 0.0
      %v1043 = vsel %vm1035, %v1039, 0.0
      %v1044 = vadd.s32 %v818, %v580
      %v1045 = vadd.s32 %v819, %v581
      %v1046 = vlaneseq
      %v1047 = vshrl.u32 %v1046, 7
      %v1048 = vsub.s32 1, %v1047
      %v1049 = vrot.slane %v1044, %v1048
      %v1050 = vlaneseq
      %v1051 = vshrl.u32 %v1050, 7
      %v1052 = vsub.s32 1, %v1051
      %v1053 = vrot.slane %v1045, %v1052
      %vm1054 = vcmp.eq.s32.totalorder %v334, %v1049
      %vm1055 = vcmp.eq.s32.totalorder %v334, %v1053
      %vm1056 = vcmp.eq.s32.totalorder %v335, %v1049
      %vm1057 = vcmp.eq.s32.totalorder %v335, %v1053
      %vm1058 = vcmp.eq.s32.totalorder %v336, %v1049
      %vm1059 = vcmp.eq.s32.totalorder %v336, %v1053
      %vm1060 = vcmp.eq.s32.totalorder %v337, %v1049
      %vm1061 = vcmp.eq.s32.totalorder %v337, %v1053
      %vm1062 = vcmp.eq.s32.totalorder %v338, %v1049
      %vm1063 = vcmp.eq.s32.totalorder %v338, %v1053
      %vm1064 = vcmp.eq.s32.totalorder %v339, %v1049
      %vm1065 = vcmp.eq.s32.totalorder %v339, %v1053
      %vm1066 = vcmp.eq.s32.totalorder %v340, %v1049
      %vm1067 = vcmp.eq.s32.totalorder %v340, %v1053
      %vm1068 = vcmp.eq.s32.totalorder %v341, %v1049
      %vm1069 = vcmp.eq.s32.totalorder %v341, %v1053
      %vm1070 = vcmp.eq.s32.totalorder %v342, %v1049
      %vm1071 = vcmp.eq.s32.totalorder %v342, %v1053
      %vm1072 = vcmp.eq.s32.totalorder %v343, %v1049
      %vm1073 = vcmp.eq.s32.totalorder %v343, %v1053
      %vm1074 = vcmp.eq.s32.totalorder %v344, %v1049
      %vm1075 = vcmp.eq.s32.totalorder %v344, %v1053
      %vm1076 = vcmp.eq.s32.totalorder %v345, %v1049
      %vm1077 = vcmp.eq.s32.totalorder %v345, %v1053
      %vm1078 = vcmp.eq.s32.totalorder %v346, %v1049
      %vm1079 = vcmp.eq.s32.totalorder %v346, %v1053
      %vm1080 = vcmp.eq.s32.totalorder %v347, %v1049
      %vm1081 = vcmp.eq.s32.totalorder %v347, %v1053
      %vm1082 = vcmp.eq.s32.totalorder %v348, %v1049
      %vm1083 = vcmp.eq.s32.totalorder %v348, %v1053
      %vm1084 = vcmp.eq.s32.totalorder %v349, %v1049
      %vm1085 = vcmp.eq.s32.totalorder %v349, %v1053
      %vm1086 = vcmp.eq.s32.totalorder %v350, %v1049
      %vm1087 = vcmp.eq.s32.totalorder %v350, %v1053
      %vm1088 = vcmp.eq.s32.totalorder %v351, %v1049
      %vm1089 = vcmp.eq.s32.totalorder %v351, %v1053
      %vm1090 = vcmp.eq.s32.totalorder %v352, %v1049
      %vm1091 = vcmp.eq.s32.totalorder %v352, %v1053
      %vm1092 = vcmp.eq.s32.totalorder %v353, %v1049
      %vm1093 = vcmp.eq.s32.totalorder %v353, %v1053
      %vm1094 = vcmp.eq.s32.totalorder %v354, %v1049
      %vm1095 = vcmp.eq.s32.totalorder %v354, %v1053
      %vm1096 = vcmp.eq.s32.totalorder %v355, %v1049
      %vm1097 = vcmp.eq.s32.totalorder %v355, %v1053
      %vm1098 = vcmp.eq.s32.totalorder %v356, %v1049
      %vm1099 = vcmp.eq.s32.totalorder %v356, %v1053
      %vm1100 = vcmp.eq.s32.totalorder %v357, %v1049
      %vm1101 = vcmp.eq.s32.totalorder %v357, %v1053
      %vm1102 = vcmp.eq.s32.totalorder %v358, %v1049
      %vm1103 = vcmp.eq.s32.totalorder %v358, %v1053
      %vm1104 = vcmp.eq.s32.totalorder %v359, %v1049
      %vm1105 = vcmp.eq.s32.totalorder %v359, %v1053
      %vm1106 = vcmp.eq.s32.totalorder %v360, %v1049
      %vm1107 = vcmp.eq.s32.totalorder %v360, %v1053
      %vm1108 = vcmp.eq.s32.totalorder %v361, %v1049
      %vm1109 = vcmp.eq.s32.totalorder %v361, %v1053
      %vm1110 = vcmp.eq.s32.totalorder %v362, %v1049
      %vm1111 = vcmp.eq.s32.totalorder %v362, %v1053
      %vm1112 = vcmp.eq.s32.totalorder %v363, %v1049
      %vm1113 = vcmp.eq.s32.totalorder %v363, %v1053
      %vm1114 = vcmp.eq.s32.totalorder %v364, %v1049
      %vm1115 = vcmp.eq.s32.totalorder %v364, %v1053
      %vm1116 = vcmp.eq.s32.totalorder %v365, %v1049
      %vm1117 = vcmp.eq.s32.totalorder %v365, %v1053
      %v1118 = vlaneseq
      %v1119 = vshrl.u32 %v1118, 7
      %v1120 = vsub.s32 0, %v1119
      %v1121 = vrot.slane %v1042, %v1120
      %v1122 = vlaneseq
      %v1123 = vshrl.u32 %v1122, 7
      %v1124 = vsub.s32 0, %v1123
      %v1125 = vrot.slane %v1043, %v1124
      %v1126 = vsel %vm1054, %v1121, 0.0
      %v1127 = vsel %vm1055, %v1125, 0.0
      %v1128 = vsel %vm1056, %v1121, 0.0
      %v1129 = vsel %vm1057, %v1125, 0.0
      %v1130 = vsel %vm1058, %v1121, 0.0
      %v1131 = vsel %vm1059, %v1125, 0.0
      %v1132 = vsel %vm1060, %v1121, 0.0
      %v1133 = vsel %vm1061, %v1125, 0.0
      %v1134 = vsel %vm1062, %v1121, 0.0
      %v1135 = vsel %vm1063, %v1125, 0.0
      %v1136 = vsel %vm1064, %v1121, 0.0
      %v1137 = vsel %vm1065, %v1125, 0.0
      %v1138 = vsel %vm1066, %v1121, 0.0
      %v1139 = vsel %vm1067, %v1125, 0.0
      %v1140 = vsel %vm1068, %v1121, 0.0
      %v1141 = vsel %vm1069, %v1125, 0.0
      %v1142 = vsel %vm1070, %v1121, 0.0
      %v1143 = vsel %vm1071, %v1125, 0.0
      %v1144 = vsel %vm1072, %v1121, 0.0
      %v1145 = vsel %vm1073, %v1125, 0.0
      %v1146 = vsel %vm1074, %v1121, 0.0
      %v1147 = vsel %vm1075, %v1125, 0.0
      %v1148 = vsel %vm1076, %v1121, 0.0
      %v1149 = vsel %vm1077, %v1125, 0.0
      %v1150 = vsel %vm1078, %v1121, 0.0
      %v1151 = vsel %vm1079, %v1125, 0.0
      %v1152 = vsel %vm1080, %v1121, 0.0
      %v1153 = vsel %vm1081, %v1125, 0.0
      %v1154 = vsel %vm1082, %v1121, 0.0
      %v1155 = vsel %vm1083, %v1125, 0.0
      %v1156 = vsel %vm1084, %v1121, 0.0
      %v1157 = vsel %vm1085, %v1125, 0.0
      %v1158 = vsel %vm1086, %v1121, 0.0
      %v1159 = vsel %vm1087, %v1125, 0.0
      %v1160 = vsel %vm1088, %v1121, 0.0
      %v1161 = vsel %vm1089, %v1125, 0.0
      %v1162 = vsel %vm1090, %v1121, 0.0
      %v1163 = vsel %vm1091, %v1125, 0.0
      %v1164 = vsel %vm1092, %v1121, 0.0
      %v1165 = vsel %vm1093, %v1125, 0.0
      %v1166 = vsel %vm1094, %v1121, 0.0
      %v1167 = vsel %vm1095, %v1125, 0.0
      %v1168 = vsel %vm1096, %v1121, 0.0
      %v1169 = vsel %vm1097, %v1125, 0.0
      %v1170 = vsel %vm1098, %v1121, 0.0
      %v1171 = vsel %vm1099, %v1125, 0.0
      %v1172 = vsel %vm1100, %v1121, 0.0
      %v1173 = vsel %vm1101, %v1125, 0.0
      %v1174 = vsel %vm1102, %v1121, 0.0
      %v1175 = vsel %vm1103, %v1125, 0.0
      %v1176 = vsel %vm1104, %v1121, 0.0
      %v1177 = vsel %vm1105, %v1125, 0.0
      %v1178 = vsel %vm1106, %v1121, 0.0
      %v1179 = vsel %vm1107, %v1125, 0.0
      %v1180 = vsel %vm1108, %v1121, 0.0
      %v1181 = vsel %vm1109, %v1125, 0.0
      %v1182 = vsel %vm1110, %v1121, 0.0
      %v1183 = vsel %vm1111, %v1125, 0.0
      %v1184 = vsel %vm1112, %v1121, 0.0
      %v1185 = vsel %vm1113, %v1125, 0.0
      %v1186 = vsel %vm1114, %v1121, 0.0
      %v1187 = vsel %vm1115, %v1125, 0.0
      %v1188 = vsel %vm1116, %v1121, 0.0
      %v1189 = vsel %vm1117, %v1125, 0.0
      %v1190 = vadd.f32 %v966, %v1126
      %v1191 = vadd.f32 %v967, %v1127
      %v1192 = vadd.f32 %v968, %v1128
      %v1193 = vadd.f32 %v969, %v1129
      %v1194 = vadd.f32 %v970, %v1130
      %v1195 = vadd.f32 %v971, %v1131
      %v1196 = vadd.f32 %v972, %v1132
      %v1197 = vadd.f32 %v973, %v1133
      %v1198 = vadd.f32 %v974, %v1134
      %v1199 = vadd.f32 %v975, %v1135
      %v1200 = vadd.f32 %v976, %v1136
      %v1201 = vadd.f32 %v977, %v1137
      %v1202 = vadd.f32 %v978, %v1138
      %v1203 = vadd.f32 %v979, %v1139
      %v1204 = vadd.f32 %v980, %v1140
      %v1205 = vadd.f32 %v981, %v1141
      %v1206 = vadd.f32 %v982, %v1142
      %v1207 = vadd.f32 %v983, %v1143
      %v1208 = vadd.f32 %v984, %v1144
      %v1209 = vadd.f32 %v985, %v1145
      %v1210 = vadd.f32 %v986, %v1146
      %v1211 = vadd.f32 %v987, %v1147
      %v1212 = vadd.f32 %v988, %v1148
      %v1213 = vadd.f32 %v989, %v1149
      %v1214 = vadd.f32 %v990, %v1150
      %v1215 = vadd.f32 %v991, %v1151
      %v1216 = vadd.f32 %v992, %v1152
      %v1217 = vadd.f32 %v993, %v1153
      %v1218 = vadd.f32 %v994, %v1154
      %v1219 = vadd.f32 %v995, %v1155
      %v1220 = vadd.f32 %v996, %v1156
      %v1221 = vadd.f32 %v997, %v1157
      %v1222 = vadd.f32 %v998, %v1158
      %v1223 = vadd.f32 %v999, %v1159
      %v1224 = vadd.f32 %v1000, %v1160
      %v1225 = vadd.f32 %v1001, %v1161
      %v1226 = vadd.f32 %v1002, %v1162
      %v1227 = vadd.f32 %v1003, %v1163
      %v1228 = vadd.f32 %v1004, %v1164
      %v1229 = vadd.f32 %v1005, %v1165
      %v1230 = vadd.f32 %v1006, %v1166
      %v1231 = vadd.f32 %v1007, %v1167
      %v1232 = vadd.f32 %v1008, %v1168
      %v1233 = vadd.f32 %v1009, %v1169
      %v1234 = vadd.f32 %v1010, %v1170
      %v1235 = vadd.f32 %v1011, %v1171
      %v1236 = vadd.f32 %v1012, %v1172
      %v1237 = vadd.f32 %v1013, %v1173
      %v1238 = vadd.f32 %v1014, %v1174
      %v1239 = vadd.f32 %v1015, %v1175
      %v1240 = vadd.f32 %v1016, %v1176
      %v1241 = vadd.f32 %v1017, %v1177
      %v1242 = vadd.f32 %v1018, %v1178
      %v1243 = vadd.f32 %v1019, %v1179
      %v1244 = vadd.f32 %v1020, %v1180
      %v1245 = vadd.f32 %v1021, %v1181
      %v1246 = vadd.f32 %v1022, %v1182
      %v1247 = vadd.f32 %v1023, %v1183
      %v1248 = vadd.f32 %v1024, %v1184
      %v1249 = vadd.f32 %v1025, %v1185
      %v1250 = vadd.f32 %v1026, %v1186
      %v1251 = vadd.f32 %v1027, %v1187
      %v1252 = vadd.f32 %v1028, %v1188
      %v1253 = vadd.f32 %v1029, %v1189
      %v1254 = vld [vmem:[%s222] sm:$0xff]
      %v1256 = vcombine.high %v1254, %v1254
      %1258 = vmatprep.subr.mxu0 %v1191
      %1259 = vmatpush1.msra.mxu0 %v1190
      %1260 = vmatprep.subr.mxu0 %v1193
      %1261 = vmatpush1.msra.mxu0 %v1192
      %1262 = vmatprep.subr.mxu0 %v1195
      %1263 = vmatpush1.msra.mxu0 %v1194
      %1264 = vmatprep.subr.mxu0 %v1197
      %1265 = vmatpush1.msra.mxu0 %v1196
      %1266 = vmatprep.subr.mxu0 %v1199
      %1267 = vmatpush1.msra.mxu0 %v1198
      %1268 = vmatprep.subr.mxu0 %v1201
      %1269 = vmatpush1.msra.mxu0 %v1200
      %1270 = vmatprep.subr.mxu0 %v1203
      %1271 = vmatpush1.msra.mxu0 %v1202
      %1272 = vmatprep.subr.mxu0 %v1205
      %1273 = vmatpush1.msra.mxu0 %v1204
      %1274 = vmatprep.subr.mxu0 %v1207
      %1275 = vmatpush1.msra.mxu0 %v1206
      %1276 = vmatprep.subr.mxu0 %v1209
      %1277 = vmatpush1.msra.mxu0 %v1208
      %1278 = vmatprep.subr.mxu0 %v1211
      %1279 = vmatpush1.msra.mxu0 %v1210
      %1280 = vmatprep.subr.mxu0 %v1213
      %1281 = vmatpush1.msra.mxu0 %v1212
      %1282 = vmatprep.subr.mxu0 %v1215
      %1283 = vmatpush1.msra.mxu0 %v1214
      %1284 = vmatprep.subr.mxu0 %v1217
      %1285 = vmatpush1.msra.mxu0 %v1216
      %1286 = vmatprep.subr.mxu0 %v1219
      %1287 = vmatpush1.msra.mxu0 %v1218
      %1288 = vmatprep.subr.mxu0 %v1221
      %1289 = vmatpush1.msra.mxu0 %v1220
      %1290 = vmatprep.subr.mxu0 %v1223
      %1291 = vmatpush1.msra.mxu0 %v1222
      %1292 = vmatprep.subr.mxu0 %v1225
      %1293 = vmatpush1.msra.mxu0 %v1224
      %1294 = vmatprep.subr.mxu0 %v1227
      %1295 = vmatpush1.msra.mxu0 %v1226
      %1296 = vmatprep.subr.mxu0 %v1229
      %1297 = vmatpush1.msra.mxu0 %v1228
      %1298 = vmatprep.subr.mxu0 %v1231
      %1299 = vmatpush1.msra.mxu0 %v1230
      %1300 = vmatprep.subr.mxu0 %v1233
      %1301 = vmatpush1.msra.mxu0 %v1232
      %1302 = vmatprep.subr.mxu0 %v1235
      %1303 = vmatpush1.msra.mxu0 %v1234
      %1304 = vmatprep.subr.mxu0 %v1237
      %1305 = vmatpush1.msra.mxu0 %v1236
      %1306 = vmatprep.subr.mxu0 %v1239
      %1307 = vmatpush1.msra.mxu0 %v1238
      %1308 = vmatprep.subr.mxu0 %v1241
      %1309 = vmatpush1.msra.mxu0 %v1240
      %1310 = vmatprep.subr.mxu0 %v1243
      %1311 = vmatpush1.msra.mxu0 %v1242
      %1312 = vmatprep.subr.mxu0 %v1245
      %1313 = vmatpush1.msra.mxu0 %v1244
      %1314 = vmatprep.subr.mxu0 %v1247
      %1315 = vmatpush1.msra.mxu0 %v1246
      %1316 = vmatprep.subr.mxu0 %v1249
      %1317 = vmatpush1.msra.mxu0 %v1248
      %1318 = vmatprep.subr.mxu0 %v1251
      %1319 = vmatpush1.msra.mxu0 %v1250
      %1320 = vmatprep.subr.mxu0 %v1253
      %1321 = vmatpush1.msra.mxu0 %v1252
      %1322 = vmatprep.mubr.f32.mxu0 %v1256
      %1323 = vmatmul.mubr.f32.gmra.mrb[0].mxu0 %v1254
      %v1324 = vpop.f32.mrb[0].mxu0
      %v1325 = vadd.f32 0.0, %v1324
      %v1326 = vpop.f32.mrb[0].mxu0
      %v1327 = vadd.f32 0.0, %v1326
      %1328 = vdwg.mxu0
      %v1331 = vcombine.low %v1325, %v1327
      %1333 = vst [vmem:[%s231] sm:$0xff] %v1331
      %s1334 = smul.u32 2, %s19
      %p1335 = scmp.lt.s32.totalorder %s18, 1
      %s1336 = scalar_select %p1335, %s18, 1
      %p1337 = scmp.lt.s32.totalorder %s1334, 1
      %s1338 = scalar_select %p1337, %s1334, 1
      %s1339 = smul.addr %s1336, 2
      %s1340 = sadd.s32 %s1338, %s1339
      %s1341 = smul.addr %s1340, 4
      %s1342 = scalar_lea.vmem %s3, %s1341
      // Predicated region
      $region33: #{stn_forward.3} parent=31 // pred_check
        %p1343 = pneg %p124
      $region34: #{stn_forward.3} parent=31 // pred_check_branch
        %1345 = sbr.rel (%p1343) target = $region36
      $region35: #{stn_forward.3} parent=31 // pred_region
        %s1346 = smul.u32 2, %s19
      $region36: #{stn_forward.3} parent=31 // pred_fallthru
        _
    $region32: #{stn_forward.3} parent=5 // pred_fallthru
      _
    %p1347 = scmp.le.s32.totalorder 2, %s9
    // Predicated region
    $region37: #{stn_forward.3} parent=5 // pred_check
      %p1348 = pneg %p1347
    $region38: #{stn_forward.3} parent=5 // pred_check_branch
      %1350 = sbr.rel (%p1348) target = $region40
    $region39: #{stn_forward.3} parent=5 // pred_region
      %s1351 = ssub.s32 %s9, 2
      // Predicated region
      $region41: #{stn_forward.3} parent=39 // pred_check
        %p1352 = pneg %p130
      $region42: #{stn_forward.3} parent=39 // pred_check_branch
        %1354 = sbr.rel (%p1352) target = $region44
      $region43: #{stn_forward.3} parent=39 // pred_region
        %s1355 = smul.u32 2, %s21
        %p1356 = scmp.lt.s32.totalorder %s20, 1
        %s1357 = scalar_select %p1356, %s20, 1
        %p1358 = scmp.lt.s32.totalorder %s1355, 1
        %s1359 = scalar_select %p1358, %s1355, 1
        %s1360 = smul.addr %s1357, 2
        %s1361 = sadd.s32 %s1359, %s1360
        %s1362 = smul.addr %s1361, 4
        %s1363 = scalar_lea.vmem %s3, %s1362
      $region44: #{stn_forward.3} parent=39 // pred_fallthru
        _
    $region40: #{stn_forward.3} parent=5 // pred_fallthru
      _
  $region6: #{stn_forward.3} parent=0 // loop_footer
    %s13 = sadd.s32 1, %s9
  $region7: #{stn_forward.3} parent=0 // loop_footer_branch
    %8 = sbr.rel target = $region3
  $region8: #{stn_forward.3} parent=0 // loop_exit
    _

// kernel: stn_forward.2
$region0: #{stn_forward.2}
  #allocation0 [shape = 'u32[]', space=smem, size = 0x4, offset = 0x4, fixed_abs, tag = 'smem constant byte address 0x4 - core index']
  #allocation1 [shape = 'u32[144,128]{1,0:T(1,128)}', space=vmem, size = 0x12000, scoped, tag = 'internal scratch']
  %s0 = inlined_call_operand.vmem [shape: f32[2,4,256], index: 0, kind: input, shape index: {}]
  %s1 = inlined_call_operand.hbm [shape: f32[4,256,196], index: 1, kind: input, shape index: {}]
  %s2 = inlined_call_operand.vmem [shape: f32[25,8,4], index: 2, kind: input, shape index: {}]
  %s3 = inlined_call_operand.vmem [shape: f32[8,1], index: 3, kind: input, shape index: {}]
  %s4 = inlined_call_operand.vmem [shape: f32[4,144,100], index: 4, kind: input, shape index: {}]
  %s5 = inlined_call_operand.vmem [shape: f32[25,8,8], index: 5, kind: input, shape index: {}]
  %s6 = inlined_call_operand.vmem [shape: f32[8,1], index: 6, kind: input, shape index: {}]
  %s7 = inlined_call_operand.hbm [shape: f32[4,64,4], index: 7, kind: input, shape index: {}]
  %s8 = inlined_call_operand.vmem [shape: f32[4,32,8], index: 8, kind: input, shape index: {}]
  %s9 = inlined_call_operand.vmem [shape: f32[32,1], index: 9, kind: input, shape index: {}]
  %s10 = inlined_call_operand.vmem [shape: f32[6,32], index: 10, kind: input, shape index: {}]
  %s11 = inlined_call_operand.vmem [shape: f32[6,1], index: 11, kind: input, shape index: {}]
  %s12 = inlined_call_operand.vmem [shape: f32[2,6,1], index: 12, kind: output, shape index: {}]
  %s13 = sld [smem:[#allocation0]]
  $region89: #{stn_forward.2} parent=0
    _
  %s15 = ssub.s32 1, %s13
  %s16 = scalar_select 0, %s15, %s13
  $region1: #{stn_forward.2} parent=0
    #allocation2 [shape = 'u8[1048576]{0}', space=vmem, size = 0x100000, scoped, tag = 'input window, operand 1, single buffered']
    #allocation3 [shape = 's32[2]{0}', space=sflag, size = 0x8, scoped, tag = 'scoped memory for stn_forward.2']
    #allocation4 [shape = 'u8[131072]{0}', space=vmem, size = 0x20000, scoped, tag = 'input window, operand 7, single buffered']
    #allocation5 [shape = 's32[1]{0}', space=sflag, size = 0x4, scoped, tag = 'scoped memory for stn_forward.2']
    %17 = vsyncpa [#allocation3], 0
    %18 = vsyncpa [#allocation5], 0
    loop: start=0, step=1, limit=4
    $region2: #{stn_forward.2} parent=1 // loop_pre_header
      _
    $region3: #{stn_forward.2} parent=1 // loop_header
      %s20 = sphi 0, %s24
      %p21 = scmp.ge.s32.totalorder %s20, 4
      %s30 = sphi 0, %s32
      %s33 = sphi 0, %s30
      %s34 = sphi 0, %s33
      %s50 = sphi 0, %s34
      %s54 = sphi 0, %s54
      %s56 = sphi 0, %s54
      %s57 = sphi 0, %s56
      %s71 = sphi 0, %s57
      %s75 = sphi 0, %s75
      %s77 = sphi 0, %s75
      %s78 = sphi 0, %s77
      %s92 = sphi 0, %s78
      %s96 = sphi 0, %s96
      %s98 = sphi 0, %s96
      %s99 = sphi 0, %s98
      %s113 = sphi 0, %s99
      %s117 = sphi 0, %s117
      %s119 = sphi 0, %s117
      %s120 = sphi 0, %s119
      %s134 = sphi 0, %s120
      %s138 = sphi 0, %s138
      %s140 = sphi 0, %s138
      %s141 = sphi 0, %s140
      %s155 = sphi 0, %s141
      %s159 = sphi 0, %s159
      %s161 = sphi 0, %s159
      %s162 = sphi 0, %s161
      %s176 = sphi 0, %s162
      %s180 = sphi 0, %s180
      %s182 = sphi 0, %s180
      %s183 = sphi 0, %s182
      %s197 = sphi 0, %s183
      %s201 = sphi 0, %s201
      %s203 = sphi 0, %s201
      %s204 = sphi 0, %s203
      %s218 = sphi 0, %s204
      %s222 = sphi 0, %s222
      %s224 = sphi 0, %s222
      %s225 = sphi 0, %s224
      %s239 = sphi 0, %s225
      %s243 = sphi 0, %s243
      %s245 = sphi 0, %s243
      %s246 = sphi 0, %s245
      %s260 = sphi 0, %s246
      %s264 = sphi 0, %s264
      %s266 = sphi 0, %s264
      %s267 = sphi 0, %s266
      %s281 = sphi 0, %s267
      %s287 = sphi 0, %s289
      %s290 = sphi 0, %s287
      %s291 = sphi 0, %s290
      %s307 = sphi 0, %s291
    $region4: #{stn_forward.2} parent=1 // loop_header_branch
      %23 = sbr.rel (%p21) target = $region8
    $region5: #{stn_forward.2} parent=1 // loop_body
      %s25 = ssub.s32 %s20, 1
      %s26 = ssub.s32 %s20, 2
      %s27 = sadd.s32 %s20, 1
      %s28 = ssub.s32 %s20, %s27
      %p29 = scmp.eq.s32.totalorder %s28, 0
      %s31 = sadd.s32 %s30, 1
      %s32 = scalar_select %p29, %s30, %s31
      %p35 = pneg %p29
      %p36 = scmp.eq.s32.totalorder %s20, 1
      %p37 = por %p35, %p36
      %p38 = scmp.ne.s32.totalorder %s30, %s33
      %p39 = scmp.eq.s32.totalorder %s20, 0
      %p40 = por %p38, %p39
      %p41 = scmp.ne.s32.totalorder %s30, %s33
      %p42 = scmp.eq.s32.totalorder %s25, 1
      %p43 = por %p41, %p42
      %p44 = scmp.ne.s32.totalorder %s33, %s34
      %p45 = scmp.eq.s32.totalorder %s25, 0
      %p46 = por %p44, %p45
      %p47 = scmp.ne.s32.totalorder %s33, %s34
      %p48 = scmp.eq.s32.totalorder %s26, 1
      %p49 = por %p47, %p48
      %p51 = scmp.ne.s32.totalorder %s34, %s50
      %p52 = scmp.eq.s32.totalorder %s26, 0
      %p53 = por %p51, %p52
      %s55 = sadd.s32 %s54, 1
      %p58 = scmp.eq.s32.totalorder %s20, 1
      %p59 = scmp.ne.s32.totalorder %s54, %s56
      %p60 = scmp.eq.s32.totalorder %s20, 0
      %p61 = por %p59, %p60
      %p62 = scmp.ne.s32.totalorder %s54, %s56
      %p63 = scmp.eq.s32.totalorder %s25, 1
      %p64 = por %p62, %p63
      %p65 = scmp.ne.s32.totalorder %s56, %s57
      %p66 = scmp.eq.s32.totalorder %s25, 0
      %p67 = por %p65, %p66
      %p68 = scmp.ne.s32.totalorder %s56, %s57
      %p69 = scmp.eq.s32.totalorder %s26, 1
      %p70 = por %p68, %p69
      %p72 = scmp.ne.s32.totalorder %s57, %s71
      %p73 = scmp.eq.s32.totalorder %s26, 0
      %p74 = por %p72, %p73
      %s76 = sadd.s32 %s75, 1
      %p79 = scmp.eq.s32.totalorder %s20, 1
      %p80 = scmp.ne.s32.totalorder %s75, %s77
      %p81 = scmp.eq.s32.totalorder %s20, 0
      %p82 = por %p80, %p81
      %p83 = scmp.ne.s32.totalorder %s75, %s77
      %p84 = scmp.eq.s32.totalorder %s25, 1
      %p85 = por %p83, %p84
      %p86 = scmp.ne.s32.totalorder %s77, %s78
      %p87 = scmp.eq.s32.totalorder %s25, 0
      %p88 = por %p86, %p87
      %p89 = scmp.ne.s32.totalorder %s77, %s78
      %p90 = scmp.eq.s32.totalorder %s26, 1
      %p91 = por %p89, %p90
      %p93 = scmp.ne.s32.totalorder %s78, %s92
      %p94 = scmp.eq.s32.totalorder %s26, 0
      %p95 = por %p93, %p94
      %s97 = sadd.s32 %s96, 1
      %p100 = scmp.eq.s32.totalorder %s20, 1
      %p101 = scmp.ne.s32.totalorder %s96, %s98
      %p102 = scmp.eq.s32.totalorder %s20, 0
      %p103 = por %p101, %p102
      %p104 = scmp.ne.s32.totalorder %s96, %s98
      %p105 = scmp.eq.s32.totalorder %s25, 1
      %p106 = por %p104, %p105
      %p107 = scmp.ne.s32.totalorder %s98, %s99
      %p108 = scmp.eq.s32.totalorder %s25, 0
      %p109 = por %p107, %p108
      %p110 = scmp.ne.s32.totalorder %s98, %s99
      %p111 = scmp.eq.s32.totalorder %s26, 1
      %p112 = por %p110, %p111
      %p114 = scmp.ne.s32.totalorder %s99, %s113
      %p115 = scmp.eq.s32.totalorder %s26, 0
      %p116 = por %p114, %p115
      %s118 = sadd.s32 %s117, 1
      %p121 = scmp.eq.s32.totalorder %s20, 1
      %p122 = scmp.ne.s32.totalorder %s117, %s119
      %p123 = scmp.eq.s32.totalorder %s20, 0
      %p124 = por %p122, %p123
      %p125 = scmp.ne.s32.totalorder %s117, %s119
      %p126 = scmp.eq.s32.totalorder %s25, 1
      %p127 = por %p125, %p126
      %p128 = scmp.ne.s32.totalorder %s119, %s120
      %p129 = scmp.eq.s32.totalorder %s25, 0
      %p130 = por %p128, %p129
      %p131 = scmp.ne.s32.totalorder %s119, %s120
      %p132 = scmp.eq.s32.totalorder %s26, 1
      %p133 = por %p131, %p132
      %p135 = scmp.ne.s32.totalorder %s120, %s134
      %p136 = scmp.eq.s32.totalorder %s26, 0
      %p137 = por %p135, %p136
      %s139 = sadd.s32 %s138, 1
      %p142 = scmp.eq.s32.totalorder %s20, 1
      %p143 = scmp.ne.s32.totalorder %s138, %s140
      %p144 = scmp.eq.s32.totalorder %s20, 0
      %p145 = por %p143, %p144
      %p146 = scmp.ne.s32.totalorder %s138, %s140
      %p147 = scmp.eq.s32.totalorder %s25, 1
      %p148 = por %p146, %p147
      %p149 = scmp.ne.s32.totalorder %s140, %s141
      %p150 = scmp.eq.s32.totalorder %s25, 0
      %p151 = por %p149, %p150
      %p152 = scmp.ne.s32.totalorder %s140, %s141
      %p153 = scmp.eq.s32.totalorder %s26, 1
      %p154 = por %p152, %p153
      %p156 = scmp.ne.s32.totalorder %s141, %s155
      %p157 = scmp.eq.s32.totalorder %s26, 0
      %p158 = por %p156, %p157
      %s160 = sadd.s32 %s159, 1
      %p163 = scmp.eq.s32.totalorder %s20, 1
      %p164 = scmp.ne.s32.totalorder %s159, %s161
      %p165 = scmp.eq.s32.totalorder %s20, 0
      %p166 = por %p164, %p165
      %p167 = scmp.ne.s32.totalorder %s159, %s161
      %p168 = scmp.eq.s32.totalorder %s25, 1
      %p169 = por %p167, %p168
      %p170 = scmp.ne.s32.totalorder %s161, %s162
      %p171 = scmp.eq.s32.totalorder %s25, 0
      %p172 = por %p170, %p171
      %p173 = scmp.ne.s32.totalorder %s161, %s162
      %p174 = scmp.eq.s32.totalorder %s26, 1
      %p175 = por %p173, %p174
      %p177 = scmp.ne.s32.totalorder %s162, %s176
      %p178 = scmp.eq.s32.totalorder %s26, 0
      %p179 = por %p177, %p178
      %s181 = sadd.s32 %s180, 1
      %p184 = scmp.eq.s32.totalorder %s20, 1
      %p185 = scmp.ne.s32.totalorder %s180, %s182
      %p186 = scmp.eq.s32.totalorder %s20, 0
      %p187 = por %p185, %p186
      %p188 = scmp.ne.s32.totalorder %s180, %s182
      %p189 = scmp.eq.s32.totalorder %s25, 1
      %p190 = por %p188, %p189
      %p191 = scmp.ne.s32.totalorder %s182, %s183
      %p192 = scmp.eq.s32.totalorder %s25, 0
      %p193 = por %p191, %p192
      %p194 = scmp.ne.s32.totalorder %s182, %s183
      %p195 = scmp.eq.s32.totalorder %s26, 1
      %p196 = por %p194, %p195
      %p198 = scmp.ne.s32.totalorder %s183, %s197
      %p199 = scmp.eq.s32.totalorder %s26, 0
      %p200 = por %p198, %p199
      %s202 = sadd.s32 %s201, 1
      %p205 = scmp.eq.s32.totalorder %s20, 1
      %p206 = scmp.ne.s32.totalorder %s201, %s203
      %p207 = scmp.eq.s32.totalorder %s20, 0
      %p208 = por %p206, %p207
      %p209 = scmp.ne.s32.totalorder %s201, %s203
      %p210 = scmp.eq.s32.totalorder %s25, 1
      %p211 = por %p209, %p210
      %p212 = scmp.ne.s32.totalorder %s203, %s204
      %p213 = scmp.eq.s32.totalorder %s25, 0
      %p214 = por %p212, %p213
      %p215 = scmp.ne.s32.totalorder %s203, %s204
      %p216 = scmp.eq.s32.totalorder %s26, 1
      %p217 = por %p215, %p216
      %p219 = scmp.ne.s32.totalorder %s204, %s218
      %p220 = scmp.eq.s32.totalorder %s26, 0
      %p221 = por %p219, %p220
      %s223 = sadd.s32 %s222, 1
      %p226 = scmp.eq.s32.totalorder %s20, 1
      %p227 = scmp.ne.s32.totalorder %s222, %s224
      %p228 = scmp.eq.s32.totalorder %s20, 0
      %p229 = por %p227, %p228
      %p230 = scmp.ne.s32.totalorder %s222, %s224
      %p231 = scmp.eq.s32.totalorder %s25, 1
      %p232 = por %p230, %p231
      %p233 = scmp.ne.s32.totalorder %s224, %s225
      %p234 = scmp.eq.s32.totalorder %s25, 0
      %p235 = por %p233, %p234
      %p236 = scmp.ne.s32.totalorder %s224, %s225
      %p237 = scmp.eq.s32.totalorder %s26, 1
      %p238 = por %p236, %p237
      %p240 = scmp.ne.s32.totalorder %s225, %s239
      %p241 = scmp.eq.s32.totalorder %s26, 0
      %p242 = por %p240, %p241
      %s244 = sadd.s32 %s243, 1
      %p247 = scmp.eq.s32.totalorder %s20, 1
      %p248 = scmp.ne.s32.totalorder %s243, %s245
      %p249 = scmp.eq.s32.totalorder %s20, 0
      %p250 = por %p248, %p249
      %p251 = scmp.ne.s32.totalorder %s243, %s245
      %p252 = scmp.eq.s32.totalorder %s25, 1
      %p253 = por %p251, %p252
      %p254 = scmp.ne.s32.totalorder %s245, %s246
      %p255 = scmp.eq.s32.totalorder %s25, 0
      %p256 = por %p254, %p255
      %p257 = scmp.ne.s32.totalorder %s245, %s246
      %p258 = scmp.eq.s32.totalorder %s26, 1
      %p259 = por %p257, %p258
      %p261 = scmp.ne.s32.totalorder %s246, %s260
      %p262 = scmp.eq.s32.totalorder %s26, 0
      %p263 = por %p261, %p262
      %s265 = sadd.s32 %s264, 1
      %p268 = scmp.eq.s32.totalorder %s20, 1
      %p269 = scmp.ne.s32.totalorder %s264, %s266
      %p270 = scmp.eq.s32.totalorder %s20, 0
      %p271 = por %p269, %p270
      %p272 = scmp.ne.s32.totalorder %s264, %s266
      %p273 = scmp.eq.s32.totalorder %s25, 1
      %p274 = por %p272, %p273
      %p275 = scmp.ne.s32.totalorder %s266, %s267
      %p276 = scmp.eq.s32.totalorder %s25, 0
      %p277 = por %p275, %p276
      %p278 = scmp.ne.s32.totalorder %s266, %s267
      %p279 = scmp.eq.s32.totalorder %s26, 1
      %p280 = por %p278, %p279
      %p282 = scmp.ne.s32.totalorder %s267, %s281
      %p283 = scmp.eq.s32.totalorder %s26, 0
      %p284 = por %p282, %p283
      %s285 = ssub.s32 %s20, %s27
      %p286 = scmp.eq.s32.totalorder %s285, 0
      %s288 = sadd.s32 %s287, 1
      %s289 = scalar_select %p286, %s287, %s288
      %p292 = pneg %p286
      %p293 = scmp.eq.s32.totalorder %s20, 1
      %p294 = por %p292, %p293
      %p295 = scmp.ne.s32.totalorder %s287, %s290
      %p296 = scmp.eq.s32.totalorder %s20, 0
      %p297 = por %p295, %p296
      %p298 = scmp.ne.s32.totalorder %s287, %s290
      %p299 = scmp.eq.s32.totalorder %s25, 1
      %p300 = por %p298, %p299
      %p301 = scmp.ne.s32.totalorder %s290, %s291
      %p302 = scmp.eq.s32.totalorder %s25, 0
      %p303 = por %p301, %p302
      %p304 = scmp.ne.s32.totalorder %s290, %s291
      %p305 = scmp.eq.s32.totalorder %s26, 1
      %p306 = por %p304, %p305
      %p308 = scmp.ne.s32.totalorder %s291, %s307
      %p309 = scmp.eq.s32.totalorder %s26, 0
      %p310 = por %p308, %p309
      %p311 = scmp.le.s32.totalorder 1, %s20
      %p312 = scmp.lt.s32.totalorder %s20, 3
      %p313 = pnand %p311, %p312
      %p314 = pneg %p313
      // Predicated region
      $region9: #{stn_forward.2} parent=5 // pred_check
        _
      $region10: #{stn_forward.2} parent=5 // pred_check_branch
        %316 = sbr.rel (%p313) target = $region12
      $region11: #{stn_forward.2} parent=5 // pred_region
        %s317 = ssub.s32 %s20, 1
        // Predicated region
        $region13: #{stn_forward.2} parent=11 // pred_check
          %p318 = pneg %p67
        $region14: #{stn_forward.2} parent=11 // pred_check_branch
          %320 = sbr.rel (%p318) target = $region16
        $region15: #{stn_forward.2} parent=11 // pred_region
          %s322 = ssub.s32 32768, 32768
          %323 = vsyncadd [#allocation3], %s322
          %s324 = sshll.u32 [#allocation2], 4
          %s325 = int_to_ptr.vmem [resolvable:$true] %s324
          %330 = dma.hbm_to_vmem [thread:$0]  %s1, 32768, %s325, [#allocation3], 256, 256, 16
        $region16: #{stn_forward.2} parent=11 // pred_fallthru
          _
        // Predicated region
        $region17: #{stn_forward.2} parent=11 // pred_check
          %p331 = pneg %p88
        $region18: #{stn_forward.2} parent=11 // pred_check_branch
          %333 = sbr.rel (%p331) target = $region20
        $region19: #{stn_forward.2} parent=11 // pred_region
          _
        $region20: #{stn_forward.2} parent=11 // pred_fallthru
          _
        // Predicated region
        $region21: #{stn_forward.2} parent=11 // pred_check
          %p334 = pneg %p109
        $region22: #{stn_forward.2} parent=11 // pred_check_branch
          %336 = sbr.rel (%p334) target = $region24
        $region23: #{stn_forward.2} parent=11 // pred_region
          _
        $region24: #{stn_forward.2} parent=11 // pred_fallthru
          _
        // Predicated region
        $region25: #{stn_forward.2} parent=11 // pred_check
          %p337 = pneg %p130
        $region26: #{stn_forward.2} parent=11 // pred_check_branch
          %339 = sbr.rel (%p337) target = $region28
        $region27: #{stn_forward.2} parent=11 // pred_region
          _
        $region28: #{stn_forward.2} parent=11 // pred_fallthru
          _
        // Predicated region
        $region29: #{stn_forward.2} parent=11 // pred_check
          %p340 = pneg %p151
        $region30: #{stn_forward.2} parent=11 // pred_check_branch
          %342 = sbr.rel (%p340) target = $region32
        $region31: #{stn_forward.2} parent=11 // pred_region
          _
        $region32: #{stn_forward.2} parent=11 // pred_fallthru
          _
        // Predicated region
        $region33: #{stn_forward.2} parent=11 // pred_check
          %p343 = pneg %p172
        $region34: #{stn_forward.2} parent=11 // pred_check_branch
          %345 = sbr.rel (%p343) target = $region36
        $region35: #{stn_forward.2} parent=11 // pred_region
          _
        $region36: #{stn_forward.2} parent=11 // pred_fallthru
          _
        // Predicated region
        $region37: #{stn_forward.2} parent=11 // pred_check
          %p346 = pneg %p193
        $region38: #{stn_forward.2} parent=11 // pred_check_branch
          %348 = sbr.rel (%p346) target = $region40
        $region39: #{stn_forward.2} parent=11 // pred_region
          %s350 = ssub.s32 4096, 4096
          %351 = vsyncadd [#allocation5], %s350
          %s352 = sshll.u32 [#allocation4], 4
          %s353 = int_to_ptr.vmem [resolvable:$true] %s352
          %358 = dma.hbm_to_vmem [thread:$0]  %s7, 4096, %s353, [#allocation5], 128, 128, 8
        $region40: #{stn_forward.2} parent=11 // pred_fallthru
          _
        // Predicated region
        $region41: #{stn_forward.2} parent=11 // pred_check
          %p359 = pneg %p214
        $region42: #{stn_forward.2} parent=11 // pred_check_branch
          %361 = sbr.rel (%p359) target = $region44
        $region43: #{stn_forward.2} parent=11 // pred_region
          _
        $region44: #{stn_forward.2} parent=11 // pred_fallthru
          _
        // Predicated region
        $region45: #{stn_forward.2} parent=11 // pred_check
          %p362 = pneg %p235
        $region46: #{stn_forward.2} parent=11 // pred_check_branch
          %364 = sbr.rel (%p362) target = $region48
        $region47: #{stn_forward.2} parent=11 // pred_region
          _
        $region48: #{stn_forward.2} parent=11 // pred_fallthru
          _
        // Predicated region
        $region49: #{stn_forward.2} parent=11 // pred_check
          %p365 = pneg %p256
        $region50: #{stn_forward.2} parent=11 // pred_check_branch
          %367 = sbr.rel (%p365) target = $region52
        $region51: #{stn_forward.2} parent=11 // pred_region
          _
        $region52: #{stn_forward.2} parent=11 // pred_fallthru
          _
        // Predicated region
        $region53: #{stn_forward.2} parent=11 // pred_check
          %p368 = pneg %p277
        $region54: #{stn_forward.2} parent=11 // pred_check_branch
          %370 = sbr.rel (%p368) target = $region56
        $region55: #{stn_forward.2} parent=11 // pred_region
          _
        $region56: #{stn_forward.2} parent=11 // pred_fallthru
          _
      $region12: #{stn_forward.2} parent=5 // pred_fallthru
        _
      %p371 = scmp.lt.s32.totalorder %s20, 2
      // Predicated region
      $region57: #{stn_forward.2} parent=5 // pred_check
        %p372 = pneg %p371
      $region58: #{stn_forward.2} parent=5 // pred_check_branch
        %374 = sbr.rel (%p372) target = $region60
      $region59: #{stn_forward.2} parent=5 // pred_region
        // Predicated region
        $region61: #{stn_forward.2} parent=59 // pred_check
          %p375 = pneg %p40
        $region62: #{stn_forward.2} parent=59 // pred_check_branch
          %377 = sbr.rel (%p375) target = $region64
        $region63: #{stn_forward.2} parent=59 // pred_region
          %p378 = scmp.lt.s32.totalorder %s20, 1
          %s379 = scalar_select %p378, %s20, 1
          %s380 = smul.addr %s379, 2
          %s381 = smul.addr %s380, 4
          %s382 = scalar_lea.vmem %s0, %s381
        $region64: #{stn_forward.2} parent=59 // pred_fallthru
          _
      $region60: #{stn_forward.2} parent=5 // pred_fallthru
        _
      %p383 = scmp.le.s32.totalorder 1, %s20
      %p384 = scmp.lt.s32.totalorder %s20, 3
      %p385 = pnand %p383, %p384
      %p386 = pneg %p385
      // Predicated region
      $region65: #{stn_forward.2} parent=5 // pred_check
        _
      $region66: #{stn_forward.2} parent=5 // pred_check_branch
        %388 = sbr.rel (%p385) target = $region68
      $region67: #{stn_forward.2} parent=5 // pred_region
        %s389 = ssub.s32 %s20, 1
        // Predicated region
        $region69: #{stn_forward.2} parent=67 // pred_check
          %p390 = pneg %p67
        $region70: #{stn_forward.2} parent=67 // pred_check_branch
          %392 = sbr.rel (%p390) target = $region72
        $region71: #{stn_forward.2} parent=67 // pred_region
          %393 = dma.done [#allocation3], 32768
        $region72: #{stn_forward.2} parent=67 // pred_fallthru
          _
        // Predicated region
        $region73: #{stn_forward.2} parent=67 // pred_check
          %p394 = pneg %p193
        $region74: #{stn_forward.2} parent=67 // pred_check_branch
          %396 = sbr.rel (%p394) target = $region76
        $region75: #{stn_forward.2} parent=67 // pred_region
          %397 = dma.done [#allocation5], 4096
        $region76: #{stn_forward.2} parent=67 // pred_fallthru
          _
        %p398 = scmp.lt.s32.totalorder %s25, 1
        %s399 = scalar_select %p398, %s25, 1
        %s400 = smul.addr %s399, 2
        %s401 = smul.addr %s400, 4
        %s402 = scalar_lea.vmem %s0, %s401
        %p403 = pneg %p46
        %p404 = pneg %p43
        %p405 = pneg %p67
        %p406 = pneg %p64
        %p407 = pneg %p88
        %p408 = pneg %p85
        %p409 = pneg %p109
        %p410 = pneg %p106
        %p411 = pneg %p130
        %p412 = pneg %p127
        %p413 = pneg %p151
        %p414 = pneg %p148
        %p415 = pneg %p172
        %p416 = pneg %p169
        %p417 = pneg %p193
        %p418 = pneg %p190
        %p419 = pneg %p214
        %p420 = pneg %p211
        %p421 = pneg %p235
        %p422 = pneg %p232
        %p423 = pneg %p256
        %p424 = pneg %p253
        %p425 = pneg %p277
        %p426 = pneg %p274
        %p427 = pneg %p303
        %p428 = pneg %p300
        %p429 = scmp.lt.s32.totalorder %s25, 1
        %s430 = scalar_select %p429, %s25, 1
        %s431 = smul.addr %s430, 8
        %s432 = scalar_lea.vmem %s12, %s431
        %p433 = scmp.lt.s32.totalorder %s25, 1
        %s434 = scalar_select %p433, %s25, 1
        %s435 = smul.addr %s434, 2
        %s436 = smul.addr %s435, 4
        %s437 = scalar_lea.vmem %s0, %s436
        %p438 = scmp.lt.s32.totalorder %s25, 1
        %s439 = scalar_select %p438, %s25, 1
        %s440 = smul.addr %s439, 8
        %s441 = scalar_lea.vmem %s12, %s440
        %v442 = vld [vmem:[%s437] sm:$0xff]
        %v443 = vld [vmem:[#allocation2] sm:$0xff]
        %v444 = vld [vmem:[#allocation2 + $0x8] sm:$0xff]
        %v445 = vld [vmem:[#allocation2 + $0x10] sm:$0xff]
        %v446 = vld [vmem:[#allocation2 + $0x18] sm:$0xff]
        %v447 = vld [vmem:[#allocation2 + $0x20] sm:$0xff]
        %v448 = vld [vmem:[#allocation2 + $0x28] sm:$0xff]
        %v449 = vld [vmem:[#allocation2 + $0x30] sm:$0xff]
        %v450 = vld [vmem:[#allocation2 + $0x38] sm:$0xff]
        %v451 = vld [vmem:[#allocation2 + $0x40] sm:$0xff]
        %v452 = vld [vmem:[#allocation2 + $0x48] sm:$0xff]
        %v453 = vld [vmem:[#allocation2 + $0x50] sm:$0xff]
        %v454 = vld [vmem:[#allocation2 + $0x58] sm:$0xff]
        %v455 = vld [vmem:[#allocation2 + $0x60] sm:$0xff]
        %v456 = vld [vmem:[#allocation2 + $0x68] sm:$0xff]
        %v457 = vld [vmem:[#allocation2 + $0x70] sm:$0xff]
        %v458 = vld [vmem:[#allocation2 + $0x78] sm:$0xff]
        %v459 = vld [vmem:[#allocation2 + $0x80] sm:$0xff]
        %v460 = vld [vmem:[#allocation2 + $0x88] sm:$0xff]
        %v461 = vld [vmem:[#allocation2 + $0x90] sm:$0xff]
        %v462 = vld [vmem:[#allocation2 + $0x98] sm:$0xff]
        %v463 = vld [vmem:[#allocation2 + $0xa0] sm:$0xff]
        %v464 = vld [vmem:[#allocation2 + $0xa8] sm:$0xff]
        %v465 = vld [vmem:[#allocation2 + $0xb0] sm:$0xff]
        %v466 = vld [vmem:[#allocation2 + $0xb8] sm:$0xff]
        %v467 = vld [vmem:[#allocation2 + $0xc0] sm:$0xff]
        %v468 = vld [vmem:[#allocation2 + $0xc8] sm:$0xff]
        %v469 = vld [vmem:[#allocation2 + $0xd0] sm:$0xff]
        %v470 = vld [vmem:[#allocation2 + $0xd8] sm:$0xff]
        %v471 = vld [vmem:[#allocation2 + $0xe0] sm:$0xff]
        %v472 = vld [vmem:[#allocation2 + $0xe8] sm:$0xff]
        %v473 = vld [vmem:[#allocation2 + $0xf0] sm:$0xff]
        %v474 = vld [vmem:[#allocation2 + $0xf8] sm:$0xff]
        %v475 = vld [vmem:[#allocation2 + $0x100] sm:$0xff]
        %v476 = vld [vmem:[#allocation2 + $0x108] sm:$0xff]
        %v477 = vld [vmem:[#allocation2 + $0x110] sm:$0xff]
        %v478 = vld [vmem:[#allocation2 + $0x118] sm:$0xff]
        %v479 = vld [vmem:[#allocation2 + $0x120] sm:$0xff]
        %v480 = vld [vmem:[#allocation2 + $0x128] sm:$0xff]
        %v481 = vld [vmem:[#allocation2 + $0x130] sm:$0xff]
        %v482 = vld [vmem:[#allocation2 + $0x138] sm:$0xff]
        %v483 = vld [vmem:[#allocation2 + $0x140] sm:$0xff]
        %v484 = vld [vmem:[#allocation2 + $0x148] sm:$0xff]
        %v485 = vld [vmem:[#allocation2 + $0x150] sm:$0xff]
        %v486 = vld [vmem:[#allocation2 + $0x158] sm:$0xff]
        %v487 = vld [vmem:[#allocation2 + $0x160] sm:$0xff]
        %v488 = vld [vmem:[#allocation2 + $0x168] sm:$0xff]
        %v489 = vld [vmem:[#allocation2 + $0x170] sm:$0xff]
        %v490 = vld [vmem:[#allocation2 + $0x178] sm:$0xff]
        %v491 = vld [vmem:[#allocation2 + $0x180] sm:$0xff]
        %v492 = vld [vmem:[#allocation2 + $0x188] sm:$0xff]
        %v493 = vld [vmem:[#allocation2 + $0x190] sm:$0xff]
        %v494 = vld [vmem:[#allocation2 + $0x198] sm:$0xff]
        %v495 = vld [vmem:[#allocation2 + $0x1a0] sm:$0xff]
        %v496 = vld [vmem:[#allocation2 + $0x1a8] sm:$0xff]
        %v497 = vld [vmem:[#allocation2 + $0x1b0] sm:$0xff]
        %v498 = vld [vmem:[#allocation2 + $0x1b8] sm:$0xff]
        %v499 = vld [vmem:[#allocation2 + $0x1c0] sm:$0xff]
        %v500 = vld [vmem:[#allocation2 + $0x1c8] sm:$0xff]
        %v501 = vld [vmem:[#allocation2 + $0x1d0] sm:$0xff]
        %v502 = vld [vmem:[#allocation2 + $0x1d8] sm:$0xff]
        %v503 = vld [vmem:[#allocation2 + $0x1e0] sm:$0xff]
        %v504 = vld [vmem:[#allocation2 + $0x1e8] sm:$0xff]
        %v505 = vld [vmem:[#allocation2 + $0x1f0] sm:$0xff]
        %v506 = vld [vmem:[#allocation2 + $0x1f8] sm:$0xff]
        %v508 = vcombine.high %v442, %v442
        %510 = vmatprep.subr.mxu0 %v444
        %511 = vmatpush1.msra.mxu0 %v443
        %512 = vmatprep.subr.mxu0 %v446
        %513 = vmatpush1.msra.mxu0 %v445
        %514 = vmatprep.subr.mxu0 %v448
        %515 = vmatpush1.msra.mxu0 %v447
        %516 = vmatprep.subr.mxu0 %v450
        %517 = vmatpush1.msra.mxu0 %v449
        %518 = vmatprep.subr.mxu0 %v452
        %519 = vmatpush1.msra.mxu0 %v451
        %520 = vmatprep.subr.mxu0 %v454
        %521 = vmatpush1.msra.mxu0 %v453
        %522 = vmatprep.subr.mxu0 %v456
        %523 = vmatpush1.msra.mxu0 %v455
        %524 = vmatprep.subr.mxu0 %v458
        %525 = vmatpush1.msra.mxu0 %v457
        %526 = vmatprep.subr.mxu0 %v460
        %527 = vmatpush1.msra.mxu0 %v459
        %528 = vmatprep.subr.mxu0 %v462
        %529 = vmatpush1.msra.mxu0 %v461
        %530 = vmatprep.subr.mxu0 %v464
        %531 = vmatpush1.msra.mxu0 %v463
        %532 = vmatprep.subr.mxu0 %v466
        %533 = vmatpush1.msra.mxu0 %v465
        %534 = vmatprep.subr.mxu0 %v468
        %535 = vmatpush1.msra.mxu0 %v467
        %536 = vmatprep.subr.mxu0 %v470
        %537 = vmatpush1.msra.mxu0 %v469
        %538 = vmatprep.subr.mxu0 %v472
        %539 = vmatpush1.msra.mxu0 %v471
        %540 = vmatprep.subr.mxu0 %v474
        %541 = vmatpush1.msra.mxu0 %v473
        %542 = vmatprep.subr.mxu0 %v476
        %543 = vmatpush1.msra.mxu0 %v475
        %544 = vmatprep.subr.mxu0 %v478
        %545 = vmatpush1.msra.mxu0 %v477
        %546 = vmatprep.subr.mxu0 %v480
        %547 = vmatpush1.msra.mxu0 %v479
        %548 = vmatprep.subr.mxu0 %v482
        %549 = vmatpush1.msra.mxu0 %v481
        %550 = vmatprep.subr.mxu0 %v484
        %551 = vmatpush1.msra.mxu0 %v483
        %552 = vmatprep.subr.mxu0 %v486
        %553 = vmatpush1.msra.mxu0 %v485
        %554 = vmatprep.subr.mxu0 %v488
        %555 = vmatpush1.msra.mxu0 %v487
        %556 = vmatprep.subr.mxu0 %v490
        %557 = vmatpush1.msra.mxu0 %v489
        %558 = vmatprep.subr.mxu0 %v492
        %559 = vmatpush1.msra.mxu0 %v491
        %560 = vmatprep.subr.mxu0 %v494
        %561 = vmatpush1.msra.mxu0 %v493
        %562 = vmatprep.subr.mxu0 %v496
        %563 = vmatpush1.msra.mxu0 %v495
        %564 = vmatprep.subr.mxu0 %v498
        %565 = vmatpush1.msra.mxu0 %v497
        %566 = vmatprep.subr.mxu0 %v500
        %567 = vmatpush1.msra.mxu0 %v499
        %568 = vmatprep.subr.mxu0 %v502
        %569 = vmatpush1.msra.mxu0 %v501
        %570 = vmatprep.subr.mxu0 %v504
        %571 = vmatpush1.msra.mxu0 %v503
        %572 = vmatprep.subr.mxu0 %v506
        %573 = vmatpush1.msra.mxu0 %v505
        %574 = vmatprep.mubr.f32.mxu0 %v508
        %575 = vmatmul.mubr.f32.gmra.mrb[0].mxu0 %v442
        %v576 = vpop.f32.mrb[0].mxu0
        %v577 = vadd.f32 0.0, %v576
        %v578 = vpop.f32.mrb[0].mxu0
        %v579 = vadd.f32 0.0, %v578
        %580 = vdwg.mxu0
        %s581 = scalar_lea.vmem [#allocation2], 512
        %v582 = vld [vmem:[%s581] sm:$0xff]
        %v583 = vld [vmem:[%s581 + $0x8] sm:$0xff]
        %v584 = vld [vmem:[%s581 + $0x10] sm:$0xff]
        %v585 = vld [vmem:[%s581 + $0x18] sm:$0xff]
        %v586 = vld [vmem:[%s581 + $0x20] sm:$0xff]
        %v587 = vld [vmem:[%s581 + $0x28] sm:$0xff]
        %v588 = vld [vmem:[%s581 + $0x30] sm:$0xff]
        %v589 = vld [vmem:[%s581 + $0x38] sm:$0xff]
        %v590 = vld [vmem:[%s581 + $0x40] sm:$0xff]
        %v591 = vld [vmem:[%s581 + $0x48] sm:$0xff]
        %v592 = vld [vmem:[%s581 + $0x50] sm:$0xff]
        %v593 = vld [vmem:[%s581 + $0x58] sm:$0xff]
        %v594 = vld [vmem:[%s581 + $0x60] sm:$0xff]
        %v595 = vld [vmem:[%s581 + $0x68] sm:$0xff]
        %v596 = vld [vmem:[%s581 + $0x70] sm:$0xff]
        %v597 = vld [vmem:[%s581 + $0x78] sm:$0xff]
        %v598 = vld [vmem:[%s581 + $0x80] sm:$0xff]
        %v599 = vld [vmem:[%s581 + $0x88] sm:$0xff]
        %v600 = vld [vmem:[%s581 + $0x90] sm:$0xff]
        %v601 = vld [vmem:[%s581 + $0x98] sm:$0xff]
        %v602 = vld [vmem:[%s581 + $0xa0] sm:$0xff]
        %v603 = vld [vmem:[%s581 + $0xa8] sm:$0xff]
        %v604 = vld [vmem:[%s581 + $0xb0] sm:$0xff]
        %v605 = vld [vmem:[%s581 + $0xb8] sm:$0xff]
        %v606 = vld [vmem:[%s581 + $0xc0] sm:$0xff]
        %v607 = vld [vmem:[%s581 + $0xc8] sm:$0xff]
        %v608 = vld [vmem:[%s581 + $0xd0] sm:$0xff]
        %v609 = vld [vmem:[%s581 + $0xd8] sm:$0xff]
        %v610 = vld [vmem:[%s581 + $0xe0] sm:$0xff]
        %v611 = vld [vmem:[%s581 + $0xe8] sm:$0xff]
        %v612 = vld [vmem:[%s581 + $0xf0] sm:$0xff]
        %v613 = vld [vmem:[%s581 + $0xf8] sm:$0xff]
        %v614 = vld [vmem:[%s581 + $0x100] sm:$0xff]
        %v615 = vld [vmem:[%s581 + $0x108] sm:$0xff]
        %v616 = vld [vmem:[%s581 + $0x110] sm:$0xff]
        %v617 = vld [vmem:[%s581 + $0x118] sm:$0xff]
        %v618 = vld [vmem:[%s581 + $0x120] sm:$0xff]
        %v619 = vld [vmem:[%s581 + $0x128] sm:$0xff]
        %v620 = vld [vmem:[%s581 + $0x130] sm:$0xff]
        %v621 = vld [vmem:[%s581 + $0x138] sm:$0xff]
        %v622 = vld [vmem:[%s581 + $0x140] sm:$0xff]
        %v623 = vld [vmem:[%s581 + $0x148] sm:$0xff]
        %v624 = vld [vmem:[%s581 + $0x150] sm:$0xff]
        %v625 = vld [vmem:[%s581 + $0x158] sm:$0xff]
        %v626 = vld [vmem:[%s581 + $0x160] sm:$0xff]
        %v627 = vld [vmem:[%s581 + $0x168] sm:$0xff]
        %v628 = vld [vmem:[%s581 + $0x170] sm:$0xff]
        %v629 = vld [vmem:[%s581 + $0x178] sm:$0xff]
        %v630 = vld [vmem:[%s581 + $0x180] sm:$0xff]
        %v631 = vld [vmem:[%s581 + $0x188] sm:$0xff]
        %v632 = vld [vmem:[%s581 + $0x190] sm:$0xff]
        %v633 = vld [vmem:[%s581 + $0x198] sm:$0xff]
        %v634 = vld [vmem:[%s581 + $0x1a0] sm:$0xff]
        %v635 = vld [vmem:[%s581 + $0x1a8] sm:$0xff]
        %v636 = vld [vmem:[%s581 + $0x1b0] sm:$0xff]
        %v637 = vld [vmem:[%s581 + $0x1b8] sm:$0xff]
        %v638 = vld [vmem:[%s581 + $0x1c0] sm:$0xff]
        %v639 = vld [vmem:[%s581 + $0x1c8] sm:$0xff]
        %v640 = vld [vmem:[%s581 + $0x1d0] sm:$0xff]
        %v641 = vld [vmem:[%s581 + $0x1d8] sm:$0xff]
        %v642 = vld [vmem:[%s581 + $0x1e0] sm:$0xff]
        %v643 = vld [vmem:[%s581 + $0x1e8] sm:$0xff]
        %v644 = vld [vmem:[%s581 + $0x1f0] sm:$0xff]
        %v645 = vld [vmem:[%s581 + $0x1f8] sm:$0xff]
        %646 = vmatprep.subr.mxu0 %v583
        %647 = vmatpush1.msra.mxu0 %v582
        %648 = vmatprep.subr.mxu0 %v585
        %649 = vmatpush1.msra.mxu0 %v584
        %650 = vmatprep.subr.mxu0 %v587
        %651 = vmatpush1.msra.mxu0 %v586
        %652 = vmatprep.subr.mxu0 %v589
        %653 = vmatpush1.msra.mxu0 %v588
        %654 = vmatprep.subr.mxu0 %v591
        %655 = vmatpush1.msra.mxu0 %v590
        %656 = vmatprep.subr.mxu0 %v593
        %657 = vmatpush1.msra.mxu0 %v592
        %658 = vmatprep.subr.mxu0 %v595
        %659 = vmatpush1.msra.mxu0 %v594
        %660 = vmatprep.subr.mxu0 %v597
        %661 = vmatpush1.msra.mxu0 %v596
        %662 = vmatprep.subr.mxu0 %v599
        %663 = vmatpush1.msra.mxu0 %v598
        %664 = vmatprep.subr.mxu0 %v601
        %665 = vmatpush1.msra.mxu0 %v600
        %666 = vmatprep.subr.mxu0 %v603
        %667 = vmatpush1.msra.mxu0 %v602
        %668 = vmatprep.subr.mxu0 %v605
        %669 = vmatpush1.msra.mxu0 %v604
        %670 = vmatprep.subr.mxu0 %v607
        %671 = vmatpush1.msra.mxu0 %v606
        %672 = vmatprep.subr.mxu0 %v609
        %673 = vmatpush1.msra.mxu0 %v608
        %674 = vmatprep.subr.mxu0 %v611
        %675 = vmatpush1.msra.mxu0 %v610
        %676 = vmatprep.subr.mxu0 %v613
        %677 = vmatpush1.msra.mxu0 %v612
        %678 = vmatprep.subr.mxu0 %v615
        %679 = vmatpush1.msra.mxu0 %v614
        %680 = vmatprep.subr.mxu0 %v617
        %681 = vmatpush1.msra.mxu0 %v616
        %682 = vmatprep.subr.mxu0 %v619
        %683 = vmatpush1.msra.mxu0 %v618
        %684 = vmatprep.subr.mxu0 %v621
        %685 = vmatpush1.msra.mxu0 %v620
        %686 = vmatprep.subr.mxu0 %v623
        %687 = vmatpush1.msra.mxu0 %v622
        %688 = vmatprep.subr.mxu0 %v625
        %689 = vmatpush1.msra.mxu0 %v624
        %690 = vmatprep.subr.mxu0 %v627
        %691 = vmatpush1.msra.mxu0 %v626
        %692 = vmatprep.subr.mxu0 %v629
        %693 = vmatpush1.msra.mxu0 %v628
        %694 = vmatprep.subr.mxu0 %v631
        %695 = vmatpush1.msra.mxu0 %v630
        %696 = vmatprep.subr.mxu0 %v633
        %697 = vmatpush1.msra.mxu0 %v632
        %698 = vmatprep.subr.mxu0 %v635
        %699 = vmatpush1.msra.mxu0 %v634
        %700 = vmatprep.subr.mxu0 %v637
        %701 = vmatpush1.msra.mxu0 %v636
        %702 = vmatprep.subr.mxu0 %v639
        %703 = vmatpush1.msra.mxu0 %v638
        %704 = vmatprep.subr.mxu0 %v641
        %705 = vmatpush1.msra.mxu0 %v640
        %706 = vmatprep.subr.mxu0 %v643
        %707 = vmatpush1.msra.mxu0 %v642
        %708 = vmatprep.subr.mxu0 %v645
        %709 = vmatpush1.msra.mxu0 %v644
        %710 = vmatprep.mubr.f32.mxu0 %v508
        %711 = vmatmul.mubr.f32.gmra.mrb[0].mxu0 %v442
        %v712 = vpop.f32.mrb[0].mxu0
        %v713 = vadd.f32 0.0, %v712
        %v714 = vpop.f32.mrb[0].mxu0
        %v715 = vadd.f32 0.0, %v714
        %716 = vdwg.mxu0
        %v717 = vmax.f32 %v577, %v713
        %v718 = vmax.f32 %v579, %v715
        %s719 = scalar_lea.vmem [#allocation2], 1024
        %v720 = vld [vmem:[%s719] sm:$0xff]
        %v721 = vld [vmem:[%s719 + $0x8] sm:$0xff]
        %v722 = vld [vmem:[%s719 + $0x10] sm:$0xff]
        %v723 = vld [vmem:[%s719 + $0x18] sm:$0xff]
        %v724 = vld [vmem:[%s719 + $0x20] sm:$0xff]
        %v725 = vld [vmem:[%s719 + $0x28] sm:$0xff]
        %v726 = vld [vmem:[%s719 + $0x30] sm:$0xff]
        %v727 = vld [vmem:[%s719 + $0x38] sm:$0xff]
        %v728 = vld [vmem:[%s719 + $0x40] sm:$0xff]
        %v729 = vld [vmem:[%s719 + $0x48] sm:$0xff]
        %v730 = vld [vmem:[%s719 + $0x50] sm:$0xff]
        %v731 = vld [vmem:[%s719 + $0x58] sm:$0xff]
        %v732 = vld [vmem:[%s719 + $0x60] sm:$0xff]
        %v733 = vld [vmem:[%s719 + $0x68] sm:$0xff]
        %v734 = vld [vmem:[%s719 + $0x70] sm:$0xff]
        %v735 = vld [vmem:[%s719 + $0x78] sm:$0xff]
        %v736 = vld [vmem:[%s719 + $0x80] sm:$0xff]
        %v737 = vld [vmem:[%s719 + $0x88] sm:$0xff]
        %v738 = vld [vmem:[%s719 + $0x90] sm:$0xff]
        %v739 = vld [vmem:[%s719 + $0x98] sm:$0xff]
        %v740 = vld [vmem:[%s719 + $0xa0] sm:$0xff]
        %v741 = vld [vmem:[%s719 + $0xa8] sm:$0xff]
        %v742 = vld [vmem:[%s719 + $0xb0] sm:$0xff]
        %v743 = vld [vmem:[%s719 + $0xb8] sm:$0xff]
        %v744 = vld [vmem:[%s719 + $0xc0] sm:$0xff]
        %v745 = vld [vmem:[%s719 + $0xc8] sm:$0xff]
        %v746 = vld [vmem:[%s719 + $0xd0] sm:$0xff]
        %v747 = vld [vmem:[%s719 + $0xd8] sm:$0xff]
        %v748 = vld [vmem:[%s719 + $0xe0] sm:$0xff]
        %v749 = vld [vmem:[%s719 + $0xe8] sm:$0xff]
        %v750 = vld [vmem:[%s719 + $0xf0] sm:$0xff]
        %v751 = vld [vmem:[%s719 + $0xf8] sm:$0xff]
        %v752 = vld [vmem:[%s719 + $0x100] sm:$0xff]
        %v753 = vld [vmem:[%s719 + $0x108] sm:$0xff]
        %v754 = vld [vmem:[%s719 + $0x110] sm:$0xff]
        %v755 = vld [vmem:[%s719 + $0x118] sm:$0xff]
        %v756 = vld [vmem:[%s719 + $0x120] sm:$0xff]
        %v757 = vld [vmem:[%s719 + $0x128] sm:$0xff]
        %v758 = vld [vmem:[%s719 + $0x130] sm:$0xff]
        %v759 = vld [vmem:[%s719 + $0x138] sm:$0xff]
        %v760 = vld [vmem:[%s719 + $0x140] sm:$0xff]
        %v761 = vld [vmem:[%s719 + $0x148] sm:$0xff]
        %v762 = vld [vmem:[%s719 + $0x150] sm:$0xff]
        %v763 = vld [vmem:[%s719 + $0x158] sm:$0xff]
        %v764 = vld [vmem:[%s719 + $0x160] sm:$0xff]
        %v765 = vld [vmem:[%s719 + $0x168] sm:$0xff]
        %v766 = vld [vmem:[%s719 + $0x170] sm:$0xff]
        %v767 = vld [vmem:[%s719 + $0x178] sm:$0xff]
        %v768 = vld [vmem:[%s719 + $0x180] sm:$0xff]
        %v769 = vld [vmem:[%s719 + $0x188] sm:$0xff]
        %v770 = vld [vmem:[%s719 + $0x190] sm:$0xff]
        %v771 = vld [vmem:[%s719 + $0x198] sm:$0xff]
        %v772 = vld [vmem:[%s719 + $0x1a0] sm:$0xff]
        %v773 = vld [vmem:[%s719 + $0x1a8] sm:$0xff]
        %v774 = vld [vmem:[%s719 + $0x1b0] sm:$0xff]
        %v775 = vld [vmem:[%s719 + $0x1b8] sm:$0xff]
        %v776 = vld [vmem:[%s719 + $0x1c0] sm:$0xff]
        %v777 = vld [vmem:[%s719 + $0x1c8] sm:$0xff]
        %v778 = vld [vmem:[%s719 + $0x1d0] sm:$0xff]
        %v779 = vld [vmem:[%s719 + $0x1d8] sm:$0xff]
        %v780 = vld [vmem:[%s719 + $0x1e0] sm:$0xff]
        %v781 = vld [vmem:[%s719 + $0x1e8] sm:$0xff]
        %v782 = vld [vmem:[%s719 + $0x1f0] sm:$0xff]
        %v783 = vld [vmem:[%s719 + $0x1f8] sm:$0xff]
        %784 = vmatprep.subr.mxu0 %v721
        %785 = vmatpush1.msra.mxu0 %v720
        %786 = vmatprep.subr.mxu0 %v723
        %787 = vmatpush1.msra.mxu0 %v722
        %788 = vmatprep.subr.mxu0 %v725
        %789 = vmatpush1.msra.mxu0 %v724
        %790 = vmatprep.subr.mxu0 %v727
        %791 = vmatpush1.msra.mxu0 %v726
        %792 = vmatprep.subr.mxu0 %v729
        %793 = vmatpush1.msra.mxu0 %v728
        %794 = vmatprep.subr.mxu0 %v731
        %795 = vmatpush1.msra.mxu0 %v730
        %796 = vmatprep.subr.mxu0 %v733
        %797 = vmatpush1.msra.mxu0 %v732
        %798 = vmatprep.subr.mxu0 %v735
        %799 = vmatpush1.msra.mxu0 %v734
        %800 = vmatprep.subr.mxu0 %v737
        %801 = vmatpush1.msra.mxu0 %v736
        %802 = vmatprep.subr.mxu0 %v739
        %803 = vmatpush1.msra.mxu0 %v738
        %804 = vmatprep.subr.mxu0 %v741
        %805 = vmatpush1.msra.mxu0 %v740
        %806 = vmatprep.subr.mxu0 %v743
        %807 = vmatpush1.msra.mxu0 %v742
        %808 = vmatprep.subr.mxu0 %v745
        %809 = vmatpush1.msra.mxu0 %v744
        %810 = vmatprep.subr.mxu0 %v747
        %811 = vmatpush1.msra.mxu0 %v746
        %812 = vmatprep.subr.mxu0 %v749
        %813 = vmatpush1.msra.mxu0 %v748
        %814 = vmatprep.subr.mxu0 %v751
        %815 = vmatpush1.msra.mxu0 %v750
        %816 = vmatprep.subr.mxu0 %v753
        %817 = vmatpush1.msra.mxu0 %v752
        %818 = vmatprep.subr.mxu0 %v755
        %819 = vmatpush1.msra.mxu0 %v754
        %820 = vmatprep.subr.mxu0 %v757
        %821 = vmatpush1.msra.mxu0 %v756
        %822 = vmatprep.subr.mxu0 %v759
        %823 = vmatpush1.msra.mxu0 %v758
        %824 = vmatprep.subr.mxu0 %v761
        %825 = vmatpush1.msra.mxu0 %v760
        %826 = vmatprep.subr.mxu0 %v763
        %827 = vmatpush1.msra.mxu0 %v762
        %828 = vmatprep.subr.mxu0 %v765
        %829 = vmatpush1.msra.mxu0 %v764
        %830 = vmatprep.subr.mxu0 %v767
        %831 = vmatpush1.msra.mxu0 %v766
        %832 = vmatprep.subr.mxu0 %v769
        %833 = vmatpush1.msra.mxu0 %v768
        %834 = vmatprep.subr.mxu0 %v771
        %835 = vmatpush1.msra.mxu0 %v770
        %836 = vmatprep.subr.mxu0 %v773
        %837 = vmatpush1.msra.mxu0 %v772
        %838 = vmatprep.subr.mxu0 %v775
        %839 = vmatpush1.msra.mxu0 %v774
        %840 = vmatprep.subr.mxu0 %v777
        %841 = vmatpush1.msra.mxu0 %v776
        %842 = vmatprep.subr.mxu0 %v779
        %843 = vmatpush1.msra.mxu0 %v778
        %844 = vmatprep.subr.mxu0 %v781
        %845 = vmatpush1.msra.mxu0 %v780
        %846 = vmatprep.subr.mxu0 %v783
        %847 = vmatpush1.msra.mxu0 %v782
        %848 = vmatprep.mubr.f32.mxu0 %v508
        %849 = vmatmul.mubr.f32.gmra.mrb[0].mxu0 %v442
        %v850 = vpop.f32.mrb[0].mxu0
        %v851 = vadd.f32 0.0, %v850
        %v852 = vpop.f32.mrb[0].mxu0
        %v853 = vadd.f32 0.0, %v852
        %854 = vdwg.mxu0
        %v855 = vmax.f32 %v717, %v851
        %v856 = vmax.f32 %v718, %v853
        %s857 = scalar_lea.vmem [#allocation2], 1536
        %v858 = vld [vmem:[%s857] sm:$0xff]
        %v859 = vld [vmem:[%s857 + $0x8] sm:$0xff]
        %v860 = vld [vmem:[%s857 + $0x10] sm:$0xff]
        %v861 = vld [vmem:[%s857 + $0x18] sm:$0xff]
        %v862 = vld [vmem:[%s857 + $0x20] sm:$0xff]
        %v863 = vld [vmem:[%s857 + $0x28] sm:$0xff]
        %v864 = vld [vmem:[%s857 + $0x30] sm:$0xff]
        %v865 = vld [vmem:[%s857 + $0x38] sm:$0xff]
        %v866 = vld [vmem:[%s857 + $0x40] sm:$0xff]
        %v867 = vld [vmem:[%s857 + $0x48] sm:$0xff]
        %v868 = vld [vmem:[%s857 + $0x50] sm:$0xff]
        %v869 = vld [vmem:[%s857 + $0x58] sm:$0xff]
        %v870 = vld [vmem:[%s857 + $0x60] sm:$0xff]
        %v871 = vld [vmem:[%s857 + $0x68] sm:$0xff]
        %v872 = vld [vmem:[%s857 + $0x70] sm:$0xff]
        %v873 = vld [vmem:[%s857 + $0x78] sm:$0xff]
        %v874 = vld [vmem:[%s857 + $0x80] sm:$0xff]
        %v875 = vld [vmem:[%s857 + $0x88] sm:$0xff]
        %v876 = vld [vmem:[%s857 + $0x90] sm:$0xff]
        %v877 = vld [vmem:[%s857 + $0x98] sm:$0xff]
        %v878 = vld [vmem:[%s857 + $0xa0] sm:$0xff]
        %v879 = vld [vmem:[%s857 + $0xa8] sm:$0xff]
        %v880 = vld [vmem:[%s857 + $0xb0] sm:$0xff]
        %v881 = vld [vmem:[%s857 + $0xb8] sm:$0xff]
        %v882 = vld [vmem:[%s857 + $0xc0] sm:$0xff]
        %v883 = vld [vmem:[%s857 + $0xc8] sm:$0xff]
        %v884 = vld [vmem:[%s857 + $0xd0] sm:$0xff]
        %v885 = vld [vmem:[%s857 + $0xd8] sm:$0xff]
        %v886 = vld [vmem:[%s857 + $0xe0] sm:$0xff]
        %v887 = vld [vmem:[%s857 + $0xe8] sm:$0xff]
        %v888 = vld [vmem:[%s857 + $0xf0] sm:$0xff]
        %v889 = vld [vmem:[%s857 + $0xf8] sm:$0xff]
        %v890 = vld [vmem:[%s857 + $0x100] sm:$0xff]
        %v891 = vld [vmem:[%s857 + $0x108] sm:$0xff]
        %v892 = vld [vmem:[%s857 + $0x110] sm:$0xff]
        %v893 = vld [vmem:[%s857 + $0x118] sm:$0xff]
        %v894 = vld [vmem:[%s857 + $0x120] sm:$0xff]
        %v895 = vld [vmem:[%s857 + $0x128] sm:$0xff]
        %v896 = vld [vmem:[%s857 + $0x130] sm:$0xff]
        %v897 = vld [vmem:[%s857 + $0x138] sm:$0xff]
        %v898 = vld [vmem:[%s857 + $0x140] sm:$0xff]
        %v899 = vld [vmem:[%s857 + $0x148] sm:$0xff]
        %v900 = vld [vmem:[%s857 + $0x150] sm:$0xff]
        %v901 = vld [vmem:[%s857 + $0x158] sm:$0xff]
        %v902 = vld [vmem:[%s857 + $0x160] sm:$0xff]
        %v903 = vld [vmem:[%s857 + $0x168] sm:$0xff]
        %v904 = vld [vmem:[%s857 + $0x170] sm:$0xff]
        %v905 = vld [vmem:[%s857 + $0x178] sm:$0xff]
        %v906 = vld [vmem:[%s857 + $0x180] sm:$0xff]
        %v907 = vld [vmem:[%s857 + $0x188] sm:$0xff]
        %v908 = vld [vmem:[%s857 + $0x190] sm:$0xff]
        %v909 = vld [vmem:[%s857 + $0x198] sm:$0xff]
        %v910 = vld [vmem:[%s857 + $0x1a0] sm:$0xff]
        %v911 = vld [vmem:[%s857 + $0x1a8] sm:$0xff]
        %v912 = vld [vmem:[%s857 + $0x1b0] sm:$0xff]
        %v913 = vld [vmem:[%s857 + $0x1b8] sm:$0xff]
        %v914 = vld [vmem:[%s857 + $0x1c0] sm:$0xff]
        %v915 = vld [vmem:[%s857 + $0x1c8] sm:$0xff]
        %v916 = vld [vmem:[%s857 + $0x1d0] sm:$0xff]
        %v917 = vld [vmem:[%s857 + $0x1d8] sm:$0xff]
        %v918 = vld [vmem:[%s857 + $0x1e0] sm:$0xff]
        %v919 = vld [vmem:[%s857 + $0x1e8] sm:$0xff]
        %v920 = vld [vmem:[%s857 + $0x1f0] sm:$0xff]
        %v921 = vld [vmem:[%s857 + $0x1f8] sm:$0xff]
        %922 = vmatprep.subr.mxu0 %v859
        %923 = vmatpush1.msra.mxu0 %v858
        %924 = vmatprep.subr.mxu0 %v861
        %925 = vmatpush1.msra.mxu0 %v860
        %926 = vmatprep.subr.mxu0 %v863
        %927 = vmatpush1.msra.mxu0 %v862
        %928 = vmatprep.subr.mxu0 %v865
        %929 = vmatpush1.msra.mxu0 %v864
        %930 = vmatprep.subr.mxu0 %v867
        %931 = vmatpush1.msra.mxu0 %v866
        %932 = vmatprep.subr.mxu0 %v869
        %933 = vmatpush1.msra.mxu0 %v868
        %934 = vmatprep.subr.mxu0 %v871
        %935 = vmatpush1.msra.mxu0 %v870
        %936 = vmatprep.subr.mxu0 %v873
        %937 = vmatpush1.msra.mxu0 %v872
        %938 = vmatprep.subr.mxu0 %v875
        %939 = vmatpush1.msra.mxu0 %v874
        %940 = vmatprep.subr.mxu0 %v877
        %941 = vmatpush1.msra.mxu0 %v876
        %942 = vmatprep.subr.mxu0 %v879
        %943 = vmatpush1.msra.mxu0 %v878
        %944 = vmatprep.subr.mxu0 %v881
        %945 = vmatpush1.msra.mxu0 %v880
        %946 = vmatprep.subr.mxu0 %v883
        %947 = vmatpush1.msra.mxu0 %v882
        %948 = vmatprep.subr.mxu0 %v885
        %949 = vmatpush1.msra.mxu0 %v884
        %950 = vmatprep.subr.mxu0 %v887
        %951 = vmatpush1.msra.mxu0 %v886
        %952 = vmatprep.subr.mxu0 %v889
        %953 = vmatpush1.msra.mxu0 %v888
        %954 = vmatprep.subr.mxu0 %v891
        %955 = vmatpush1.msra.mxu0 %v890
        %956 = vmatprep.subr.mxu0 %v893
        %957 = vmatpush1.msra.mxu0 %v892
        %958 = vmatprep.subr.mxu0 %v895
        %959 = vmatpush1.msra.mxu0 %v894
        %960 = vmatprep.subr.mxu0 %v897
        %961 = vmatpush1.msra.mxu0 %v896
        %962 = vmatprep.subr.mxu0 %v899
        %963 = vmatpush1.msra.mxu0 %v898
        %964 = vmatprep.subr.mxu0 %v901
        %965 = vmatpush1.msra.mxu0 %v900
        %966 = vmatprep.subr.mxu0 %v903
        %967 = vmatpush1.msra.mxu0 %v902
        %968 = vmatprep.subr.mxu0 %v905
        %969 = vmatpush1.msra.mxu0 %v904
        %970 = vmatprep.subr.mxu0 %v907
        %971 = vmatpush1.msra.mxu0 %v906
        %972 = vmatprep.subr.mxu0 %v909
        %973 = vmatpush1.msra.mxu0 %v908
        %974 = vmatprep.subr.mxu0 %v911
        %975 = vmatpush1.msra.mxu0 %v910
        %976 = vmatprep.subr.mxu0 %v913
        %977 = vmatpush1.msra.mxu0 %v912
        %978 = vmatprep.subr.mxu0 %v915
        %979 = vmatpush1.msra.mxu0 %v914
        %980 = vmatprep.subr.mxu0 %v917
        %981 = vmatpush1.msra.mxu0 %v916
        %982 = vmatprep.subr.mxu0 %v919
        %983 = vmatpush1.msra.mxu0 %v918
        %984 = vmatprep.subr.mxu0 %v921
        %985 = vmatpush1.msra.mxu0 %v920
        %986 = vmatprep.mubr.f32.mxu0 %v508
        %987 = vmatmul.mubr.f32.gmra.mrb[0].mxu0 %v442
        %v988 = vpop.f32.mrb[0].mxu0
        %v989 = vadd.f32 0.0, %v988
        %v990 = vpop.f32.mrb[0].mxu0
        %v991 = vadd.f32 0.0, %v990
        %992 = vdwg.mxu0
        %v993 = vmax.f32 %v855, %v989
        %v994 = vmax.f32 %v856, %v991
        %v995 = vld [vmem:[%s2] sm:$0xff]
        %s996 = scalar_lea.vmem %s2, 8
        %v997 = vld [vmem:[%s996] sm:$0xff]
        %1000 = vrot.lane.b32.xlu0 %v993, 127
        %v1001 = vpop.permute.xlu0 %1000
        %1002 = vrot.lane.b32.xlu0 %v994, 127
        %v1003 = vpop.permute.xlu0 %1002
        %vm1004 = vcmask 1039360
        %v1005 = vsel %vm1004, %v1001, %v1003
        %vm1006 = vcmask 31744
        %v1008 = vsel %vm1006, %v997, 0
        %vm1010 = vcmask 1043456
        %v1011 = vsel %vm1010, %v1005, 0
        %v1013 = vsel %vm1010, %v1003, 0
        %1015 = vmatprep.subr.mxu0 %v1013
        %1016 = vmatpush1.msra.mxu0 %v1011
        %1017 = vmatprep.subr.mxu0 0.0
        %1018 = vmatpush1.msra.mxu0 0.0
        %1019 = vmatprep.subr.mxu0 0.0
        %1020 = vmatpush1.msra.mxu0 0.0
        %1021 = vmatprep.subr.mxu0 0.0
        %1022 = vmatpush1.msra.mxu0 0.0
        %1023 = vmatprep.subr.mxu0 0.0
        %1024 = vmatpush1.msra.mxu0 0.0
        %1025 = vmatprep.subr.mxu0 0.0
        %1026 = vmatpush1.msra.mxu0 0.0
        %1027 = vmatprep.subr.mxu0 0.0
        %1028 = vmatpush1.msra.mxu0 0.0
        %1029 = vmatprep.subr.mxu0 0.0
        %1030 = vmatpush1.msra.mxu0 0.0
        %1031 = vmatprep.subr.mxu0 0.0
        %1032 = vmatpush1.msra.mxu0 0.0
        %1033 = vmatprep.subr.mxu0 0.0
        %1034 = vmatpush1.msra.mxu0 0.0
        %1035 = vmatprep.subr.mxu0 0.0
        %1036 = vmatpush1.msra.mxu0 0.0
        %1037 = vmatprep.subr.mxu0 0.0
        %1038 = vmatpush1.msra.mxu0 0.0
        %1039 = vmatprep.subr.mxu0 0.0
        %1040 = vmatpush1.msra.mxu0 0.0
        %1041 = vmatprep.subr.mxu0 0.0
        %1042 = vmatpush1.msra.mxu0 0.0
        %1043 = vmatprep.subr.mxu0 0.0
        %1044 = vmatpush1.msra.mxu0 0.0
        %1045 = vmatprep.subr.mxu0 0.0
        %1046 = vmatpush1.msra.mxu0 0.0
        %1047 = vmatprep.subr.mxu0 0.0
        %1048 = vmatpush1.msra.mxu0 0.0
        %1049 = vmatprep.subr.mxu0 0.0
        %1050 = vmatpush1.msra.mxu0 0.0
        %1051 = vmatprep.subr.mxu0 0.0
        %1052 = vmatpush1.msra.mxu0 0.0
        %1053 = vmatprep.subr.mxu0 0.0
        %1054 = vmatpush1.msra.mxu0 0.0
        %1055 = vmatprep.subr.mxu0 0.0
        %1056 = vmatpush1.msra.mxu0 0.0
        %1057 = vmatprep.subr.mxu0 0.0
        %1058 = vmatpush1.msra.mxu0 0.0
        %1059 = vmatprep.subr.mxu0 0.0
        %1060 = vmatpush1.msra.mxu0 0.0
        %1061 = vmatprep.subr.mxu0 0.0
        %1062 = vmatpush1.msra.mxu0 0.0
        %1063 = vmatprep.subr.mxu0 0.0
        %1064 = vmatpush1.msra.mxu0 0.0
        %1065 = vmatprep.subr.mxu0 0.0
        %1066 = vmatpush1.msra.mxu0 0.0
        %1067 = vmatprep.subr.mxu0 0.0
        %1068 = vmatpush1.msra.mxu0 0.0
        %1069 = vmatprep.subr.mxu0 0.0
        %1070 = vmatpush1.msra.mxu0 0.0
        %1071 = vmatprep.subr.mxu0 0.0
        %1072 = vmatpush1.msra.mxu0 0.0
        %1073 = vmatprep.subr.mxu0 0.0
        %1074 = vmatpush1.msra.mxu0 0.0
        %1075 = vmatprep.subr.mxu0 0.0
        %1076 = vmatpush1.msra.mxu0 0.0
        %1077 = vmatprep.subr.mxu0 0.0
        %1078 = vmatpush1.msra.mxu0 0.0
        %1079 = vmatprep.mubr.f32.mxu0 0.0
        %1080 = vmatmul.mubr.f32.gmra.mrb[0].mxu0 %v1008
        %v1081 = vpop.f32.mrb[0].mxu0
        %v1082 = vadd.f32 0.0, %v1081
        %v1083 = vpop.f32.mrb[0].mxu0
        %v1084 = vadd.f32 0.0, %v1083
        %1085 = vdwg.mxu0
        %v1087 = vsel %vm1006, %v995, 0
        %v1089 = vsel %vm1010, %v993, 0
        %v1091 = vsel %vm1010, %v994, 0
        %1093 = vmatprep.subr.mxu0 %v1091
        %1094 = vmatpush1.msra.mxu0 %v1089
        %1095 = vmatprep.subr.mxu0 0.0
        %1096 = vmatpush1.msra.mxu0 0.0
        %1097 = vmatprep.subr.mxu0 0.0
        %1098 = vmatpush1.msra.mxu0 0.0
        %1099 = vmatprep.subr.mxu0 0.0
        %1100 = vmatpush1.msra.mxu0 0.0
        %1101 = vmatprep.subr.mxu0 0.0
        %1102 = vmatpush1.msra.mxu0 0.0
        %1103 = vmatprep.subr.mxu0 0.0
        %1104 = vmatpush1.msra.mxu0 0.0
        %1105 = vmatprep.subr.mxu0 0.0
        %1106 = vmatpush1.msra.mxu0 0.0
        %1107 = vmatprep.subr.mxu0 0.0
        %1108 = vmatpush1.msra.mxu0 0.0
        %1109 = vmatprep.subr.mxu0 0.0
        %1110 = vmatpush1.msra.mxu0 0.0
        %1111 = vmatprep.subr.mxu0 0.0
        %1112 = vmatpush1.msra.mxu0 0.0
        %1113 = vmatprep.subr.mxu0 0.0
        %1114 = vmatpush1.msra.mxu0 0.0
        %1115 = vmatprep.subr.mxu0 0.0
        %1116 = vmatpush1.msra.mxu0 0.0
        %1117 = vmatprep.subr.mxu0 0.0
        %1118 = vmatpush1.msra.mxu0 0.0
        %1119 = vmatprep.subr.mxu0 0.0
        %1120 = vmatpush1.msra.mxu0 0.0
        %1121 = vmatprep.subr.mxu0 0.0
        %1122 = vmatpush1.msra.mxu0 0.0
        %1123 = vmatprep.subr.mxu0 0.0
        %1124 = vmatpush1.msra.mxu0 0.0
        %1125 = vmatprep.subr.mxu0 0.0
        %1126 = vmatpush1.msra.mxu0 0.0
        %1127 = vmatprep.subr.mxu0 0.0
        %1128 = vmatpush1.msra.mxu0 0.0
        %1129 = vmatprep.subr.mxu0 0.0
        %1130 = vmatpush1.msra.mxu0 0.0
        %1131 = vmatprep.subr.mxu0 0.0
        %1132 = vmatpush1.msra.mxu0 0.0
        %1133 = vmatprep.subr.mxu0 0.0
        %1134 = vmatpush1.msra.mxu0 0.0
        %1135 = vmatprep.subr.mxu0 0.0
        %1136 = vmatpush1.msra.mxu0 0.0
        %1137 = vmatprep.subr.mxu0 0.0
        %1138 = vmatpush1.msra.mxu0 0.0
        %1139 = vmatprep.subr.mxu0 0.0
        %1140 = vmatpush1.msra.mxu0 0.0
        %1141 = vmatprep.subr.mxu0 0.0
        %1142 = vmatpush1.msra.mxu0 0.0
        %1143 = vmatprep.subr.mxu0 0.0
        %1144 = vmatpush1.msra.mxu0 0.0
        %1145 = vmatprep.subr.mxu0 0.0
        %1146 = vmatpush1.msra.mxu0 0.0
        %1147 = vmatprep.subr.mxu0 0.0
        %1148 = vmatpush1.msra.mxu0 0.0
        %1149 = vmatprep.subr.mxu0 0.0
        %1150 = vmatpush1.msra.mxu0 0.0
        %1151 = vmatprep.subr.mxu0 0.0
        %1152 = vmatpush1.msra.mxu0 0.0
        %1153 = vmatprep.subr.mxu0 0.0
        %1154 = vmatpush1.msra.mxu0 0.0
        %1155 = vmatprep.subr.mxu0 0.0
        %1156 = vmatpush1.msra.mxu0 0.0
        %1157 = vmatprep.mubr.f32.mxu0 0.0
        %1158 = vmatmul.mubr.f32.gmra.mrb[0].mxu0 %v1087
        %v1159 = vpop.f32.mrb[0].mxu0
        %v1160 = vadd.f32 %v1082, %v1159
        %v1161 = vpop.f32.mrb[0].mxu0
        %v1162 = vadd.f32 %v1084, %v1161
        %1163 = vdwg.mxu0
        %s1164 = scalar_lea.vmem %s2, 16
        %v1165 = vld [vmem:[%s1164] sm:$0xff]
        %1166 = vrot.lane.b32.xlu0 %v993, 126
        %v1167 = vpop.permute.xlu0 %1166
        %1168 = vrot.lane.b32.xlu0 %v994, 126
        %v1169 = vpop.permute.xlu0 %1168
        %vm1170 = vcmask 1031168
        %v1171 = vsel %vm1170, %v1167, %v1169
        %v1173 = vsel %vm1006, %v1165, 0
        %v1175 = vsel %vm1010, %v1171, 0
        %v1177 = vsel %vm1010, %v1169, 0
        %1179 = vmatprep.subr.mxu0 %v1177
        %1180 = vmatpush1.msra.mxu0 %v1175
        %1181 = vmatprep.subr.mxu0 0.0
        %1182 = vmatpush1.msra.mxu0 0.0
        %1183 = vmatprep.subr.mxu0 0.0
        %1184 = vmatpush1.msra.mxu0 0.0
        %1185 = vmatprep.subr.mxu0 0.0
        %1186 = vmatpush1.msra.mxu0 0.0
        %1187 = vmatprep.subr.mxu0 0.0
        %1188 = vmatpush1.msra.mxu0 0.0
        %1189 = vmatprep.subr.mxu0 0.0
        %1190 = vmatpush1.msra.mxu0 0.0
        %1191 = vmatprep.subr.mxu0 0.0
        %1192 = vmatpush1.msra.mxu0 0.0
        %1193 = vmatprep.subr.mxu0 0.0
        %1194 = vmatpush1.msra.mxu0 0.0
        %1195 = vmatprep.subr.mxu0 0.0
        %1196 = vmatpush1.msra.mxu0 0.0
        %1197 = vmatprep.subr.mxu0 0.0
        %1198 = vmatpush1.msra.mxu0 0.0
        %1199 = vmatprep.subr.mxu0 0.0
        %1200 = vmatpush1.msra.mxu0 0.0
        %1201 = vmatprep.subr.mxu0 0.0
        %1202 = vmatpush1.msra.mxu0 0.0
        %1203 = vmatprep.subr.mxu0 0.0
        %1204 = vmatpush1.msra.mxu0 0.0
        %1205 = vmatprep.subr.mxu0 0.0
        %1206 = vmatpush1.msra.mxu0 0.0
        %1207 = vmatprep.subr.mxu0 0.0
        %1208 = vmatpush1.msra.mxu0 0.0
        %1209 = vmatprep.subr.mxu0 0.0
        %1210 = vmatpush1.msra.mxu0 0.0
        %1211 = vmatprep.subr.mxu0 0.0
        %1212 = vmatpush1.msra.mxu0 0.0
        %1213 = vmatprep.subr.mxu0 0.0
        %1214 = vmatpush1.msra.mxu0 0.0
        %1215 = vmatprep.subr.mxu0 0.0
        %1216 = vmatpush1.msra.mxu0 0.0
        %1217 = vmatprep.subr.mxu0 0.0
        %1218 = vmatpush1.msra.mxu0 0.0
        %1219 = vmatprep.subr.mxu0 0.0
        %1220 = vmatpush1.msra.mxu0 0.0
        %1221 = vmatprep.subr.mxu0 0.0
        %1222 = vmatpush1.msra.mxu0 0.0
        %1223 = vmatprep.subr.mxu0 0.0
        %1224 = vmatpush1.msra.mxu0 0.0
        %1225 = vmatprep.subr.mxu0 0.0
        %1226 = vmatpush1.msra.mxu0 0.0
        %1227 = vmatprep.subr.mxu0 0.0
        %1228 = vmatpush1.msra.mxu0 0.0
        %1229 = vmatprep.subr.mxu0 0.0
        %1230 = vmatpush1.msra.mxu0 0.0
        %1231 = vmatprep.subr.mxu0 0.0
        %1232 = vmatpush1.msra.mxu0 0.0
        %1233 = vmatprep.subr.mxu0 0.0
        %1234 = vmatpush1.msra.mxu0 0.0
        %1235 = vmatprep.subr.mxu0 0.0
        %1236 = vmatpush1.msra.mxu0 0.0
        %1237 = vmatprep.subr.mxu0 0.0
        %1238 = vmatpush1.msra.mxu0 0.0
        %1239 = vmatprep.subr.mxu0 0.0
        %1240 = vmatpush1.msra.mxu0 0.0
        %1241 = vmatprep.subr.mxu0 0.0
        %1242 = vmatpush1.msra.mxu0 0.0
        %1243 = vmatprep.mubr.f32.mxu0 0.0
        %1244 = vmatmul.mubr.f32.gmra.mrb[0].mxu0 %v1173
        %v1245 = vpop.f32.mrb[0].mxu0
        %v1246 = vadd.f32 0.0, %v1245
        %v1247 = vpop.f32.mrb[0].mxu0
        %v1248 = vadd.f32 0.0, %v1247
        %1249 = vdwg.mxu0
        %v1250 = vadd.f32 %v1160, %v1246
        %v1251 = vadd.f32 %v1162, %v1248
        %s1252 = scalar_lea.vmem %s2, 24
        %v1253 = vld [vmem:[%s1252] sm:$0xff]
        %1254 = vrot.lane.b32.xlu0 %v993, 125
        %v1255 = vpop.permute.xlu0 %1254
        %1256 = vrot.lane.b32.xlu0 %v994, 125
        %v1257 = vpop.permute.xlu0 %1256
        %vm1258 = vcmask 1022976
        %v1259 = vsel %vm1258, %v1255, %v1257
        %v1261 = vsel %vm1006, %v1253, 0
        %v1263 = vsel %vm1010, %v1259, 0
        %v1265 = vsel %vm1010, %v1257, 0
        %1267 = vmatprep.subr.mxu0 %v1265
        %1268 = vmatpush1.msra.mxu0 %v1263
        %1269 = vmatprep.subr.mxu0 0.0
        %1270 = vmatpush1.msra.mxu0 0.0
        %1271 = vmatprep.subr.mxu0 0.0
        %1272 = vmatpush1.msra.mxu0 0.0
        %1273 = vmatprep.subr.mxu0 0.0
        %1274 = vmatpush1.msra.mxu0 0.0
        %1275 = vmatprep.subr.mxu0 0.0
        %1276 = vmatpush1.msra.mxu0 0.0
        %1277 = vmatprep.subr.mxu0 0.0
        %1278 = vmatpush1.msra.mxu0 0.0
        %1279 = vmatprep.subr.mxu0 0.0
        %1280 = vmatpush1.msra.mxu0 0.0
        %1281 = vmatprep.subr.mxu0 0.0
        %1282 = vmatpush1.msra.mxu0 0.0
        %1283 = vmatprep.subr.mxu0 0.0
        %1284 = vmatpush1.msra.mxu0 0.0
        %1285 = vmatprep.subr.mxu0 0.0
        %1286 = vmatpush1.msra.mxu0 0.0
        %1287 = vmatprep.subr.mxu0 0.0
        %1288 = vmatpush1.msra.mxu0 0.0
        %1289 = vmatprep.subr.mxu0 0.0
        %1290 = vmatpush1.msra.mxu0 0.0
        %1291 = vmatprep.subr.mxu0 0.0
        %1292 = vmatpush1.msra.mxu0 0.0
        %1293 = vmatprep.subr.mxu0 0.0
        %1294 = vmatpush1.msra.mxu0 0.0
        %1295 = vmatprep.subr.mxu0 0.0
        %1296 = vmatpush1.msra.mxu0 0.0
        %1297 = vmatprep.subr.mxu0 0.0
        %1298 = vmatpush1.msra.mxu0 0.0
        %1299 = vmatprep.subr.mxu0 0.0
        %1300 = vmatpush1.msra.mxu0 0.0
        %1301 = vmatprep.subr.mxu0 0.0
        %1302 = vmatpush1.msra.mxu0 0.0
        %1303 = vmatprep.subr.mxu0 0.0
        %1304 = vmatpush1.msra.mxu0 0.0
        %1305 = vmatprep.subr.mxu0 0.0
        %1306 = vmatpush1.msra.mxu0 0.0
        %1307 = vmatprep.subr.mxu0 0.0
        %1308 = vmatpush1.msra.mxu0 0.0
        %1309 = vmatprep.subr.mxu0 0.0
        %1310 = vmatpush1.msra.mxu0 0.0
        %1311 = vmatprep.subr.mxu0 0.0
        %1312 = vmatpush1.msra.mxu0 0.0
        %1313 = vmatprep.subr.mxu0 0.0
        %1314 = vmatpush1.msra.mxu0 0.0
        %1315 = vmatprep.subr.mxu0 0.0
        %1316 = vmatpush1.msra.mxu0 0.0
        %1317 = vmatprep.subr.mxu0 0.0
        %1318 = vmatpush1.msra.mxu0 0.0
        %1319 = vmatprep.subr.mxu0 0.0
        %1320 = vmatpush1.msra.mxu0 0.0
        %1321 = vmatprep.subr.mxu0 0.0
        %1322 = vmatpush1.msra.mxu0 0.0
        %1323 = vmatprep.subr.mxu0 0.0
        %1324 = vmatpush1.msra.mxu0 0.0
        %1325 = vmatprep.subr.mxu0 0.0
        %1326 = vmatpush1.msra.mxu0 0.0
        %1327 = vmatprep.subr.mxu0 0.0
        %1328 = vmatpush1.msra.mxu0 0.0
        %1329 = vmatprep.subr.mxu0 0.0
        %1330 = vmatpush1.msra.mxu0 0.0
        %1331 = vmatprep.mubr.f32.mxu0 0.0
        %1332 = vmatmul.mubr.f32.gmra.mrb[0].mxu0 %v1261
        %v1333 = vpop.f32.mrb[0].mxu0
        %v1334 = vadd.f32 0.0, %v1333
        %v1335 = vpop.f32.mrb[0].mxu0
        %v1336 = vadd.f32 0.0, %v1335
        %1337 = vdwg.mxu0
        %v1338 = vadd.f32 %v1250, %v1334
        %v1339 = vadd.f32 %v1251, %v1336
        %s1340 = scalar_lea.vmem %s2, 32
        %v1341 = vld [vmem:[%s1340] sm:$0xff]
        %1342 = vrot.lane.b32.xlu0 %v993, 124
        %v1343 = vpop.permute.xlu0 %1342
        %1344 = vrot.lane.b32.xlu0 %v994, 124
        %v1345 = vpop.permute.xlu0 %1344
        %vm1346 = vcmask 1014784
        %v1347 = vsel %vm1346, %v1343, %v1345
        %v1349 = vsel %vm1006, %v1341, 0
        %v1351 = vsel %vm1010, %v1347, 0
        %v1353 = vsel %vm1010, %v1345, 0
        %1355 = vmatprep.subr.mxu0 %v1353
        %1356 = vmatpush1.msra.mxu0 %v1351
        %1357 = vmatprep.subr.mxu0 0.0
        %1358 = vmatpush1.msra.mxu0 0.0
        %1359 = vmatprep.subr.mxu0 0.0
        %1360 = vmatpush1.msra.mxu0 0.0
        %1361 = vmatprep.subr.mxu0 0.0
        %1362 = vmatpush1.msra.mxu0 0.0
        %1363 = vmatprep.subr.mxu0 0.0
        %1364 = vmatpush1.msra.mxu0 0.0
        %1365 = vmatprep.subr.mxu0 0.0
        %1366 = vmatpush1.msra.mxu0 0.0
        %1367 = vmatprep.subr.mxu0 0.0
        %1368 = vmatpush1.msra.mxu0 0.0
        %1369 = vmatprep.subr.mxu0 0.0
        %1370 = vmatpush1.msra.mxu0 0.0
        %1371 = vmatprep.subr.mxu0 0.0
        %1372 = vmatpush1.msra.mxu0 0.0
        %1373 = vmatprep.subr.mxu0 0.0
        %1374 = vmatpush1.msra.mxu0 0.0
        %1375 = vmatprep.subr.mxu0 0.0
        %1376 = vmatpush1.msra.mxu0 0.0
        %1377 = vmatprep.subr.mxu0 0.0
        %1378 = vmatpush1.msra.mxu0 0.0
        %1379 = vmatprep.subr.mxu0 0.0
        %1380 = vmatpush1.msra.mxu0 0.0
        %1381 = vmatprep.subr.mxu0 0.0
        %1382 = vmatpush1.msra.mxu0 0.0
        %1383 = vmatprep.subr.mxu0 0.0
        %1384 = vmatpush1.msra.mxu0 0.0
        %1385 = vmatprep.subr.mxu0 0.0
        %1386 = vmatpush1.msra.mxu0 0.0
        %1387 = vmatprep.subr.mxu0 0.0
        %1388 = vmatpush1.msra.mxu0 0.0
        %1389 = vmatprep.subr.mxu0 0.0
        %1390 = vmatpush1.msra.mxu0 0.0
        %1391 = vmatprep.subr.mxu0 0.0
        %1392 = vmatpush1.msra.mxu0 0.0
        %1393 = vmatprep.subr.mxu0 0.0
        %1394 = vmatpush1.msra.mxu0 0.0
        %1395 = vmatprep.subr.mxu0 0.0
        %1396 = vmatpush1.msra.mxu0 0.0
        %1397 = vmatprep.subr.mxu0 0.0
        %1398 = vmatpush1.msra.mxu0 0.0
        %1399 = vmatprep.subr.mxu0 0.0
        %1400 = vmatpush1.msra.mxu0 0.0
        %1401 = vmatprep.subr.mxu0 0.0
        %1402 = vmatpush1.msra.mxu0 0.0
        %1403 = vmatprep.subr.mxu0 0.0
        %1404 = vmatpush1.msra.mxu0 0.0
        %1405 = vmatprep.subr.mxu0 0.0
        %1406 = vmatpush1.msra.mxu0 0.0
        %1407 = vmatprep.subr.mxu0 0.0
        %1408 = vmatpush1.msra.mxu0 0.0
        %1409 = vmatprep.subr.mxu0 0.0
        %1410 = vmatpush1.msra.mxu0 0.0
        %1411 = vmatprep.subr.mxu0 0.0
        %1412 = vmatpush1.msra.mxu0 0.0
        %1413 = vmatprep.subr.mxu0 0.0
        %1414 = vmatpush1.msra.mxu0 0.0
        %1415 = vmatprep.subr.mxu0 0.0
        %1416 = vmatpush1.msra.mxu0 0.0
        %1417 = vmatprep.subr.mxu0 0.0
        %1418 = vmatpush1.msra.mxu0 0.0
        %1419 = vmatprep.mubr.f32.mxu0 0.0
        %1420 = vmatmul.mubr.f32.gmra.mrb[0].mxu0 %v1349
        %v1421 = vpop.f32.mrb[0].mxu0
        %v1422 = vadd.f32 0.0, %v1421
        %v1423 = vpop.f32.mrb[0].mxu0
        %v1424 = vadd.f32 0.0, %v1423
        %1425 = vdwg.mxu0
        %v1426 = vadd.f32 %v1338, %v1422
        %v1427 = vadd.f32 %v1339, %v1424
        %s1428 = scalar_lea.vmem %s2, 40
        %v1429 = vld [vmem:[%s1428] sm:$0xff]
        %1430 = vrot.lane.b32.xlu0 %v993, 116
        %v1431 = vpop.permute.xlu0 %1430
        %1432 = vrot.lane.b32.xlu0 %v994, 116
        %v1433 = vpop.permute.xlu0 %1432
        %vm1434 = vcmask 949248
        %v1435 = vsel %vm1434, %v1431, %v1433
        %v1437 = vsel %vm1006, %v1429, 0
        %v1439 = vsel %vm1010, %v1435, 0
        %v1441 = vsel %vm1010, %v1433, 0
        %1443 = vmatprep.subr.mxu0 %v1441
        %1444 = vmatpush1.msra.mxu0 %v1439
        %1445 = vmatprep.subr.mxu0 0.0
        %1446 = vmatpush1.msra.mxu0 0.0
        %1447 = vmatprep.subr.mxu0 0.0
        %1448 = vmatpush1.msra.mxu0 0.0
        %1449 = vmatprep.subr.mxu0 0.0
        %1450 = vmatpush1.msra.mxu0 0.0
        %1451 = vmatprep.subr.mxu0 0.0
        %1452 = vmatpush1.msra.mxu0 0.0
        %1453 = vmatprep.subr.mxu0 0.0
        %1454 = vmatpush1.msra.mxu0 0.0
        %1455 = vmatprep.subr.mxu0 0.0
        %1456 = vmatpush1.msra.mxu0 0.0
        %1457 = vmatprep.subr.mxu0 0.0
        %1458 = vmatpush1.msra.mxu0 0.0
        %1459 = vmatprep.subr.mxu0 0.0
        %1460 = vmatpush1.msra.mxu0 0.0
        %1461 = vmatprep.subr.mxu0 0.0
        %1462 = vmatpush1.msra.mxu0 0.0
        %1463 = vmatprep.subr.mxu0 0.0
        %1464 = vmatpush1.msra.mxu0 0.0
        %1465 = vmatprep.subr.mxu0 0.0
        %1466 = vmatpush1.msra.mxu0 0.0
        %1467 = vmatprep.subr.mxu0 0.0
        %1468 = vmatpush1.msra.mxu0 0.0
        %1469 = vmatprep.subr.mxu0 0.0
        %1470 = vmatpush1.msra.mxu0 0.0
        %1471 = vmatprep.subr.mxu0 0.0
        %1472 = vmatpush1.msra.mxu0 0.0
        %1473 = vmatprep.subr.mxu0 0.0
        %1474 = vmatpush1.msra.mxu0 0.0
        %1475 = vmatprep.subr.mxu0 0.0
        %1476 = vmatpush1.msra.mxu0 0.0
        %1477 = vmatprep.subr.mxu0 0.0
        %1478 = vmatpush1.msra.mxu0 0.0
        %1479 = vmatprep.subr.mxu0 0.0
        %1480 = vmatpush1.msra.mxu0 0.0
        %1481 = vmatprep.subr.mxu0 0.0
        %1482 = vmatpush1.msra.mxu0 0.0
        %1483 = vmatprep.subr.mxu0 0.0
        %1484 = vmatpush1.msra.mxu0 0.0
        %1485 = vmatprep.subr.mxu0 0.0
        %1486 = vmatpush1.msra.mxu0 0.0
        %1487 = vmatprep.subr.mxu0 0.0
        %1488 = vmatpush1.msra.mxu0 0.0
        %1489 = vmatprep.subr.mxu0 0.0
        %1490 = vmatpush1.msra.mxu0 0.0
        %1491 = vmatprep.subr.mxu0 0.0
        %1492 = vmatpush1.msra.mxu0 0.0
        %1493 = vmatprep.subr.mxu0 0.0
        %1494 = vmatpush1.msra.mxu0 0.0
        %1495 = vmatprep.subr.mxu0 0.0
        %1496 = vmatpush1.msra.mxu0 0.0
        %1497 = vmatprep.subr.mxu0 0.0
        %1498 = vmatpush1.msra.mxu0 0.0
        %1499 = vmatprep.subr.mxu0 0.0
        %1500 = vmatpush1.msra.mxu0 0.0
        %1501 = vmatprep.subr.mxu0 0.0
        %1502 = vmatpush1.msra.mxu0 0.0
        %1503 = vmatprep.subr.mxu0 0.0
        %1504 = vmatpush1.msra.mxu0 0.0
        %1505 = vmatprep.subr.mxu0 0.0
        %1506 = vmatpush1.msra.mxu0 0.0
        %1507 = vmatprep.mubr.f32.mxu0 0.0
        %1508 = vmatmul.mubr.f32.gmra.mrb[0].mxu0 %v1437
        %v1509 = vpop.f32.mrb[0].mxu0
        %v1510 = vadd.f32 0.0, %v1509
        %v1511 = vpop.f32.mrb[0].mxu0
        %v1512 = vadd.f32 0.0, %v1511
        %1513 = vdwg.mxu0
        %v1514 = vadd.f32 %v1426, %v1510
        %v1515 = vadd.f32 %v1427, %v1512
        %s1516 = scalar_lea.vmem %s2, 48
        %v1517 = vld [vmem:[%s1516] sm:$0xff]
        %1518 = vrot.lane.b32.xlu0 %v993, 115
        %v1519 = vpop.permute.xlu0 %1518
        %1520 = vrot.lane.b32.xlu0 %v994, 115
        %v1521 = vpop.permute.xlu0 %1520
        %vm1522 = vcmask 941056
        %v1523 = vsel %vm1522, %v1519, %v1521
        %v1525 = vsel %vm1006, %v1517, 0
        %v1527 = vsel %vm1010, %v1523, 0
        %v1529 = vsel %vm1010, %v1521, 0
        %1531 = vmatprep.subr.mxu0 %v1529
        %1532 = vmatpush1.msra.mxu0 %v1527
        %1533 = vmatprep.subr.mxu0 0.0
        %1534 = vmatpush1.msra.mxu0 0.0
        %1535 = vmatprep.subr.mxu0 0.0
        %1536 = vmatpush1.msra.mxu0 0.0
        %1537 = vmatprep.subr.mxu0 0.0
        %1538 = vmatpush1.msra.mxu0 0.0
        %1539 = vmatprep.subr.mxu0 0.0
        %1540 = vmatpush1.msra.mxu0 0.0
        %1541 = vmatprep.subr.mxu0 0.0
        %1542 = vmatpush1.msra.mxu0 0.0
        %1543 = vmatprep.subr.mxu0 0.0
        %1544 = vmatpush1.msra.mxu0 0.0
        %1545 = vmatprep.subr.mxu0 0.0
        %1546 = vmatpush1.msra.mxu0 0.0
        %1547 = vmatprep.subr.mxu0 0.0
        %1548 = vmatpush1.msra.mxu0 0.0
        %1549 = vmatprep.subr.mxu0 0.0
        %1550 = vmatpush1.msra.mxu0 0.0
        %1551 = vmatprep.subr.mxu0 0.0
        %1552 = vmatpush1.msra.mxu0 0.0
        %1553 = vmatprep.subr.mxu0 0.0
        %1554 = vmatpush1.msra.mxu0 0.0
        %1555 = vmatprep.subr.mxu0 0.0
        %1556 = vmatpush1.msra.mxu0 0.0
        %1557 = vmatprep.subr.mxu0 0.0
        %1558 = vmatpush1.msra.mxu0 0.0
        %1559 = vmatprep.subr.mxu0 0.0
        %1560 = vmatpush1.msra.mxu0 0.0
        %1561 = vmatprep.subr.mxu0 0.0
        %1562 = vmatpush1.msra.mxu0 0.0
        %1563 = vmatprep.subr.mxu0 0.0
        %1564 = vmatpush1.msra.mxu0 0.0
        %1565 = vmatprep.subr.mxu0 0.0
        %1566 = vmatpush1.msra.mxu0 0.0
        %1567 = vmatprep.subr.mxu0 0.0
        %1568 = vmatpush1.msra.mxu0 0.0
        %1569 = vmatprep.subr.mxu0 0.0
        %1570 = vmatpush1.msra.mxu0 0.0
        %1571 = vmatprep.subr.mxu0 0.0
        %1572 = vmatpush1.msra.mxu0 0.0
        %1573 = vmatprep.subr.mxu0 0.0
        %1574 = vmatpush1.msra.mxu0 0.0
        %1575 = vmatprep.subr.mxu0 0.0
        %1576 = vmatpush1.msra.mxu0 0.0
        %1577 = vmatprep.subr.mxu0 0.0
        %1578 = vmatpush1.msra.mxu0 0.0
        %1579 = vmatprep.subr.mxu0 0.0
        %1580 = vmatpush1.msra.mxu0 0.0
        %1581 = vmatprep.subr.mxu0 0.0
        %1582 = vmatpush1.msra.mxu0 0.0
        %1583 = vmatprep.subr.mxu0 0.0
        %1584 = vmatpush1.msra.mxu0 0.0
        %1585 = vmatprep.subr.mxu0 0.0
        %1586 = vmatpush1.msra.mxu0 0.0
        %1587 = vmatprep.subr.mxu0 0.0
        %1588 = vmatpush1.msra.mxu0 0.0
        %1589 = vmatprep.subr.mxu0 0.0
        %1590 = vmatpush1.msra.mxu0 0.0
        %1591 = vmatprep.subr.mxu0 0.0
        %1592 = vmatpush1.msra.mxu0 0.0
        %1593 = vmatprep.subr.mxu0 0.0
        %1594 = vmatpush1.msra.mxu0 0.0
        %1595 = vmatprep.mubr.f32.mxu0 0.0
        %1596 = vmatmul.mubr.f32.gmra.mrb[0].mxu0 %v1525
        %v1597 = vpop.f32.mrb[0].mxu0
        %v1598 = vadd.f32 0.0, %v1597
        %v1599 = vpop.f32.mrb[0].mxu0
        %v1600 = vadd.f32 0.0, %v1599
        %1601 = vdwg.mxu0
        %v1602 = vadd.f32 %v1514, %v1598
        %v1603 = vadd.f32 %v1515, %v1600
        %s1604 = scalar_lea.vmem %s2, 56
        %v1605 = vld [vmem:[%s1604] sm:$0xff]
        %1606 = vrot.lane.b32.xlu0 %v993, 114
        %v1607 = vpop.permute.xlu0 %1606
        %1608 = vrot.lane.b32.xlu0 %v994, 114
        %v1609 = vpop.permute.xlu0 %1608
        %vm1610 = vcmask 932864
        %v1611 = vsel %vm1610, %v1607, %v1609
        %v1613 = vsel %vm1006, %v1605, 0
        %v1615 = vsel %vm1010, %v1611, 0
        %v1617 = vsel %vm1010, %v1609, 0
        %1619 = vmatprep.subr.mxu0 %v1617
        %1620 = vmatpush1.msra.mxu0 %v1615
        %1621 = vmatprep.subr.mxu0 0.0
        %1622 = vmatpush1.msra.mxu0 0.0
        %1623 = vmatprep.subr.mxu0 0.0
        %1624 = vmatpush1.msra.mxu0 0.0
        %1625 = vmatprep.subr.mxu0 0.0
        %1626 = vmatpush1.msra.mxu0 0.0
        %1627 = vmatprep.subr.mxu0 0.0
        %1628 = vmatpush1.msra.mxu0 0.0
        %1629 = vmatprep.subr.mxu0 0.0
        %1630 = vmatpush1.msra.mxu0 0.0
        %1631 = vmatprep.subr.mxu0 0.0
        %1632 = vmatpush1.msra.mxu0 0.0
        %1633 = vmatprep.subr.mxu0 0.0
        %1634 = vmatpush1.msra.mxu0 0.0
        %1635 = vmatprep.subr.mxu0 0.0
        %1636 = vmatpush1.msra.mxu0 0.0
        %1637 = vmatprep.subr.mxu0 0.0
        %1638 = vmatpush1.msra.mxu0 0.0
        %1639 = vmatprep.subr.mxu0 0.0
        %1640 = vmatpush1.msra.mxu0 0.0
        %1641 = vmatprep.subr.mxu0 0.0
        %1642 = vmatpush1.msra.mxu0 0.0
        %1643 = vmatprep.subr.mxu0 0.0
        %1644 = vmatpush1.msra.mxu0 0.0
        %1645 = vmatprep.subr.mxu0 0.0
        %1646 = vmatpush1.msra.mxu0 0.0
        %1647 = vmatprep.subr.mxu0 0.0
        %1648 = vmatpush1.msra.mxu0 0.0
        %1649 = vmatprep.subr.mxu0 0.0
        %1650 = vmatpush1.msra.mxu0 0.0
        %1651 = vmatprep.subr.mxu0 0.0
        %1652 = vmatpush1.msra.mxu0 0.0
        %1653 = vmatprep.subr.mxu0 0.0
        %1654 = vmatpush1.msra.mxu0 0.0
        %1655 = vmatprep.subr.mxu0 0.0
        %1656 = vmatpush1.msra.mxu0 0.0
        %1657 = vmatprep.subr.mxu0 0.0
        %1658 = vmatpush1.msra.mxu0 0.0
        %1659 = vmatprep.subr.mxu0 0.0
        %1660 = vmatpush1.msra.mxu0 0.0
        %1661 = vmatprep.subr.mxu0 0.0
        %1662 = vmatpush1.msra.mxu0 0.0
        %1663 = vmatprep.subr.mxu0 0.0
        %1664 = vmatpush1.msra.mxu0 0.0
        %1665 = vmatprep.subr.mxu0 0.0
        %1666 = vmatpush1.msra.mxu0 0.0
        %1667 = vmatprep.subr.mxu0 0.0
        %1668 = vmatpush1.msra.mxu0 0.0
        %1669 = vmatprep.subr.mxu0 0.0
        %1670 = vmatpush1.msra.mxu0 0.0
        %1671 = vmatprep.subr.mxu0 0.0
        %1672 = vmatpush1.msra.mxu0 0.0
        %1673 = vmatprep.subr.mxu0 0.0
        %1674 = vmatpush1.msra.mxu0 0.0
        %1675 = vmatprep.subr.mxu0 0.0
        %1676 = vmatpush1.msra.mxu0 0.0
        %1677 = vmatprep.subr.mxu0 0.0
        %1678 = vmatpush1.msra.mxu0 0.0
        %1679 = vmatprep.subr.mxu0 0.0
        %1680 = vmatpush1.msra.mxu0 0.0
        %1681 = vmatprep.subr.mxu0 0.0
        %1682 = vmatpush1.msra.mxu0 0.0
        %1683 = vmatprep.mubr.f32.mxu0 0.0
        %1684 = vmatmul.mubr.f32.gmra.mrb[0].mxu0 %v1613
        %v1685 = vpop.f32.mrb[0].mxu0
        %v1686 = vadd.f32 0.0, %v1685
        %v1687 = vpop.f32.mrb[0].mxu0
        %v1688 = vadd.f32 0.0, %v1687
        %1689 = vdwg.mxu0
        %v1690 = vadd.f32 %v1602, %v1686
        %v1691 = vadd.f32 %v1603, %v1688
        %s1692 = scalar_lea.vmem %s2, 64
        %v1693 = vld [vmem:[%s1692] sm:$0xff]
        %1694 = vrot.lane.b32.xlu0 %v993, 113
        %v1695 = vpop.permute.xlu0 %1694
        %1696 = vrot.lane.b32.xlu0 %v994, 113
        %v1697 = vpop.permute.xlu0 %1696
        %vm1698 = vcmask 924672
        %v1699 = vsel %vm1698, %v1695, %v1697
        %v1701 = vsel %vm1006, %v1693, 0
        %v1703 = vsel %vm1010, %v1699, 0
        %v1705 = vsel %vm1010, %v1697, 0
        %1707 = vmatprep.subr.mxu0 %v1705
        %1708 = vmatpush1.msra.mxu0 %v1703
        %1709 = vmatprep.subr.mxu0 0.0
        %1710 = vmatpush1.msra.mxu0 0.0
        %1711 = vmatprep.subr.mxu0 0.0
        %1712 = vmatpush1.msra.mxu0 0.0
        %1713 = vmatprep.subr.mxu0 0.0
        %1714 = vmatpush1.msra.mxu0 0.0
        %1715 = vmatprep.subr.mxu0 0.0
        %1716 = vmatpush1.msra.mxu0 0.0
        %1717 = vmatprep.subr.mxu0 0.0
        %1718 = vmatpush1.msra.mxu0 0.0
        %1719 = vmatprep.subr.mxu0 0.0
        %1720 = vmatpush1.msra.mxu0 0.0
        %1721 = vmatprep.subr.mxu0 0.0
        %1722 = vmatpush1.msra.mxu0 0.0
        %1723 = vmatprep.subr.mxu0 0.0
        %1724 = vmatpush1.msra.mxu0 0.0
        %1725 = vmatprep.subr.mxu0 0.0
        %1726 = vmatpush1.msra.mxu0 0.0
        %1727 = vmatprep.subr.mxu0 0.0
        %1728 = vmatpush1.msra.mxu0 0.0
        %1729 = vmatprep.subr.mxu0 0.0
        %1730 = vmatpush1.msra.mxu0 0.0
        %1731 = vmatprep.subr.mxu0 0.0
        %1732 = vmatpush1.msra.mxu0 0.0
        %1733 = vmatprep.subr.mxu0 0.0
        %1734 = vmatpush1.msra.mxu0 0.0
        %1735 = vmatprep.subr.mxu0 0.0
        %1736 = vmatpush1.msra.mxu0 0.0
        %1737 = vmatprep.subr.mxu0 0.0
        %1738 = vmatpush1.msra.mxu0 0.0
        %1739 = vmatprep.subr.mxu0 0.0
        %1740 = vmatpush1.msra.mxu0 0.0
        %1741 = vmatprep.subr.mxu0 0.0
        %1742 = vmatpush1.msra.mxu0 0.0
        %1743 = vmatprep.subr.mxu0 0.0
        %1744 = vmatpush1.msra.mxu0 0.0
        %1745 = vmatprep.subr.mxu0 0.0
        %1746 = vmatpush1.msra.mxu0 0.0
        %1747 = vmatprep.subr.mxu0 0.0
        %1748 = vmatpush1.msra.mxu0 0.0
        %1749 = vmatprep.subr.mxu0 0.0
        %1750 = vmatpush1.msra.mxu0 0.0
        %1751 = vmatprep.subr.mxu0 0.0
        %1752 = vmatpush1.msra.mxu0 0.0
        %1753 = vmatprep.subr.mxu0 0.0
        %1754 = vmatpush1.msra.mxu0 0.0
        %1755 = vmatprep.subr.mxu0 0.0
        %1756 = vmatpush1.msra.mxu0 0.0
        %1757 = vmatprep.subr.mxu0 0.0
        %1758 = vmatpush1.msra.mxu0 0.0
        %1759 = vmatprep.subr.mxu0 0.0
        %1760 = vmatpush1.msra.mxu0 0.0
        %1761 = vmatprep.subr.mxu0 0.0
        %1762 = vmatpush1.msra.mxu0 0.0
        %1763 = vmatprep.subr.mxu0 0.0
        %1764 = vmatpush1.msra.mxu0 0.0
        %1765 = vmatprep.subr.mxu0 0.0
        %1766 = vmatpush1.msra.mxu0 0.0
        %1767 = vmatprep.subr.mxu0 0.0
        %1768 = vmatpush1.msra.mxu0 0.0
        %1769 = vmatprep.subr.mxu0 0.0
        %1770 = vmatpush1.msra.mxu0 0.0
        %1771 = vmatprep.mubr.f32.mxu0 0.0
        %1772 = vmatmul.mubr.f32.gmra.mrb[0].mxu0 %v1701
        %v1773 = vpop.f32.mrb[0].mxu0
        %v1774 = vadd.f32 0.0, %v1773
        %v1775 = vpop.f32.mrb[0].mxu0
        %v1776 = vadd.f32 0.0, %v1775
        %1777 = vdwg.mxu0
        %v1778 = vadd.f32 %v1690, %v1774
        %v1779 = vadd.f32 %v1691, %v1776
        %s1780 = scalar_lea.vmem %s2, 72
        %v1781 = vld [vmem:[%s1780] sm:$0xff]
        %1782 = vrot.lane.b32.xlu0 %v993, 112
        %v1783 = vpop.permute.xlu0 %1782
        %1784 = vrot.lane.b32.xlu0 %v994, 112
        %v1785 = vpop.permute.xlu0 %1784
        %vm1786 = vcmask 916480
        %v1787 = vsel %vm1786, %v1783, %v1785
        %v1789 = vsel %vm1006, %v1781, 0
        %v1791 = vsel %vm1010, %v1787, 0
        %v1793 = vsel %vm1010, %v1785, 0
        %1795 = vmatprep.subr.mxu0 %v1793
        %1796 = vmatpush1.msra.mxu0 %v1791
        %1797 = vmatprep.subr.mxu0 0.0
        %1798 = vmatpush1.msra.mxu0 0.0
        %1799 = vmatprep.subr.mxu0 0.0
        %1800 = vmatpush1.msra.mxu0 0.0
        %1801 = vmatprep.subr.mxu0 0.0
        %1802 = vmatpush1.msra.mxu0 0.0
        %1803 = vmatprep.subr.mxu0 0.0
        %1804 = vmatpush1.msra.mxu0 0.0
        %1805 = vmatprep.subr.mxu0 0.0
        %1806 = vmatpush1.msra.mxu0 0.0
        %1807 = vmatprep.subr.mxu0 0.0
        %1808 = vmatpush1.msra.mxu0 0.0
        %1809 = vmatprep.subr.mxu0 0.0
        %1810 = vmatpush1.msra.mxu0 0.0
        %1811 = vmatprep.subr.mxu0 0.0
        %1812 = vmatpush1.msra.mxu0 0.0
        %1813 = vmatprep.subr.mxu0 0.0
        %1814 = vmatpush1.msra.mxu0 0.0
        %1815 = vmatprep.subr.mxu0 0.0
        %1816 = vmatpush1.msra.mxu0 0.0
        %1817 = vmatprep.subr.mxu0 0.0
        %1818 = vmatpush1.msra.mxu0 0.0
        %1819 = vmatprep.subr.mxu0 0.0
        %1820 = vmatpush1.msra.mxu0 0.0
        %1821 = vmatprep.subr.mxu0 0.0
        %1822 = vmatpush1.msra.mxu0 0.0
        %1823 = vmatprep.subr.mxu0 0.0
        %1824 = vmatpush1.msra.mxu0 0.0
        %1825 = vmatprep.subr.mxu0 0.0
        %1826 = vmatpush1.msra.mxu0 0.0
        %1827 = vmatprep.subr.mxu0 0.0
        %1828 = vmatpush1.msra.mxu0 0.0
        %1829 = vmatprep.subr.mxu0 0.0
        %1830 = vmatpush1.msra.mxu0 0.0
        %1831 = vmatprep.subr.mxu0 0.0
        %1832 = vmatpush1.msra.mxu0 0.0
        %1833 = vmatprep.subr.mxu0 0.0
        %1834 = vmatpush1.msra.mxu0 0.0
        %1835 = vmatprep.subr.mxu0 0.0
        %1836 = vmatpush1.msra.mxu0 0.0
        %1837 = vmatprep.subr.mxu0 0.0
        %1838 = vmatpush1.msra.mxu0 0.0
        %1839 = vmatprep.subr.mxu0 0.0
        %1840 = vmatpush1.msra.mxu0 0.0
        %1841 = vmatprep.subr.mxu0 0.0
        %1842 = vmatpush1.msra.mxu0 0.0
        %1843 = vmatprep.subr.mxu0 0.0
        %1844 = vmatpush1.msra.mxu0 0.0
        %1845 = vmatprep.subr.mxu0 0.0
        %1846 = vmatpush1.msra.mxu0 0.0
        %1847 = vmatprep.subr.mxu0 0.0
        %1848 = vmatpush1.msra.mxu0 0.0
        %1849 = vmatprep.subr.mxu0 0.0
        %1850 = vmatpush1.msra.mxu0 0.0
        %1851 = vmatprep.subr.mxu0 0.0
        %1852 = vmatpush1.msra.mxu0 0.0
        %1853 = vmatprep.subr.mxu0 0.0
        %1854 = vmatpush1.msra.mxu0 0.0
        %1855 = vmatprep.subr.mxu0 0.0
        %1856 = vmatpush1.msra.mxu0 0.0
        %1857 = vmatprep.subr.mxu0 0.0
        %1858 = vmatpush1.msra.mxu0 0.0
        %1859 = vmatprep.mubr.f32.mxu0 0.0
        %1860 = vmatmul.mubr.f32.gmra.mrb[0].mxu0 %v1789
        %v1861 = vpop.f32.mrb[0].mxu0
        %v1862 = vadd.f32 0.0, %v1861
        %v1863 = vpop.f32.mrb[0].mxu0
        %v1864 = vadd.f32 0.0, %v1863
        %1865 = vdwg.mxu0
        %v1866 = vadd.f32 %v1778, %v1862
        %v1867 = vadd.f32 %v1779, %v1864
        %s1868 = scalar_lea.vmem %s2, 80
        %v1869 = vld [vmem:[%s1868] sm:$0xff]
        %1870 = vrot.lane.b32.xlu0 %v993, 104
        %v1871 = vpop.permute.xlu0 %1870
        %1872 = vrot.lane.b32.xlu0 %v994, 104
        %v1873 = vpop.permute.xlu0 %1872
        %vm1874 = vcmask 850944
        %v1875 = vsel %vm1874, %v1871, %v1873
        %v1877 = vsel %vm1006, %v1869, 0
        %v1879 = vsel %vm1010, %v1875, 0
        %v1881 = vsel %vm1010, %v1873, 0
        %1883 = vmatprep.subr.mxu0 %v1881
        %1884 = vmatpush1.msra.mxu0 %v1879
        %1885 = vmatprep.subr.mxu0 0.0
        %1886 = vmatpush1.msra.mxu0 0.0
        %1887 = vmatprep.subr.mxu0 0.0
        %1888 = vmatpush1.msra.mxu0 0.0
        %1889 = vmatprep.subr.mxu0 0.0
        %1890 = vmatpush1.msra.mxu0 0.0
        %1891 = vmatprep.subr.mxu0 0.0
        %1892 = vmatpush1.msra.mxu0 0.0
        %1893 = vmatprep.subr.mxu0 0.0
        %1894 = vmatpush1.msra.mxu0 0.0
        %1895 = vmatprep.subr.mxu0 0.0
        %1896 = vmatpush1.msra.mxu0 0.0
        %1897 = vmatprep.subr.mxu0 0.0
        %1898 = vmatpush1.msra.mxu0 0.0
        %1899 = vmatprep.subr.mxu0 0.0
        %1900 = vmatpush1.msra.mxu0 0.0
        %1901 = vmatprep.subr.mxu0 0.0
        %1902 = vmatpush1.msra.mxu0 0.0
        %1903 = vmatprep.subr.mxu0 0.0
        %1904 = vmatpush1.msra.mxu0 0.0
        %1905 = vmatprep.subr.mxu0 0.0
        %1906 = vmatpush1.msra.mxu0 0.0
        %1907 = vmatprep.subr.mxu0 0.0
        %1908 = vmatpush1.msra.mxu0 0.0
        %1909 = vmatprep.subr.mxu0 0.0
        %1910 = vmatpush1.msra.mxu0 0.0
        %1911 = vmatprep.subr.mxu0 0.0
        %1912 = vmatpush1.msra.mxu0 0.0
        %1913 = vmatprep.subr.mxu0 0.0
        %1914 = vmatpush1.msra.mxu0 0.0
        %1915 = vmatprep.subr.mxu0 0.0
        %1916 = vmatpush1.msra.mxu0 0.0
        %1917 = vmatprep.subr.mxu0 0.0
        %1918 = vmatpush1.msra.mxu0 0.0
        %1919 = vmatprep.subr.mxu0 0.0
        %1920 = vmatpush1.msra.mxu0 0.0
        %1921 = vmatprep.subr.mxu0 0.0
        %1922 = vmatpush1.msra.mxu0 0.0
        %1923 = vmatprep.subr.mxu0 0.0
        %1924 = vmatpush1.msra.mxu0 0.0
        %1925 = vmatprep.subr.mxu0 0.0
        %1926 = vmatpush1.msra.mxu0 0.0
        %1927 = vmatprep.subr.mxu0 0.0
        %1928 = vmatpush1.msra.mxu0 0.0
        %1929 = vmatprep.subr.mxu0 0.0
        %1930 = vmatpush1.msra.mxu0 0.0
        %1931 = vmatprep.subr.mxu0 0.0
        %1932 = vmatpush1.msra.mxu0 0.0
        %1933 = vmatprep.subr.mxu0 0.0
        %1934 = vmatpush1.msra.mxu0 0.0
        %1935 = vmatprep.subr.mxu0 0.0
        %1936 = vmatpush1.msra.mxu0 0.0
        %1937 = vmatprep.subr.mxu0 0.0
        %1938 = vmatpush1.msra.mxu0 0.0
        %1939 = vmatprep.subr.mxu0 0.0
        %1940 = vmatpush1.msra.mxu0 0.0
        %1941 = vmatprep.subr.mxu0 0.0
        %1942 = vmatpush1.msra.mxu0 0.0
        %1943 = vmatprep.subr.mxu0 0.0
        %1944 = vmatpush1.msra.mxu0 0.0
        %1945 = vmatprep.subr.mxu0 0.0
        %1946 = vmatpush1.msra.mxu0 0.0
        %1947 = vmatprep.mubr.f32.mxu0 0.0
        %1948 = vmatmul.mubr.f32.gmra.mrb[0].mxu0 %v1877
        %v1949 = vpop.f32.mrb[0].mxu0
        %v1950 = vadd.f32 0.0, %v1949
        %v1951 = vpop.f32.mrb[0].mxu0
        %v1952 = vadd.f32 0.0, %v1951
        %1953 = vdwg.mxu0
        %v1954 = vadd.f32 %v1866, %v1950
        %v1955 = vadd.f32 %v1867, %v1952
        %s1956 = scalar_lea.vmem %s2, 88
        %v1957 = vld [vmem:[%s1956] sm:$0xff]
        %1958 = vrot.lane.b32.xlu0 %v993, 103
        %v1959 = vpop.permute.xlu0 %1958
        %1960 = vrot.lane.b32.xlu0 %v994, 103
        %v1961 = vpop.permute.xlu0 %1960
        %vm1962 = vcmask 842752
        %v1963 = vsel %vm1962, %v1959, %v1961
        %v1965 = vsel %vm1006, %v1957, 0
        %v1967 = vsel %vm1010, %v1963, 0
        %v1969 = vsel %vm1010, %v1961, 0
        %1971 = vmatprep.subr.mxu0 %v1969
        %1972 = vmatpush1.msra.mxu0 %v1967
        %1973 = vmatprep.subr.mxu0 0.0
        %1974 = vmatpush1.msra.mxu0 0.0
        %1975 = vmatprep.subr.mxu0 0.0
        %1976 = vmatpush1.msra.mxu0 0.0
        %1977 = vmatprep.subr.mxu0 0.0
        %1978 = vmatpush1.msra.mxu0 0.0
        %1979 = vmatprep.subr.mxu0 0.0
        %1980 = vmatpush1.msra.mxu0 0.0
        %1981 = vmatprep.subr.mxu0 0.0
        %1982 = vmatpush1.msra.mxu0 0.0
        %1983 = vmatprep.subr.mxu0 0.0
        %1984 = vmatpush1.msra.mxu0 0.0
        %1985 = vmatprep.subr.mxu0 0.0
        %1986 = vmatpush1.msra.mxu0 0.0
        %1987 = vmatprep.subr.mxu0 0.0
        %1988 = vmatpush1.msra.mxu0 0.0
        %1989 = vmatprep.subr.mxu0 0.0
        %1990 = vmatpush1.msra.mxu0 0.0
        %1991 = vmatprep.subr.mxu0 0.0
        %1992 = vmatpush1.msra.mxu0 0.0
        %1993 = vmatprep.subr.mxu0 0.0
        %1994 = vmatpush1.msra.mxu0 0.0
        %1995 = vmatprep.subr.mxu0 0.0
        %1996 = vmatpush1.msra.mxu0 0.0
        %1997 = vmatprep.subr.mxu0 0.0
        %1998 = vmatpush1.msra.mxu0 0.0
        %1999 = vmatprep.subr.mxu0 0.0
        %2000 = vmatpush1.msra.mxu0 0.0
        %2001 = vmatprep.subr.mxu0 0.0
        %2002 = vmatpush1.msra.mxu0 0.0
        %2003 = vmatprep.subr.mxu0 0.0
        %2004 = vmatpush1.msra.mxu0 0.0
        %2005 = vmatprep.subr.mxu0 0.0
        %2006 = vmatpush1.msra.mxu0 0.0
        %2007 = vmatprep.subr.mxu0 0.0
        %2008 = vmatpush1.msra.mxu0 0.0
        %2009 = vmatprep.subr.mxu0 0.0
        %2010 = vmatpush1.msra.mxu0 0.0
        %2011 = vmatprep.subr.mxu0 0.0
        %2012 = vmatpush1.msra.mxu0 0.0
        %2013 = vmatprep.subr.mxu0 0.0
        %2014 = vmatpush1.msra.mxu0 0.0
        %2015 = vmatprep.subr.mxu0 0.0
        %2016 = vmatpush1.msra.mxu0 0.0
        %2017 = vmatprep.subr.mxu0 0.0
        %2018 = vmatpush1.msra.mxu0 0.0
        %2019 = vmatprep.subr.mxu0 0.0
        %2020 = vmatpush1.msra.mxu0 0.0
        %2021 = vmatprep.subr.mxu0 0.0
        %2022 = vmatpush1.msra.mxu0 0.0
        %2023 = vmatprep.subr.mxu0 0.0
        %2024 = vmatpush1.msra.mxu0 0.0
        %2025 = vmatprep.subr.mxu0 0.0
        %2026 = vmatpush1.msra.mxu0 0.0
        %2027 = vmatprep.subr.mxu0 0.0
        %2028 = vmatpush1.msra.mxu0 0.0
        %2029 = vmatprep.subr.mxu0 0.0
        %2030 = vmatpush1.msra.mxu0 0.0
        %2031 = vmatprep.subr.mxu0 0.0
        %2032 = vmatpush1.msra.mxu0 0.0
        %2033 = vmatprep.subr.mxu0 0.0
        %2034 = vmatpush1.msra.mxu0 0.0
        %2035 = vmatprep.mubr.f32.mxu0 0.0
        %2036 = vmatmul.mubr.f32.gmra.mrb[0].mxu0 %v1965
        %v2037 = vpop.f32.mrb[0].mxu0
        %v2038 = vadd.f32 0.0, %v2037
        %v2039 = vpop.f32.mrb[0].mxu0
        %v2040 = vadd.f32 0.0, %v2039
        %2041 = vdwg.mxu0
        %v2042 = vadd.f32 %v1954, %v2038
        %v2043 = vadd.f32 %v1955, %v2040
        %s2044 = scalar_lea.vmem %s2, 96
        %v2045 = vld [vmem:[%s2044] sm:$0xff]
        %2046 = vrot.lane.b32.xlu0 %v993, 102
        %v2047 = vpop.permute.xlu0 %2046
        %2048 = vrot.lane.b32.xlu0 %v994, 102
        %v2049 = vpop.permute.xlu0 %2048
        %vm2050 = vcmask 834560
        %v2051 = vsel %vm2050, %v2047, %v2049
        %v2053 = vsel %vm1006, %v2045, 0
        %v2055 = vsel %vm1010, %v2051, 0
        %v2057 = vsel %vm1010, %v2049, 0
        %2059 = vmatprep.subr.mxu0 %v2057
        %2060 = vmatpush1.msra.mxu0 %v2055
        %2061 = vmatprep.subr.mxu0 0.0
        %2062 = vmatpush1.msra.mxu0 0.0
        %2063 = vmatprep.subr.mxu0 0.0
        %2064 = vmatpush1.msra.mxu0 0.0
        %2065 = vmatprep.subr.mxu0 0.0
        %2066 = vmatpush1.msra.mxu0 0.0
        %2067 = vmatprep.subr.mxu0 0.0
        %2068 = vmatpush1.msra.mxu0 0.0
        %2069 = vmatprep.subr.mxu0 0.0
        %2070 = vmatpush1.msra.mxu0 0.0
        %2071 = vmatprep.subr.mxu0 0.0
        %2072 = vmatpush1.msra.mxu0 0.0
        %2073 = vmatprep.subr.mxu0 0.0
        %2074 = vmatpush1.msra.mxu0 0.0
        %2075 = vmatprep.subr.mxu0 0.0
        %2076 = vmatpush1.msra.mxu0 0.0
        %2077 = vmatprep.subr.mxu0 0.0
        %2078 = vmatpush1.msra.mxu0 0.0
        %2079 = vmatprep.subr.mxu0 0.0
        %2080 = vmatpush1.msra.mxu0 0.0
        %2081 = vmatprep.subr.mxu0 0.0
        %2082 = vmatpush1.msra.mxu0 0.0
        %2083 = vmatprep.subr.mxu0 0.0
        %2084 = vmatpush1.msra.mxu0 0.0
        %2085 = vmatprep.subr.mxu0 0.0
        %2086 = vmatpush1.msra.mxu0 0.0
        %2087 = vmatprep.subr.mxu0 0.0
        %2088 = vmatpush1.msra.mxu0 0.0
        %2089 = vmatprep.subr.mxu0 0.0
        %2090 = vmatpush1.msra.mxu0 0.0
        %2091 = vmatprep.subr.mxu0 0.0
        %2092 = vmatpush1.msra.mxu0 0.0
        %2093 = vmatprep.subr.mxu0 0.0
        %2094 = vmatpush1.msra.mxu0 0.0
        %2095 = vmatprep.subr.mxu0 0.0
        %2096 = vmatpush1.msra.mxu0 0.0
        %2097 = vmatprep.subr.mxu0 0.0
        %2098 = vmatpush1.msra.mxu0 0.0
        %2099 = vmatprep.subr.mxu0 0.0
        %2100 = vmatpush1.msra.mxu0 0.0
        %2101 = vmatprep.subr.mxu0 0.0
        %2102 = vmatpush1.msra.mxu0 0.0
        %2103 = vmatprep.subr.mxu0 0.0
        %2104 = vmatpush1.msra.mxu0 0.0
        %2105 = vmatprep.subr.mxu0 0.0
        %2106 = vmatpush1.msra.mxu0 0.0
        %2107 = vmatprep.subr.mxu0 0.0
        %2108 = vmatpush1.msra.mxu0 0.0
        %2109 = vmatprep.subr.mxu0 0.0
        %2110 = vmatpush1.msra.mxu0 0.0
        %2111 = vmatprep.subr.mxu0 0.0
        %2112 = vmatpush1.msra.mxu0 0.0
        %2113 = vmatprep.subr.mxu0 0.0
        %2114 = vmatpush1.msra.mxu0 0.0
        %2115 = vmatprep.subr.mxu0 0.0
        %2116 = vmatpush1.msra.mxu0 0.0
        %2117 = vmatprep.subr.mxu0 0.0
        %2118 = vmatpush1.msra.mxu0 0.0
        %2119 = vmatprep.subr.mxu0 0.0
        %2120 = vmatpush1.msra.mxu0 0.0
        %2121 = vmatprep.subr.mxu0 0.0
        %2122 = vmatpush1.msra.mxu0 0.0
        %2123 = vmatprep.mubr.f32.mxu0 0.0
        %2124 = vmatmul.mubr.f32.gmra.mrb[0].mxu0 %v2053
        %v2125 = vpop.f32.mrb[0].mxu0
        %v2126 = vadd.f32 0.0, %v2125
        %v2127 = vpop.f32.mrb[0].mxu0
        %v2128 = vadd.f32 0.0, %v2127
        %2129 = vdwg.mxu0
        %v2130 = vadd.f32 %v2042, %v2126
        %v2131 = vadd.f32 %v2043, %v2128
        %s2132 = scalar_lea.vmem %s2, 104
        %v2133 = vld [vmem:[%s2132] sm:$0xff]
        %2134 = vrot.lane.b32.xlu0 %v993, 101
        %v2135 = vpop.permute.xlu0 %2134
        %2136 = vrot.lane.b32.xlu0 %v994, 101
        %v2137 = vpop.permute.xlu0 %2136
        %vm2138 = vcmask 826368
        %v2139 = vsel %vm2138, %v2135, %v2137
        %v2141 = vsel %vm1006, %v2133, 0
        %v2143 = vsel %vm1010, %v2139, 0
        %v2145 = vsel %vm1010, %v2137, 0
        %2147 = vmatprep.subr.mxu0 %v2145
        %2148 = vmatpush1.msra.mxu0 %v2143
        %2149 = vmatprep.subr.mxu0 0.0
        %2150 = vmatpush1.msra.mxu0 0.0
        %2151 = vmatprep.subr.mxu0 0.0
        %2152 = vmatpush1.msra.mxu0 0.0
        %2153 = vmatprep.subr.mxu0 0.0
        %2154 = vmatpush1.msra.mxu0 0.0
        %2155 = vmatprep.subr.mxu0 0.0
        %2156 = vmatpush1.msra.mxu0 0.0
        %2157 = vmatprep.subr.mxu0 0.0
        %2158 = vmatpush1.msra.mxu0 0.0
        %2159 = vmatprep.subr.mxu0 0.0
        %2160 = vmatpush1.msra.mxu0 0.0
        %2161 = vmatprep.subr.mxu0 0.0
        %2162 = vmatpush1.msra.mxu0 0.0
        %2163 = vmatprep.subr.mxu0 0.0
        %2164 = vmatpush1.msra.mxu0 0.0
        %2165 = vmatprep.subr.mxu0 0.0
        %2166 = vmatpush1.msra.mxu0 0.0
        %2167 = vmatprep.subr.mxu0 0.0
        %2168 = vmatpush1.msra.mxu0 0.0
        %2169 = vmatprep.subr.mxu0 0.0
        %2170 = vmatpush1.msra.mxu0 0.0
        %2171 = vmatprep.subr.mxu0 0.0
        %2172 = vmatpush1.msra.mxu0 0.0
        %2173 = vmatprep.subr.mxu0 0.0
        %2174 = vmatpush1.msra.mxu0 0.0
        %2175 = vmatprep.subr.mxu0 0.0
        %2176 = vmatpush1.msra.mxu0 0.0
        %2177 = vmatprep.subr.mxu0 0.0
        %2178 = vmatpush1.msra.mxu0 0.0
        %2179 = vmatprep.subr.mxu0 0.0
        %2180 = vmatpush1.msra.mxu0 0.0
        %2181 = vmatprep.subr.mxu0 0.0
        %2182 = vmatpush1.msra.mxu0 0.0
        %2183 = vmatprep.subr.mxu0 0.0
        %2184 = vmatpush1.msra.mxu0 0.0
        %2185 = vmatprep.subr.mxu0 0.0
        %2186 = vmatpush1.msra.mxu0 0.0
        %2187 = vmatprep.subr.mxu0 0.0
        %2188 = vmatpush1.msra.mxu0 0.0
        %2189 = vmatprep.subr.mxu0 0.0
        %2190 = vmatpush1.msra.mxu0 0.0
        %2191 = vmatprep.subr.mxu0 0.0
        %2192 = vmatpush1.msra.mxu0 0.0
        %2193 = vmatprep.subr.mxu0 0.0
        %2194 = vmatpush1.msra.mxu0 0.0
        %2195 = vmatprep.subr.mxu0 0.0
        %2196 = vmatpush1.msra.mxu0 0.0
        %2197 = vmatprep.subr.mxu0 0.0
        %2198 = vmatpush1.msra.mxu0 0.0
        %2199 = vmatprep.subr.mxu0 0.0
        %2200 = vmatpush1.msra.mxu0 0.0
        %2201 = vmatprep.subr.mxu0 0.0
        %2202 = vmatpush1.msra.mxu0 0.0
        %2203 = vmatprep.subr.mxu0 0.0
        %2204 = vmatpush1.msra.mxu0 0.0
        %2205 = vmatprep.subr.mxu0 0.0
        %2206 = vmatpush1.msra.mxu0 0.0
        %2207 = vmatprep.subr.mxu0 0.0
        %2208 = vmatpush1.msra.mxu0 0.0
        %2209 = vmatprep.subr.mxu0 0.0
        %2210 = vmatpush1.msra.mxu0 0.0
        %2211 = vmatprep.mubr.f32.mxu0 0.0
        %2212 = vmatmul.mubr.f32.gmra.mrb[0].mxu0 %v2141
        %v2213 = vpop.f32.mrb[0].mxu0
        %v2214 = vadd.f32 0.0, %v2213
        %v2215 = vpop.f32.mrb[0].mxu0
        %v2216 = vadd.f32 0.0, %v2215
        %2217 = vdwg.mxu0
        %v2218 = vadd.f32 %v2130, %v2214
        %v2219 = vadd.f32 %v2131, %v2216
        %s2220 = scalar_lea.vmem %s2, 112
        %v2221 = vld [vmem:[%s2220] sm:$0xff]
        %2222 = vrot.lane.b32.xlu0 %v993, 100
        %v2223 = vpop.permute.xlu0 %2222
        %2224 = vrot.lane.b32.xlu0 %v994, 100
        %v2225 = vpop.permute.xlu0 %2224
        %vm2226 = vcmask 818176
        %v2227 = vsel %vm2226, %v2223, %v2225
        %v2229 = vsel %vm1006, %v2221, 0
        %v2231 = vsel %vm1010, %v2227, 0
        %v2233 = vsel %vm1010, %v2225, 0
        %2235 = vmatprep.subr.mxu0 %v2233
        %2236 = vmatpush1.msra.mxu0 %v2231
        %2237 = vmatprep.subr.mxu0 0.0
        %2238 = vmatpush1.msra.mxu0 0.0
        %2239 = vmatprep.subr.mxu0 0.0
        %2240 = vmatpush1.msra.mxu0 0.0
        %2241 = vmatprep.subr.mxu0 0.0
        %2242 = vmatpush1.msra.mxu0 0.0
        %2243 = vmatprep.subr.mxu0 0.0
        %2244 = vmatpush1.msra.mxu0 0.0
        %2245 = vmatprep.subr.mxu0 0.0
        %2246 = vmatpush1.msra.mxu0 0.0
        %2247 = vmatprep.subr.mxu0 0.0
        %2248 = vmatpush1.msra.mxu0 0.0
        %2249 = vmatprep.subr.mxu0 0.0
        %2250 = vmatpush1.msra.mxu0 0.0
        %2251 = vmatprep.subr.mxu0 0.0
        %2252 = vmatpush1.msra.mxu0 0.0
        %2253 = vmatprep.subr.mxu0 0.0
        %2254 = vmatpush1.msra.mxu0 0.0
        %2255 = vmatprep.subr.mxu0 0.0
        %2256 = vmatpush1.msra.mxu0 0.0
        %2257 = vmatprep.subr.mxu0 0.0
        %2258 = vmatpush1.msra.mxu0 0.0
        %2259 = vmatprep.subr.mxu0 0.0
        %2260 = vmatpush1.msra.mxu0 0.0
        %2261 = vmatprep.subr.mxu0 0.0
        %2262 = vmatpush1.msra.mxu0 0.0
        %2263 = vmatprep.subr.mxu0 0.0
        %2264 = vmatpush1.msra.mxu0 0.0
        %2265 = vmatprep.subr.mxu0 0.0
        %2266 = vmatpush1.msra.mxu0 0.0
        %2267 = vmatprep.subr.mxu0 0.0
        %2268 = vmatpush1.msra.mxu0 0.0
        %2269 = vmatprep.subr.mxu0 0.0
        %2270 = vmatpush1.msra.mxu0 0.0
        %2271 = vmatprep.subr.mxu0 0.0
        %2272 = vmatpush1.msra.mxu0 0.0
        %2273 = vmatprep.subr.mxu0 0.0
        %2274 = vmatpush1.msra.mxu0 0.0
        %2275 = vmatprep.subr.mxu0 0.0
        %2276 = vmatpush1.msra.mxu0 0.0
        %2277 = vmatprep.subr.mxu0 0.0
        %2278 = vmatpush1.msra.mxu0 0.0
        %2279 = vmatprep.subr.mxu0 0.0
        %2280 = vmatpush1.msra.mxu0 0.0
        %2281 = vmatprep.subr.mxu0 0.0
        %2282 = vmatpush1.msra.mxu0 0.0
        %2283 = vmatprep.subr.mxu0 0.0
        %2284 = vmatpush1.msra.mxu0 0.0
        %2285 = vmatprep.subr.mxu0 0.0
        %2286 = vmatpush1.msra.mxu0 0.0
        %2287 = vmatprep.subr.mxu0 0.0
        %2288 = vmatpush1.msra.mxu0 0.0
        %2289 = vmatprep.subr.mxu0 0.0
        %2290 = vmatpush1.msra.mxu0 0.0
        %2291 = vmatprep.subr.mxu0 0.0
        %2292 = vmatpush1.msra.mxu0 0.0
        %2293 = vmatprep.subr.mxu0 0.0
        %2294 = vmatpush1.msra.mxu0 0.0
        %2295 = vmatprep.subr.mxu0 0.0
        %2296 = vmatpush1.msra.mxu0 0.0
        %2297 = vmatprep.subr.mxu0 0.0
        %2298 = vmatpush1.msra.mxu0 0.0
        %2299 = vmatprep.mubr.f32.mxu0 0.0
        %2300 = vmatmul.mubr.f32.gmra.mrb[0].mxu0 %v2229
        %v2301 = vpop.f32.mrb[0].mxu0
        %v2302 = vadd.f32 0.0, %v2301
        %v2303 = vpop.f32.mrb[0].mxu0
        %v2304 = vadd.f32 0.0, %v2303
        %2305 = vdwg.mxu0
        %v2306 = vadd.f32 %v2218, %v2302
        %v2307 = vadd.f32 %v2219, %v2304
        %s2308 = scalar_lea.vmem %s2, 120
        %v2309 = vld [vmem:[%s2308] sm:$0xff]
        %2310 = vrot.lane.b32.xlu0 %v993, 92
        %v2311 = vpop.permute.xlu0 %2310
        %2312 = vrot.lane.b32.xlu0 %v994, 92
        %v2313 = vpop.permute.xlu0 %2312
        %vm2314 = vcmask 752640
        %v2315 = vsel %vm2314, %v2311, %v2313
        %v2317 = vsel %vm1006, %v2309, 0
        %v2319 = vsel %vm1010, %v2315, 0
        %v2321 = vsel %vm1010, %v2313, 0
        %2323 = vmatprep.subr.mxu0 %v2321
        %2324 = vmatpush1.msra.mxu0 %v2319
        %2325 = vmatprep.subr.mxu0 0.0
        %2326 = vmatpush1.msra.mxu0 0.0
        %2327 = vmatprep.subr.mxu0 0.0
        %2328 = vmatpush1.msra.mxu0 0.0
        %2329 = vmatprep.subr.mxu0 0.0
        %2330 = vmatpush1.msra.mxu0 0.0
        %2331 = vmatprep.subr.mxu0 0.0
        %2332 = vmatpush1.msra.mxu0 0.0
        %2333 = vmatprep.subr.mxu0 0.0
        %2334 = vmatpush1.msra.mxu0 0.0
        %2335 = vmatprep.subr.mxu0 0.0
        %2336 = vmatpush1.msra.mxu0 0.0
        %2337 = vmatprep.subr.mxu0 0.0
        %2338 = vmatpush1.msra.mxu0 0.0
        %2339 = vmatprep.subr.mxu0 0.0
        %2340 = vmatpush1.msra.mxu0 0.0
        %2341 = vmatprep.subr.mxu0 0.0
        %2342 = vmatpush1.msra.mxu0 0.0
        %2343 = vmatprep.subr.mxu0 0.0
        %2344 = vmatpush1.msra.mxu0 0.0
        %2345 = vmatprep.subr.mxu0 0.0
        %2346 = vmatpush1.msra.mxu0 0.0
        %2347 = vmatprep.subr.mxu0 0.0
        %2348 = vmatpush1.msra.mxu0 0.0
        %2349 = vmatprep.subr.mxu0 0.0
        %2350 = vmatpush1.msra.mxu0 0.0
        %2351 = vmatprep.subr.mxu0 0.0
        %2352 = vmatpush1.msra.mxu0 0.0
        %2353 = vmatprep.subr.mxu0 0.0
        %2354 = vmatpush1.msra.mxu0 0.0
        %2355 = vmatprep.subr.mxu0 0.0
        %2356 = vmatpush1.msra.mxu0 0.0
        %2357 = vmatprep.subr.mxu0 0.0
        %2358 = vmatpush1.msra.mxu0 0.0
        %2359 = vmatprep.subr.mxu0 0.0
        %2360 = vmatpush1.msra.mxu0 0.0
        %2361 = vmatprep.subr.mxu0 0.0
        %2362 = vmatpush1.msra.mxu0 0.0
        %2363 = vmatprep.subr.mxu0 0.0
        %2364 = vmatpush1.msra.mxu0 0.0
        %2365 = vmatprep.subr.mxu0 0.0
        %2366 = vmatpush1.msra.mxu0 0.0
        %2367 = vmatprep.subr.mxu0 0.0
        %2368 = vmatpush1.msra.mxu0 0.0
        %2369 = vmatprep.subr.mxu0 0.0
        %2370 = vmatpush1.msra.mxu0 0.0
        %2371 = vmatprep.subr.mxu0 0.0
        %2372 = vmatpush1.msra.mxu0 0.0
        %2373 = vmatprep.subr.mxu0 0.0
        %2374 = vmatpush1.msra.mxu0 0.0
        %2375 = vmatprep.subr.mxu0 0.0
        %2376 = vmatpush1.msra.mxu0 0.0
        %2377 = vmatprep.subr.mxu0 0.0
        %2378 = vmatpush1.msra.mxu0 0.0
        %2379 = vmatprep.subr.mxu0 0.0
        %2380 = vmatpush1.msra.mxu0 0.0
        %2381 = vmatprep.subr.mxu0 0.0
        %2382 = vmatpush1.msra.mxu0 0.0
        %2383 = vmatprep.subr.mxu0 0.0
        %2384 = vmatpush1.msra.mxu0 0.0
        %2385 = vmatprep.subr.mxu0 0.0
        %2386 = vmatpush1.msra.mxu0 0.0
        %2387 = vmatprep.mubr.f32.mxu0 0.0
        %2388 = vmatmul.mubr.f32.gmra.mrb[0].mxu0 %v2317
        %v2389 = vpop.f32.mrb[0].mxu0
        %v2390 = vadd.f32 0.0, %v2389
        %v2391 = vpop.f32.mrb[0].mxu0
        %v2392 = vadd.f32 0.0, %v2391
        %2393 = vdwg.mxu0
        %v2394 = vadd.f32 %v2306, %v2390
        %v2395 = vadd.f32 %v2307, %v2392
        %s2396 = scalar_lea.vmem %s2, 128
        %v2397 = vld [vmem:[%s2396] sm:$0xff]
        %2398 = vrot.lane.b32.xlu0 %v993, 91
        %v2399 = vpop.permute.xlu0 %2398
        %2400 = vrot.lane.b32.xlu0 %v994, 91
        %v2401 = vpop.permute.xlu0 %2400
        %vm2402 = vcmask 744448
        %v2403 = vsel %vm2402, %v2399, %v2401
        %v2405 = vsel %vm1006, %v2397, 0
        %v2407 = vsel %vm1010, %v2403, 0
        %v2409 = vsel %vm1010, %v2401, 0
        %2411 = vmatprep.subr.mxu0 %v2409
        %2412 = vmatpush1.msra.mxu0 %v2407
        %2413 = vmatprep.subr.mxu0 0.0
        %2414 = vmatpush1.msra.mxu0 0.0
        %2415 = vmatprep.subr.mxu0 0.0
        %2416 = vmatpush1.msra.mxu0 0.0
        %2417 = vmatprep.subr.mxu0 0.0
        %2418 = vmatpush1.msra.mxu0 0.0
        %2419 = vmatprep.subr.mxu0 0.0
        %2420 = vmatpush1.msra.mxu0 0.0
        %2421 = vmatprep.subr.mxu0 0.0
        %2422 = vmatpush1.msra.mxu0 0.0
        %2423 = vmatprep.subr.mxu0 0.0
        %2424 = vmatpush1.msra.mxu0 0.0
        %2425 = vmatprep.subr.mxu0 0.0
        %2426 = vmatpush1.msra.mxu0 0.0
        %2427 = vmatprep.subr.mxu0 0.0
        %2428 = vmatpush1.msra.mxu0 0.0
        %2429 = vmatprep.subr.mxu0 0.0
        %2430 = vmatpush1.msra.mxu0 0.0
        %2431 = vmatprep.subr.mxu0 0.0
        %2432 = vmatpush1.msra.mxu0 0.0
        %2433 = vmatprep.subr.mxu0 0.0
        %2434 = vmatpush1.msra.mxu0 0.0
        %2435 = vmatprep.subr.mxu0 0.0
        %2436 = vmatpush1.msra.mxu0 0.0
        %2437 = vmatprep.subr.mxu0 0.0
        %2438 = vmatpush1.msra.mxu0 0.0
        %2439 = vmatprep.subr.mxu0 0.0
        %2440 = vmatpush1.msra.mxu0 0.0
        %2441 = vmatprep.subr.mxu0 0.0
        %2442 = vmatpush1.msra.mxu0 0.0
        %2443 = vmatprep.subr.mxu0 0.0
        %2444 = vmatpush1.msra.mxu0 0.0
        %2445 = vmatprep.subr.mxu0 0.0
        %2446 = vmatpush1.msra.mxu0 0.0
        %2447 = vmatprep.subr.mxu0 0.0
        %2448 = vmatpush1.msra.mxu0 0.0
        %2449 = vmatprep.subr.mxu0 0.0
        %2450 = vmatpush1.msra.mxu0 0.0
        %2451 = vmatprep.subr.mxu0 0.0
        %2452 = vmatpush1.msra.mxu0 0.0
        %2453 = vmatprep.subr.mxu0 0.0
        %2454 = vmatpush1.msra.mxu0 0.0
        %2455 = vmatprep.subr.mxu0 0.0
        %2456 = vmatpush1.msra.mxu0 0.0
        %2457 = vmatprep.subr.mxu0 0.0
        %2458 = vmatpush1.msra.mxu0 0.0
        %2459 = vmatprep.subr.mxu0 0.0
        %2460 = vmatpush1.msra.mxu0 0.0
        %2461 = vmatprep.subr.mxu0 0.0
        %2462 = vmatpush1.msra.mxu0 0.0
        %2463 = vmatprep.subr.mxu0 0.0
        %2464 = vmatpush1.msra.mxu0 0.0
        %2465 = vmatprep.subr.mxu0 0.0
        %2466 = vmatpush1.msra.mxu0 0.0
        %2467 = vmatprep.subr.mxu0 0.0
        %2468 = vmatpush1.msra.mxu0 0.0
        %2469 = vmatprep.subr.mxu0 0.0
        %2470 = vmatpush1.msra.mxu0 0.0
        %2471 = vmatprep.subr.mxu0 0.0
        %2472 = vmatpush1.msra.mxu0 0.0
        %2473 = vmatprep.subr.mxu0 0.0
        %2474 = vmatpush1.msra.mxu0 0.0
        %2475 = vmatprep.mubr.f32.mxu0 0.0
        %2476 = vmatmul.mubr.f32.gmra.mrb[0].mxu0 %v2405
        %v2477 = vpop.f32.mrb[0].mxu0
        %v2478 = vadd.f32 0.0, %v2477
        %v2479 = vpop.f32.mrb[0].mxu0
        %v2480 = vadd.f32 0.0, %v2479
        %2481 = vdwg.mxu0
        %v2482 = vadd.f32 %v2394, %v2478
        %v2483 = vadd.f32 %v2395, %v2480
        %s2484 = scalar_lea.vmem %s2, 136
        %v2485 = vld [vmem:[%s2484] sm:$0xff]
        %2486 = vrot.lane.b32.xlu0 %v993, 90
        %v2487 = vpop.permute.xlu0 %2486
        %2488 = vrot.lane.b32.xlu0 %v994, 90
        %v2489 = vpop.permute.xlu0 %2488
        %vm2490 = vcmask 736256
        %v2491 = vsel %vm2490, %v2487, %v2489
        %v2493 = vsel %vm1006, %v2485, 0
        %v2495 = vsel %vm1010, %v2491, 0
        %v2497 = vsel %vm1010, %v2489, 0
        %2499 = vmatprep.subr.mxu0 %v2497
        %2500 = vmatpush1.msra.mxu0 %v2495
        %2501 = vmatprep.subr.mxu0 0.0
        %2502 = vmatpush1.msra.mxu0 0.0
        %2503 = vmatprep.subr.mxu0 0.0
        %2504 = vmatpush1.msra.mxu0 0.0
        %2505 = vmatprep.subr.mxu0 0.0
        %2506 = vmatpush1.msra.mxu0 0.0
        %2507 = vmatprep.subr.mxu0 0.0
        %2508 = vmatpush1.msra.mxu0 0.0
        %2509 = vmatprep.subr.mxu0 0.0
        %2510 = vmatpush1.msra.mxu0 0.0
        %2511 = vmatprep.subr.mxu0 0.0
        %2512 = vmatpush1.msra.mxu0 0.0
        %2513 = vmatprep.subr.mxu0 0.0
        %2514 = vmatpush1.msra.mxu0 0.0
        %2515 = vmatprep.subr.mxu0 0.0
        %2516 = vmatpush1.msra.mxu0 0.0
        %2517 = vmatprep.subr.mxu0 0.0
        %2518 = vmatpush1.msra.mxu0 0.0
        %2519 = vmatprep.subr.mxu0 0.0
        %2520 = vmatpush1.msra.mxu0 0.0
        %2521 = vmatprep.subr.mxu0 0.0
        %2522 = vmatpush1.msra.mxu0 0.0
        %2523 = vmatprep.subr.mxu0 0.0
        %2524 = vmatpush1.msra.mxu0 0.0
        %2525 = vmatprep.subr.mxu0 0.0
        %2526 = vmatpush1.msra.mxu0 0.0
        %2527 = vmatprep.subr.mxu0 0.0
        %2528 = vmatpush1.msra.mxu0 0.0
        %2529 = vmatprep.subr.mxu0 0.0
        %2530 = vmatpush1.msra.mxu0 0.0
        %2531 = vmatprep.subr.mxu0 0.0
        %2532 = vmatpush1.msra.mxu0 0.0
        %2533 = vmatprep.subr.mxu0 0.0
        %2534 = vmatpush1.msra.mxu0 0.0
        %2535 = vmatprep.subr.mxu0 0.0
        %2536 = vmatpush1.msra.mxu0 0.0
        %2537 = vmatprep.subr.mxu0 0.0
        %2538 = vmatpush1.msra.mxu0 0.0
        %2539 = vmatprep.subr.mxu0 0.0
        %2540 = vmatpush1.msra.mxu0 0.0
        %2541 = vmatprep.subr.mxu0 0.0
        %2542 = vmatpush1.msra.mxu0 0.0
        %2543 = vmatprep.subr.mxu0 0.0
        %2544 = vmatpush1.msra.mxu0 0.0
        %2545 = vmatprep.subr.mxu0 0.0
        %2546 = vmatpush1.msra.mxu0 0.0
        %2547 = vmatprep.subr.mxu0 0.0
        %2548 = vmatpush1.msra.mxu0 0.0
        %2549 = vmatprep.subr.mxu0 0.0
        %2550 = vmatpush1.msra.mxu0 0.0
        %2551 = vmatprep.subr.mxu0 0.0
        %2552 = vmatpush1.msra.mxu0 0.0
        %2553 = vmatprep.subr.mxu0 0.0
        %2554 = vmatpush1.msra.mxu0 0.0
        %2555 = vmatprep.subr.mxu0 0.0
        %2556 = vmatpush1.msra.mxu0 0.0
        %2557 = vmatprep.subr.mxu0 0.0
        %2558 = vmatpush1.msra.mxu0 0.0
        %2559 = vmatprep.subr.mxu0 0.0
        %2560 = vmatpush1.msra.mxu0 0.0
        %2561 = vmatprep.subr.mxu0 0.0
        %2562 = vmatpush1.msra.mxu0 0.0
        %2563 = vmatprep.mubr.f32.mxu0 0.0
        %2564 = vmatmul.mubr.f32.gmra.mrb[0].mxu0 %v2493
        %v2565 = vpop.f32.mrb[0].mxu0
        %v2566 = vadd.f32 0.0, %v2565
        %v2567 = vpop.f32.mrb[0].mxu0
        %v2568 = vadd.f32 0.0, %v2567
        %2569 = vdwg.mxu0
        %v2570 = vadd.f32 %v2482, %v2566
        %v2571 = vadd.f32 %v2483, %v2568
        %s2572 = scalar_lea.vmem %s2, 144
        %v2573 = vld [vmem:[%s2572] sm:$0xff]
        %2574 = vrot.lane.b32.xlu0 %v993, 89
        %v2575 = vpop.permute.xlu0 %2574
        %2576 = vrot.lane.b32.xlu0 %v994, 89
        %v2577 = vpop.permute.xlu0 %2576
        %vm2578 = vcmask 728064
        %v2579 = vsel %vm2578, %v2575, %v2577
        %v2581 = vsel %vm1006, %v2573, 0
        %v2583 = vsel %vm1010, %v2579, 0
        %v2585 = vsel %vm1010, %v2577, 0
        %2587 = vmatprep.subr.mxu0 %v2585
        %2588 = vmatpush1.msra.mxu0 %v2583
        %2589 = vmatprep.subr.mxu0 0.0
        %2590 = vmatpush1.msra.mxu0 0.0
        %2591 = vmatprep.subr.mxu0 0.0
        %2592 = vmatpush1.msra.mxu0 0.0
        %2593 = vmatprep.subr.mxu0 0.0
        %2594 = vmatpush1.msra.mxu0 0.0
        %2595 = vmatprep.subr.mxu0 0.0
        %2596 = vmatpush1.msra.mxu0 0.0
        %2597 = vmatprep.subr.mxu0 0.0
        %2598 = vmatpush1.msra.mxu0 0.0
        %2599 = vmatprep.subr.mxu0 0.0
        %2600 = vmatpush1.msra.mxu0 0.0
        %2601 = vmatprep.subr.mxu0 0.0
        %2602 = vmatpush1.msra.mxu0 0.0
        %2603 = vmatprep.subr.mxu0 0.0
        %2604 = vmatpush1.msra.mxu0 0.0
        %2605 = vmatprep.subr.mxu0 0.0
        %2606 = vmatpush1.msra.mxu0 0.0
        %2607 = vmatprep.subr.mxu0 0.0
        %2608 = vmatpush1.msra.mxu0 0.0
        %2609 = vmatprep.subr.mxu0 0.0
        %2610 = vmatpush1.msra.mxu0 0.0
        %2611 = vmatprep.subr.mxu0 0.0
        %2612 = vmatpush1.msra.mxu0 0.0
        %2613 = vmatprep.subr.mxu0 0.0
        %2614 = vmatpush1.msra.mxu0 0.0
        %2615 = vmatprep.subr.mxu0 0.0
        %2616 = vmatpush1.msra.mxu0 0.0
        %2617 = vmatprep.subr.mxu0 0.0
        %2618 = vmatpush1.msra.mxu0 0.0
        %2619 = vmatprep.subr.mxu0 0.0
        %2620 = vmatpush1.msra.mxu0 0.0
        %2621 = vmatprep.subr.mxu0 0.0
        %2622 = vmatpush1.msra.mxu0 0.0
        %2623 = vmatprep.subr.mxu0 0.0
        %2624 = vmatpush1.msra.mxu0 0.0
        %2625 = vmatprep.subr.mxu0 0.0
        %2626 = vmatpush1.msra.mxu0 0.0
        %2627 = vmatprep.subr.mxu0 0.0
        %2628 = vmatpush1.msra.mxu0 0.0
        %2629 = vmatprep.subr.mxu0 0.0
        %2630 = vmatpush1.msra.mxu0 0.0
        %2631 = vmatprep.subr.mxu0 0.0
        %2632 = vmatpush1.msra.mxu0 0.0
        %2633 = vmatprep.subr.mxu0 0.0
        %2634 = vmatpush1.msra.mxu0 0.0
        %2635 = vmatprep.subr.mxu0 0.0
        %2636 = vmatpush1.msra.mxu0 0.0
        %2637 = vmatprep.subr.mxu0 0.0
        %2638 = vmatpush1.msra.mxu0 0.0
        %2639 = vmatprep.subr.mxu0 0.0
        %2640 = vmatpush1.msra.mxu0 0.0
        %2641 = vmatprep.subr.mxu0 0.0
        %2642 = vmatpush1.msra.mxu0 0.0
        %2643 = vmatprep.subr.mxu0 0.0
        %2644 = vmatpush1.msra.mxu0 0.0
        %2645 = vmatprep.subr.mxu0 0.0
        %2646 = vmatpush1.msra.mxu0 0.0
        %2647 = vmatprep.subr.mxu0 0.0
        %2648 = vmatpush1.msra.mxu0 0.0
        %2649 = vmatprep.subr.mxu0 0.0
        %2650 = vmatpush1.msra.mxu0 0.0
        %2651 = vmatprep.mubr.f32.mxu0 0.0
        %2652 = vmatmul.mubr.f32.gmra.mrb[0].mxu0 %v2581
        %v2653 = vpop.f32.mrb[0].mxu0
        %v2654 = vadd.f32 0.0, %v2653
        %v2655 = vpop.f32.mrb[0].mxu0
        %v2656 = vadd.f32 0.0, %v2655
        %2657 = vdwg.mxu0
        %v2658 = vadd.f32 %v2570, %v2654
        %v2659 = vadd.f32 %v2571, %v2656
        %s2660 = scalar_lea.vmem %s2, 152
        %v2661 = vld [vmem:[%s2660] sm:$0xff]
        %2662 = vrot.lane.b32.xlu0 %v993, 88
        %v2663 = vpop.permute.xlu0 %2662
        %2664 = vrot.lane.b32.xlu0 %v994, 88
        %v2665 = vpop.permute.xlu0 %2664
        %vm2666 = vcmask 719872
        %v2667 = vsel %vm2666, %v2663, %v2665
        %v2669 = vsel %vm1006, %v2661, 0
        %v2671 = vsel %vm1010, %v2667, 0
        %v2673 = vsel %vm1010, %v2665, 0
        %2675 = vmatprep.subr.mxu0 %v2673
        %2676 = vmatpush1.msra.mxu0 %v2671
        %2677 = vmatprep.subr.mxu0 0.0
        %2678 = vmatpush1.msra.mxu0 0.0
        %2679 = vmatprep.subr.mxu0 0.0
        %2680 = vmatpush1.msra.mxu0 0.0
        %2681 = vmatprep.subr.mxu0 0.0
        %2682 = vmatpush1.msra.mxu0 0.0
        %2683 = vmatprep.subr.mxu0 0.0
        %2684 = vmatpush1.msra.mxu0 0.0
        %2685 = vmatprep.subr.mxu0 0.0
        %2686 = vmatpush1.msra.mxu0 0.0
        %2687 = vmatprep.subr.mxu0 0.0
        %2688 = vmatpush1.msra.mxu0 0.0
        %2689 = vmatprep.subr.mxu0 0.0
        %2690 = vmatpush1.msra.mxu0 0.0
        %2691 = vmatprep.subr.mxu0 0.0
        %2692 = vmatpush1.msra.mxu0 0.0
        %2693 = vmatprep.subr.mxu0 0.0
        %2694 = vmatpush1.msra.mxu0 0.0
        %2695 = vmatprep.subr.mxu0 0.0
        %2696 = vmatpush1.msra.mxu0 0.0
        %2697 = vmatprep.subr.mxu0 0.0
        %2698 = vmatpush1.msra.mxu0 0.0
        %2699 = vmatprep.subr.mxu0 0.0
        %2700 = vmatpush1.msra.mxu0 0.0
        %2701 = vmatprep.subr.mxu0 0.0
        %2702 = vmatpush1.msra.mxu0 0.0
        %2703 = vmatprep.subr.mxu0 0.0
        %2704 = vmatpush1.msra.mxu0 0.0
        %2705 = vmatprep.subr.mxu0 0.0
        %2706 = vmatpush1.msra.mxu0 0.0
        %2707 = vmatprep.subr.mxu0 0.0
        %2708 = vmatpush1.msra.mxu0 0.0
        %2709 = vmatprep.subr.mxu0 0.0
        %2710 = vmatpush1.msra.mxu0 0.0
        %2711 = vmatprep.subr.mxu0 0.0
        %2712 = vmatpush1.msra.mxu0 0.0
        %2713 = vmatprep.subr.mxu0 0.0
        %2714 = vmatpush1.msra.mxu0 0.0
        %2715 = vmatprep.subr.mxu0 0.0
        %2716 = vmatpush1.msra.mxu0 0.0
        %2717 = vmatprep.subr.mxu0 0.0
        %2718 = vmatpush1.msra.mxu0 0.0
        %2719 = vmatprep.subr.mxu0 0.0
        %2720 = vmatpush1.msra.mxu0 0.0
        %2721 = vmatprep.subr.mxu0 0.0
        %2722 = vmatpush1.msra.mxu0 0.0
        %2723 = vmatprep.subr.mxu0 0.0
        %2724 = vmatpush1.msra.mxu0 0.0
        %2725 = vmatprep.subr.mxu0 0.0
        %2726 = vmatpush1.msra.mxu0 0.0
        %2727 = vmatprep.subr.mxu0 0.0
        %2728 = vmatpush1.msra.mxu0 0.0
        %2729 = vmatprep.subr.mxu0 0.0
        %2730 = vmatpush1.msra.mxu0 0.0
        %2731 = vmatprep.subr.mxu0 0.0
        %2732 = vmatpush1.msra.mxu0 0.0
        %2733 = vmatprep.subr.mxu0 0.0
        %2734 = vmatpush1.msra.mxu0 0.0
        %2735 = vmatprep.subr.mxu0 0.0
        %2736 = vmatpush1.msra.mxu0 0.0
        %2737 = vmatprep.subr.mxu0 0.0
        %2738 = vmatpush1.msra.mxu0 0.0
        %2739 = vmatprep.mubr.f32.mxu0 0.0
        %2740 = vmatmul.mubr.f32.gmra.mrb[0].mxu0 %v2669
        %v2741 = vpop.f32.mrb[0].mxu0
        %v2742 = vadd.f32 0.0, %v2741
        %v2743 = vpop.f32.mrb[0].mxu0
        %v2744 = vadd.f32 0.0, %v2743
        %2745 = vdwg.mxu0
        %v2746 = vadd.f32 %v2658, %v2742
        %v2747 = vadd.f32 %v2659, %v2744
        %s2748 = scalar_lea.vmem %s2, 160
        %v2749 = vld [vmem:[%s2748] sm:$0xff]
        %2750 = vrot.lane.b32.xlu0 %v993, 80
        %v2751 = vpop.permute.xlu0 %2750
        %2752 = vrot.lane.b32.xlu0 %v994, 80
        %v2753 = vpop.permute.xlu0 %2752
        %vm2754 = vcmask 654336
        %v2755 = vsel %vm2754, %v2751, %v2753
        %v2757 = vsel %vm1006, %v2749, 0
        %v2759 = vsel %vm1010, %v2755, 0
        %v2761 = vsel %vm1010, %v2753, 0
        %2763 = vmatprep.subr.mxu0 %v2761
        %2764 = vmatpush1.msra.mxu0 %v2759
        %2765 = vmatprep.subr.mxu0 0.0
        %2766 = vmatpush1.msra.mxu0 0.0
        %2767 = vmatprep.subr.mxu0 0.0
        %2768 = vmatpush1.msra.mxu0 0.0
        %2769 = vmatprep.subr.mxu0 0.0
        %2770 = vmatpush1.msra.mxu0 0.0
        %2771 = vmatprep.subr.mxu0 0.0
        %2772 = vmatpush1.msra.mxu0 0.0
        %2773 = vmatprep.subr.mxu0 0.0
        %2774 = vmatpush1.msra.mxu0 0.0
        %2775 = vmatprep.subr.mxu0 0.0
        %2776 = vmatpush1.msra.mxu0 0.0
        %2777 = vmatprep.subr.mxu0 0.0
        %2778 = vmatpush1.msra.mxu0 0.0
        %2779 = vmatprep.subr.mxu0 0.0
        %2780 = vmatpush1.msra.mxu0 0.0
        %2781 = vmatprep.subr.mxu0 0.0
        %2782 = vmatpush1.msra.mxu0 0.0
        %2783 = vmatprep.subr.mxu0 0.0
        %2784 = vmatpush1.msra.mxu0 0.0
        %2785 = vmatprep.subr.mxu0 0.0
        %2786 = vmatpush1.msra.mxu0 0.0
        %2787 = vmatprep.subr.mxu0 0.0
        %2788 = vmatpush1.msra.mxu0 0.0
        %2789 = vmatprep.subr.mxu0 0.0
        %2790 = vmatpush1.msra.mxu0 0.0
        %2791 = vmatprep.subr.mxu0 0.0
        %2792 = vmatpush1.msra.mxu0 0.0
        %2793 = vmatprep.subr.mxu0 0.0
        %2794 = vmatpush1.msra.mxu0 0.0
        %2795 = vmatprep.subr.mxu0 0.0
        %2796 = vmatpush1.msra.mxu0 0.0
        %2797 = vmatprep.subr.mxu0 0.0
        %2798 = vmatpush1.msra.mxu0 0.0
        %2799 = vmatprep.subr.mxu0 0.0
        %2800 = vmatpush1.msra.mxu0 0.0
        %2801 = vmatprep.subr.mxu0 0.0
        %2802 = vmatpush1.msra.mxu0 0.0
        %2803 = vmatprep.subr.mxu0 0.0
        %2804 = vmatpush1.msra.mxu0 0.0
        %2805 = vmatprep.subr.mxu0 0.0
        %2806 = vmatpush1.msra.mxu0 0.0
        %2807 = vmatprep.subr.mxu0 0.0
        %2808 = vmatpush1.msra.mxu0 0.0
        %2809 = vmatprep.subr.mxu0 0.0
        %2810 = vmatpush1.msra.mxu0 0.0
        %2811 = vmatprep.subr.mxu0 0.0
        %2812 = vmatpush1.msra.mxu0 0.0
        %2813 = vmatprep.subr.mxu0 0.0
        %2814 = vmatpush1.msra.mxu0 0.0
        %2815 = vmatprep.subr.mxu0 0.0
        %2816 = vmatpush1.msra.mxu0 0.0
        %2817 = vmatprep.subr.mxu0 0.0
        %2818 = vmatpush1.msra.mxu0 0.0
        %2819 = vmatprep.subr.mxu0 0.0
        %2820 = vmatpush1.msra.mxu0 0.0
        %2821 = vmatprep.subr.mxu0 0.0
        %2822 = vmatpush1.msra.mxu0 0.0
        %2823 = vmatprep.subr.mxu0 0.0
        %2824 = vmatpush1.msra.mxu0 0.0
        %2825 = vmatprep.subr.mxu0 0.0
        %2826 = vmatpush1.msra.mxu0 0.0
        %2827 = vmatprep.mubr.f32.mxu0 0.0
        %2828 = vmatmul.mubr.f32.gmra.mrb[0].mxu0 %v2757
        %v2829 = vpop.f32.mrb[0].mxu0
        %v2830 = vadd.f32 0.0, %v2829
        %v2831 = vpop.f32.mrb[0].mxu0
        %v2832 = vadd.f32 0.0, %v2831
        %2833 = vdwg.mxu0
        %v2834 = vadd.f32 %v2746, %v2830
        %v2835 = vadd.f32 %v2747, %v2832
        %s2836 = scalar_lea.vmem %s2, 168
        %v2837 = vld [vmem:[%s2836] sm:$0xff]
        %2838 = vrot.lane.b32.xlu0 %v993, 79
        %v2839 = vpop.permute.xlu0 %2838
        %2840 = vrot.lane.b32.xlu0 %v994, 79
        %v2841 = vpop.permute.xlu0 %2840
        %vm2842 = vcmask 646144
        %v2843 = vsel %vm2842, %v2839, %v2841
        %v2845 = vsel %vm1006, %v2837, 0
        %v2847 = vsel %vm1010, %v2843, 0
        %v2849 = vsel %vm1010, %v2841, 0
        %2851 = vmatprep.subr.mxu0 %v2849
        %2852 = vmatpush1.msra.mxu0 %v2847
        %2853 = vmatprep.subr.mxu0 0.0
        %2854 = vmatpush1.msra.mxu0 0.0
        %2855 = vmatprep.subr.mxu0 0.0
        %2856 = vmatpush1.msra.mxu0 0.0
        %2857 = vmatprep.subr.mxu0 0.0
        %2858 = vmatpush1.msra.mxu0 0.0
        %2859 = vmatprep.subr.mxu0 0.0
        %2860 = vmatpush1.msra.mxu0 0.0
        %2861 = vmatprep.subr.mxu0 0.0
        %2862 = vmatpush1.msra.mxu0 0.0
        %2863 = vmatprep.subr.mxu0 0.0
        %2864 = vmatpush1.msra.mxu0 0.0
        %2865 = vmatprep.subr.mxu0 0.0
        %2866 = vmatpush1.msra.mxu0 0.0
        %2867 = vmatprep.subr.mxu0 0.0
        %2868 = vmatpush1.msra.mxu0 0.0
        %2869 = vmatprep.subr.mxu0 0.0
        %2870 = vmatpush1.msra.mxu0 0.0
        %2871 = vmatprep.subr.mxu0 0.0
        %2872 = vmatpush1.msra.mxu0 0.0
        %2873 = vmatprep.subr.mxu0 0.0
        %2874 = vmatpush1.msra.mxu0 0.0
        %2875 = vmatprep.subr.mxu0 0.0
        %2876 = vmatpush1.msra.mxu0 0.0
        %2877 = vmatprep.subr.mxu0 0.0
        %2878 = vmatpush1.msra.mxu0 0.0
        %2879 = vmatprep.subr.mxu0 0.0
        %2880 = vmatpush1.msra.mxu0 0.0
        %2881 = vmatprep.subr.mxu0 0.0
        %2882 = vmatpush1.msra.mxu0 0.0
        %2883 = vmatprep.subr.mxu0 0.0
        %2884 = vmatpush1.msra.mxu0 0.0
        %2885 = vmatprep.subr.mxu0 0.0
        %2886 = vmatpush1.msra.mxu0 0.0
        %2887 = vmatprep.subr.mxu0 0.0
        %2888 = vmatpush1.msra.mxu0 0.0
        %2889 = vmatprep.subr.mxu0 0.0
        %2890 = vmatpush1.msra.mxu0 0.0
        %2891 = vmatprep.subr.mxu0 0.0
        %2892 = vmatpush1.msra.mxu0 0.0
        %2893 = vmatprep.subr.mxu0 0.0
        %2894 = vmatpush1.msra.mxu0 0.0
        %2895 = vmatprep.subr.mxu0 0.0
        %2896 = vmatpush1.msra.mxu0 0.0
        %2897 = vmatprep.subr.mxu0 0.0
        %2898 = vmatpush1.msra.mxu0 0.0
        %2899 = vmatprep.subr.mxu0 0.0
        %2900 = vmatpush1.msra.mxu0 0.0
        %2901 = vmatprep.subr.mxu0 0.0
        %2902 = vmatpush1.msra.mxu0 0.0
        %2903 = vmatprep.subr.mxu0 0.0
        %2904 = vmatpush1.msra.mxu0 0.0
        %2905 = vmatprep.subr.mxu0 0.0
        %2906 = vmatpush1.msra.mxu0 0.0
        %2907 = vmatprep.subr.mxu0 0.0
        %2908 = vmatpush1.msra.mxu0 0.0
        %2909 = vmatprep.subr.mxu0 0.0
        %2910 = vmatpush1.msra.mxu0 0.0
        %2911 = vmatprep.subr.mxu0 0.0
        %2912 = vmatpush1.msra.mxu0 0.0
        %2913 = vmatprep.subr.mxu0 0.0
        %2914 = vmatpush1.msra.mxu0 0.0
        %2915 = vmatprep.mubr.f32.mxu0 0.0
        %2916 = vmatmul.mubr.f32.gmra.mrb[0].mxu0 %v2845
        %v2917 = vpop.f32.mrb[0].mxu0
        %v2918 = vadd.f32 0.0, %v2917
        %v2919 = vpop.f32.mrb[0].mxu0
        %v2920 = vadd.f32 0.0, %v2919
        %2921 = vdwg.mxu0
        %v2922 = vadd.f32 %v2834, %v2918
        %v2923 = vadd.f32 %v2835, %v2920
        %s2924 = scalar_lea.vmem %s2, 176
        %v2925 = vld [vmem:[%s2924] sm:$0xff]
        %2926 = vrot.lane.b32.xlu0 %v993, 78
        %v2927 = vpop.permute.xlu0 %2926
        %2928 = vrot.lane.b32.xlu0 %v994, 78
        %v2929 = vpop.permute.xlu0 %2928
        %vm2930 = vcmask 637952
        %v2931 = vsel %vm2930, %v2927, %v2929
        %v2933 = vsel %vm1006, %v2925, 0
        %v2935 = vsel %vm1010, %v2931, 0
        %v2937 = vsel %vm1010, %v2929, 0
        %2939 = vmatprep.subr.mxu0 %v2937
        %2940 = vmatpush1.msra.mxu0 %v2935
        %2941 = vmatprep.subr.mxu0 0.0
        %2942 = vmatpush1.msra.mxu0 0.0
        %2943 = vmatprep.subr.mxu0 0.0
        %2944 = vmatpush1.msra.mxu0 0.0
        %2945 = vmatprep.subr.mxu0 0.0
        %2946 = vmatpush1.msra.mxu0 0.0
        %2947 = vmatprep.subr.mxu0 0.0
        %2948 = vmatpush1.msra.mxu0 0.0
        %2949 = vmatprep.subr.mxu0 0.0
        %2950 = vmatpush1.msra.mxu0 0.0
        %2951 = vmatprep.subr.mxu0 0.0
        %2952 = vmatpush1.msra.mxu0 0.0
        %2953 = vmatprep.subr.mxu0 0.0
        %2954 = vmatpush1.msra.mxu0 0.0
        %2955 = vmatprep.subr.mxu0 0.0
        %2956 = vmatpush1.msra.mxu0 0.0
        %2957 = vmatprep.subr.mxu0 0.0
        %2958 = vmatpush1.msra.mxu0 0.0
        %2959 = vmatprep.subr.mxu0 0.0
        %2960 = vmatpush1.msra.mxu0 0.0
        %2961 = vmatprep.subr.mxu0 0.0
        %2962 = vmatpush1.msra.mxu0 0.0
        %2963 = vmatprep.subr.mxu0 0.0
        %2964 = vmatpush1.msra.mxu0 0.0
        %2965 = vmatprep.subr.mxu0 0.0
        %2966 = vmatpush1.msra.mxu0 0.0
        %2967 = vmatprep.subr.mxu0 0.0
        %2968 = vmatpush1.msra.mxu0 0.0
        %2969 = vmatprep.subr.mxu0 0.0
        %2970 = vmatpush1.msra.mxu0 0.0
        %2971 = vmatprep.subr.mxu0 0.0
        %2972 = vmatpush1.msra.mxu0 0.0
        %2973 = vmatprep.subr.mxu0 0.0
        %2974 = vmatpush1.msra.mxu0 0.0
        %2975 = vmatprep.subr.mxu0 0.0
        %2976 = vmatpush1.msra.mxu0 0.0
        %2977 = vmatprep.subr.mxu0 0.0
        %2978 = vmatpush1.msra.mxu0 0.0
        %2979 = vmatprep.subr.mxu0 0.0
        %2980 = vmatpush1.msra.mxu0 0.0
        %2981 = vmatprep.subr.mxu0 0.0
        %2982 = vmatpush1.msra.mxu0 0.0
        %2983 = vmatprep.subr.mxu0 0.0
        %2984 = vmatpush1.msra.mxu0 0.0
        %2985 = vmatprep.subr.mxu0 0.0
        %2986 = vmatpush1.msra.mxu0 0.0
        %2987 = vmatprep.subr.mxu0 0.0
        %2988 = vmatpush1.msra.mxu0 0.0
        %2989 = vmatprep.subr.mxu0 0.0
        %2990 = vmatpush1.msra.mxu0 0.0
        %2991 = vmatprep.subr.mxu0 0.0
        %2992 = vmatpush1.msra.mxu0 0.0
        %2993 = vmatprep.subr.mxu0 0.0
        %2994 = vmatpush1.msra.mxu0 0.0
        %2995 = vmatprep.subr.mxu0 0.0
        %2996 = vmatpush1.msra.mxu0 0.0
        %2997 = vmatprep.subr.mxu0 0.0
        %2998 = vmatpush1.msra.mxu0 0.0
        %2999 = vmatprep.subr.mxu0 0.0
        %3000 = vmatpush1.msra.mxu0 0.0
        %3001 = vmatprep.subr.mxu0 0.0
        %3002 = vmatpush1.msra.mxu0 0.0
        %3003 = vmatprep.mubr.f32.mxu0 0.0
        %3004 = vmatmul.mubr.f32.gmra.mrb[0].mxu0 %v2933
        %v3005 = vpop.f32.mrb[0].mxu0
        %v3006 = vadd.f32 0.0, %v3005
        %v3007 = vpop.f32.mrb[0].mxu0
        %v3008 = vadd.f32 0.0, %v3007
        %3009 = vdwg.mxu0
        %v3010 = vadd.f32 %v2922, %v3006
        %v3011 = vadd.f32 %v2923, %v3008
        %s3012 = scalar_lea.vmem %s2, 184
        %v3013 = vld [vmem:[%s3012] sm:$0xff]
        %3014 = vrot.lane.b32.xlu0 %v993, 77
        %v3015 = vpop.permute.xlu0 %3014
        %3016 = vrot.lane.b32.xlu0 %v994, 77
        %v3017 = vpop.permute.xlu0 %3016
        %vm3018 = vcmask 629760
        %v3019 = vsel %vm3018, %v3015, %v3017
        %v3021 = vsel %vm1006, %v3013, 0
        %v3023 = vsel %vm1010, %v3019, 0
        %v3025 = vsel %vm1010, %v3017, 0
        %3027 = vmatprep.subr.mxu0 %v3025
        %3028 = vmatpush1.msra.mxu0 %v3023
        %3029 = vmatprep.subr.mxu0 0.0
        %3030 = vmatpush1.msra.mxu0 0.0
        %3031 = vmatprep.subr.mxu0 0.0
        %3032 = vmatpush1.msra.mxu0 0.0
        %3033 = vmatprep.subr.mxu0 0.0
        %3034 = vmatpush1.msra.mxu0 0.0
        %3035 = vmatprep.subr.mxu0 0.0
        %3036 = vmatpush1.msra.mxu0 0.0
        %3037 = vmatprep.subr.mxu0 0.0
        %3038 = vmatpush1.msra.mxu0 0.0
        %3039 = vmatprep.subr.mxu0 0.0
        %3040 = vmatpush1.msra.mxu0 0.0
        %3041 = vmatprep.subr.mxu0 0.0
        %3042 = vmatpush1.msra.mxu0 0.0
        %3043 = vmatprep.subr.mxu0 0.0
        %3044 = vmatpush1.msra.mxu0 0.0
        %3045 = vmatprep.subr.mxu0 0.0
        %3046 = vmatpush1.msra.mxu0 0.0
        %3047 = vmatprep.subr.mxu0 0.0
        %3048 = vmatpush1.msra.mxu0 0.0
        %3049 = vmatprep.subr.mxu0 0.0
        %3050 = vmatpush1.msra.mxu0 0.0
        %3051 = vmatprep.subr.mxu0 0.0
        %3052 = vmatpush1.msra.mxu0 0.0
        %3053 = vmatprep.subr.mxu0 0.0
        %3054 = vmatpush1.msra.mxu0 0.0
        %3055 = vmatprep.subr.mxu0 0.0
        %3056 = vmatpush1.msra.mxu0 0.0
        %3057 = vmatprep.subr.mxu0 0.0
        %3058 = vmatpush1.msra.mxu0 0.0
        %3059 = vmatprep.subr.mxu0 0.0
        %3060 = vmatpush1.msra.mxu0 0.0
        %3061 = vmatprep.subr.mxu0 0.0
        %3062 = vmatpush1.msra.mxu0 0.0
        %3063 = vmatprep.subr.mxu0 0.0
        %3064 = vmatpush1.msra.mxu0 0.0
        %3065 = vmatprep.subr.mxu0 0.0
        %3066 = vmatpush1.msra.mxu0 0.0
        %3067 = vmatprep.subr.mxu0 0.0
        %3068 = vmatpush1.msra.mxu0 0.0
        %3069 = vmatprep.subr.mxu0 0.0
        %3070 = vmatpush1.msra.mxu0 0.0
        %3071 = vmatprep.subr.mxu0 0.0
        %3072 = vmatpush1.msra.mxu0 0.0
        %3073 = vmatprep.subr.mxu0 0.0
        %3074 = vmatpush1.msra.mxu0 0.0
        %3075 = vmatprep.subr.mxu0 0.0
        %3076 = vmatpush1.msra.mxu0 0.0
        %3077 = vmatprep.subr.mxu0 0.0
        %3078 = vmatpush1.msra.mxu0 0.0
        %3079 = vmatprep.subr.mxu0 0.0
        %3080 = vmatpush1.msra.mxu0 0.0
        %3081 = vmatprep.subr.mxu0 0.0
        %3082 = vmatpush1.msra.mxu0 0.0
        %3083 = vmatprep.subr.mxu0 0.0
        %3084 = vmatpush1.msra.mxu0 0.0
        %3085 = vmatprep.subr.mxu0 0.0
        %3086 = vmatpush1.msra.mxu0 0.0
        %3087 = vmatprep.subr.mxu0 0.0
        %3088 = vmatpush1.msra.mxu0 0.0
        %3089 = vmatprep.subr.mxu0 0.0
        %3090 = vmatpush1.msra.mxu0 0.0
        %3091 = vmatprep.mubr.f32.mxu0 0.0
        %3092 = vmatmul.mubr.f32.gmra.mrb[0].mxu0 %v3021
        %v3093 = vpop.f32.mrb[0].mxu0
        %v3094 = vadd.f32 0.0, %v3093
        %v3095 = vpop.f32.mrb[0].mxu0
        %v3096 = vadd.f32 0.0, %v3095
        %3097 = vdwg.mxu0
        %v3098 = vadd.f32 %v3010, %v3094
        %v3099 = vadd.f32 %v3011, %v3096
        %s3100 = scalar_lea.vmem %s2, 192
        %v3101 = vld [vmem:[%s3100] sm:$0xff]
        %3102 = vrot.lane.b32.xlu0 %v993, 76
        %v3103 = vpop.permute.xlu0 %3102
        %3104 = vrot.lane.b32.xlu0 %v994, 76
        %v3105 = vpop.permute.xlu0 %3104
        %vm3106 = vcmask 621568
        %v3107 = vsel %vm3106, %v3103, %v3105
        %v3109 = vsel %vm1006, %v3101, 0
        %v3111 = vsel %vm1010, %v3107, 0
        %v3113 = vsel %vm1010, %v3105, 0
        %3115 = vmatprep.subr.mxu0 %v3113
        %3116 = vmatpush1.msra.mxu0 %v3111
        %3117 = vmatprep.subr.mxu0 0.0
        %3118 = vmatpush1.msra.mxu0 0.0
        %3119 = vmatprep.subr.mxu0 0.0
        %3120 = vmatpush1.msra.mxu0 0.0
        %3121 = vmatprep.subr.mxu0 0.0
        %3122 = vmatpush1.msra.mxu0 0.0
        %3123 = vmatprep.subr.mxu0 0.0
        %3124 = vmatpush1.msra.mxu0 0.0
        %3125 = vmatprep.subr.mxu0 0.0
        %3126 = vmatpush1.msra.mxu0 0.0
        %3127 = vmatprep.subr.mxu0 0.0
        %3128 = vmatpush1.msra.mxu0 0.0
        %3129 = vmatprep.subr.mxu0 0.0
        %3130 = vmatpush1.msra.mxu0 0.0
        %3131 = vmatprep.subr.mxu0 0.0
        %3132 = vmatpush1.msra.mxu0 0.0
        %3133 = vmatprep.subr.mxu0 0.0
        %3134 = vmatpush1.msra.mxu0 0.0
        %3135 = vmatprep.subr.mxu0 0.0
        %3136 = vmatpush1.msra.mxu0 0.0
        %3137 = vmatprep.subr.mxu0 0.0
        %3138 = vmatpush1.msra.mxu0 0.0
        %3139 = vmatprep.subr.mxu0 0.0
        %3140 = vmatpush1.msra.mxu0 0.0
        %3141 = vmatprep.subr.mxu0 0.0
        %3142 = vmatpush1.msra.mxu0 0.0
        %3143 = vmatprep.subr.mxu0 0.0
        %3144 = vmatpush1.msra.mxu0 0.0
        %3145 = vmatprep.subr.mxu0 0.0
        %3146 = vmatpush1.msra.mxu0 0.0
        %3147 = vmatprep.subr.mxu0 0.0
        %3148 = vmatpush1.msra.mxu0 0.0
        %3149 = vmatprep.subr.mxu0 0.0
        %3150 = vmatpush1.msra.mxu0 0.0
        %3151 = vmatprep.subr.mxu0 0.0
        %3152 = vmatpush1.msra.mxu0 0.0
        %3153 = vmatprep.subr.mxu0 0.0
        %3154 = vmatpush1.msra.mxu0 0.0
        %3155 = vmatprep.subr.mxu0 0.0
        %3156 = vmatpush1.msra.mxu0 0.0
        %3157 = vmatprep.subr.mxu0 0.0
        %3158 = vmatpush1.msra.mxu0 0.0
        %3159 = vmatprep.subr.mxu0 0.0
        %3160 = vmatpush1.msra.mxu0 0.0
        %3161 = vmatprep.subr.mxu0 0.0
        %3162 = vmatpush1.msra.mxu0 0.0
        %3163 = vmatprep.subr.mxu0 0.0
        %3164 = vmatpush1.msra.mxu0 0.0
        %3165 = vmatprep.subr.mxu0 0.0
        %3166 = vmatpush1.msra.mxu0 0.0
        %3167 = vmatprep.subr.mxu0 0.0
        %3168 = vmatpush1.msra.mxu0 0.0
        %3169 = vmatprep.subr.mxu0 0.0
        %3170 = vmatpush1.msra.mxu0 0.0
        %3171 = vmatprep.subr.mxu0 0.0
        %3172 = vmatpush1.msra.mxu0 0.0
        %3173 = vmatprep.subr.mxu0 0.0
        %3174 = vmatpush1.msra.mxu0 0.0
        %3175 = vmatprep.subr.mxu0 0.0
        %3176 = vmatpush1.msra.mxu0 0.0
        %3177 = vmatprep.subr.mxu0 0.0
        %3178 = vmatpush1.msra.mxu0 0.0
        %3179 = vmatprep.mubr.f32.mxu0 0.0
        %3180 = vmatmul.mubr.f32.gmra.mrb[0].mxu0 %v3109
        %v3181 = vpop.f32.mrb[0].mxu0
        %v3182 = vadd.f32 0.0, %v3181
        %v3183 = vpop.f32.mrb[0].mxu0
        %v3184 = vadd.f32 0.0, %v3183
        %3185 = vdwg.mxu0
        %v3186 = vadd.f32 %v3098, %v3182
        %v3187 = vadd.f32 %v3099, %v3184
        %v3188 = vld [vmem:[%s3] sm:$0xff]
        %3190 = vset.pattern.permute.xlu0 0
        %3191 = vperm.xlu0 %3190, %v3188
        %v3192 = vpop.permute.xlu0 %3191
        %v3194 = vadd.f32 %v3186, %v3192
        %v3195 = vadd.f32 %v3187, %v3192
        %v3196 = vmax.f32 %v3194, 0.0
        %v3197 = vmax.f32 %v3195, 0.0
        %v3198 = vld [vmem:[%s4] sm:$0xff]
        %v3199 = vld [vmem:[%s4 + $0x8] sm:$0xff]
        %v3200 = vld [vmem:[%s4 + $0x10] sm:$0xff]
        %v3201 = vld [vmem:[%s4 + $0x18] sm:$0xff]
        %v3202 = vld [vmem:[%s4 + $0x20] sm:$0xff]
        %v3203 = vld [vmem:[%s4 + $0x28] sm:$0xff]
        %v3204 = vld [vmem:[%s4 + $0x30] sm:$0xff]
        %v3205 = vld [vmem:[%s4 + $0x38] sm:$0xff]
        %v3206 = vld [vmem:[%s4 + $0x40] sm:$0xff]
        %v3207 = vld [vmem:[%s4 + $0x48] sm:$0xff]
        %v3208 = vld [vmem:[%s4 + $0x50] sm:$0xff]
        %v3209 = vld [vmem:[%s4 + $0x58] sm:$0xff]
        %v3210 = vld [vmem:[%s4 + $0x60] sm:$0xff]
        %v3211 = vld [vmem:[%s4 + $0x68] sm:$0xff]
        %v3212 = vld [vmem:[%s4 + $0x70] sm:$0xff]
        %v3213 = vld [vmem:[%s4 + $0x78] sm:$0xff]
        %v3214 = vld [vmem:[%s4 + $0x80] sm:$0xff]
        %v3215 = vld [vmem:[%s4 + $0x88] sm:$0xff]
        %vm3216 = vcmask 130048
        %v3218 = vsel %vm3216, %v3197, 0
        %3220 = vmatprep.subr.mxu0 0.0
        %3221 = vmatpush1.msra.mxu0 %v3198
        %3222 = vmatprep.subr.mxu0 0.0
        %3223 = vmatpush1.msra.mxu0 %v3199
        %3224 = vmatprep.subr.mxu0 0.0
        %3225 = vmatpush1.msra.mxu0 %v3200
        %3226 = vmatprep.subr.mxu0 0.0
        %3227 = vmatpush1.msra.mxu0 %v3201
        %3228 = vmatprep.subr.mxu0 0.0
        %3229 = vmatpush1.msra.mxu0 %v3202
        %3230 = vmatprep.subr.mxu0 0.0
        %3231 = vmatpush1.msra.mxu0 %v3203
        %3232 = vmatprep.subr.mxu0 0.0
        %3233 = vmatpush1.msra.mxu0 %v3204
        %3234 = vmatprep.subr.mxu0 0.0
        %3235 = vmatpush1.msra.mxu0 %v3205
        %3236 = vmatprep.subr.mxu0 0.0
        %3237 = vmatpush1.msra.mxu0 %v3206
        %3238 = vmatprep.subr.mxu0 0.0
        %3239 = vmatpush1.msra.mxu0 %v3207
        %3240 = vmatprep.subr.mxu0 0.0
        %3241 = vmatpush1.msra.mxu0 %v3208
        %3242 = vmatprep.subr.mxu0 0.0
        %3243 = vmatpush1.msra.mxu0 %v3209
        %3244 = vmatprep.subr.mxu0 0.0
        %3245 = vmatpush1.msra.mxu0 %v3210
        %3246 = vmatprep.subr.mxu0 0.0
        %3247 = vmatpush1.msra.mxu0 %v3211
        %3248 = vmatprep.subr.mxu0 0.0
        %3249 = vmatpush1.msra.mxu0 %v3212
        %3250 = vmatprep.subr.mxu0 0.0
        %3251 = vmatpush1.msra.mxu0 %v3213
        %3252 = vmatprep.subr.mxu0 0.0
        %3253 = vmatpush1.msra.mxu0 %v3214
        %3254 = vmatprep.subr.mxu0 0.0
        %3255 = vmatpush1.msra.mxu0 %v3215
        %3256 = vmatprep.subr.mxu0 0.0
        %3257 = vmatpush1.msra.mxu0 0.0
        %3258 = vmatprep.subr.mxu0 0.0
        %3259 = vmatpush1.msra.mxu0 0.0
        %3260 = vmatprep.subr.mxu0 0.0
        %3261 = vmatpush1.msra.mxu0 0.0
        %3262 = vmatprep.subr.mxu0 0.0
        %3263 = vmatpush1.msra.mxu0 0.0
        %3264 = vmatprep.subr.mxu0 0.0
        %3265 = vmatpush1.msra.mxu0 0.0
        %3266 = vmatprep.subr.mxu0 0.0
        %3267 = vmatpush1.msra.mxu0 0.0
        %3268 = vmatprep.subr.mxu0 0.0
        %3269 = vmatpush1.msra.mxu0 0.0
        %3270 = vmatprep.subr.mxu0 0.0
        %3271 = vmatpush1.msra.mxu0 0.0
        %3272 = vmatprep.subr.mxu0 0.0
        %3273 = vmatpush1.msra.mxu0 0.0
        %3274 = vmatprep.subr.mxu0 0.0
        %3275 = vmatpush1.msra.mxu0 0.0
        %3276 = vmatprep.subr.mxu0 0.0
        %3277 = vmatpush1.msra.mxu0 0.0
        %3278 = vmatprep.subr.mxu0 0.0
        %3279 = vmatpush1.msra.mxu0 0.0
        %3280 = vmatprep.subr.mxu0 0.0
        %3281 = vmatpush1.msra.mxu0 0.0
        %3282 = vmatprep.subr.mxu0 0.0
        %3283 = vmatpush1.msra.mxu0 0.0
        %3284 = vmatprep.mubr.f32.mxu0 %v3218
        %3285 = vmatmul.mubr.f32.gmra.mrb[0].mxu0 %v3196
        %v3286 = vpop.f32.mrb[0].mxu0
        %v3287 = vadd.f32 0.0, %v3286
        %v3288 = vpop.f32.mrb[0].mxu0
        %3289 = vdwg.mxu0
        %s3290 = scalar_lea.vmem %s4, 144
        %v3291 = vld [vmem:[%s3290] sm:$0xff]
        %v3292 = vld [vmem:[%s3290 + $0x8] sm:$0xff]
        %v3293 = vld [vmem:[%s3290 + $0x10] sm:$0xff]
        %v3294 = vld [vmem:[%s3290 + $0x18] sm:$0xff]
        %v3295 = vld [vmem:[%s3290 + $0x20] sm:$0xff]
        %v3296 = vld [vmem:[%s3290 + $0x28] sm:$0xff]
        %v3297 = vld [vmem:[%s3290 + $0x30] sm:$0xff]
        %v3298 = vld [vmem:[%s3290 + $0x38] sm:$0xff]
        %v3299 = vld [vmem:[%s3290 + $0x40] sm:$0xff]
        %v3300 = vld [vmem:[%s3290 + $0x48] sm:$0xff]
        %v3301 = vld [vmem:[%s3290 + $0x50] sm:$0xff]
        %v3302 = vld [vmem:[%s3290 + $0x58] sm:$0xff]
        %v3303 = vld [vmem:[%s3290 + $0x60] sm:$0xff]
        %v3304 = vld [vmem:[%s3290 + $0x68] sm:$0xff]
        %v3305 = vld [vmem:[%s3290 + $0x70] sm:$0xff]
        %v3306 = vld [vmem:[%s3290 + $0x78] sm:$0xff]
        %v3307 = vld [vmem:[%s3290 + $0x80] sm:$0xff]
        %v3308 = vld [vmem:[%s3290 + $0x88] sm:$0xff]
        %3309 = vmatprep.subr.mxu0 0.0
        %3310 = vmatpush1.msra.mxu0 %v3291
        %3311 = vmatprep.subr.mxu0 0.0
        %3312 = vmatpush1.msra.mxu0 %v3292
        %3313 = vmatprep.subr.mxu0 0.0
        %3314 = vmatpush1.msra.mxu0 %v3293
        %3315 = vmatprep.subr.mxu0 0.0
        %3316 = vmatpush1.msra.mxu0 %v3294
        %3317 = vmatprep.subr.mxu0 0.0
        %3318 = vmatpush1.msra.mxu0 %v3295
        %3319 = vmatprep.subr.mxu0 0.0
        %3320 = vmatpush1.msra.mxu0 %v3296
        %3321 = vmatprep.subr.mxu0 0.0
        %3322 = vmatpush1.msra.mxu0 %v3297
        %3323 = vmatprep.subr.mxu0 0.0
        %3324 = vmatpush1.msra.mxu0 %v3298
        %3325 = vmatprep.subr.mxu0 0.0
        %3326 = vmatpush1.msra.mxu0 %v3299
        %3327 = vmatprep.subr.mxu0 0.0
        %3328 = vmatpush1.msra.mxu0 %v3300
        %3329 = vmatprep.subr.mxu0 0.0
        %3330 = vmatpush1.msra.mxu0 %v3301
        %3331 = vmatprep.subr.mxu0 0.0
        %3332 = vmatpush1.msra.mxu0 %v3302
        %3333 = vmatprep.subr.mxu0 0.0
        %3334 = vmatpush1.msra.mxu0 %v3303
        %3335 = vmatprep.subr.mxu0 0.0
        %3336 = vmatpush1.msra.mxu0 %v3304
        %3337 = vmatprep.subr.mxu0 0.0
        %3338 = vmatpush1.msra.mxu0 %v3305
        %3339 = vmatprep.subr.mxu0 0.0
        %3340 = vmatpush1.msra.mxu0 %v3306
        %3341 = vmatprep.subr.mxu0 0.0
        %3342 = vmatpush1.msra.mxu0 %v3307
        %3343 = vmatprep.subr.mxu0 0.0
        %3344 = vmatpush1.msra.mxu0 %v3308
        %3345 = vmatprep.subr.mxu0 0.0
        %3346 = vmatpush1.msra.mxu0 0.0
        %3347 = vmatprep.subr.mxu0 0.0
        %3348 = vmatpush1.msra.mxu0 0.0
        %3349 = vmatprep.subr.mxu0 0.0
        %3350 = vmatpush1.msra.mxu0 0.0
        %3351 = vmatprep.subr.mxu0 0.0
        %3352 = vmatpush1.msra.mxu0 0.0
        %3353 = vmatprep.subr.mxu0 0.0
        %3354 = vmatpush1.msra.mxu0 0.0
        %3355 = vmatprep.subr.mxu0 0.0
        %3356 = vmatpush1.msra.mxu0 0.0
        %3357 = vmatprep.subr.mxu0 0.0
        %3358 = vmatpush1.msra.mxu0 0.0
        %3359 = vmatprep.subr.mxu0 0.0
        %3360 = vmatpush1.msra.mxu0 0.0
        %3361 = vmatprep.subr.mxu0 0.0
        %3362 = vmatpush1.msra.mxu0 0.0
        %3363 = vmatprep.subr.mxu0 0.0
        %3364 = vmatpush1.msra.mxu0 0.0
        %3365 = vmatprep.subr.mxu0 0.0
        %3366 = vmatpush1.msra.mxu0 0.0
        %3367 = vmatprep.subr.mxu0 0.0
        %3368 = vmatpush1.msra.mxu0 0.0
        %3369 = vmatprep.subr.mxu0 0.0
        %3370 = vmatpush1.msra.mxu0 0.0
        %3371 = vmatprep.subr.mxu0 0.0
        %3372 = vmatpush1.msra.mxu0 0.0
        %3373 = vmatprep.mubr.f32.mxu0 %v3218
        %3374 = vmatmul.mubr.f32.gmra.mrb[0].mxu0 %v3196
        %v3375 = vpop.f32.mrb[0].mxu0
        %v3376 = vadd.f32 0.0, %v3375
        %v3377 = vpop.f32.mrb[0].mxu0
        %3378 = vdwg.mxu0
        %v3379 = vmax.f32 %v3287, %v3376
        %s3380 = scalar_lea.vmem %s4, 288
        %v3381 = vld [vmem:[%s3380] sm:$0xff]
        %v3382 = vld [vmem:[%s3380 + $0x8] sm:$0xff]
        %v3383 = vld [vmem:[%s3380 + $0x10] sm:$0xff]
        %v3384 = vld [vmem:[%s3380 + $0x18] sm:$0xff]
        %v3385 = vld [vmem:[%s3380 + $0x20] sm:$0xff]
        %v3386 = vld [vmem:[%s3380 + $0x28] sm:$0xff]
        %v3387 = vld [vmem:[%s3380 + $0x30] sm:$0xff]
        %v3388 = vld [vmem:[%s3380 + $0x38] sm:$0xff]
        %v3389 = vld [vmem:[%s3380 + $0x40] sm:$0xff]
        %v3390 = vld [vmem:[%s3380 + $0x48] sm:$0xff]
        %v3391 = vld [vmem:[%s3380 + $0x50] sm:$0xff]
        %v3392 = vld [vmem:[%s3380 + $0x58] sm:$0xff]
        %v3393 = vld [vmem:[%s3380 + $0x60] sm:$0xff]
        %v3394 = vld [vmem:[%s3380 + $0x68] sm:$0xff]
        %v3395 = vld [vmem:[%s3380 + $0x70] sm:$0xff]
        %v3396 = vld [vmem:[%s3380 + $0x78] sm:$0xff]
        %v3397 = vld [vmem:[%s3380 + $0x80] sm:$0xff]
        %v3398 = vld [vmem:[%s3380 + $0x88] sm:$0xff]
        %3399 = vmatprep.subr.mxu0 0.0
        %3400 = vmatpush1.msra.mxu0 %v3381
        %3401 = vmatprep.subr.mxu0 0.0
        %3402 = vmatpush1.msra.mxu0 %v3382
        %3403 = vmatprep.subr.mxu0 0.0
        %3404 = vmatpush1.msra.mxu0 %v3383
        %3405 = vmatprep.subr.mxu0 0.0
        %3406 = vmatpush1.msra.mxu0 %v3384
        %3407 = vmatprep.subr.mxu0 0.0
        %3408 = vmatpush1.msra.mxu0 %v3385
        %3409 = vmatprep.subr.mxu0 0.0
        %3410 = vmatpush1.msra.mxu0 %v3386
        %3411 = vmatprep.subr.mxu0 0.0
        %3412 = vmatpush1.msra.mxu0 %v3387
        %3413 = vmatprep.subr.mxu0 0.0
        %3414 = vmatpush1.msra.mxu0 %v3388
        %3415 = vmatprep.subr.mxu0 0.0
        %3416 = vmatpush1.msra.mxu0 %v3389
        %3417 = vmatprep.subr.mxu0 0.0
        %3418 = vmatpush1.msra.mxu0 %v3390
        %3419 = vmatprep.subr.mxu0 0.0
        %3420 = vmatpush1.msra.mxu0 %v3391
        %3421 = vmatprep.subr.mxu0 0.0
        %3422 = vmatpush1.msra.mxu0 %v3392
        %3423 = vmatprep.subr.mxu0 0.0
        %3424 = vmatpush1.msra.mxu0 %v3393
        %3425 = vmatprep.subr.mxu0 0.0
        %3426 = vmatpush1.msra.mxu0 %v3394
        %3427 = vmatprep.subr.mxu0 0.0
        %3428 = vmatpush1.msra.mxu0 %v3395
        %3429 = vmatprep.subr.mxu0 0.0
        %3430 = vmatpush1.msra.mxu0 %v3396
        %3431 = vmatprep.subr.mxu0 0.0
        %3432 = vmatpush1.msra.mxu0 %v3397
        %3433 = vmatprep.subr.mxu0 0.0
        %3434 = vmatpush1.msra.mxu0 %v3398
        %3435 = vmatprep.subr.mxu0 0.0
        %3436 = vmatpush1.msra.mxu0 0.0
        %3437 = vmatprep.subr.mxu0 0.0
        %3438 = vmatpush1.msra.mxu0 0.0
        %3439 = vmatprep.subr.mxu0 0.0
        %3440 = vmatpush1.msra.mxu0 0.0
        %3441 = vmatprep.subr.mxu0 0.0
        %3442 = vmatpush1.msra.mxu0 0.0
        %3443 = vmatprep.subr.mxu0 0.0
        %3444 = vmatpush1.msra.mxu0 0.0
        %3445 = vmatprep.subr.mxu0 0.0
        %3446 = vmatpush1.msra.mxu0 0.0
        %3447 = vmatprep.subr.mxu0 0.0
        %3448 = vmatpush1.msra.mxu0 0.0
        %3449 = vmatprep.subr.mxu0 0.0
        %3450 = vmatpush1.msra.mxu0 0.0
        %3451 = vmatprep.subr.mxu0 0.0
        %3452 = vmatpush1.msra.mxu0 0.0
        %3453 = vmatprep.subr.mxu0 0.0
        %3454 = vmatpush1.msra.mxu0 0.0
        %3455 = vmatprep.subr.mxu0 0.0
        %3456 = vmatpush1.msra.mxu0 0.0
        %3457 = vmatprep.subr.mxu0 0.0
        %3458 = vmatpush1.msra.mxu0 0.0
        %3459 = vmatprep.subr.mxu0 0.0
        %3460 = vmatpush1.msra.mxu0 0.0
        %3461 = vmatprep.subr.mxu0 0.0
        %3462 = vmatpush1.msra.mxu0 0.0
        %3463 = vmatprep.mubr.f32.mxu0 %v3218
        %3464 = vmatmul.mubr.f32.gmra.mrb[0].mxu0 %v3196
        %v3465 = vpop.f32.mrb[0].mxu0
        %v3466 = vadd.f32 0.0, %v3465
        %v3467 = vpop.f32.mrb[0].mxu0
        %3468 = vdwg.mxu0
        %v3469 = vmax.f32 %v3379, %v3466
        %s3470 = scalar_lea.vmem %s4, 432
        %v3471 = vld [vmem:[%s3470] sm:$0xff]
        %v3472 = vld [vmem:[%s3470 + $0x8] sm:$0xff]
        %v3473 = vld [vmem:[%s3470 + $0x10] sm:$0xff]
        %v3474 = vld [vmem:[%s3470 + $0x18] sm:$0xff]
        %v3475 = vld [vmem:[%s3470 + $0x20] sm:$0xff]
        %v3476 = vld [vmem:[%s3470 + $0x28] sm:$0xff]
        %v3477 = vld [vmem:[%s3470 + $0x30] sm:$0xff]
        %v3478 = vld [vmem:[%s3470 + $0x38] sm:$0xff]
        %v3479 = vld [vmem:[%s3470 + $0x40] sm:$0xff]
        %v3480 = vld [vmem:[%s3470 + $0x48] sm:$0xff]
        %v3481 = vld [vmem:[%s3470 + $0x50] sm:$0xff]
        %v3482 = vld [vmem:[%s3470 + $0x58] sm:$0xff]
        %v3483 = vld [vmem:[%s3470 + $0x60] sm:$0xff]
        %v3484 = vld [vmem:[%s3470 + $0x68] sm:$0xff]
        %v3485 = vld [vmem:[%s3470 + $0x70] sm:$0xff]
        %v3486 = vld [vmem:[%s3470 + $0x78] sm:$0xff]
        %v3487 = vld [vmem:[%s3470 + $0x80] sm:$0xff]
        %v3488 = vld [vmem:[%s3470 + $0x88] sm:$0xff]
        %3489 = vmatprep.subr.mxu0 0.0
        %3490 = vmatpush1.msra.mxu0 %v3471
        %3491 = vmatprep.subr.mxu0 0.0
        %3492 = vmatpush1.msra.mxu0 %v3472
        %3493 = vmatprep.subr.mxu0 0.0
        %3494 = vmatpush1.msra.mxu0 %v3473
        %3495 = vmatprep.subr.mxu0 0.0
        %3496 = vmatpush1.msra.mxu0 %v3474
        %3497 = vmatprep.subr.mxu0 0.0
        %3498 = vmatpush1.msra.mxu0 %v3475
        %3499 = vmatprep.subr.mxu0 0.0
        %3500 = vmatpush1.msra.mxu0 %v3476
        %3501 = vmatprep.subr.mxu0 0.0
        %3502 = vmatpush1.msra.mxu0 %v3477
        %3503 = vmatprep.subr.mxu0 0.0
        %3504 = vmatpush1.msra.mxu0 %v3478
        %3505 = vmatprep.subr.mxu0 0.0
        %3506 = vmatpush1.msra.mxu0 %v3479
        %3507 = vmatprep.subr.mxu0 0.0
        %3508 = vmatpush1.msra.mxu0 %v3480
        %3509 = vmatprep.subr.mxu0 0.0
        %3510 = vmatpush1.msra.mxu0 %v3481
        %3511 = vmatprep.subr.mxu0 0.0
        %3512 = vmatpush1.msra.mxu0 %v3482
        %3513 = vmatprep.subr.mxu0 0.0
        %3514 = vmatpush1.msra.mxu0 %v3483
        %3515 = vmatprep.subr.mxu0 0.0
        %3516 = vmatpush1.msra.mxu0 %v3484
        %3517 = vmatprep.subr.mxu0 0.0
        %3518 = vmatpush1.msra.mxu0 %v3485
        %3519 = vmatprep.subr.mxu0 0.0
        %3520 = vmatpush1.msra.mxu0 %v3486
        %3521 = vmatprep.subr.mxu0 0.0
        %3522 = vmatpush1.msra.mxu0 %v3487
        %3523 = vmatprep.subr.mxu0 0.0
        %3524 = vmatpush1.msra.mxu0 %v3488
        %3525 = vmatprep.subr.mxu0 0.0
        %3526 = vmatpush1.msra.mxu0 0.0
        %3527 = vmatprep.subr.mxu0 0.0
        %3528 = vmatpush1.msra.mxu0 0.0
        %3529 = vmatprep.subr.mxu0 0.0
        %3530 = vmatpush1.msra.mxu0 0.0
        %3531 = vmatprep.subr.mxu0 0.0
        %3532 = vmatpush1.msra.mxu0 0.0
        %3533 = vmatprep.subr.mxu0 0.0
        %3534 = vmatpush1.msra.mxu0 0.0
        %3535 = vmatprep.subr.mxu0 0.0
        %3536 = vmatpush1.msra.mxu0 0.0
        %3537 = vmatprep.subr.mxu0 0.0
        %3538 = vmatpush1.msra.mxu0 0.0
        %3539 = vmatprep.subr.mxu0 0.0
        %3540 = vmatpush1.msra.mxu0 0.0
        %3541 = vmatprep.subr.mxu0 0.0
        %3542 = vmatpush1.msra.mxu0 0.0
        %3543 = vmatprep.subr.mxu0 0.0
        %3544 = vmatpush1.msra.mxu0 0.0
        %3545 = vmatprep.subr.mxu0 0.0
        %3546 = vmatpush1.msra.mxu0 0.0
        %3547 = vmatprep.subr.mxu0 0.0
        %3548 = vmatpush1.msra.mxu0 0.0
        %3549 = vmatprep.subr.mxu0 0.0
        %3550 = vmatpush1.msra.mxu0 0.0
        %3551 = vmatprep.subr.mxu0 0.0
        %3552 = vmatpush1.msra.mxu0 0.0
        %3553 = vmatprep.mubr.f32.mxu0 %v3218
        %3554 = vmatmul.mubr.f32.gmra.mrb[0].mxu0 %v3196
        %v3555 = vpop.f32.mrb[0].mxu0
        %v3556 = vadd.f32 0.0, %v3555
        %v3557 = vpop.f32.mrb[0].mxu0
        %3558 = vdwg.mxu0
        %v3559 = vmax.f32 %v3469, %v3556
        %v3560 = vld [vmem:[%s5] sm:$0xff]
        %s3561 = scalar_lea.vmem %s5, 8
        %v3562 = vld [vmem:[%s3561] sm:$0xff]
        %3564 = vrot.lane.b32.xlu0 %v3559, 127
        %v3565 = vpop.permute.xlu0 %3564
        %vm3567 = vcmask 64512
        %v3569 = vsel %vm3567, %v3562, 0
        %3571 = vmatprep.subr.mxu0 0.0
        %3572 = vmatpush1.msra.mxu0 %v3565
        %3573 = vmatprep.subr.mxu0 0.0
        %3574 = vmatpush1.msra.mxu0 0.0
        %3575 = vmatprep.subr.mxu0 0.0
        %3576 = vmatpush1.msra.mxu0 0.0
        %3577 = vmatprep.subr.mxu0 0.0
        %3578 = vmatpush1.msra.mxu0 0.0
        %3579 = vmatprep.subr.mxu0 0.0
        %3580 = vmatpush1.msra.mxu0 0.0
        %3581 = vmatprep.subr.mxu0 0.0
        %3582 = vmatpush1.msra.mxu0 0.0
        %3583 = vmatprep.subr.mxu0 0.0
        %3584 = vmatpush1.msra.mxu0 0.0
        %3585 = vmatprep.subr.mxu0 0.0
        %3586 = vmatpush1.msra.mxu0 0.0
        %3587 = vmatprep.subr.mxu0 0.0
        %3588 = vmatpush1.msra.mxu0 0.0
        %3589 = vmatprep.subr.mxu0 0.0
        %3590 = vmatpush1.msra.mxu0 0.0
        %3591 = vmatprep.subr.mxu0 0.0
        %3592 = vmatpush1.msra.mxu0 0.0
        %3593 = vmatprep.subr.mxu0 0.0
        %3594 = vmatpush1.msra.mxu0 0.0
        %3595 = vmatprep.subr.mxu0 0.0
        %3596 = vmatpush1.msra.mxu0 0.0
        %3597 = vmatprep.subr.mxu0 0.0
        %3598 = vmatpush1.msra.mxu0 0.0
        %3599 = vmatprep.subr.mxu0 0.0
        %3600 = vmatpush1.msra.mxu0 0.0
        %3601 = vmatprep.subr.mxu0 0.0
        %3602 = vmatpush1.msra.mxu0 0.0
        %3603 = vmatprep.subr.mxu0 0.0
        %3604 = vmatpush1.msra.mxu0 0.0
        %3605 = vmatprep.subr.mxu0 0.0
        %3606 = vmatpush1.msra.mxu0 0.0
        %3607 = vmatprep.subr.mxu0 0.0
        %3608 = vmatpush1.msra.mxu0 0.0
        %3609 = vmatprep.subr.mxu0 0.0
        %3610 = vmatpush1.msra.mxu0 0.0
        %3611 = vmatprep.subr.mxu0 0.0
        %3612 = vmatpush1.msra.mxu0 0.0
        %3613 = vmatprep.subr.mxu0 0.0
        %3614 = vmatpush1.msra.mxu0 0.0
        %3615 = vmatprep.subr.mxu0 0.0
        %3616 = vmatpush1.msra.mxu0 0.0
        %3617 = vmatprep.subr.mxu0 0.0
        %3618 = vmatpush1.msra.mxu0 0.0
        %3619 = vmatprep.subr.mxu0 0.0
        %3620 = vmatpush1.msra.mxu0 0.0
        %3621 = vmatprep.subr.mxu0 0.0
        %3622 = vmatpush1.msra.mxu0 0.0
        %3623 = vmatprep.subr.mxu0 0.0
        %3624 = vmatpush1.msra.mxu0 0.0
        %3625 = vmatprep.subr.mxu0 0.0
        %3626 = vmatpush1.msra.mxu0 0.0
        %3627 = vmatprep.subr.mxu0 0.0
        %3628 = vmatpush1.msra.mxu0 0.0
        %3629 = vmatprep.subr.mxu0 0.0
        %3630 = vmatpush1.msra.mxu0 0.0
        %3631 = vmatprep.subr.mxu0 0.0
        %3632 = vmatpush1.msra.mxu0 0.0
        %3633 = vmatprep.subr.mxu0 0.0
        %3634 = vmatpush1.msra.mxu0 0.0
        %3635 = vmatprep.mubr.f32.mxu0 0.0
        %3636 = vmatmul.mubr.f32.gmra.mrb[0].mxu0 %v3569
        %v3637 = vpop.f32.mrb[0].mxu0
        %v3638 = vadd.f32 0.0, %v3637
        %v3639 = vpop.f32.mrb[0].mxu0
        %3640 = vdwg.mxu0
        %v3642 = vsel %vm3567, %v3560, 0
        %3644 = vmatprep.subr.mxu0 0.0
        %3645 = vmatpush1.msra.mxu0 %v3559
        %3646 = vmatprep.subr.mxu0 0.0
        %3647 = vmatpush1.msra.mxu0 0.0
        %3648 = vmatprep.subr.mxu0 0.0
        %3649 = vmatpush1.msra.mxu0 0.0
        %3650 = vmatprep.subr.mxu0 0.0
        %3651 = vmatpush1.msra.mxu0 0.0
        %3652 = vmatprep.subr.mxu0 0.0
        %3653 = vmatpush1.msra.mxu0 0.0
        %3654 = vmatprep.subr.mxu0 0.0
        %3655 = vmatpush1.msra.mxu0 0.0
        %3656 = vmatprep.subr.mxu0 0.0
        %3657 = vmatpush1.msra.mxu0 0.0
        %3658 = vmatprep.subr.mxu0 0.0
        %3659 = vmatpush1.msra.mxu0 0.0
        %3660 = vmatprep.subr.mxu0 0.0
        %3661 = vmatpush1.msra.mxu0 0.0
        %3662 = vmatprep.subr.mxu0 0.0
        %3663 = vmatpush1.msra.mxu0 0.0
        %3664 = vmatprep.subr.mxu0 0.0
        %3665 = vmatpush1.msra.mxu0 0.0
        %3666 = vmatprep.subr.mxu0 0.0
        %3667 = vmatpush1.msra.mxu0 0.0
        %3668 = vmatprep.subr.mxu0 0.0
        %3669 = vmatpush1.msra.mxu0 0.0
        %3670 = vmatprep.subr.mxu0 0.0
        %3671 = vmatpush1.msra.mxu0 0.0
        %3672 = vmatprep.subr.mxu0 0.0
        %3673 = vmatpush1.msra.mxu0 0.0
        %3674 = vmatprep.subr.mxu0 0.0
        %3675 = vmatpush1.msra.mxu0 0.0
        %3676 = vmatprep.subr.mxu0 0.0
        %3677 = vmatpush1.msra.mxu0 0.0
        %3678 = vmatprep.subr.mxu0 0.0
        %3679 = vmatpush1.msra.mxu0 0.0
        %3680 = vmatprep.subr.mxu0 0.0
        %3681 = vmatpush1.msra.mxu0 0.0
        %3682 = vmatprep.subr.mxu0 0.0
        %3683 = vmatpush1.msra.mxu0 0.0
        %3684 = vmatprep.subr.mxu0 0.0
        %3685 = vmatpush1.msra.mxu0 0.0
        %3686 = vmatprep.subr.mxu0 0.0
        %3687 = vmatpush1.msra.mxu0 0.0
        %3688 = vmatprep.subr.mxu0 0.0
        %3689 = vmatpush1.msra.mxu0 0.0
        %3690 = vmatprep.subr.mxu0 0.0
        %3691 = vmatpush1.msra.mxu0 0.0
        %3692 = vmatprep.subr.mxu0 0.0
        %3693 = vmatpush1.msra.mxu0 0.0
        %3694 = vmatprep.subr.mxu0 0.0
        %3695 = vmatpush1.msra.mxu0 0.0
        %3696 = vmatprep.subr.mxu0 0.0
        %3697 = vmatpush1.msra.mxu0 0.0
        %3698 = vmatprep.subr.mxu0 0.0
        %3699 = vmatpush1.msra.mxu0 0.0
        %3700 = vmatprep.subr.mxu0 0.0
        %3701 = vmatpush1.msra.mxu0 0.0
        %3702 = vmatprep.subr.mxu0 0.0
        %3703 = vmatpush1.msra.mxu0 0.0
        %3704 = vmatprep.subr.mxu0 0.0
        %3705 = vmatpush1.msra.mxu0 0.0
        %3706 = vmatprep.subr.mxu0 0.0
        %3707 = vmatpush1.msra.mxu0 0.0
        %3708 = vmatprep.mubr.f32.mxu0 0.0
        %3709 = vmatmul.mubr.f32.gmra.mrb[0].mxu0 %v3642
        %v3710 = vpop.f32.mrb[0].mxu0
        %v3711 = vadd.f32 %v3638, %v3710
        %v3712 = vpop.f32.mrb[0].mxu0
        %3713 = vdwg.mxu0
        %s3714 = scalar_lea.vmem %s5, 16
        %v3715 = vld [vmem:[%s3714] sm:$0xff]
        %3716 = vrot.lane.b32.xlu0 %v3559, 126
        %v3717 = vpop.permute.xlu0 %3716
        %v3720 = vsel %vm3567, %v3715, 0
        %3722 = vmatprep.subr.mxu0 0.0
        %3723 = vmatpush1.msra.mxu0 %v3717
        %3724 = vmatprep.subr.mxu0 0.0
        %3725 = vmatpush1.msra.mxu0 0.0
        %3726 = vmatprep.subr.mxu0 0.0
        %3727 = vmatpush1.msra.mxu0 0.0
        %3728 = vmatprep.subr.mxu0 0.0
        %3729 = vmatpush1.msra.mxu0 0.0
        %3730 = vmatprep.subr.mxu0 0.0
        %3731 = vmatpush1.msra.mxu0 0.0
        %3732 = vmatprep.subr.mxu0 0.0
        %3733 = vmatpush1.msra.mxu0 0.0
        %3734 = vmatprep.subr.mxu0 0.0
        %3735 = vmatpush1.msra.mxu0 0.0
        %3736 = vmatprep.subr.mxu0 0.0
        %3737 = vmatpush1.msra.mxu0 0.0
        %3738 = vmatprep.subr.mxu0 0.0
        %3739 = vmatpush1.msra.mxu0 0.0
        %3740 = vmatprep.subr.mxu0 0.0
        %3741 = vmatpush1.msra.mxu0 0.0
        %3742 = vmatprep.subr.mxu0 0.0
        %3743 = vmatpush1.msra.mxu0 0.0
        %3744 = vmatprep.subr.mxu0 0.0
        %3745 = vmatpush1.msra.mxu0 0.0
        %3746 = vmatprep.subr.mxu0 0.0
        %3747 = vmatpush1.msra.mxu0 0.0
        %3748 = vmatprep.subr.mxu0 0.0
        %3749 = vmatpush1.msra.mxu0 0.0
        %3750 = vmatprep.subr.mxu0 0.0
        %3751 = vmatpush1.msra.mxu0 0.0
        %3752 = vmatprep.subr.mxu0 0.0
        %3753 = vmatpush1.msra.mxu0 0.0
        %3754 = vmatprep.subr.mxu0 0.0
        %3755 = vmatpush1.msra.mxu0 0.0
        %3756 = vmatprep.subr.mxu0 0.0
        %3757 = vmatpush1.msra.mxu0 0.0
        %3758 = vmatprep.subr.mxu0 0.0
        %3759 = vmatpush1.msra.mxu0 0.0
        %3760 = vmatprep.subr.mxu0 0.0
        %3761 = vmatpush1.msra.mxu0 0.0
        %3762 = vmatprep.subr.mxu0 0.0
        %3763 = vmatpush1.msra.mxu0 0.0
        %3764 = vmatprep.subr.mxu0 0.0
        %3765 = vmatpush1.msra.mxu0 0.0
        %3766 = vmatprep.subr.mxu0 0.0
        %3767 = vmatpush1.msra.mxu0 0.0
        %3768 = vmatprep.subr.mxu0 0.0
        %3769 = vmatpush1.msra.mxu0 0.0
        %3770 = vmatprep.subr.mxu0 0.0
        %3771 = vmatpush1.msra.mxu0 0.0
        %3772 = vmatprep.subr.mxu0 0.0
        %3773 = vmatpush1.msra.mxu0 0.0
        %3774 = vmatprep.subr.mxu0 0.0
        %3775 = vmatpush1.msra.mxu0 0.0
        %3776 = vmatprep.subr.mxu0 0.0
        %3777 = vmatpush1.msra.mxu0 0.0
        %3778 = vmatprep.subr.mxu0 0.0
        %3779 = vmatpush1.msra.mxu0 0.0
        %3780 = vmatprep.subr.mxu0 0.0
        %3781 = vmatpush1.msra.mxu0 0.0
        %3782 = vmatprep.subr.mxu0 0.0
        %3783 = vmatpush1.msra.mxu0 0.0
        %3784 = vmatprep.subr.mxu0 0.0
        %3785 = vmatpush1.msra.mxu0 0.0
        %3786 = vmatprep.mubr.f32.mxu0 0.0
        %3787 = vmatmul.mubr.f32.gmra.mrb[0].mxu0 %v3720
        %v3788 = vpop.f32.mrb[0].mxu0
        %v3789 = vadd.f32 0.0, %v3788
        %v3790 = vpop.f32.mrb[0].mxu0
        %3791 = vdwg.mxu0
        %v3792 = vadd.f32 %v3711, %v3789
        %s3793 = scalar_lea.vmem %s5, 24
        %v3794 = vld [vmem:[%s3793] sm:$0xff]
        %3795 = vrot.lane.b32.xlu0 %v3559, 125
        %v3796 = vpop.permute.xlu0 %3795
        %v3799 = vsel %vm3567, %v3794, 0
        %3801 = vmatprep.subr.mxu0 0.0
        %3802 = vmatpush1.msra.mxu0 %v3796
        %3803 = vmatprep.subr.mxu0 0.0
        %3804 = vmatpush1.msra.mxu0 0.0
        %3805 = vmatprep.subr.mxu0 0.0
        %3806 = vmatpush1.msra.mxu0 0.0
        %3807 = vmatprep.subr.mxu0 0.0
        %3808 = vmatpush1.msra.mxu0 0.0
        %3809 = vmatprep.subr.mxu0 0.0
        %3810 = vmatpush1.msra.mxu0 0.0
        %3811 = vmatprep.subr.mxu0 0.0
        %3812 = vmatpush1.msra.mxu0 0.0
        %3813 = vmatprep.subr.mxu0 0.0
        %3814 = vmatpush1.msra.mxu0 0.0
        %3815 = vmatprep.subr.mxu0 0.0
        %3816 = vmatpush1.msra.mxu0 0.0
        %3817 = vmatprep.subr.mxu0 0.0
        %3818 = vmatpush1.msra.mxu0 0.0
        %3819 = vmatprep.subr.mxu0 0.0
        %3820 = vmatpush1.msra.mxu0 0.0
        %3821 = vmatprep.subr.mxu0 0.0
        %3822 = vmatpush1.msra.mxu0 0.0
        %3823 = vmatprep.subr.mxu0 0.0
        %3824 = vmatpush1.msra.mxu0 0.0
        %3825 = vmatprep.subr.mxu0 0.0
        %3826 = vmatpush1.msra.mxu0 0.0
        %3827 = vmatprep.subr.mxu0 0.0
        %3828 = vmatpush1.msra.mxu0 0.0
        %3829 = vmatprep.subr.mxu0 0.0
        %3830 = vmatpush1.msra.mxu0 0.0
        %3831 = vmatprep.subr.mxu0 0.0
        %3832 = vmatpush1.msra.mxu0 0.0
        %3833 = vmatprep.subr.mxu0 0.0
        %3834 = vmatpush1.msra.mxu0 0.0
        %3835 = vmatprep.subr.mxu0 0.0
        %3836 = vmatpush1.msra.mxu0 0.0
        %3837 = vmatprep.subr.mxu0 0.0
        %3838 = vmatpush1.msra.mxu0 0.0
        %3839 = vmatprep.subr.mxu0 0.0
        %3840 = vmatpush1.msra.mxu0 0.0
        %3841 = vmatprep.subr.mxu0 0.0
        %3842 = vmatpush1.msra.mxu0 0.0
        %3843 = vmatprep.subr.mxu0 0.0
        %3844 = vmatpush1.msra.mxu0 0.0
        %3845 = vmatprep.subr.mxu0 0.0
        %3846 = vmatpush1.msra.mxu0 0.0
        %3847 = vmatprep.subr.mxu0 0.0
        %3848 = vmatpush1.msra.mxu0 0.0
        %3849 = vmatprep.subr.mxu0 0.0
        %3850 = vmatpush1.msra.mxu0 0.0
        %3851 = vmatprep.subr.mxu0 0.0
        %3852 = vmatpush1.msra.mxu0 0.0
        %3853 = vmatprep.subr.mxu0 0.0
        %3854 = vmatpush1.msra.mxu0 0.0
        %3855 = vmatprep.subr.mxu0 0.0
        %3856 = vmatpush1.msra.mxu0 0.0
        %3857 = vmatprep.subr.mxu0 0.0
        %3858 = vmatpush1.msra.mxu0 0.0
        %3859 = vmatprep.subr.mxu0 0.0
        %3860 = vmatpush1.msra.mxu0 0.0
        %3861 = vmatprep.subr.mxu0 0.0
        %3862 = vmatpush1.msra.mxu0 0.0
        %3863 = vmatprep.subr.mxu0 0.0
        %3864 = vmatpush1.msra.mxu0 0.0
        %3865 = vmatprep.mubr.f32.mxu0 0.0
        %3866 = vmatmul.mubr.f32.gmra.mrb[0].mxu0 %v3799
        %v3867 = vpop.f32.mrb[0].mxu0
        %v3868 = vadd.f32 0.0, %v3867
        %v3869 = vpop.f32.mrb[0].mxu0
        %3870 = vdwg.mxu0
        %v3871 = vadd.f32 %v3792, %v3868
        %s3872 = scalar_lea.vmem %s5, 32
        %v3873 = vld [vmem:[%s3872] sm:$0xff]
        %3874 = vrot.lane.b32.xlu0 %v3559, 124
        %v3875 = vpop.permute.xlu0 %3874
        %v3878 = vsel %vm3567, %v3873, 0
        %3880 = vmatprep.subr.mxu0 0.0
        %3881 = vmatpush1.msra.mxu0 %v3875
        %3882 = vmatprep.subr.mxu0 0.0
        %3883 = vmatpush1.msra.mxu0 0.0
        %3884 = vmatprep.subr.mxu0 0.0
        %3885 = vmatpush1.msra.mxu0 0.0
        %3886 = vmatprep.subr.mxu0 0.0
        %3887 = vmatpush1.msra.mxu0 0.0
        %3888 = vmatprep.subr.mxu0 0.0
        %3889 = vmatpush1.msra.mxu0 0.0
        %3890 = vmatprep.subr.mxu0 0.0
        %3891 = vmatpush1.msra.mxu0 0.0
        %3892 = vmatprep.subr.mxu0 0.0
        %3893 = vmatpush1.msra.mxu0 0.0
        %3894 = vmatprep.subr.mxu0 0.0
        %3895 = vmatpush1.msra.mxu0 0.0
        %3896 = vmatprep.subr.mxu0 0.0
        %3897 = vmatpush1.msra.mxu0 0.0
        %3898 = vmatprep.subr.mxu0 0.0
        %3899 = vmatpush1.msra.mxu0 0.0
        %3900 = vmatprep.subr.mxu0 0.0
        %3901 = vmatpush1.msra.mxu0 0.0
        %3902 = vmatprep.subr.mxu0 0.0
        %3903 = vmatpush1.msra.mxu0 0.0
        %3904 = vmatprep.subr.mxu0 0.0
        %3905 = vmatpush1.msra.mxu0 0.0
        %3906 = vmatprep.subr.mxu0 0.0
        %3907 = vmatpush1.msra.mxu0 0.0
        %3908 = vmatprep.subr.mxu0 0.0
        %3909 = vmatpush1.msra.mxu0 0.0
        %3910 = vmatprep.subr.mxu0 0.0
        %3911 = vmatpush1.msra.mxu0 0.0
        %3912 = vmatprep.subr.mxu0 0.0
        %3913 = vmatpush1.msra.mxu0 0.0
        %3914 = vmatprep.subr.mxu0 0.0
        %3915 = vmatpush1.msra.mxu0 0.0
        %3916 = vmatprep.subr.mxu0 0.0
        %3917 = vmatpush1.msra.mxu0 0.0
        %3918 = vmatprep.subr.mxu0 0.0
        %3919 = vmatpush1.msra.mxu0 0.0
        %3920 = vmatprep.subr.mxu0 0.0
        %3921 = vmatpush1.msra.mxu0 0.0
        %3922 = vmatprep.subr.mxu0 0.0
        %3923 = vmatpush1.msra.mxu0 0.0
        %3924 = vmatprep.subr.mxu0 0.0
        %3925 = vmatpush1.msra.mxu0 0.0
        %3926 = vmatprep.subr.mxu0 0.0
        %3927 = vmatpush1.msra.mxu0 0.0
        %3928 = vmatprep.subr.mxu0 0.0
        %3929 = vmatpush1.msra.mxu0 0.0
        %3930 = vmatprep.subr.mxu0 0.0
        %3931 = vmatpush1.msra.mxu0 0.0
        %3932 = vmatprep.subr.mxu0 0.0
        %3933 = vmatpush1.msra.mxu0 0.0
        %3934 = vmatprep.subr.mxu0 0.0
        %3935 = vmatpush1.msra.mxu0 0.0
        %3936 = vmatprep.subr.mxu0 0.0
        %3937 = vmatpush1.msra.mxu0 0.0
        %3938 = vmatprep.subr.mxu0 0.0
        %3939 = vmatpush1.msra.mxu0 0.0
        %3940 = vmatprep.subr.mxu0 0.0
        %3941 = vmatpush1.msra.mxu0 0.0
        %3942 = vmatprep.subr.mxu0 0.0
        %3943 = vmatpush1.msra.mxu0 0.0
        %3944 = vmatprep.mubr.f32.mxu0 0.0
        %3945 = vmatmul.mubr.f32.gmra.mrb[0].mxu0 %v3878
        %v3946 = vpop.f32.mrb[0].mxu0
        %v3947 = vadd.f32 0.0, %v3946
        %v3948 = vpop.f32.mrb[0].mxu0
        %3949 = vdwg.mxu0
        %v3950 = vadd.f32 %v3871, %v3947
        %s3951 = scalar_lea.vmem %s5, 40
        %v3952 = vld [vmem:[%s3951] sm:$0xff]
        %3953 = vrot.lane.b32.xlu0 %v3559, 120
        %v3954 = vpop.permute.xlu0 %3953
        %v3957 = vsel %vm3567, %v3952, 0
        %3959 = vmatprep.subr.mxu0 0.0
        %3960 = vmatpush1.msra.mxu0 %v3954
        %3961 = vmatprep.subr.mxu0 0.0
        %3962 = vmatpush1.msra.mxu0 0.0
        %3963 = vmatprep.subr.mxu0 0.0
        %3964 = vmatpush1.msra.mxu0 0.0
        %3965 = vmatprep.subr.mxu0 0.0
        %3966 = vmatpush1.msra.mxu0 0.0
        %3967 = vmatprep.subr.mxu0 0.0
        %3968 = vmatpush1.msra.mxu0 0.0
        %3969 = vmatprep.subr.mxu0 0.0
        %3970 = vmatpush1.msra.mxu0 0.0
        %3971 = vmatprep.subr.mxu0 0.0
        %3972 = vmatpush1.msra.mxu0 0.0
        %3973 = vmatprep.subr.mxu0 0.0
        %3974 = vmatpush1.msra.mxu0 0.0
        %3975 = vmatprep.subr.mxu0 0.0
        %3976 = vmatpush1.msra.mxu0 0.0
        %3977 = vmatprep.subr.mxu0 0.0
        %3978 = vmatpush1.msra.mxu0 0.0
        %3979 = vmatprep.subr.mxu0 0.0
        %3980 = vmatpush1.msra.mxu0 0.0
        %3981 = vmatprep.subr.mxu0 0.0
        %3982 = vmatpush1.msra.mxu0 0.0
        %3983 = vmatprep.subr.mxu0 0.0
        %3984 = vmatpush1.msra.mxu0 0.0
        %3985 = vmatprep.subr.mxu0 0.0
        %3986 = vmatpush1.msra.mxu0 0.0
        %3987 = vmatprep.subr.mxu0 0.0
        %3988 = vmatpush1.msra.mxu0 0.0
        %3989 = vmatprep.subr.mxu0 0.0
        %3990 = vmatpush1.msra.mxu0 0.0
        %3991 = vmatprep.subr.mxu0 0.0
        %3992 = vmatpush1.msra.mxu0 0.0
        %3993 = vmatprep.subr.mxu0 0.0
        %3994 = vmatpush1.msra.mxu0 0.0
        %3995 = vmatprep.subr.mxu0 0.0
        %3996 = vmatpush1.msra.mxu0 0.0
        %3997 = vmatprep.subr.mxu0 0.0
        %3998 = vmatpush1.msra.mxu0 0.0
        %3999 = vmatprep.subr.mxu0 0.0
        %4000 = vmatpush1.msra.mxu0 0.0
        %4001 = vmatprep.subr.mxu0 0.0
        %4002 = vmatpush1.msra.mxu0 0.0
        %4003 = vmatprep.subr.mxu0 0.0
        %4004 = vmatpush1.msra.mxu0 0.0
        %4005 = vmatprep.subr.mxu0 0.0
        %4006 = vmatpush1.msra.mxu0 0.0
        %4007 = vmatprep.subr.mxu0 0.0
        %4008 = vmatpush1.msra.mxu0 0.0
        %4009 = vmatprep.subr.mxu0 0.0
        %4010 = vmatpush1.msra.mxu0 0.0
        %4011 = vmatprep.subr.mxu0 0.0
        %4012 = vmatpush1.msra.mxu0 0.0
        %4013 = vmatprep.subr.mxu0 0.0
        %4014 = vmatpush1.msra.mxu0 0.0
        %4015 = vmatprep.subr.mxu0 0.0
        %4016 = vmatpush1.msra.mxu0 0.0
        %4017 = vmatprep.subr.mxu0 0.0
        %4018 = vmatpush1.msra.mxu0 0.0
        %4019 = vmatprep.subr.mxu0 0.0
        %4020 = vmatpush1.msra.mxu0 0.0
        %4021 = vmatprep.subr.mxu0 0.0
        %4022 = vmatpush1.msra.mxu0 0.0
        %4023 = vmatprep.mubr.f32.mxu0 0.0
        %4024 = vmatmul.mubr.f32.gmra.mrb[0].mxu0 %v3957
        %v4025 = vpop.f32.mrb[0].mxu0
        %v4026 = vadd.f32 0.0, %v4025
        %v4027 = vpop.f32.mrb[0].mxu0
        %4028 = vdwg.mxu0
        %v4029 = vadd.f32 %v3950, %v4026
        %s4030 = scalar_lea.vmem %s5, 48
        %v4031 = vld [vmem:[%s4030] sm:$0xff]
        %4032 = vrot.lane.b32.xlu0 %v3559, 119
        %v4033 = vpop.permute.xlu0 %4032
        %v4036 = vsel %vm3567, %v4031, 0
        %4038 = vmatprep.subr.mxu0 0.0
        %4039 = vmatpush1.msra.mxu0 %v4033
        %4040 = vmatprep.subr.mxu0 0.0
        %4041 = vmatpush1.msra.mxu0 0.0
        %4042 = vmatprep.subr.mxu0 0.0
        %4043 = vmatpush1.msra.mxu0 0.0
        %4044 = vmatprep.subr.mxu0 0.0
        %4045 = vmatpush1.msra.mxu0 0.0
        %4046 = vmatprep.subr.mxu0 0.0
        %4047 = vmatpush1.msra.mxu0 0.0
        %4048 = vmatprep.subr.mxu0 0.0
        %4049 = vmatpush1.msra.mxu0 0.0
        %4050 = vmatprep.subr.mxu0 0.0
        %4051 = vmatpush1.msra.mxu0 0.0
        %4052 = vmatprep.subr.mxu0 0.0
        %4053 = vmatpush1.msra.mxu0 0.0
        %4054 = vmatprep.subr.mxu0 0.0
        %4055 = vmatpush1.msra.mxu0 0.0
        %4056 = vmatprep.subr.mxu0 0.0
        %4057 = vmatpush1.msra.mxu0 0.0
        %4058 = vmatprep.subr.mxu0 0.0
        %4059 = vmatpush1.msra.mxu0 0.0
        %4060 = vmatprep.subr.mxu0 0.0
        %4061 = vmatpush1.msra.mxu0 0.0
        %4062 = vmatprep.subr.mxu0 0.0
        %4063 = vmatpush1.msra.mxu0 0.0
        %4064 = vmatprep.subr.mxu0 0.0
        %4065 = vmatpush1.msra.mxu0 0.0
        %4066 = vmatprep.subr.mxu0 0.0
        %4067 = vmatpush1.msra.mxu0 0.0
        %4068 = vmatprep.subr.mxu0 0.0
        %4069 = vmatpush1.msra.mxu0 0.0
        %4070 = vmatprep.subr.mxu0 0.0
        %4071 = vmatpush1.msra.mxu0 0.0
        %4072 = vmatprep.subr.mxu0 0.0
        %4073 = vmatpush1.msra.mxu0 0.0
        %4074 = vmatprep.subr.mxu0 0.0
        %4075 = vmatpush1.msra.mxu0 0.0
        %4076 = vmatprep.subr.mxu0 0.0
        %4077 = vmatpush1.msra.mxu0 0.0
        %4078 = vmatprep.subr.mxu0 0.0
        %4079 = vmatpush1.msra.mxu0 0.0
        %4080 = vmatprep.subr.mxu0 0.0
        %4081 = vmatpush1.msra.mxu0 0.0
        %4082 = vmatprep.subr.mxu0 0.0
        %4083 = vmatpush1.msra.mxu0 0.0
        %4084 = vmatprep.subr.mxu0 0.0
        %4085 = vmatpush1.msra.mxu0 0.0
        %4086 = vmatprep.subr.mxu0 0.0
        %4087 = vmatpush1.msra.mxu0 0.0
        %4088 = vmatprep.subr.mxu0 0.0
        %4089 = vmatpush1.msra.mxu0 0.0
        %4090 = vmatprep.subr.mxu0 0.0
        %4091 = vmatpush1.msra.mxu0 0.0
        %4092 = vmatprep.subr.mxu0 0.0
        %4093 = vmatpush1.msra.mxu0 0.0
        %4094 = vmatprep.subr.mxu0 0.0
        %4095 = vmatpush1.msra.mxu0 0.0
        %4096 = vmatprep.subr.mxu0 0.0
        %4097 = vmatpush1.msra.mxu0 0.0
        %4098 = vmatprep.subr.mxu0 0.0
        %4099 = vmatpush1.msra.mxu0 0.0
        %4100 = vmatprep.subr.mxu0 0.0
        %4101 = vmatpush1.msra.mxu0 0.0
        %4102 = vmatprep.mubr.f32.mxu0 0.0
        %4103 = vmatmul.mubr.f32.gmra.mrb[0].mxu0 %v4036
        %v4104 = vpop.f32.mrb[0].mxu0
        %v4105 = vadd.f32 0.0, %v4104
        %v4106 = vpop.f32.mrb[0].mxu0
        %4107 = vdwg.mxu0
        %v4108 = vadd.f32 %v4029, %v4105
        %s4109 = scalar_lea.vmem %s5, 56
        %v4110 = vld [vmem:[%s4109] sm:$0xff]
        %4111 = vrot.lane.b32.xlu0 %v3559, 118
        %v4112 = vpop.permute.xlu0 %4111
        %v4115 = vsel %vm3567, %v4110, 0
        %4117 = vmatprep.subr.mxu0 0.0
        %4118 = vmatpush1.msra.mxu0 %v4112
        %4119 = vmatprep.subr.mxu0 0.0
        %4120 = vmatpush1.msra.mxu0 0.0
        %4121 = vmatprep.subr.mxu0 0.0
        %4122 = vmatpush1.msra.mxu0 0.0
        %4123 = vmatprep.subr.mxu0 0.0
        %4124 = vmatpush1.msra.mxu0 0.0
        %4125 = vmatprep.subr.mxu0 0.0
        %4126 = vmatpush1.msra.mxu0 0.0
        %4127 = vmatprep.subr.mxu0 0.0
        %4128 = vmatpush1.msra.mxu0 0.0
        %4129 = vmatprep.subr.mxu0 0.0
        %4130 = vmatpush1.msra.mxu0 0.0
        %4131 = vmatprep.subr.mxu0 0.0
        %4132 = vmatpush1.msra.mxu0 0.0
        %4133 = vmatprep.subr.mxu0 0.0
        %4134 = vmatpush1.msra.mxu0 0.0
        %4135 = vmatprep.subr.mxu0 0.0
        %4136 = vmatpush1.msra.mxu0 0.0
        %4137 = vmatprep.subr.mxu0 0.0
        %4138 = vmatpush1.msra.mxu0 0.0
        %4139 = vmatprep.subr.mxu0 0.0
        %4140 = vmatpush1.msra.mxu0 0.0
        %4141 = vmatprep.subr.mxu0 0.0
        %4142 = vmatpush1.msra.mxu0 0.0
        %4143 = vmatprep.subr.mxu0 0.0
        %4144 = vmatpush1.msra.mxu0 0.0
        %4145 = vmatprep.subr.mxu0 0.0
        %4146 = vmatpush1.msra.mxu0 0.0
        %4147 = vmatprep.subr.mxu0 0.0
        %4148 = vmatpush1.msra.mxu0 0.0
        %4149 = vmatprep.subr.mxu0 0.0
        %4150 = vmatpush1.msra.mxu0 0.0
        %4151 = vmatprep.subr.mxu0 0.0
        %4152 = vmatpush1.msra.mxu0 0.0
        %4153 = vmatprep.subr.mxu0 0.0
        %4154 = vmatpush1.msra.mxu0 0.0
        %4155 = vmatprep.subr.mxu0 0.0
        %4156 = vmatpush1.msra.mxu0 0.0
        %4157 = vmatprep.subr.mxu0 0.0
        %4158 = vmatpush1.msra.mxu0 0.0
        %4159 = vmatprep.subr.mxu0 0.0
        %4160 = vmatpush1.msra.mxu0 0.0
        %4161 = vmatprep.subr.mxu0 0.0
        %4162 = vmatpush1.msra.mxu0 0.0
        %4163 = vmatprep.subr.mxu0 0.0
        %4164 = vmatpush1.msra.mxu0 0.0
        %4165 = vmatprep.subr.mxu0 0.0
        %4166 = vmatpush1.msra.mxu0 0.0
        %4167 = vmatprep.subr.mxu0 0.0
        %4168 = vmatpush1.msra.mxu0 0.0
        %4169 = vmatprep.subr.mxu0 0.0
        %4170 = vmatpush1.msra.mxu0 0.0
        %4171 = vmatprep.subr.mxu0 0.0
        %4172 = vmatpush1.msra.mxu0 0.0
        %4173 = vmatprep.subr.mxu0 0.0
        %4174 = vmatpush1.msra.mxu0 0.0
        %4175 = vmatprep.subr.mxu0 0.0
        %4176 = vmatpush1.msra.mxu0 0.0
        %4177 = vmatprep.subr.mxu0 0.0
        %4178 = vmatpush1.msra.mxu0 0.0
        %4179 = vmatprep.subr.mxu0 0.0
        %4180 = vmatpush1.msra.mxu0 0.0
        %4181 = vmatprep.mubr.f32.mxu0 0.0
        %4182 = vmatmul.mubr.f32.gmra.mrb[0].mxu0 %v4115
        %v4183 = vpop.f32.mrb[0].mxu0
        %v4184 = vadd.f32 0.0, %v4183
        %v4185 = vpop.f32.mrb[0].mxu0
        %4186 = vdwg.mxu0
        %v4187 = vadd.f32 %v4108, %v4184
        %s4188 = scalar_lea.vmem %s5, 64
        %v4189 = vld [vmem:[%s4188] sm:$0xff]
        %4190 = vrot.lane.b32.xlu0 %v3559, 117
        %v4191 = vpop.permute.xlu0 %4190
        %v4194 = vsel %vm3567, %v4189, 0
        %4196 = vmatprep.subr.mxu0 0.0
        %4197 = vmatpush1.msra.mxu0 %v4191
        %4198 = vmatprep.subr.mxu0 0.0
        %4199 = vmatpush1.msra.mxu0 0.0
        %4200 = vmatprep.subr.mxu0 0.0
        %4201 = vmatpush1.msra.mxu0 0.0
        %4202 = vmatprep.subr.mxu0 0.0
        %4203 = vmatpush1.msra.mxu0 0.0
        %4204 = vmatprep.subr.mxu0 0.0
        %4205 = vmatpush1.msra.mxu0 0.0
        %4206 = vmatprep.subr.mxu0 0.0
        %4207 = vmatpush1.msra.mxu0 0.0
        %4208 = vmatprep.subr.mxu0 0.0
        %4209 = vmatpush1.msra.mxu0 0.0
        %4210 = vmatprep.subr.mxu0 0.0
        %4211 = vmatpush1.msra.mxu0 0.0
        %4212 = vmatprep.subr.mxu0 0.0
        %4213 = vmatpush1.msra.mxu0 0.0
        %4214 = vmatprep.subr.mxu0 0.0
        %4215 = vmatpush1.msra.mxu0 0.0
        %4216 = vmatprep.subr.mxu0 0.0
        %4217 = vmatpush1.msra.mxu0 0.0
        %4218 = vmatprep.subr.mxu0 0.0
        %4219 = vmatpush1.msra.mxu0 0.0
        %4220 = vmatprep.subr.mxu0 0.0
        %4221 = vmatpush1.msra.mxu0 0.0
        %4222 = vmatprep.subr.mxu0 0.0
        %4223 = vmatpush1.msra.mxu0 0.0
        %4224 = vmatprep.subr.mxu0 0.0
        %4225 = vmatpush1.msra.mxu0 0.0
        %4226 = vmatprep.subr.mxu0 0.0
        %4227 = vmatpush1.msra.mxu0 0.0
        %4228 = vmatprep.subr.mxu0 0.0
        %4229 = vmatpush1.msra.mxu0 0.0
        %4230 = vmatprep.subr.mxu0 0.0
        %4231 = vmatpush1.msra.mxu0 0.0
        %4232 = vmatprep.subr.mxu0 0.0
        %4233 = vmatpush1.msra.mxu0 0.0
        %4234 = vmatprep.subr.mxu0 0.0
        %4235 = vmatpush1.msra.mxu0 0.0
        %4236 = vmatprep.subr.mxu0 0.0
        %4237 = vmatpush1.msra.mxu0 0.0
        %4238 = vmatprep.subr.mxu0 0.0
        %4239 = vmatpush1.msra.mxu0 0.0
        %4240 = vmatprep.subr.mxu0 0.0
        %4241 = vmatpush1.msra.mxu0 0.0
        %4242 = vmatprep.subr.mxu0 0.0
        %4243 = vmatpush1.msra.mxu0 0.0
        %4244 = vmatprep.subr.mxu0 0.0
        %4245 = vmatpush1.msra.mxu0 0.0
        %4246 = vmatprep.subr.mxu0 0.0
        %4247 = vmatpush1.msra.mxu0 0.0
        %4248 = vmatprep.subr.mxu0 0.0
        %4249 = vmatpush1.msra.mxu0 0.0
        %4250 = vmatprep.subr.mxu0 0.0
        %4251 = vmatpush1.msra.mxu0 0.0
        %4252 = vmatprep.subr.mxu0 0.0
        %4253 = vmatpush1.msra.mxu0 0.0
        %4254 = vmatprep.subr.mxu0 0.0
        %4255 = vmatpush1.msra.mxu0 0.0
        %4256 = vmatprep.subr.mxu0 0.0
        %4257 = vmatpush1.msra.mxu0 0.0
        %4258 = vmatprep.subr.mxu0 0.0
        %4259 = vmatpush1.msra.mxu0 0.0
        %4260 = vmatprep.mubr.f32.mxu0 0.0
        %4261 = vmatmul.mubr.f32.gmra.mrb[0].mxu0 %v4194
        %v4262 = vpop.f32.mrb[0].mxu0
        %v4263 = vadd.f32 0.0, %v4262
        %v4264 = vpop.f32.mrb[0].mxu0
        %4265 = vdwg.mxu0
        %v4266 = vadd.f32 %v4187, %v4263
        %s4267 = scalar_lea.vmem %s5, 72
        %v4268 = vld [vmem:[%s4267] sm:$0xff]
        %4269 = vrot.lane.b32.xlu0 %v3559, 116
        %v4270 = vpop.permute.xlu0 %4269
        %v4273 = vsel %vm3567, %v4268, 0
        %4275 = vmatprep.subr.mxu0 0.0
        %4276 = vmatpush1.msra.mxu0 %v4270
        %4277 = vmatprep.subr.mxu0 0.0
        %4278 = vmatpush1.msra.mxu0 0.0
        %4279 = vmatprep.subr.mxu0 0.0
        %4280 = vmatpush1.msra.mxu0 0.0
        %4281 = vmatprep.subr.mxu0 0.0
        %4282 = vmatpush1.msra.mxu0 0.0
        %4283 = vmatprep.subr.mxu0 0.0
        %4284 = vmatpush1.msra.mxu0 0.0
        %4285 = vmatprep.subr.mxu0 0.0
        %4286 = vmatpush1.msra.mxu0 0.0
        %4287 = vmatprep.subr.mxu0 0.0
        %4288 = vmatpush1.msra.mxu0 0.0
        %4289 = vmatprep.subr.mxu0 0.0
        %4290 = vmatpush1.msra.mxu0 0.0
        %4291 = vmatprep.subr.mxu0 0.0
        %4292 = vmatpush1.msra.mxu0 0.0
        %4293 = vmatprep.subr.mxu0 0.0
        %4294 = vmatpush1.msra.mxu0 0.0
        %4295 = vmatprep.subr.mxu0 0.0
        %4296 = vmatpush1.msra.mxu0 0.0
        %4297 = vmatprep.subr.mxu0 0.0
        %4298 = vmatpush1.msra.mxu0 0.0
        %4299 = vmatprep.subr.mxu0 0.0
        %4300 = vmatpush1.msra.mxu0 0.0
        %4301 = vmatprep.subr.mxu0 0.0
        %4302 = vmatpush1.msra.mxu0 0.0
        %4303 = vmatprep.subr.mxu0 0.0
        %4304 = vmatpush1.msra.mxu0 0.0
        %4305 = vmatprep.subr.mxu0 0.0
        %4306 = vmatpush1.msra.mxu0 0.0
        %4307 = vmatprep.subr.mxu0 0.0
        %4308 = vmatpush1.msra.mxu0 0.0
        %4309 = vmatprep.subr.mxu0 0.0
        %4310 = vmatpush1.msra.mxu0 0.0
        %4311 = vmatprep.subr.mxu0 0.0
        %4312 = vmatpush1.msra.mxu0 0.0
        %4313 = vmatprep.subr.mxu0 0.0
        %4314 = vmatpush1.msra.mxu0 0.0
        %4315 = vmatprep.subr.mxu0 0.0
        %4316 = vmatpush1.msra.mxu0 0.0
        %4317 = vmatprep.subr.mxu0 0.0
        %4318 = vmatpush1.msra.mxu0 0.0
        %4319 = vmatprep.subr.mxu0 0.0
        %4320 = vmatpush1.msra.mxu0 0.0
        %4321 = vmatprep.subr.mxu0 0.0
        %4322 = vmatpush1.msra.mxu0 0.0
        %4323 = vmatprep.subr.mxu0 0.0
        %4324 = vmatpush1.msra.mxu0 0.0
        %4325 = vmatprep.subr.mxu0 0.0
        %4326 = vmatpush1.msra.mxu0 0.0
        %4327 = vmatprep.subr.mxu0 0.0
        %4328 = vmatpush1.msra.mxu0 0.0
        %4329 = vmatprep.subr.mxu0 0.0
        %4330 = vmatpush1.msra.mxu0 0.0
        %4331 = vmatprep.subr.mxu0 0.0
        %4332 = vmatpush1.msra.mxu0 0.0
        %4333 = vmatprep.subr.mxu0 0.0
        %4334 = vmatpush1.msra.mxu0 0.0
        %4335 = vmatprep.subr.mxu0 0.0
        %4336 = vmatpush1.msra.mxu0 0.0
        %4337 = vmatprep.subr.mxu0 0.0
        %4338 = vmatpush1.msra.mxu0 0.0
        %4339 = vmatprep.mubr.f32.mxu0 0.0
        %4340 = vmatmul.mubr.f32.gmra.mrb[0].mxu0 %v4273
        %v4341 = vpop.f32.mrb[0].mxu0
        %v4342 = vadd.f32 0.0, %v4341
        %v4343 = vpop.f32.mrb[0].mxu0
        %4344 = vdwg.mxu0
        %v4345 = vadd.f32 %v4266, %v4342
        %s4346 = scalar_lea.vmem %s5, 80
        %v4347 = vld [vmem:[%s4346] sm:$0xff]
        %4348 = vrot.lane.b32.xlu0 %v3559, 112
        %v4349 = vpop.permute.xlu0 %4348
        %v4352 = vsel %vm3567, %v4347, 0
        %4354 = vmatprep.subr.mxu0 0.0
        %4355 = vmatpush1.msra.mxu0 %v4349
        %4356 = vmatprep.subr.mxu0 0.0
        %4357 = vmatpush1.msra.mxu0 0.0
        %4358 = vmatprep.subr.mxu0 0.0
        %4359 = vmatpush1.msra.mxu0 0.0
        %4360 = vmatprep.subr.mxu0 0.0
        %4361 = vmatpush1.msra.mxu0 0.0
        %4362 = vmatprep.subr.mxu0 0.0
        %4363 = vmatpush1.msra.mxu0 0.0
        %4364 = vmatprep.subr.mxu0 0.0
        %4365 = vmatpush1.msra.mxu0 0.0
        %4366 = vmatprep.subr.mxu0 0.0
        %4367 = vmatpush1.msra.mxu0 0.0
        %4368 = vmatprep.subr.mxu0 0.0
        %4369 = vmatpush1.msra.mxu0 0.0
        %4370 = vmatprep.subr.mxu0 0.0
        %4371 = vmatpush1.msra.mxu0 0.0
        %4372 = vmatprep.subr.mxu0 0.0
        %4373 = vmatpush1.msra.mxu0 0.0
        %4374 = vmatprep.subr.mxu0 0.0
        %4375 = vmatpush1.msra.mxu0 0.0
        %4376 = vmatprep.subr.mxu0 0.0
        %4377 = vmatpush1.msra.mxu0 0.0
        %4378 = vmatprep.subr.mxu0 0.0
        %4379 = vmatpush1.msra.mxu0 0.0
        %4380 = vmatprep.subr.mxu0 0.0
        %4381 = vmatpush1.msra.mxu0 0.0
        %4382 = vmatprep.subr.mxu0 0.0
        %4383 = vmatpush1.msra.mxu0 0.0
        %4384 = vmatprep.subr.mxu0 0.0
        %4385 = vmatpush1.msra.mxu0 0.0
        %4386 = vmatprep.subr.mxu0 0.0
        %4387 = vmatpush1.msra.mxu0 0.0
        %4388 = vmatprep.subr.mxu0 0.0
        %4389 = vmatpush1.msra.mxu0 0.0
        %4390 = vmatprep.subr.mxu0 0.0
        %4391 = vmatpush1.msra.mxu0 0.0
        %4392 = vmatprep.subr.mxu0 0.0
        %4393 = vmatpush1.msra.mxu0 0.0
        %4394 = vmatprep.subr.mxu0 0.0
        %4395 = vmatpush1.msra.mxu0 0.0
        %4396 = vmatprep.subr.mxu0 0.0
        %4397 = vmatpush1.msra.mxu0 0.0
        %4398 = vmatprep.subr.mxu0 0.0
        %4399 = vmatpush1.msra.mxu0 0.0
        %4400 = vmatprep.subr.mxu0 0.0
        %4401 = vmatpush1.msra.mxu0 0.0
        %4402 = vmatprep.subr.mxu0 0.0
        %4403 = vmatpush1.msra.mxu0 0.0
        %4404 = vmatprep.subr.mxu0 0.0
        %4405 = vmatpush1.msra.mxu0 0.0
        %4406 = vmatprep.subr.mxu0 0.0
        %4407 = vmatpush1.msra.mxu0 0.0
        %4408 = vmatprep.subr.mxu0 0.0
        %4409 = vmatpush1.msra.mxu0 0.0
        %4410 = vmatprep.subr.mxu0 0.0
        %4411 = vmatpush1.msra.mxu0 0.0
        %4412 = vmatprep.subr.mxu0 0.0
        %4413 = vmatpush1.msra.mxu0 0.0
        %4414 = vmatprep.subr.mxu0 0.0
        %4415 = vmatpush1.msra.mxu0 0.0
        %4416 = vmatprep.subr.mxu0 0.0
        %4417 = vmatpush1.msra.mxu0 0.0
        %4418 = vmatprep.mubr.f32.mxu0 0.0
        %4419 = vmatmul.mubr.f32.gmra.mrb[0].mxu0 %v4352
        %v4420 = vpop.f32.mrb[0].mxu0
        %v4421 = vadd.f32 0.0, %v4420
        %v4422 = vpop.f32.mrb[0].mxu0
        %4423 = vdwg.mxu0
        %v4424 = vadd.f32 %v4345, %v4421
        %s4425 = scalar_lea.vmem %s5, 88
        %v4426 = vld [vmem:[%s4425] sm:$0xff]
        %4427 = vrot.lane.b32.xlu0 %v3559, 111
        %v4428 = vpop.permute.xlu0 %4427
        %v4431 = vsel %vm3567, %v4426, 0
        %4433 = vmatprep.subr.mxu0 0.0
        %4434 = vmatpush1.msra.mxu0 %v4428
        %4435 = vmatprep.subr.mxu0 0.0
        %4436 = vmatpush1.msra.mxu0 0.0
        %4437 = vmatprep.subr.mxu0 0.0
        %4438 = vmatpush1.msra.mxu0 0.0
        %4439 = vmatprep.subr.mxu0 0.0
        %4440 = vmatpush1.msra.mxu0 0.0
        %4441 = vmatprep.subr.mxu0 0.0
        %4442 = vmatpush1.msra.mxu0 0.0
        %4443 = vmatprep.subr.mxu0 0.0
        %4444 = vmatpush1.msra.mxu0 0.0
        %4445 = vmatprep.subr.mxu0 0.0
        %4446 = vmatpush1.msra.mxu0 0.0
        %4447 = vmatprep.subr.mxu0 0.0
        %4448 = vmatpush1.msra.mxu0 0.0
        %4449 = vmatprep.subr.mxu0 0.0
        %4450 = vmatpush1.msra.mxu0 0.0
        %4451 = vmatprep.subr.mxu0 0.0
        %4452 = vmatpush1.msra.mxu0 0.0
        %4453 = vmatprep.subr.mxu0 0.0
        %4454 = vmatpush1.msra.mxu0 0.0
        %4455 = vmatprep.subr.mxu0 0.0
        %4456 = vmatpush1.msra.mxu0 0.0
        %4457 = vmatprep.subr.mxu0 0.0
        %4458 = vmatpush1.msra.mxu0 0.0
        %4459 = vmatprep.subr.mxu0 0.0
        %4460 = vmatpush1.msra.mxu0 0.0
        %4461 = vmatprep.subr.mxu0 0.0
        %4462 = vmatpush1.msra.mxu0 0.0
        %4463 = vmatprep.subr.mxu0 0.0
        %4464 = vmatpush1.msra.mxu0 0.0
        %4465 = vmatprep.subr.mxu0 0.0
        %4466 = vmatpush1.msra.mxu0 0.0
        %4467 = vmatprep.subr.mxu0 0.0
        %4468 = vmatpush1.msra.mxu0 0.0
        %4469 = vmatprep.subr.mxu0 0.0
        %4470 = vmatpush1.msra.mxu0 0.0
        %4471 = vmatprep.subr.mxu0 0.0
        %4472 = vmatpush1.msra.mxu0 0.0
        %4473 = vmatprep.subr.mxu0 0.0
        %4474 = vmatpush1.msra.mxu0 0.0
        %4475 = vmatprep.subr.mxu0 0.0
        %4476 = vmatpush1.msra.mxu0 0.0
        %4477 = vmatprep.subr.mxu0 0.0
        %4478 = vmatpush1.msra.mxu0 0.0
        %4479 = vmatprep.subr.mxu0 0.0
        %4480 = vmatpush1.msra.mxu0 0.0
        %4481 = vmatprep.subr.mxu0 0.0
        %4482 = vmatpush1.msra.mxu0 0.0
        %4483 = vmatprep.subr.mxu0 0.0
        %4484 = vmatpush1.msra.mxu0 0.0
        %4485 = vmatprep.subr.mxu0 0.0
        %4486 = vmatpush1.msra.mxu0 0.0
        %4487 = vmatprep.subr.mxu0 0.0
        %4488 = vmatpush1.msra.mxu0 0.0
        %4489 = vmatprep.subr.mxu0 0.0
        %4490 = vmatpush1.msra.mxu0 0.0
        %4491 = vmatprep.subr.mxu0 0.0
        %4492 = vmatpush1.msra.mxu0 0.0
        %4493 = vmatprep.subr.mxu0 0.0
        %4494 = vmatpush1.msra.mxu0 0.0
        %4495 = vmatprep.subr.mxu0 0.0
        %4496 = vmatpush1.msra.mxu0 0.0
        %4497 = vmatprep.mubr.f32.mxu0 0.0
        %4498 = vmatmul.mubr.f32.gmra.mrb[0].mxu0 %v4431
        %v4499 = vpop.f32.mrb[0].mxu0
        %v4500 = vadd.f32 0.0, %v4499
        %v4501 = vpop.f32.mrb[0].mxu0
        %4502 = vdwg.mxu0
        %v4503 = vadd.f32 %v4424, %v4500
        %s4504 = scalar_lea.vmem %s5, 96
        %v4505 = vld [vmem:[%s4504] sm:$0xff]
        %4506 = vrot.lane.b32.xlu0 %v3559, 110
        %v4507 = vpop.permute.xlu0 %4506
        %v4510 = vsel %vm3567, %v4505, 0
        %4512 = vmatprep.subr.mxu0 0.0
        %4513 = vmatpush1.msra.mxu0 %v4507
        %4514 = vmatprep.subr.mxu0 0.0
        %4515 = vmatpush1.msra.mxu0 0.0
        %4516 = vmatprep.subr.mxu0 0.0
        %4517 = vmatpush1.msra.mxu0 0.0
        %4518 = vmatprep.subr.mxu0 0.0
        %4519 = vmatpush1.msra.mxu0 0.0
        %4520 = vmatprep.subr.mxu0 0.0
        %4521 = vmatpush1.msra.mxu0 0.0
        %4522 = vmatprep.subr.mxu0 0.0
        %4523 = vmatpush1.msra.mxu0 0.0
        %4524 = vmatprep.subr.mxu0 0.0
        %4525 = vmatpush1.msra.mxu0 0.0
        %4526 = vmatprep.subr.mxu0 0.0
        %4527 = vmatpush1.msra.mxu0 0.0
        %4528 = vmatprep.subr.mxu0 0.0
        %4529 = vmatpush1.msra.mxu0 0.0
        %4530 = vmatprep.subr.mxu0 0.0
        %4531 = vmatpush1.msra.mxu0 0.0
        %4532 = vmatprep.subr.mxu0 0.0
        %4533 = vmatpush1.msra.mxu0 0.0
        %4534 = vmatprep.subr.mxu0 0.0
        %4535 = vmatpush1.msra.mxu0 0.0
        %4536 = vmatprep.subr.mxu0 0.0
        %4537 = vmatpush1.msra.mxu0 0.0
        %4538 = vmatprep.subr.mxu0 0.0
        %4539 = vmatpush1.msra.mxu0 0.0
        %4540 = vmatprep.subr.mxu0 0.0
        %4541 = vmatpush1.msra.mxu0 0.0
        %4542 = vmatprep.subr.mxu0 0.0
        %4543 = vmatpush1.msra.mxu0 0.0
        %4544 = vmatprep.subr.mxu0 0.0
        %4545 = vmatpush1.msra.mxu0 0.0
        %4546 = vmatprep.subr.mxu0 0.0
        %4547 = vmatpush1.msra.mxu0 0.0
        %4548 = vmatprep.subr.mxu0 0.0
        %4549 = vmatpush1.msra.mxu0 0.0
        %4550 = vmatprep.subr.mxu0 0.0
        %4551 = vmatpush1.msra.mxu0 0.0
        %4552 = vmatprep.subr.mxu0 0.0
        %4553 = vmatpush1.msra.mxu0 0.0
        %4554 = vmatprep.subr.mxu0 0.0
        %4555 = vmatpush1.msra.mxu0 0.0
        %4556 = vmatprep.subr.mxu0 0.0
        %4557 = vmatpush1.msra.mxu0 0.0
        %4558 = vmatprep.subr.mxu0 0.0
        %4559 = vmatpush1.msra.mxu0 0.0
        %4560 = vmatprep.subr.mxu0 0.0
        %4561 = vmatpush1.msra.mxu0 0.0
        %4562 = vmatprep.subr.mxu0 0.0
        %4563 = vmatpush1.msra.mxu0 0.0
        %4564 = vmatprep.subr.mxu0 0.0
        %4565 = vmatpush1.msra.mxu0 0.0
        %4566 = vmatprep.subr.mxu0 0.0
        %4567 = vmatpush1.msra.mxu0 0.0
        %4568 = vmatprep.subr.mxu0 0.0
        %4569 = vmatpush1.msra.mxu0 0.0
        %4570 = vmatprep.subr.mxu0 0.0
        %4571 = vmatpush1.msra.mxu0 0.0
        %4572 = vmatprep.subr.mxu0 0.0
        %4573 = vmatpush1.msra.mxu0 0.0
        %4574 = vmatprep.subr.mxu0 0.0
        %4575 = vmatpush1.msra.mxu0 0.0
        %4576 = vmatprep.mubr.f32.mxu0 0.0
        %4577 = vmatmul.mubr.f32.gmra.mrb[0].mxu0 %v4510
        %v4578 = vpop.f32.mrb[0].mxu0
        %v4579 = vadd.f32 0.0, %v4578
        %v4580 = vpop.f32.mrb[0].mxu0
        %4581 = vdwg.mxu0
        %v4582 = vadd.f32 %v4503, %v4579
        %s4583 = scalar_lea.vmem %s5, 104
        %v4584 = vld [vmem:[%s4583] sm:$0xff]
        %4585 = vrot.lane.b32.xlu0 %v3559, 109
        %v4586 = vpop.permute.xlu0 %4585
        %v4589 = vsel %vm3567, %v4584, 0
        %4591 = vmatprep.subr.mxu0 0.0
        %4592 = vmatpush1.msra.mxu0 %v4586
        %4593 = vmatprep.subr.mxu0 0.0
        %4594 = vmatpush1.msra.mxu0 0.0
        %4595 = vmatprep.subr.mxu0 0.0
        %4596 = vmatpush1.msra.mxu0 0.0
        %4597 = vmatprep.subr.mxu0 0.0
        %4598 = vmatpush1.msra.mxu0 0.0
        %4599 = vmatprep.subr.mxu0 0.0
        %4600 = vmatpush1.msra.mxu0 0.0
        %4601 = vmatprep.subr.mxu0 0.0
        %4602 = vmatpush1.msra.mxu0 0.0
        %4603 = vmatprep.subr.mxu0 0.0
        %4604 = vmatpush1.msra.mxu0 0.0
        %4605 = vmatprep.subr.mxu0 0.0
        %4606 = vmatpush1.msra.mxu0 0.0
        %4607 = vmatprep.subr.mxu0 0.0
        %4608 = vmatpush1.msra.mxu0 0.0
        %4609 = vmatprep.subr.mxu0 0.0
        %4610 = vmatpush1.msra.mxu0 0.0
        %4611 = vmatprep.subr.mxu0 0.0
        %4612 = vmatpush1.msra.mxu0 0.0
        %4613 = vmatprep.subr.mxu0 0.0
        %4614 = vmatpush1.msra.mxu0 0.0
        %4615 = vmatprep.subr.mxu0 0.0
        %4616 = vmatpush1.msra.mxu0 0.0
        %4617 = vmatprep.subr.mxu0 0.0
        %4618 = vmatpush1.msra.mxu0 0.0
        %4619 = vmatprep.subr.mxu0 0.0
        %4620 = vmatpush1.msra.mxu0 0.0
        %4621 = vmatprep.subr.mxu0 0.0
        %4622 = vmatpush1.msra.mxu0 0.0
        %4623 = vmatprep.subr.mxu0 0.0
        %4624 = vmatpush1.msra.mxu0 0.0
        %4625 = vmatprep.subr.mxu0 0.0
        %4626 = vmatpush1.msra.mxu0 0.0
        %4627 = vmatprep.subr.mxu0 0.0
        %4628 = vmatpush1.msra.mxu0 0.0
        %4629 = vmatprep.subr.mxu0 0.0
        %4630 = vmatpush1.msra.mxu0 0.0
        %4631 = vmatprep.subr.mxu0 0.0
        %4632 = vmatpush1.msra.mxu0 0.0
        %4633 = vmatprep.subr.mxu0 0.0
        %4634 = vmatpush1.msra.mxu0 0.0
        %4635 = vmatprep.subr.mxu0 0.0
        %4636 = vmatpush1.msra.mxu0 0.0
        %4637 = vmatprep.subr.mxu0 0.0
        %4638 = vmatpush1.msra.mxu0 0.0
        %4639 = vmatprep.subr.mxu0 0.0
        %4640 = vmatpush1.msra.mxu0 0.0
        %4641 = vmatprep.subr.mxu0 0.0
        %4642 = vmatpush1.msra.mxu0 0.0
        %4643 = vmatprep.subr.mxu0 0.0
        %4644 = vmatpush1.msra.mxu0 0.0
        %4645 = vmatprep.subr.mxu0 0.0
        %4646 = vmatpush1.msra.mxu0 0.0
        %4647 = vmatprep.subr.mxu0 0.0
        %4648 = vmatpush1.msra.mxu0 0.0
        %4649 = vmatprep.subr.mxu0 0.0
        %4650 = vmatpush1.msra.mxu0 0.0
        %4651 = vmatprep.subr.mxu0 0.0
        %4652 = vmatpush1.msra.mxu0 0.0
        %4653 = vmatprep.subr.mxu0 0.0
        %4654 = vmatpush1.msra.mxu0 0.0
        %4655 = vmatprep.mubr.f32.mxu0 0.0
        %4656 = vmatmul.mubr.f32.gmra.mrb[0].mxu0 %v4589
        %v4657 = vpop.f32.mrb[0].mxu0
        %v4658 = vadd.f32 0.0, %v4657
        %v4659 = vpop.f32.mrb[0].mxu0
        %4660 = vdwg.mxu0
        %v4661 = vadd.f32 %v4582, %v4658
        %s4662 = scalar_lea.vmem %s5, 112
        %v4663 = vld [vmem:[%s4662] sm:$0xff]
        %4664 = vrot.lane.b32.xlu0 %v3559, 108
        %v4665 = vpop.permute.xlu0 %4664
        %v4668 = vsel %vm3567, %v4663, 0
        %4670 = vmatprep.subr.mxu0 0.0
        %4671 = vmatpush1.msra.mxu0 %v4665
        %4672 = vmatprep.subr.mxu0 0.0
        %4673 = vmatpush1.msra.mxu0 0.0
        %4674 = vmatprep.subr.mxu0 0.0
        %4675 = vmatpush1.msra.mxu0 0.0
        %4676 = vmatprep.subr.mxu0 0.0
        %4677 = vmatpush1.msra.mxu0 0.0
        %4678 = vmatprep.subr.mxu0 0.0
        %4679 = vmatpush1.msra.mxu0 0.0
        %4680 = vmatprep.subr.mxu0 0.0
        %4681 = vmatpush1.msra.mxu0 0.0
        %4682 = vmatprep.subr.mxu0 0.0
        %4683 = vmatpush1.msra.mxu0 0.0
        %4684 = vmatprep.subr.mxu0 0.0
        %4685 = vmatpush1.msra.mxu0 0.0
        %4686 = vmatprep.subr.mxu0 0.0
        %4687 = vmatpush1.msra.mxu0 0.0
        %4688 = vmatprep.subr.mxu0 0.0
        %4689 = vmatpush1.msra.mxu0 0.0
        %4690 = vmatprep.subr.mxu0 0.0
        %4691 = vmatpush1.msra.mxu0 0.0
        %4692 = vmatprep.subr.mxu0 0.0
        %4693 = vmatpush1.msra.mxu0 0.0
        %4694 = vmatprep.subr.mxu0 0.0
        %4695 = vmatpush1.msra.mxu0 0.0
        %4696 = vmatprep.subr.mxu0 0.0
        %4697 = vmatpush1.msra.mxu0 0.0
        %4698 = vmatprep.subr.mxu0 0.0
        %4699 = vmatpush1.msra.mxu0 0.0
        %4700 = vmatprep.subr.mxu0 0.0
        %4701 = vmatpush1.msra.mxu0 0.0
        %4702 = vmatprep.subr.mxu0 0.0
        %4703 = vmatpush1.msra.mxu0 0.0
        %4704 = vmatprep.subr.mxu0 0.0
        %4705 = vmatpush1.msra.mxu0 0.0
        %4706 = vmatprep.subr.mxu0 0.0
        %4707 = vmatpush1.msra.mxu0 0.0
        %4708 = vmatprep.subr.mxu0 0.0
        %4709 = vmatpush1.msra.mxu0 0.0
        %4710 = vmatprep.subr.mxu0 0.0
        %4711 = vmatpush1.msra.mxu0 0.0
        %4712 = vmatprep.subr.mxu0 0.0
        %4713 = vmatpush1.msra.mxu0 0.0
        %4714 = vmatprep.subr.mxu0 0.0
        %4715 = vmatpush1.msra.mxu0 0.0
        %4716 = vmatprep.subr.mxu0 0.0
        %4717 = vmatpush1.msra.mxu0 0.0
        %4718 = vmatprep.subr.mxu0 0.0
        %4719 = vmatpush1.msra.mxu0 0.0
        %4720 = vmatprep.subr.mxu0 0.0
        %4721 = vmatpush1.msra.mxu0 0.0
        %4722 = vmatprep.subr.mxu0 0.0
        %4723 = vmatpush1.msra.mxu0 0.0
        %4724 = vmatprep.subr.mxu0 0.0
        %4725 = vmatpush1.msra.mxu0 0.0
        %4726 = vmatprep.subr.mxu0 0.0
        %4727 = vmatpush1.msra.mxu0 0.0
        %4728 = vmatprep.subr.mxu0 0.0
        %4729 = vmatpush1.msra.mxu0 0.0
        %4730 = vmatprep.subr.mxu0 0.0
        %4731 = vmatpush1.msra.mxu0 0.0
        %4732 = vmatprep.subr.mxu0 0.0
        %4733 = vmatpush1.msra.mxu0 0.0
        %4734 = vmatprep.mubr.f32.mxu0 0.0
        %4735 = vmatmul.mubr.f32.gmra.mrb[0].mxu0 %v4668
        %v4736 = vpop.f32.mrb[0].mxu0
        %v4737 = vadd.f32 0.0, %v4736
        %v4738 = vpop.f32.mrb[0].mxu0
        %4739 = vdwg.mxu0
        %v4740 = vadd.f32 %v4661, %v4737
        %s4741 = scalar_lea.vmem %s5, 120
        %v4742 = vld [vmem:[%s4741] sm:$0xff]
        %4743 = vrot.lane.b32.xlu0 %v3559, 104
        %v4744 = vpop.permute.xlu0 %4743
        %v4747 = vsel %vm3567, %v4742, 0
        %4749 = vmatprep.subr.mxu0 0.0
        %4750 = vmatpush1.msra.mxu0 %v4744
        %4751 = vmatprep.subr.mxu0 0.0
        %4752 = vmatpush1.msra.mxu0 0.0
        %4753 = vmatprep.subr.mxu0 0.0
        %4754 = vmatpush1.msra.mxu0 0.0
        %4755 = vmatprep.subr.mxu0 0.0
        %4756 = vmatpush1.msra.mxu0 0.0
        %4757 = vmatprep.subr.mxu0 0.0
        %4758 = vmatpush1.msra.mxu0 0.0
        %4759 = vmatprep.subr.mxu0 0.0
        %4760 = vmatpush1.msra.mxu0 0.0
        %4761 = vmatprep.subr.mxu0 0.0
        %4762 = vmatpush1.msra.mxu0 0.0
        %4763 = vmatprep.subr.mxu0 0.0
        %4764 = vmatpush1.msra.mxu0 0.0
        %4765 = vmatprep.subr.mxu0 0.0
        %4766 = vmatpush1.msra.mxu0 0.0
        %4767 = vmatprep.subr.mxu0 0.0
        %4768 = vmatpush1.msra.mxu0 0.0
        %4769 = vmatprep.subr.mxu0 0.0
        %4770 = vmatpush1.msra.mxu0 0.0
        %4771 = vmatprep.subr.mxu0 0.0
        %4772 = vmatpush1.msra.mxu0 0.0
        %4773 = vmatprep.subr.mxu0 0.0
        %4774 = vmatpush1.msra.mxu0 0.0
        %4775 = vmatprep.subr.mxu0 0.0
        %4776 = vmatpush1.msra.mxu0 0.0
        %4777 = vmatprep.subr.mxu0 0.0
        %4778 = vmatpush1.msra.mxu0 0.0
        %4779 = vmatprep.subr.mxu0 0.0
        %4780 = vmatpush1.msra.mxu0 0.0
        %4781 = vmatprep.subr.mxu0 0.0
        %4782 = vmatpush1.msra.mxu0 0.0
        %4783 = vmatprep.subr.mxu0 0.0
        %4784 = vmatpush1.msra.mxu0 0.0
        %4785 = vmatprep.subr.mxu0 0.0
        %4786 = vmatpush1.msra.mxu0 0.0
        %4787 = vmatprep.subr.mxu0 0.0
        %4788 = vmatpush1.msra.mxu0 0.0
        %4789 = vmatprep.subr.mxu0 0.0
        %4790 = vmatpush1.msra.mxu0 0.0
        %4791 = vmatprep.subr.mxu0 0.0
        %4792 = vmatpush1.msra.mxu0 0.0
        %4793 = vmatprep.subr.mxu0 0.0
        %4794 = vmatpush1.msra.mxu0 0.0
        %4795 = vmatprep.subr.mxu0 0.0
        %4796 = vmatpush1.msra.mxu0 0.0
        %4797 = vmatprep.subr.mxu0 0.0
        %4798 = vmatpush1.msra.mxu0 0.0
        %4799 = vmatprep.subr.mxu0 0.0
        %4800 = vmatpush1.msra.mxu0 0.0
        %4801 = vmatprep.subr.mxu0 0.0
        %4802 = vmatpush1.msra.mxu0 0.0
        %4803 = vmatprep.subr.mxu0 0.0
        %4804 = vmatpush1.msra.mxu0 0.0
        %4805 = vmatprep.subr.mxu0 0.0
        %4806 = vmatpush1.msra.mxu0 0.0
        %4807 = vmatprep.subr.mxu0 0.0
        %4808 = vmatpush1.msra.mxu0 0.0
        %4809 = vmatprep.subr.mxu0 0.0
        %4810 = vmatpush1.msra.mxu0 0.0
        %4811 = vmatprep.subr.mxu0 0.0
        %4812 = vmatpush1.msra.mxu0 0.0
        %4813 = vmatprep.mubr.f32.mxu0 0.0
        %4814 = vmatmul.mubr.f32.gmra.mrb[0].mxu0 %v4747
        %v4815 = vpop.f32.mrb[0].mxu0
        %v4816 = vadd.f32 0.0, %v4815
        %v4817 = vpop.f32.mrb[0].mxu0
        %4818 = vdwg.mxu0
        %v4819 = vadd.f32 %v4740, %v4816
        %s4820 = scalar_lea.vmem %s5, 128
        %v4821 = vld [vmem:[%s4820] sm:$0xff]
        %4822 = vrot.lane.b32.xlu0 %v3559, 103
        %v4823 = vpop.permute.xlu0 %4822
        %v4826 = vsel %vm3567, %v4821, 0
        %4828 = vmatprep.subr.mxu0 0.0
        %4829 = vmatpush1.msra.mxu0 %v4823
        %4830 = vmatprep.subr.mxu0 0.0
        %4831 = vmatpush1.msra.mxu0 0.0
        %4832 = vmatprep.subr.mxu0 0.0
        %4833 = vmatpush1.msra.mxu0 0.0
        %4834 = vmatprep.subr.mxu0 0.0
        %4835 = vmatpush1.msra.mxu0 0.0
        %4836 = vmatprep.subr.mxu0 0.0
        %4837 = vmatpush1.msra.mxu0 0.0
        %4838 = vmatprep.subr.mxu0 0.0
        %4839 = vmatpush1.msra.mxu0 0.0
        %4840 = vmatprep.subr.mxu0 0.0
        %4841 = vmatpush1.msra.mxu0 0.0
        %4842 = vmatprep.subr.mxu0 0.0
        %4843 = vmatpush1.msra.mxu0 0.0
        %4844 = vmatprep.subr.mxu0 0.0
        %4845 = vmatpush1.msra.mxu0 0.0
        %4846 = vmatprep.subr.mxu0 0.0
        %4847 = vmatpush1.msra.mxu0 0.0
        %4848 = vmatprep.subr.mxu0 0.0
        %4849 = vmatpush1.msra.mxu0 0.0
        %4850 = vmatprep.subr.mxu0 0.0
        %4851 = vmatpush1.msra.mxu0 0.0
        %4852 = vmatprep.subr.mxu0 0.0
        %4853 = vmatpush1.msra.mxu0 0.0
        %4854 = vmatprep.subr.mxu0 0.0
        %4855 = vmatpush1.msra.mxu0 0.0
        %4856 = vmatprep.subr.mxu0 0.0
        %4857 = vmatpush1.msra.mxu0 0.0
        %4858 = vmatprep.subr.mxu0 0.0
        %4859 = vmatpush1.msra.mxu0 0.0
        %4860 = vmatprep.subr.mxu0 0.0
        %4861 = vmatpush1.msra.mxu0 0.0
        %4862 = vmatprep.subr.mxu0 0.0
        %4863 = vmatpush1.msra.mxu0 0.0
        %4864 = vmatprep.subr.mxu0 0.0
        %4865 = vmatpush1.msra.mxu0 0.0
        %4866 = vmatprep.subr.mxu0 0.0
        %4867 = vmatpush1.msra.mxu0 0.0
        %4868 = vmatprep.subr.mxu0 0.0
        %4869 = vmatpush1.msra.mxu0 0.0
        %4870 = vmatprep.subr.mxu0 0.0
        %4871 = vmatpush1.msra.mxu0 0.0
        %4872 = vmatprep.subr.mxu0 0.0
        %4873 = vmatpush1.msra.mxu0 0.0
        %4874 = vmatprep.subr.mxu0 0.0
        %4875 = vmatpush1.msra.mxu0 0.0
        %4876 = vmatprep.subr.mxu0 0.0
        %4877 = vmatpush1.msra.mxu0 0.0
        %4878 = vmatprep.subr.mxu0 0.0
        %4879 = vmatpush1.msra.mxu0 0.0
        %4880 = vmatprep.subr.mxu0 0.0
        %4881 = vmatpush1.msra.mxu0 0.0
        %4882 = vmatprep.subr.mxu0 0.0
        %4883 = vmatpush1.msra.mxu0 0.0
        %4884 = vmatprep.subr.mxu0 0.0
        %4885 = vmatpush1.msra.mxu0 0.0
        %4886 = vmatprep.subr.mxu0 0.0
        %4887 = vmatpush1.msra.mxu0 0.0
        %4888 = vmatprep.subr.mxu0 0.0
        %4889 = vmatpush1.msra.mxu0 0.0
        %4890 = vmatprep.subr.mxu0 0.0
        %4891 = vmatpush1.msra.mxu0 0.0
        %4892 = vmatprep.mubr.f32.mxu0 0.0
        %4893 = vmatmul.mubr.f32.gmra.mrb[0].mxu0 %v4826
        %v4894 = vpop.f32.mrb[0].mxu0
        %v4895 = vadd.f32 0.0, %v4894
        %v4896 = vpop.f32.mrb[0].mxu0
        %4897 = vdwg.mxu0
        %v4898 = vadd.f32 %v4819, %v4895
        %s4899 = scalar_lea.vmem %s5, 136
        %v4900 = vld [vmem:[%s4899] sm:$0xff]
        %4901 = vrot.lane.b32.xlu0 %v3559, 102
        %v4902 = vpop.permute.xlu0 %4901
        %v4905 = vsel %vm3567, %v4900, 0
        %4907 = vmatprep.subr.mxu0 0.0
        %4908 = vmatpush1.msra.mxu0 %v4902
        %4909 = vmatprep.subr.mxu0 0.0
        %4910 = vmatpush1.msra.mxu0 0.0
        %4911 = vmatprep.subr.mxu0 0.0
        %4912 = vmatpush1.msra.mxu0 0.0
        %4913 = vmatprep.subr.mxu0 0.0
        %4914 = vmatpush1.msra.mxu0 0.0
        %4915 = vmatprep.subr.mxu0 0.0
        %4916 = vmatpush1.msra.mxu0 0.0
        %4917 = vmatprep.subr.mxu0 0.0
        %4918 = vmatpush1.msra.mxu0 0.0
        %4919 = vmatprep.subr.mxu0 0.0
        %4920 = vmatpush1.msra.mxu0 0.0
        %4921 = vmatprep.subr.mxu0 0.0
        %4922 = vmatpush1.msra.mxu0 0.0
        %4923 = vmatprep.subr.mxu0 0.0
        %4924 = vmatpush1.msra.mxu0 0.0
        %4925 = vmatprep.subr.mxu0 0.0
        %4926 = vmatpush1.msra.mxu0 0.0
        %4927 = vmatprep.subr.mxu0 0.0
        %4928 = vmatpush1.msra.mxu0 0.0
        %4929 = vmatprep.subr.mxu0 0.0
        %4930 = vmatpush1.msra.mxu0 0.0
        %4931 = vmatprep.subr.mxu0 0.0
        %4932 = vmatpush1.msra.mxu0 0.0
        %4933 = vmatprep.subr.mxu0 0.0
        %4934 = vmatpush1.msra.mxu0 0.0
        %4935 = vmatprep.subr.mxu0 0.0
        %4936 = vmatpush1.msra.mxu0 0.0
        %4937 = vmatprep.subr.mxu0 0.0
        %4938 = vmatpush1.msra.mxu0 0.0
        %4939 = vmatprep.subr.mxu0 0.0
        %4940 = vmatpush1.msra.mxu0 0.0
        %4941 = vmatprep.subr.mxu0 0.0
        %4942 = vmatpush1.msra.mxu0 0.0
        %4943 = vmatprep.subr.mxu0 0.0
        %4944 = vmatpush1.msra.mxu0 0.0
        %4945 = vmatprep.subr.mxu0 0.0
        %4946 = vmatpush1.msra.mxu0 0.0
        %4947 = vmatprep.subr.mxu0 0.0
        %4948 = vmatpush1.msra.mxu0 0.0
        %4949 = vmatprep.subr.mxu0 0.0
        %4950 = vmatpush1.msra.mxu0 0.0
        %4951 = vmatprep.subr.mxu0 0.0
        %4952 = vmatpush1.msra.mxu0 0.0
        %4953 = vmatprep.subr.mxu0 0.0
        %4954 = vmatpush1.msra.mxu0 0.0
        %4955 = vmatprep.subr.mxu0 0.0
        %4956 = vmatpush1.msra.mxu0 0.0
        %4957 = vmatprep.subr.mxu0 0.0
        %4958 = vmatpush1.msra.mxu0 0.0
        %4959 = vmatprep.subr.mxu0 0.0
        %4960 = vmatpush1.msra.mxu0 0.0
        %4961 = vmatprep.subr.mxu0 0.0
        %4962 = vmatpush1.msra.mxu0 0.0
        %4963 = vmatprep.subr.mxu0 0.0
        %4964 = vmatpush1.msra.mxu0 0.0
        %4965 = vmatprep.subr.mxu0 0.0
        %4966 = vmatpush1.msra.mxu0 0.0
        %4967 = vmatprep.subr.mxu0 0.0
        %4968 = vmatpush1.msra.mxu0 0.0
        %4969 = vmatprep.subr.mxu0 0.0
        %4970 = vmatpush1.msra.mxu0 0.0
        %4971 = vmatprep.mubr.f32.mxu0 0.0
        %4972 = vmatmul.mubr.f32.gmra.mrb[0].mxu0 %v4905
        %v4973 = vpop.f32.mrb[0].mxu0
        %v4974 = vadd.f32 0.0, %v4973
        %v4975 = vpop.f32.mrb[0].mxu0
        %4976 = vdwg.mxu0
        %v4977 = vadd.f32 %v4898, %v4974
        %s4978 = scalar_lea.vmem %s5, 144
        %v4979 = vld [vmem:[%s4978] sm:$0xff]
        %4980 = vrot.lane.b32.xlu0 %v3559, 101
        %v4981 = vpop.permute.xlu0 %4980
        %v4984 = vsel %vm3567, %v4979, 0
        %4986 = vmatprep.subr.mxu0 0.0
        %4987 = vmatpush1.msra.mxu0 %v4981
        %4988 = vmatprep.subr.mxu0 0.0
        %4989 = vmatpush1.msra.mxu0 0.0
        %4990 = vmatprep.subr.mxu0 0.0
        %4991 = vmatpush1.msra.mxu0 0.0
        %4992 = vmatprep.subr.mxu0 0.0
        %4993 = vmatpush1.msra.mxu0 0.0
        %4994 = vmatprep.subr.mxu0 0.0
        %4995 = vmatpush1.msra.mxu0 0.0
        %4996 = vmatprep.subr.mxu0 0.0
        %4997 = vmatpush1.msra.mxu0 0.0
        %4998 = vmatprep.subr.mxu0 0.0
        %4999 = vmatpush1.msra.mxu0 0.0
        %5000 = vmatprep.subr.mxu0 0.0
        %5001 = vmatpush1.msra.mxu0 0.0
        %5002 = vmatprep.subr.mxu0 0.0
        %5003 = vmatpush1.msra.mxu0 0.0
        %5004 = vmatprep.subr.mxu0 0.0
        %5005 = vmatpush1.msra.mxu0 0.0
        %5006 = vmatprep.subr.mxu0 0.0
        %5007 = vmatpush1.msra.mxu0 0.0
        %5008 = vmatprep.subr.mxu0 0.0
        %5009 = vmatpush1.msra.mxu0 0.0
        %5010 = vmatprep.subr.mxu0 0.0
        %5011 = vmatpush1.msra.mxu0 0.0
        %5012 = vmatprep.subr.mxu0 0.0
        %5013 = vmatpush1.msra.mxu0 0.0
        %5014 = vmatprep.subr.mxu0 0.0
        %5015 = vmatpush1.msra.mxu0 0.0
        %5016 = vmatprep.subr.mxu0 0.0
        %5017 = vmatpush1.msra.mxu0 0.0
        %5018 = vmatprep.subr.mxu0 0.0
        %5019 = vmatpush1.msra.mxu0 0.0
        %5020 = vmatprep.subr.mxu0 0.0
        %5021 = vmatpush1.msra.mxu0 0.0
        %5022 = vmatprep.subr.mxu0 0.0
        %5023 = vmatpush1.msra.mxu0 0.0
        %5024 = vmatprep.subr.mxu0 0.0
        %5025 = vmatpush1.msra.mxu0 0.0
        %5026 = vmatprep.subr.mxu0 0.0
        %5027 = vmatpush1.msra.mxu0 0.0
        %5028 = vmatprep.subr.mxu0 0.0
        %5029 = vmatpush1.msra.mxu0 0.0
        %5030 = vmatprep.subr.mxu0 0.0
        %5031 = vmatpush1.msra.mxu0 0.0
        %5032 = vmatprep.subr.mxu0 0.0
        %5033 = vmatpush1.msra.mxu0 0.0
        %5034 = vmatprep.subr.mxu0 0.0
        %5035 = vmatpush1.msra.mxu0 0.0
        %5036 = vmatprep.subr.mxu0 0.0
        %5037 = vmatpush1.msra.mxu0 0.0
        %5038 = vmatprep.subr.mxu0 0.0
        %5039 = vmatpush1.msra.mxu0 0.0
        %5040 = vmatprep.subr.mxu0 0.0
        %5041 = vmatpush1.msra.mxu0 0.0
        %5042 = vmatprep.subr.mxu0 0.0
        %5043 = vmatpush1.msra.mxu0 0.0
        %5044 = vmatprep.subr.mxu0 0.0
        %5045 = vmatpush1.msra.mxu0 0.0
        %5046 = vmatprep.subr.mxu0 0.0
        %5047 = vmatpush1.msra.mxu0 0.0
        %5048 = vmatprep.subr.mxu0 0.0
        %5049 = vmatpush1.msra.mxu0 0.0
        %5050 = vmatprep.mubr.f32.mxu0 0.0
        %5051 = vmatmul.mubr.f32.gmra.mrb[0].mxu0 %v4984
        %v5052 = vpop.f32.mrb[0].mxu0
        %v5053 = vadd.f32 0.0, %v5052
        %v5054 = vpop.f32.mrb[0].mxu0
        %5055 = vdwg.mxu0
        %v5056 = vadd.f32 %v4977, %v5053
        %s5057 = scalar_lea.vmem %s5, 152
        %v5058 = vld [vmem:[%s5057] sm:$0xff]
        %5059 = vrot.lane.b32.xlu0 %v3559, 100
        %v5060 = vpop.permute.xlu0 %5059
        %v5063 = vsel %vm3567, %v5058, 0
        %5065 = vmatprep.subr.mxu0 0.0
        %5066 = vmatpush1.msra.mxu0 %v5060
        %5067 = vmatprep.subr.mxu0 0.0
        %5068 = vmatpush1.msra.mxu0 0.0
        %5069 = vmatprep.subr.mxu0 0.0
        %5070 = vmatpush1.msra.mxu0 0.0
        %5071 = vmatprep.subr.mxu0 0.0
        %5072 = vmatpush1.msra.mxu0 0.0
        %5073 = vmatprep.subr.mxu0 0.0
        %5074 = vmatpush1.msra.mxu0 0.0
        %5075 = vmatprep.subr.mxu0 0.0
        %5076 = vmatpush1.msra.mxu0 0.0
        %5077 = vmatprep.subr.mxu0 0.0
        %5078 = vmatpush1.msra.mxu0 0.0
        %5079 = vmatprep.subr.mxu0 0.0
        %5080 = vmatpush1.msra.mxu0 0.0
        %5081 = vmatprep.subr.mxu0 0.0
        %5082 = vmatpush1.msra.mxu0 0.0
        %5083 = vmatprep.subr.mxu0 0.0
        %5084 = vmatpush1.msra.mxu0 0.0
        %5085 = vmatprep.subr.mxu0 0.0
        %5086 = vmatpush1.msra.mxu0 0.0
        %5087 = vmatprep.subr.mxu0 0.0
        %5088 = vmatpush1.msra.mxu0 0.0
        %5089 = vmatprep.subr.mxu0 0.0
        %5090 = vmatpush1.msra.mxu0 0.0
        %5091 = vmatprep.subr.mxu0 0.0
        %5092 = vmatpush1.msra.mxu0 0.0
        %5093 = vmatprep.subr.mxu0 0.0
        %5094 = vmatpush1.msra.mxu0 0.0
        %5095 = vmatprep.subr.mxu0 0.0
        %5096 = vmatpush1.msra.mxu0 0.0
        %5097 = vmatprep.subr.mxu0 0.0
        %5098 = vmatpush1.msra.mxu0 0.0
        %5099 = vmatprep.subr.mxu0 0.0
        %5100 = vmatpush1.msra.mxu0 0.0
        %5101 = vmatprep.subr.mxu0 0.0
        %5102 = vmatpush1.msra.mxu0 0.0
        %5103 = vmatprep.subr.mxu0 0.0
        %5104 = vmatpush1.msra.mxu0 0.0
        %5105 = vmatprep.subr.mxu0 0.0
        %5106 = vmatpush1.msra.mxu0 0.0
        %5107 = vmatprep.subr.mxu0 0.0
        %5108 = vmatpush1.msra.mxu0 0.0
        %5109 = vmatprep.subr.mxu0 0.0
        %5110 = vmatpush1.msra.mxu0 0.0
        %5111 = vmatprep.subr.mxu0 0.0
        %5112 = vmatpush1.msra.mxu0 0.0
        %5113 = vmatprep.subr.mxu0 0.0
        %5114 = vmatpush1.msra.mxu0 0.0
        %5115 = vmatprep.subr.mxu0 0.0
        %5116 = vmatpush1.msra.mxu0 0.0
        %5117 = vmatprep.subr.mxu0 0.0
        %5118 = vmatpush1.msra.mxu0 0.0
        %5119 = vmatprep.subr.mxu0 0.0
        %5120 = vmatpush1.msra.mxu0 0.0
        %5121 = vmatprep.subr.mxu0 0.0
        %5122 = vmatpush1.msra.mxu0 0.0
        %5123 = vmatprep.subr.mxu0 0.0
        %5124 = vmatpush1.msra.mxu0 0.0
        %5125 = vmatprep.subr.mxu0 0.0
        %5126 = vmatpush1.msra.mxu0 0.0
        %5127 = vmatprep.subr.mxu0 0.0
        %5128 = vmatpush1.msra.mxu0 0.0
        %5129 = vmatprep.mubr.f32.mxu0 0.0
        %5130 = vmatmul.mubr.f32.gmra.mrb[0].mxu0 %v5063
        %v5131 = vpop.f32.mrb[0].mxu0
        %v5132 = vadd.f32 0.0, %v5131
        %v5133 = vpop.f32.mrb[0].mxu0
        %5134 = vdwg.mxu0
        %v5135 = vadd.f32 %v5056, %v5132
        %s5136 = scalar_lea.vmem %s5, 160
        %v5137 = vld [vmem:[%s5136] sm:$0xff]
        %5138 = vrot.lane.b32.xlu0 %v3559, 96
        %v5139 = vpop.permute.xlu0 %5138
        %v5142 = vsel %vm3567, %v5137, 0
        %5144 = vmatprep.subr.mxu0 0.0
        %5145 = vmatpush1.msra.mxu0 %v5139
        %5146 = vmatprep.subr.mxu0 0.0
        %5147 = vmatpush1.msra.mxu0 0.0
        %5148 = vmatprep.subr.mxu0 0.0
        %5149 = vmatpush1.msra.mxu0 0.0
        %5150 = vmatprep.subr.mxu0 0.0
        %5151 = vmatpush1.msra.mxu0 0.0
        %5152 = vmatprep.subr.mxu0 0.0
        %5153 = vmatpush1.msra.mxu0 0.0
        %5154 = vmatprep.subr.mxu0 0.0
        %5155 = vmatpush1.msra.mxu0 0.0
        %5156 = vmatprep.subr.mxu0 0.0
        %5157 = vmatpush1.msra.mxu0 0.0
        %5158 = vmatprep.subr.mxu0 0.0
        %5159 = vmatpush1.msra.mxu0 0.0
        %5160 = vmatprep.subr.mxu0 0.0
        %5161 = vmatpush1.msra.mxu0 0.0
        %5162 = vmatprep.subr.mxu0 0.0
        %5163 = vmatpush1.msra.mxu0 0.0
        %5164 = vmatprep.subr.mxu0 0.0
        %5165 = vmatpush1.msra.mxu0 0.0
        %5166 = vmatprep.subr.mxu0 0.0
        %5167 = vmatpush1.msra.mxu0 0.0
        %5168 = vmatprep.subr.mxu0 0.0
        %5169 = vmatpush1.msra.mxu0 0.0
        %5170 = vmatprep.subr.mxu0 0.0
        %5171 = vmatpush1.msra.mxu0 0.0
        %5172 = vmatprep.subr.mxu0 0.0
        %5173 = vmatpush1.msra.mxu0 0.0
        %5174 = vmatprep.subr.mxu0 0.0
        %5175 = vmatpush1.msra.mxu0 0.0
        %5176 = vmatprep.subr.mxu0 0.0
        %5177 = vmatpush1.msra.mxu0 0.0
        %5178 = vmatprep.subr.mxu0 0.0
        %5179 = vmatpush1.msra.mxu0 0.0
        %5180 = vmatprep.subr.mxu0 0.0
        %5181 = vmatpush1.msra.mxu0 0.0
        %5182 = vmatprep.subr.mxu0 0.0
        %5183 = vmatpush1.msra.mxu0 0.0
        %5184 = vmatprep.subr.mxu0 0.0
        %5185 = vmatpush1.msra.mxu0 0.0
        %5186 = vmatprep.subr.mxu0 0.0
        %5187 = vmatpush1.msra.mxu0 0.0
        %5188 = vmatprep.subr.mxu0 0.0
        %5189 = vmatpush1.msra.mxu0 0.0
        %5190 = vmatprep.subr.mxu0 0.0
        %5191 = vmatpush1.msra.mxu0 0.0
        %5192 = vmatprep.subr.mxu0 0.0
        %5193 = vmatpush1.msra.mxu0 0.0
        %5194 = vmatprep.subr.mxu0 0.0
        %5195 = vmatpush1.msra.mxu0 0.0
        %5196 = vmatprep.subr.mxu0 0.0
        %5197 = vmatpush1.msra.mxu0 0.0
        %5198 = vmatprep.subr.mxu0 0.0
        %5199 = vmatpush1.msra.mxu0 0.0
        %5200 = vmatprep.subr.mxu0 0.0
        %5201 = vmatpush1.msra.mxu0 0.0
        %5202 = vmatprep.subr.mxu0 0.0
        %5203 = vmatpush1.msra.mxu0 0.0
        %5204 = vmatprep.subr.mxu0 0.0
        %5205 = vmatpush1.msra.mxu0 0.0
        %5206 = vmatprep.subr.mxu0 0.0
        %5207 = vmatpush1.msra.mxu0 0.0
        %5208 = vmatprep.mubr.f32.mxu0 0.0
        %5209 = vmatmul.mubr.f32.gmra.mrb[0].mxu0 %v5142
        %v5210 = vpop.f32.mrb[0].mxu0
        %v5211 = vadd.f32 0.0, %v5210
        %v5212 = vpop.f32.mrb[0].mxu0
        %5213 = vdwg.mxu0
        %v5214 = vadd.f32 %v5135, %v5211
        %s5215 = scalar_lea.vmem %s5, 168
        %v5216 = vld [vmem:[%s5215] sm:$0xff]
        %5217 = vrot.lane.b32.xlu0 %v3559, 95
        %v5218 = vpop.permute.xlu0 %5217
        %v5221 = vsel %vm3567, %v5216, 0
        %5223 = vmatprep.subr.mxu0 0.0
        %5224 = vmatpush1.msra.mxu0 %v5218
        %5225 = vmatprep.subr.mxu0 0.0
        %5226 = vmatpush1.msra.mxu0 0.0
        %5227 = vmatprep.subr.mxu0 0.0
        %5228 = vmatpush1.msra.mxu0 0.0
        %5229 = vmatprep.subr.mxu0 0.0
        %5230 = vmatpush1.msra.mxu0 0.0
        %5231 = vmatprep.subr.mxu0 0.0
        %5232 = vmatpush1.msra.mxu0 0.0
        %5233 = vmatprep.subr.mxu0 0.0
        %5234 = vmatpush1.msra.mxu0 0.0
        %5235 = vmatprep.subr.mxu0 0.0
        %5236 = vmatpush1.msra.mxu0 0.0
        %5237 = vmatprep.subr.mxu0 0.0
        %5238 = vmatpush1.msra.mxu0 0.0
        %5239 = vmatprep.subr.mxu0 0.0
        %5240 = vmatpush1.msra.mxu0 0.0
        %5241 = vmatprep.subr.mxu0 0.0
        %5242 = vmatpush1.msra.mxu0 0.0
        %5243 = vmatprep.subr.mxu0 0.0
        %5244 = vmatpush1.msra.mxu0 0.0
        %5245 = vmatprep.subr.mxu0 0.0
        %5246 = vmatpush1.msra.mxu0 0.0
        %5247 = vmatprep.subr.mxu0 0.0
        %5248 = vmatpush1.msra.mxu0 0.0
        %5249 = vmatprep.subr.mxu0 0.0
        %5250 = vmatpush1.msra.mxu0 0.0
        %5251 = vmatprep.subr.mxu0 0.0
        %5252 = vmatpush1.msra.mxu0 0.0
        %5253 = vmatprep.subr.mxu0 0.0
        %5254 = vmatpush1.msra.mxu0 0.0
        %5255 = vmatprep.subr.mxu0 0.0
        %5256 = vmatpush1.msra.mxu0 0.0
        %5257 = vmatprep.subr.mxu0 0.0
        %5258 = vmatpush1.msra.mxu0 0.0
        %5259 = vmatprep.subr.mxu0 0.0
        %5260 = vmatpush1.msra.mxu0 0.0
        %5261 = vmatprep.subr.mxu0 0.0
        %5262 = vmatpush1.msra.mxu0 0.0
        %5263 = vmatprep.subr.mxu0 0.0
        %5264 = vmatpush1.msra.mxu0 0.0
        %5265 = vmatprep.subr.mxu0 0.0
        %5266 = vmatpush1.msra.mxu0 0.0
        %5267 = vmatprep.subr.mxu0 0.0
        %5268 = vmatpush1.msra.mxu0 0.0
        %5269 = vmatprep.subr.mxu0 0.0
        %5270 = vmatpush1.msra.mxu0 0.0
        %5271 = vmatprep.subr.mxu0 0.0
        %5272 = vmatpush1.msra.mxu0 0.0
        %5273 = vmatprep.subr.mxu0 0.0
        %5274 = vmatpush1.msra.mxu0 0.0
        %5275 = vmatprep.subr.mxu0 0.0
        %5276 = vmatpush1.msra.mxu0 0.0
        %5277 = vmatprep.subr.mxu0 0.0
        %5278 = vmatpush1.msra.mxu0 0.0
        %5279 = vmatprep.subr.mxu0 0.0
        %5280 = vmatpush1.msra.mxu0 0.0
        %5281 = vmatprep.subr.mxu0 0.0
        %5282 = vmatpush1.msra.mxu0 0.0
        %5283 = vmatprep.subr.mxu0 0.0
        %5284 = vmatpush1.msra.mxu0 0.0
        %5285 = vmatprep.subr.mxu0 0.0
        %5286 = vmatpush1.msra.mxu0 0.0
        %5287 = vmatprep.mubr.f32.mxu0 0.0
        %5288 = vmatmul.mubr.f32.gmra.mrb[0].mxu0 %v5221
        %v5289 = vpop.f32.mrb[0].mxu0
        %v5290 = vadd.f32 0.0, %v5289
        %v5291 = vpop.f32.mrb[0].mxu0
        %5292 = vdwg.mxu0
        %v5293 = vadd.f32 %v5214, %v5290
        %s5294 = scalar_lea.vmem %s5, 176
        %v5295 = vld [vmem:[%s5294] sm:$0xff]
        %5296 = vrot.lane.b32.xlu0 %v3559, 94
        %v5297 = vpop.permute.xlu0 %5296
        %v5300 = vsel %vm3567, %v5295, 0
        %5302 = vmatprep.subr.mxu0 0.0
        %5303 = vmatpush1.msra.mxu0 %v5297
        %5304 = vmatprep.subr.mxu0 0.0
        %5305 = vmatpush1.msra.mxu0 0.0
        %5306 = vmatprep.subr.mxu0 0.0
        %5307 = vmatpush1.msra.mxu0 0.0
        %5308 = vmatprep.subr.mxu0 0.0
        %5309 = vmatpush1.msra.mxu0 0.0
        %5310 = vmatprep.subr.mxu0 0.0
        %5311 = vmatpush1.msra.mxu0 0.0
        %5312 = vmatprep.subr.mxu0 0.0
        %5313 = vmatpush1.msra.mxu0 0.0
        %5314 = vmatprep.subr.mxu0 0.0
        %5315 = vmatpush1.msra.mxu0 0.0
        %5316 = vmatprep.subr.mxu0 0.0
        %5317 = vmatpush1.msra.mxu0 0.0
        %5318 = vmatprep.subr.mxu0 0.0
        %5319 = vmatpush1.msra.mxu0 0.0
        %5320 = vmatprep.subr.mxu0 0.0
        %5321 = vmatpush1.msra.mxu0 0.0
        %5322 = vmatprep.subr.mxu0 0.0
        %5323 = vmatpush1.msra.mxu0 0.0
        %5324 = vmatprep.subr.mxu0 0.0
        %5325 = vmatpush1.msra.mxu0 0.0
        %5326 = vmatprep.subr.mxu0 0.0
        %5327 = vmatpush1.msra.mxu0 0.0
        %5328 = vmatprep.subr.mxu0 0.0
        %5329 = vmatpush1.msra.mxu0 0.0
        %5330 = vmatprep.subr.mxu0 0.0
        %5331 = vmatpush1.msra.mxu0 0.0
        %5332 = vmatprep.subr.mxu0 0.0
        %5333 = vmatpush1.msra.mxu0 0.0
        %5334 = vmatprep.subr.mxu0 0.0
        %5335 = vmatpush1.msra.mxu0 0.0
        %5336 = vmatprep.subr.mxu0 0.0
        %5337 = vmatpush1.msra.mxu0 0.0
        %5338 = vmatprep.subr.mxu0 0.0
        %5339 = vmatpush1.msra.mxu0 0.0
        %5340 = vmatprep.subr.mxu0 0.0
        %5341 = vmatpush1.msra.mxu0 0.0
        %5342 = vmatprep.subr.mxu0 0.0
        %5343 = vmatpush1.msra.mxu0 0.0
        %5344 = vmatprep.subr.mxu0 0.0
        %5345 = vmatpush1.msra.mxu0 0.0
        %5346 = vmatprep.subr.mxu0 0.0
        %5347 = vmatpush1.msra.mxu0 0.0
        %5348 = vmatprep.subr.mxu0 0.0
        %5349 = vmatpush1.msra.mxu0 0.0
        %5350 = vmatprep.subr.mxu0 0.0
        %5351 = vmatpush1.msra.mxu0 0.0
        %5352 = vmatprep.subr.mxu0 0.0
        %5353 = vmatpush1.msra.mxu0 0.0
        %5354 = vmatprep.subr.mxu0 0.0
        %5355 = vmatpush1.msra.mxu0 0.0
        %5356 = vmatprep.subr.mxu0 0.0
        %5357 = vmatpush1.msra.mxu0 0.0
        %5358 = vmatprep.subr.mxu0 0.0
        %5359 = vmatpush1.msra.mxu0 0.0
        %5360 = vmatprep.subr.mxu0 0.0
        %5361 = vmatpush1.msra.mxu0 0.0
        %5362 = vmatprep.subr.mxu0 0.0
        %5363 = vmatpush1.msra.mxu0 0.0
        %5364 = vmatprep.subr.mxu0 0.0
        %5365 = vmatpush1.msra.mxu0 0.0
        %5366 = vmatprep.mubr.f32.mxu0 0.0
        %5367 = vmatmul.mubr.f32.gmra.mrb[0].mxu0 %v5300
        %v5368 = vpop.f32.mrb[0].mxu0
        %v5369 = vadd.f32 0.0, %v5368
        %v5370 = vpop.f32.mrb[0].mxu0
        %5371 = vdwg.mxu0
        %v5372 = vadd.f32 %v5293, %v5369
        %s5373 = scalar_lea.vmem %s5, 184
        %v5374 = vld [vmem:[%s5373] sm:$0xff]
        %5375 = vrot.lane.b32.xlu0 %v3559, 93
        %v5376 = vpop.permute.xlu0 %5375
        %v5379 = vsel %vm3567, %v5374, 0
        %5381 = vmatprep.subr.mxu0 0.0
        %5382 = vmatpush1.msra.mxu0 %v5376
        %5383 = vmatprep.subr.mxu0 0.0
        %5384 = vmatpush1.msra.mxu0 0.0
        %5385 = vmatprep.subr.mxu0 0.0
        %5386 = vmatpush1.msra.mxu0 0.0
        %5387 = vmatprep.subr.mxu0 0.0
        %5388 = vmatpush1.msra.mxu0 0.0
        %5389 = vmatprep.subr.mxu0 0.0
        %5390 = vmatpush1.msra.mxu0 0.0
        %5391 = vmatprep.subr.mxu0 0.0
        %5392 = vmatpush1.msra.mxu0 0.0
        %5393 = vmatprep.subr.mxu0 0.0
        %5394 = vmatpush1.msra.mxu0 0.0
        %5395 = vmatprep.subr.mxu0 0.0
        %5396 = vmatpush1.msra.mxu0 0.0
        %5397 = vmatprep.subr.mxu0 0.0
        %5398 = vmatpush1.msra.mxu0 0.0
        %5399 = vmatprep.subr.mxu0 0.0
        %5400 = vmatpush1.msra.mxu0 0.0
        %5401 = vmatprep.subr.mxu0 0.0
        %5402 = vmatpush1.msra.mxu0 0.0
        %5403 = vmatprep.subr.mxu0 0.0
        %5404 = vmatpush1.msra.mxu0 0.0
        %5405 = vmatprep.subr.mxu0 0.0
        %5406 = vmatpush1.msra.mxu0 0.0
        %5407 = vmatprep.subr.mxu0 0.0
        %5408 = vmatpush1.msra.mxu0 0.0
        %5409 = vmatprep.subr.mxu0 0.0
        %5410 = vmatpush1.msra.mxu0 0.0
        %5411 = vmatprep.subr.mxu0 0.0
        %5412 = vmatpush1.msra.mxu0 0.0
        %5413 = vmatprep.subr.mxu0 0.0
        %5414 = vmatpush1.msra.mxu0 0.0
        %5415 = vmatprep.subr.mxu0 0.0
        %5416 = vmatpush1.msra.mxu0 0.0
        %5417 = vmatprep.subr.mxu0 0.0
        %5418 = vmatpush1.msra.mxu0 0.0
        %5419 = vmatprep.subr.mxu0 0.0
        %5420 = vmatpush1.msra.mxu0 0.0
        %5421 = vmatprep.subr.mxu0 0.0
        %5422 = vmatpush1.msra.mxu0 0.0
        %5423 = vmatprep.subr.mxu0 0.0
        %5424 = vmatpush1.msra.mxu0 0.0
        %5425 = vmatprep.subr.mxu0 0.0
        %5426 = vmatpush1.msra.mxu0 0.0
        %5427 = vmatprep.subr.mxu0 0.0
        %5428 = vmatpush1.msra.mxu0 0.0
        %5429 = vmatprep.subr.mxu0 0.0
        %5430 = vmatpush1.msra.mxu0 0.0
        %5431 = vmatprep.subr.mxu0 0.0
        %5432 = vmatpush1.msra.mxu0 0.0
        %5433 = vmatprep.subr.mxu0 0.0
        %5434 = vmatpush1.msra.mxu0 0.0
        %5435 = vmatprep.subr.mxu0 0.0
        %5436 = vmatpush1.msra.mxu0 0.0
        %5437 = vmatprep.subr.mxu0 0.0
        %5438 = vmatpush1.msra.mxu0 0.0
        %5439 = vmatprep.subr.mxu0 0.0
        %5440 = vmatpush1.msra.mxu0 0.0
        %5441 = vmatprep.subr.mxu0 0.0
        %5442 = vmatpush1.msra.mxu0 0.0
        %5443 = vmatprep.subr.mxu0 0.0
        %5444 = vmatpush1.msra.mxu0 0.0
        %5445 = vmatprep.mubr.f32.mxu0 0.0
        %5446 = vmatmul.mubr.f32.gmra.mrb[0].mxu0 %v5379
        %v5447 = vpop.f32.mrb[0].mxu0
        %v5448 = vadd.f32 0.0, %v5447
        %v5449 = vpop.f32.mrb[0].mxu0
        %5450 = vdwg.mxu0
        %v5451 = vadd.f32 %v5372, %v5448
        %s5452 = scalar_lea.vmem %s5, 192
        %v5453 = vld [vmem:[%s5452] sm:$0xff]
        %5454 = vrot.lane.b32.xlu0 %v3559, 92
        %v5455 = vpop.permute.xlu0 %5454
        %v5458 = vsel %vm3567, %v5453, 0
        %5460 = vmatprep.subr.mxu0 0.0
        %5461 = vmatpush1.msra.mxu0 %v5455
        %5462 = vmatprep.subr.mxu0 0.0
        %5463 = vmatpush1.msra.mxu0 0.0
        %5464 = vmatprep.subr.mxu0 0.0
        %5465 = vmatpush1.msra.mxu0 0.0
        %5466 = vmatprep.subr.mxu0 0.0
        %5467 = vmatpush1.msra.mxu0 0.0
        %5468 = vmatprep.subr.mxu0 0.0
        %5469 = vmatpush1.msra.mxu0 0.0
        %5470 = vmatprep.subr.mxu0 0.0
        %5471 = vmatpush1.msra.mxu0 0.0
        %5472 = vmatprep.subr.mxu0 0.0
        %5473 = vmatpush1.msra.mxu0 0.0
        %5474 = vmatprep.subr.mxu0 0.0
        %5475 = vmatpush1.msra.mxu0 0.0
        %5476 = vmatprep.subr.mxu0 0.0
        %5477 = vmatpush1.msra.mxu0 0.0
        %5478 = vmatprep.subr.mxu0 0.0
        %5479 = vmatpush1.msra.mxu0 0.0
        %5480 = vmatprep.subr.mxu0 0.0
        %5481 = vmatpush1.msra.mxu0 0.0
        %5482 = vmatprep.subr.mxu0 0.0
        %5483 = vmatpush1.msra.mxu0 0.0
        %5484 = vmatprep.subr.mxu0 0.0
        %5485 = vmatpush1.msra.mxu0 0.0
        %5486 = vmatprep.subr.mxu0 0.0
        %5487 = vmatpush1.msra.mxu0 0.0
        %5488 = vmatprep.subr.mxu0 0.0
        %5489 = vmatpush1.msra.mxu0 0.0
        %5490 = vmatprep.subr.mxu0 0.0
        %5491 = vmatpush1.msra.mxu0 0.0
        %5492 = vmatprep.subr.mxu0 0.0
        %5493 = vmatpush1.msra.mxu0 0.0
        %5494 = vmatprep.subr.mxu0 0.0
        %5495 = vmatpush1.msra.mxu0 0.0
        %5496 = vmatprep.subr.mxu0 0.0
        %5497 = vmatpush1.msra.mxu0 0.0
        %5498 = vmatprep.subr.mxu0 0.0
        %5499 = vmatpush1.msra.mxu0 0.0
        %5500 = vmatprep.subr.mxu0 0.0
        %5501 = vmatpush1.msra.mxu0 0.0
        %5502 = vmatprep.subr.mxu0 0.0
        %5503 = vmatpush1.msra.mxu0 0.0
        %5504 = vmatprep.subr.mxu0 0.0
        %5505 = vmatpush1.msra.mxu0 0.0
        %5506 = vmatprep.subr.mxu0 0.0
        %5507 = vmatpush1.msra.mxu0 0.0
        %5508 = vmatprep.subr.mxu0 0.0
        %5509 = vmatpush1.msra.mxu0 0.0
        %5510 = vmatprep.subr.mxu0 0.0
        %5511 = vmatpush1.msra.mxu0 0.0
        %5512 = vmatprep.subr.mxu0 0.0
        %5513 = vmatpush1.msra.mxu0 0.0
        %5514 = vmatprep.subr.mxu0 0.0
        %5515 = vmatpush1.msra.mxu0 0.0
        %5516 = vmatprep.subr.mxu0 0.0
        %5517 = vmatpush1.msra.mxu0 0.0
        %5518 = vmatprep.subr.mxu0 0.0
        %5519 = vmatpush1.msra.mxu0 0.0
        %5520 = vmatprep.subr.mxu0 0.0
        %5521 = vmatpush1.msra.mxu0 0.0
        %5522 = vmatprep.subr.mxu0 0.0
        %5523 = vmatpush1.msra.mxu0 0.0
        %5524 = vmatprep.mubr.f32.mxu0 0.0
        %5525 = vmatmul.mubr.f32.gmra.mrb[0].mxu0 %v5458
        %v5526 = vpop.f32.mrb[0].mxu0
        %v5527 = vadd.f32 0.0, %v5526
        %v5528 = vpop.f32.mrb[0].mxu0
        %5529 = vdwg.mxu0
        %v5530 = vadd.f32 %v5451, %v5527
        %v5531 = vld [vmem:[%s6] sm:$0xff]
        %5533 = vset.pattern.permute.xlu0 0
        %5534 = vperm.xlu0 %5533, %v5531
        %v5535 = vpop.permute.xlu0 %5534
        %v5537 = vadd.f32 %v5530, %v5535
        %v5538 = vmax.f32 %v5537, 0.0
        %v5539 = vld [vmem:[#allocation4] sm:$0xff]
        %v5540 = vld [vmem:[#allocation4 + $0x8] sm:$0xff]
        %v5541 = vld [vmem:[#allocation4 + $0x10] sm:$0xff]
        %v5542 = vld [vmem:[#allocation4 + $0x18] sm:$0xff]
        %v5543 = vld [vmem:[#allocation4 + $0x20] sm:$0xff]
        %v5544 = vld [vmem:[#allocation4 + $0x28] sm:$0xff]
        %v5545 = vld [vmem:[#allocation4 + $0x30] sm:$0xff]
        %v5546 = vld [vmem:[#allocation4 + $0x38] sm:$0xff]
        %vm5547 = vcmask 523264
        %v5549 = vsel %vm5547, %v5538, 0
        %5551 = vmatprep.subr.mxu0 0.0
        %5552 = vmatpush1.msra.mxu0 %v5539
        %5553 = vmatprep.subr.mxu0 0.0
        %5554 = vmatpush1.msra.mxu0 %v5540
        %5555 = vmatprep.subr.mxu0 0.0
        %5556 = vmatpush1.msra.mxu0 %v5541
        %5557 = vmatprep.subr.mxu0 0.0
        %5558 = vmatpush1.msra.mxu0 %v5542
        %5559 = vmatprep.subr.mxu0 0.0
        %5560 = vmatpush1.msra.mxu0 %v5543
        %5561 = vmatprep.subr.mxu0 0.0
        %5562 = vmatpush1.msra.mxu0 %v5544
        %5563 = vmatprep.subr.mxu0 0.0
        %5564 = vmatpush1.msra.mxu0 %v5545
        %5565 = vmatprep.subr.mxu0 0.0
        %5566 = vmatpush1.msra.mxu0 %v5546
        %5567 = vmatprep.subr.mxu0 0.0
        %5568 = vmatpush1.msra.mxu0 0.0
        %5569 = vmatprep.subr.mxu0 0.0
        %5570 = vmatpush1.msra.mxu0 0.0
        %5571 = vmatprep.subr.mxu0 0.0
        %5572 = vmatpush1.msra.mxu0 0.0
        %5573 = vmatprep.subr.mxu0 0.0
        %5574 = vmatpush1.msra.mxu0 0.0
        %5575 = vmatprep.subr.mxu0 0.0
        %5576 = vmatpush1.msra.mxu0 0.0
        %5577 = vmatprep.subr.mxu0 0.0
        %5578 = vmatpush1.msra.mxu0 0.0
        %5579 = vmatprep.subr.mxu0 0.0
        %5580 = vmatpush1.msra.mxu0 0.0
        %5581 = vmatprep.subr.mxu0 0.0
        %5582 = vmatpush1.msra.mxu0 0.0
        %5583 = vmatprep.subr.mxu0 0.0
        %5584 = vmatpush1.msra.mxu0 0.0
        %5585 = vmatprep.subr.mxu0 0.0
        %5586 = vmatpush1.msra.mxu0 0.0
        %5587 = vmatprep.subr.mxu0 0.0
        %5588 = vmatpush1.msra.mxu0 0.0
        %5589 = vmatprep.subr.mxu0 0.0
        %5590 = vmatpush1.msra.mxu0 0.0
        %5591 = vmatprep.subr.mxu0 0.0
        %5592 = vmatpush1.msra.mxu0 0.0
        %5593 = vmatprep.subr.mxu0 0.0
        %5594 = vmatpush1.msra.mxu0 0.0
        %5595 = vmatprep.subr.mxu0 0.0
        %5596 = vmatpush1.msra.mxu0 0.0
        %5597 = vmatprep.subr.mxu0 0.0
        %5598 = vmatpush1.msra.mxu0 0.0
        %5599 = vmatprep.subr.mxu0 0.0
        %5600 = vmatpush1.msra.mxu0 0.0
        %5601 = vmatprep.subr.mxu0 0.0
        %5602 = vmatpush1.msra.mxu0 0.0
        %5603 = vmatprep.subr.mxu0 0.0
        %5604 = vmatpush1.msra.mxu0 0.0
        %5605 = vmatprep.subr.mxu0 0.0
        %5606 = vmatpush1.msra.mxu0 0.0
        %5607 = vmatprep.subr.mxu0 0.0
        %5608 = vmatpush1.msra.mxu0 0.0
        %5609 = vmatprep.subr.mxu0 0.0
        %5610 = vmatpush1.msra.mxu0 0.0
        %5611 = vmatprep.subr.mxu0 0.0
        %5612 = vmatpush1.msra.mxu0 0.0
        %5613 = vmatprep.subr.mxu0 0.0
        %5614 = vmatpush1.msra.mxu0 0.0
        %5615 = vmatprep.mubr.f32.mxu0 0.0
        %5616 = vmatmul.mubr.f32.gmra.mrb[0].mxu0 %v5549
        %v5617 = vpop.f32.mrb[0].mxu0
        %v5618 = vadd.f32 0.0, %v5617
        %v5619 = vpop.f32.mrb[0].mxu0
        %5620 = vdwg.mxu0
        %s5621 = scalar_lea.vmem [#allocation4], 64
        %v5622 = vld [vmem:[%s5621] sm:$0xff]
        %v5623 = vld [vmem:[%s5621 + $0x8] sm:$0xff]
        %v5624 = vld [vmem:[%s5621 + $0x10] sm:$0xff]
        %v5625 = vld [vmem:[%s5621 + $0x18] sm:$0xff]
        %v5626 = vld [vmem:[%s5621 + $0x20] sm:$0xff]
        %v5627 = vld [vmem:[%s5621 + $0x28] sm:$0xff]
        %v5628 = vld [vmem:[%s5621 + $0x30] sm:$0xff]
        %v5629 = vld [vmem:[%s5621 + $0x38] sm:$0xff]
        %5630 = vmatprep.subr.mxu0 0.0
        %5631 = vmatpush1.msra.mxu0 %v5622
        %5632 = vmatprep.subr.mxu0 0.0
        %5633 = vmatpush1.msra.mxu0 %v5623
        %5634 = vmatprep.subr.mxu0 0.0
        %5635 = vmatpush1.msra.mxu0 %v5624
        %5636 = vmatprep.subr.mxu0 0.0
        %5637 = vmatpush1.msra.mxu0 %v5625
        %5638 = vmatprep.subr.mxu0 0.0
        %5639 = vmatpush1.msra.mxu0 %v5626
        %5640 = vmatprep.subr.mxu0 0.0
        %5641 = vmatpush1.msra.mxu0 %v5627
        %5642 = vmatprep.subr.mxu0 0.0
        %5643 = vmatpush1.msra.mxu0 %v5628
        %5644 = vmatprep.subr.mxu0 0.0
        %5645 = vmatpush1.msra.mxu0 %v5629
        %5646 = vmatprep.subr.mxu0 0.0
        %5647 = vmatpush1.msra.mxu0 0.0
        %5648 = vmatprep.subr.mxu0 0.0
        %5649 = vmatpush1.msra.mxu0 0.0
        %5650 = vmatprep.subr.mxu0 0.0
        %5651 = vmatpush1.msra.mxu0 0.0
        %5652 = vmatprep.subr.mxu0 0.0
        %5653 = vmatpush1.msra.mxu0 0.0
        %5654 = vmatprep.subr.mxu0 0.0
        %5655 = vmatpush1.msra.mxu0 0.0
        %5656 = vmatprep.subr.mxu0 0.0
        %5657 = vmatpush1.msra.mxu0 0.0
        %5658 = vmatprep.subr.mxu0 0.0
        %5659 = vmatpush1.msra.mxu0 0.0
        %5660 = vmatprep.subr.mxu0 0.0
        %5661 = vmatpush1.msra.mxu0 0.0
        %5662 = vmatprep.subr.mxu0 0.0
        %5663 = vmatpush1.msra.mxu0 0.0
        %5664 = vmatprep.subr.mxu0 0.0
        %5665 = vmatpush1.msra.mxu0 0.0
        %5666 = vmatprep.subr.mxu0 0.0
        %5667 = vmatpush1.msra.mxu0 0.0
        %5668 = vmatprep.subr.mxu0 0.0
        %5669 = vmatpush1.msra.mxu0 0.0
        %5670 = vmatprep.subr.mxu0 0.0
        %5671 = vmatpush1.msra.mxu0 0.0
        %5672 = vmatprep.subr.mxu0 0.0
        %5673 = vmatpush1.msra.mxu0 0.0
        %5674 = vmatprep.subr.mxu0 0.0
        %5675 = vmatpush1.msra.mxu0 0.0
        %5676 = vmatprep.subr.mxu0 0.0
        %5677 = vmatpush1.msra.mxu0 0.0
        %5678 = vmatprep.subr.mxu0 0.0
        %5679 = vmatpush1.msra.mxu0 0.0
        %5680 = vmatprep.subr.mxu0 0.0
        %5681 = vmatpush1.msra.mxu0 0.0
        %5682 = vmatprep.subr.mxu0 0.0
        %5683 = vmatpush1.msra.mxu0 0.0
        %5684 = vmatprep.subr.mxu0 0.0
        %5685 = vmatpush1.msra.mxu0 0.0
        %5686 = vmatprep.subr.mxu0 0.0
        %5687 = vmatpush1.msra.mxu0 0.0
        %5688 = vmatprep.subr.mxu0 0.0
        %5689 = vmatpush1.msra.mxu0 0.0
        %5690 = vmatprep.subr.mxu0 0.0
        %5691 = vmatpush1.msra.mxu0 0.0
        %5692 = vmatprep.subr.mxu0 0.0
        %5693 = vmatpush1.msra.mxu0 0.0
        %5694 = vmatprep.mubr.f32.mxu0 0.0
        %5695 = vmatmul.mubr.f32.gmra.mrb[0].mxu0 %v5549
        %v5696 = vpop.f32.mrb[0].mxu0
        %v5697 = vadd.f32 0.0, %v5696
        %v5698 = vpop.f32.mrb[0].mxu0
        %5699 = vdwg.mxu0
        %v5700 = vmax.f32 %v5618, %v5697
        %s5701 = scalar_lea.vmem [#allocation4], 128
        %v5702 = vld [vmem:[%s5701] sm:$0xff]
        %v5703 = vld [vmem:[%s5701 + $0x8] sm:$0xff]
        %v5704 = vld [vmem:[%s5701 + $0x10] sm:$0xff]
        %v5705 = vld [vmem:[%s5701 + $0x18] sm:$0xff]
        %v5706 = vld [vmem:[%s5701 + $0x20] sm:$0xff]
        %v5707 = vld [vmem:[%s5701 + $0x28] sm:$0xff]
        %v5708 = vld [vmem:[%s5701 + $0x30] sm:$0xff]
        %v5709 = vld [vmem:[%s5701 + $0x38] sm:$0xff]
        %5710 = vmatprep.subr.mxu0 0.0
        %5711 = vmatpush1.msra.mxu0 %v5702
        %5712 = vmatprep.subr.mxu0 0.0
        %5713 = vmatpush1.msra.mxu0 %v5703
        %5714 = vmatprep.subr.mxu0 0.0
        %5715 = vmatpush1.msra.mxu0 %v5704
        %5716 = vmatprep.subr.mxu0 0.0
        %5717 = vmatpush1.msra.mxu0 %v5705
        %5718 = vmatprep.subr.mxu0 0.0
        %5719 = vmatpush1.msra.mxu0 %v5706
        %5720 = vmatprep.subr.mxu0 0.0
        %5721 = vmatpush1.msra.mxu0 %v5707
        %5722 = vmatprep.subr.mxu0 0.0
        %5723 = vmatpush1.msra.mxu0 %v5708
        %5724 = vmatprep.subr.mxu0 0.0
        %5725 = vmatpush1.msra.mxu0 %v5709
        %5726 = vmatprep.subr.mxu0 0.0
        %5727 = vmatpush1.msra.mxu0 0.0
        %5728 = vmatprep.subr.mxu0 0.0
        %5729 = vmatpush1.msra.mxu0 0.0
        %5730 = vmatprep.subr.mxu0 0.0
        %5731 = vmatpush1.msra.mxu0 0.0
        %5732 = vmatprep.subr.mxu0 0.0
        %5733 = vmatpush1.msra.mxu0 0.0
        %5734 = vmatprep.subr.mxu0 0.0
        %5735 = vmatpush1.msra.mxu0 0.0
        %5736 = vmatprep.subr.mxu0 0.0
        %5737 = vmatpush1.msra.mxu0 0.0
        %5738 = vmatprep.subr.mxu0 0.0
        %5739 = vmatpush1.msra.mxu0 0.0
        %5740 = vmatprep.subr.mxu0 0.0
        %5741 = vmatpush1.msra.mxu0 0.0
        %5742 = vmatprep.subr.mxu0 0.0
        %5743 = vmatpush1.msra.mxu0 0.0
        %5744 = vmatprep.subr.mxu0 0.0
        %5745 = vmatpush1.msra.mxu0 0.0
        %5746 = vmatprep.subr.mxu0 0.0
        %5747 = vmatpush1.msra.mxu0 0.0
        %5748 = vmatprep.subr.mxu0 0.0
        %5749 = vmatpush1.msra.mxu0 0.0
        %5750 = vmatprep.subr.mxu0 0.0
        %5751 = vmatpush1.msra.mxu0 0.0
        %5752 = vmatprep.subr.mxu0 0.0
        %5753 = vmatpush1.msra.mxu0 0.0
        %5754 = vmatprep.subr.mxu0 0.0
        %5755 = vmatpush1.msra.mxu0 0.0
        %5756 = vmatprep.subr.mxu0 0.0
        %5757 = vmatpush1.msra.mxu0 0.0
        %5758 = vmatprep.subr.mxu0 0.0
        %5759 = vmatpush1.msra.mxu0 0.0
        %5760 = vmatprep.subr.mxu0 0.0
        %5761 = vmatpush1.msra.mxu0 0.0
        %5762 = vmatprep.subr.mxu0 0.0
        %5763 = vmatpush1.msra.mxu0 0.0
        %5764 = vmatprep.subr.mxu0 0.0
        %5765 = vmatpush1.msra.mxu0 0.0
        %5766 = vmatprep.subr.mxu0 0.0
        %5767 = vmatpush1.msra.mxu0 0.0
        %5768 = vmatprep.subr.mxu0 0.0
        %5769 = vmatpush1.msra.mxu0 0.0
        %5770 = vmatprep.subr.mxu0 0.0
        %5771 = vmatpush1.msra.mxu0 0.0
        %5772 = vmatprep.subr.mxu0 0.0
        %5773 = vmatpush1.msra.mxu0 0.0
        %5774 = vmatprep.mubr.f32.mxu0 0.0
        %5775 = vmatmul.mubr.f32.gmra.mrb[0].mxu0 %v5549
        %v5776 = vpop.f32.mrb[0].mxu0
        %v5777 = vadd.f32 0.0, %v5776
        %v5778 = vpop.f32.mrb[0].mxu0
        %5779 = vdwg.mxu0
        %v5780 = vmax.f32 %v5700, %v5777
        %s5781 = scalar_lea.vmem [#allocation4], 192
        %v5782 = vld [vmem:[%s5781] sm:$0xff]
        %v5783 = vld [vmem:[%s5781 + $0x8] sm:$0xff]
        %v5784 = vld [vmem:[%s5781 + $0x10] sm:$0xff]
        %v5785 = vld [vmem:[%s5781 + $0x18] sm:$0xff]
        %v5786 = vld [vmem:[%s5781 + $0x20] sm:$0xff]
        %v5787 = vld [vmem:[%s5781 + $0x28] sm:$0xff]
        %v5788 = vld [vmem:[%s5781 + $0x30] sm:$0xff]
        %v5789 = vld [vmem:[%s5781 + $0x38] sm:$0xff]
        %5790 = vmatprep.subr.mxu0 0.0
        %5791 = vmatpush1.msra.mxu0 %v5782
        %5792 = vmatprep.subr.mxu0 0.0
        %5793 = vmatpush1.msra.mxu0 %v5783
        %5794 = vmatprep.subr.mxu0 0.0
        %5795 = vmatpush1.msra.mxu0 %v5784
        %5796 = vmatprep.subr.mxu0 0.0
        %5797 = vmatpush1.msra.mxu0 %v5785
        %5798 = vmatprep.subr.mxu0 0.0
        %5799 = vmatpush1.msra.mxu0 %v5786
        %5800 = vmatprep.subr.mxu0 0.0
        %5801 = vmatpush1.msra.mxu0 %v5787
        %5802 = vmatprep.subr.mxu0 0.0
        %5803 = vmatpush1.msra.mxu0 %v5788
        %5804 = vmatprep.subr.mxu0 0.0
        %5805 = vmatpush1.msra.mxu0 %v5789
        %5806 = vmatprep.subr.mxu0 0.0
        %5807 = vmatpush1.msra.mxu0 0.0
        %5808 = vmatprep.subr.mxu0 0.0
        %5809 = vmatpush1.msra.mxu0 0.0
        %5810 = vmatprep.subr.mxu0 0.0
        %5811 = vmatpush1.msra.mxu0 0.0
        %5812 = vmatprep.subr.mxu0 0.0
        %5813 = vmatpush1.msra.mxu0 0.0
        %5814 = vmatprep.subr.mxu0 0.0
        %5815 = vmatpush1.msra.mxu0 0.0
        %5816 = vmatprep.subr.mxu0 0.0
        %5817 = vmatpush1.msra.mxu0 0.0
        %5818 = vmatprep.subr.mxu0 0.0
        %5819 = vmatpush1.msra.mxu0 0.0
        %5820 = vmatprep.subr.mxu0 0.0
        %5821 = vmatpush1.msra.mxu0 0.0
        %5822 = vmatprep.subr.mxu0 0.0
        %5823 = vmatpush1.msra.mxu0 0.0
        %5824 = vmatprep.subr.mxu0 0.0
        %5825 = vmatpush1.msra.mxu0 0.0
        %5826 = vmatprep.subr.mxu0 0.0
        %5827 = vmatpush1.msra.mxu0 0.0
        %5828 = vmatprep.subr.mxu0 0.0
        %5829 = vmatpush1.msra.mxu0 0.0
        %5830 = vmatprep.subr.mxu0 0.0
        %5831 = vmatpush1.msra.mxu0 0.0
        %5832 = vmatprep.subr.mxu0 0.0
        %5833 = vmatpush1.msra.mxu0 0.0
        %5834 = vmatprep.subr.mxu0 0.0
        %5835 = vmatpush1.msra.mxu0 0.0
        %5836 = vmatprep.subr.mxu0 0.0
        %5837 = vmatpush1.msra.mxu0 0.0
        %5838 = vmatprep.subr.mxu0 0.0
        %5839 = vmatpush1.msra.mxu0 0.0
        %5840 = vmatprep.subr.mxu0 0.0
        %5841 = vmatpush1.msra.mxu0 0.0
        %5842 = vmatprep.subr.mxu0 0.0
        %5843 = vmatpush1.msra.mxu0 0.0
        %5844 = vmatprep.subr.mxu0 0.0
        %5845 = vmatpush1.msra.mxu0 0.0
        %5846 = vmatprep.subr.mxu0 0.0
        %5847 = vmatpush1.msra.mxu0 0.0
        %5848 = vmatprep.subr.mxu0 0.0
        %5849 = vmatpush1.msra.mxu0 0.0
        %5850 = vmatprep.subr.mxu0 0.0
        %5851 = vmatpush1.msra.mxu0 0.0
        %5852 = vmatprep.subr.mxu0 0.0
        %5853 = vmatpush1.msra.mxu0 0.0
        %5854 = vmatprep.mubr.f32.mxu0 0.0
        %5855 = vmatmul.mubr.f32.gmra.mrb[0].mxu0 %v5549
        %v5856 = vpop.f32.mrb[0].mxu0
        %v5857 = vadd.f32 0.0, %v5856
        %v5858 = vpop.f32.mrb[0].mxu0
        %5859 = vdwg.mxu0
        %v5860 = vmax.f32 %v5780, %v5857
        %v5861 = vld [vmem:[%s9] sm:$0xff]
        %v5862 = vld [vmem:[%s9 + $0x8] sm:$0xff]
        %v5863 = vld [vmem:[%s9 + $0x10] sm:$0xff]
        %v5864 = vld [vmem:[%s9 + $0x18] sm:$0xff]
        %v5865 = vld [vmem:[%s8] sm:$0xff]
        %v5866 = vld [vmem:[%s8 + $0x8] sm:$0xff]
        %v5867 = vld [vmem:[%s8 + $0x10] sm:$0xff]
        %v5868 = vld [vmem:[%s8 + $0x18] sm:$0xff]
        %v5870 = vsel %vm3567, %v5865, 0
        %v5873 = vsel %vm3567, %v5866, 0
        %v5876 = vsel %vm3567, %v5867, 0
        %v5879 = vsel %vm3567, %v5868, 0
        %5881 = vmatprep.subr.mxu0 0.0
        %5882 = vmatpush1.msra.mxu0 %v5860
        %5883 = vmatprep.subr.mxu0 0.0
        %5884 = vmatpush1.msra.mxu0 0.0
        %5885 = vmatprep.subr.mxu0 0.0
        %5886 = vmatpush1.msra.mxu0 0.0
        %5887 = vmatprep.subr.mxu0 0.0
        %5888 = vmatpush1.msra.mxu0 0.0
        %5889 = vmatprep.subr.mxu0 0.0
        %5890 = vmatpush1.msra.mxu0 0.0
        %5891 = vmatprep.subr.mxu0 0.0
        %5892 = vmatpush1.msra.mxu0 0.0
        %5893 = vmatprep.subr.mxu0 0.0
        %5894 = vmatpush1.msra.mxu0 0.0
        %5895 = vmatprep.subr.mxu0 0.0
        %5896 = vmatpush1.msra.mxu0 0.0
        %5897 = vmatprep.subr.mxu0 0.0
        %5898 = vmatpush1.msra.mxu0 0.0
        %5899 = vmatprep.subr.mxu0 0.0
        %5900 = vmatpush1.msra.mxu0 0.0
        %5901 = vmatprep.subr.mxu0 0.0
        %5902 = vmatpush1.msra.mxu0 0.0
        %5903 = vmatprep.subr.mxu0 0.0
        %5904 = vmatpush1.msra.mxu0 0.0
        %5905 = vmatprep.subr.mxu0 0.0
        %5906 = vmatpush1.msra.mxu0 0.0
        %5907 = vmatprep.subr.mxu0 0.0
        %5908 = vmatpush1.msra.mxu0 0.0
        %5909 = vmatprep.subr.mxu0 0.0
        %5910 = vmatpush1.msra.mxu0 0.0
        %5911 = vmatprep.subr.mxu0 0.0
        %5912 = vmatpush1.msra.mxu0 0.0
        %5913 = vmatprep.subr.mxu0 0.0
        %5914 = vmatpush1.msra.mxu0 0.0
        %5915 = vmatprep.subr.mxu0 0.0
        %5916 = vmatpush1.msra.mxu0 0.0
        %5917 = vmatprep.subr.mxu0 0.0
        %5918 = vmatpush1.msra.mxu0 0.0
        %5919 = vmatprep.subr.mxu0 0.0
        %5920 = vmatpush1.msra.mxu0 0.0
        %5921 = vmatprep.subr.mxu0 0.0
        %5922 = vmatpush1.msra.mxu0 0.0
        %5923 = vmatprep.subr.mxu0 0.0
        %5924 = vmatpush1.msra.mxu0 0.0
        %5925 = vmatprep.subr.mxu0 0.0
        %5926 = vmatpush1.msra.mxu0 0.0
        %5927 = vmatprep.subr.mxu0 0.0
        %5928 = vmatpush1.msra.mxu0 0.0
        %5929 = vmatprep.subr.mxu0 0.0
        %5930 = vmatpush1.msra.mxu0 0.0
        %5931 = vmatprep.subr.mxu0 0.0
        %5932 = vmatpush1.msra.mxu0 0.0
        %5933 = vmatprep.subr.mxu0 0.0
        %5934 = vmatpush1.msra.mxu0 0.0
        %5935 = vmatprep.subr.mxu0 0.0
        %5936 = vmatpush1.msra.mxu0 0.0
        %5937 = vmatprep.subr.mxu0 0.0
        %5938 = vmatpush1.msra.mxu0 0.0
        %5939 = vmatprep.subr.mxu0 0.0
        %5940 = vmatpush1.msra.mxu0 0.0
        %5941 = vmatprep.subr.mxu0 0.0
        %5942 = vmatpush1.msra.mxu0 0.0
        %5943 = vmatprep.subr.mxu0 0.0
        %5944 = vmatpush1.msra.mxu0 0.0
        %5945 = vmatprep.mubr.f32.mxu0 0.0
        %5946 = vmatmul.mubr.f32.gmra.mrb[0].mxu0 %v5870
        %v5947 = vpop.f32.mrb[0].mxu0
        %v5948 = vadd.f32 0.0, %v5947
        %v5949 = vpop.f32.mrb[0].mxu0
        %5950 = vmatprep.mubr.f32.mxu0 0.0
        %5951 = vmatmul.mubr.f32.gmra.mrb[0].mxu0 %v5873
        %v5952 = vpop.f32.mrb[0].mxu0
        %v5953 = vadd.f32 0.0, %v5952
        %v5954 = vpop.f32.mrb[0].mxu0
        %5955 = vmatprep.mubr.f32.mxu0 0.0
        %5956 = vmatmul.mubr.f32.gmra.mrb[0].mxu0 %v5876
        %v5957 = vpop.f32.mrb[0].mxu0
        %v5958 = vadd.f32 0.0, %v5957
        %v5959 = vpop.f32.mrb[0].mxu0
        %5960 = vmatprep.mubr.f32.mxu0 0.0
        %5961 = vmatmul.mubr.f32.gmra.mrb[0].mxu0 %v5879
        %v5962 = vpop.f32.mrb[0].mxu0
        %v5963 = vadd.f32 0.0, %v5962
        %v5964 = vpop.f32.mrb[0].mxu0
        %5965 = vdwg.mxu0
        %v5966 = vadd.f32 %v5861, %v5948
        %v5967 = vadd.f32 %v5862, %v5953
        %v5968 = vadd.f32 %v5863, %v5958
        %v5969 = vadd.f32 %v5864, %v5963
        %s5970 = scalar_lea.vmem %s8, 32
        %v5971 = vld [vmem:[%s5970] sm:$0xff]
        %v5972 = vld [vmem:[%s5970 + $0x8] sm:$0xff]
        %v5973 = vld [vmem:[%s5970 + $0x10] sm:$0xff]
        %v5974 = vld [vmem:[%s5970 + $0x18] sm:$0xff]
        %5976 = vrot.lane.b32.xlu0 %v5860, 127
        %v5977 = vpop.permute.xlu0 %5976
        %v5980 = vsel %vm3567, %v5971, 0
        %v5983 = vsel %vm3567, %v5972, 0
        %v5986 = vsel %vm3567, %v5973, 0
        %v5989 = vsel %vm3567, %v5974, 0
        %5991 = vmatprep.subr.mxu0 0.0
        %5992 = vmatpush1.msra.mxu0 %v5977
        %5993 = vmatprep.subr.mxu0 0.0
        %5994 = vmatpush1.msra.mxu0 0.0
        %5995 = vmatprep.subr.mxu0 0.0
        %5996 = vmatpush1.msra.mxu0 0.0
        %5997 = vmatprep.subr.mxu0 0.0
        %5998 = vmatpush1.msra.mxu0 0.0
        %5999 = vmatprep.subr.mxu0 0.0
        %6000 = vmatpush1.msra.mxu0 0.0
        %6001 = vmatprep.subr.mxu0 0.0
        %6002 = vmatpush1.msra.mxu0 0.0
        %6003 = vmatprep.subr.mxu0 0.0
        %6004 = vmatpush1.msra.mxu0 0.0
        %6005 = vmatprep.subr.mxu0 0.0
        %6006 = vmatpush1.msra.mxu0 0.0
        %6007 = vmatprep.subr.mxu0 0.0
        %6008 = vmatpush1.msra.mxu0 0.0
        %6009 = vmatprep.subr.mxu0 0.0
        %6010 = vmatpush1.msra.mxu0 0.0
        %6011 = vmatprep.subr.mxu0 0.0
        %6012 = vmatpush1.msra.mxu0 0.0
        %6013 = vmatprep.subr.mxu0 0.0
        %6014 = vmatpush1.msra.mxu0 0.0
        %6015 = vmatprep.subr.mxu0 0.0
        %6016 = vmatpush1.msra.mxu0 0.0
        %6017 = vmatprep.subr.mxu0 0.0
        %6018 = vmatpush1.msra.mxu0 0.0
        %6019 = vmatprep.subr.mxu0 0.0
        %6020 = vmatpush1.msra.mxu0 0.0
        %6021 = vmatprep.subr.mxu0 0.0
        %6022 = vmatpush1.msra.mxu0 0.0
        %6023 = vmatprep.subr.mxu0 0.0
        %6024 = vmatpush1.msra.mxu0 0.0
        %6025 = vmatprep.subr.mxu0 0.0
        %6026 = vmatpush1.msra.mxu0 0.0
        %6027 = vmatprep.subr.mxu0 0.0
        %6028 = vmatpush1.msra.mxu0 0.0
        %6029 = vmatprep.subr.mxu0 0.0
        %6030 = vmatpush1.msra.mxu0 0.0
        %6031 = vmatprep.subr.mxu0 0.0
        %6032 = vmatpush1.msra.mxu0 0.0
        %6033 = vmatprep.subr.mxu0 0.0
        %6034 = vmatpush1.msra.mxu0 0.0
        %6035 = vmatprep.subr.mxu0 0.0
        %6036 = vmatpush1.msra.mxu0 0.0
        %6037 = vmatprep.subr.mxu0 0.0
        %6038 = vmatpush1.msra.mxu0 0.0
        %6039 = vmatprep.subr.mxu0 0.0
        %6040 = vmatpush1.msra.mxu0 0.0
        %6041 = vmatprep.subr.mxu0 0.0
        %6042 = vmatpush1.msra.mxu0 0.0
        %6043 = vmatprep.subr.mxu0 0.0
        %6044 = vmatpush1.msra.mxu0 0.0
        %6045 = vmatprep.subr.mxu0 0.0
        %6046 = vmatpush1.msra.mxu0 0.0
        %6047 = vmatprep.subr.mxu0 0.0
        %6048 = vmatpush1.msra.mxu0 0.0
        %6049 = vmatprep.subr.mxu0 0.0
        %6050 = vmatpush1.msra.mxu0 0.0
        %6051 = vmatprep.subr.mxu0 0.0
        %6052 = vmatpush1.msra.mxu0 0.0
        %6053 = vmatprep.subr.mxu0 0.0
        %6054 = vmatpush1.msra.mxu0 0.0
        %6055 = vmatprep.mubr.f32.mxu0 0.0
        %6056 = vmatmul.mubr.f32.gmra.mrb[0].mxu0 %v5980
        %v6057 = vpop.f32.mrb[0].mxu0
        %v6058 = vadd.f32 0.0, %v6057
        %v6059 = vpop.f32.mrb[0].mxu0
        %6060 = vmatprep.mubr.f32.mxu0 0.0
        %6061 = vmatmul.mubr.f32.gmra.mrb[0].mxu0 %v5983
        %v6062 = vpop.f32.mrb[0].mxu0
        %v6063 = vadd.f32 0.0, %v6062
        %v6064 = vpop.f32.mrb[0].mxu0
        %6065 = vmatprep.mubr.f32.mxu0 0.0
        %6066 = vmatmul.mubr.f32.gmra.mrb[0].mxu0 %v5986
        %v6067 = vpop.f32.mrb[0].mxu0
        %v6068 = vadd.f32 0.0, %v6067
        %v6069 = vpop.f32.mrb[0].mxu0
        %6070 = vmatprep.mubr.f32.mxu0 0.0
        %6071 = vmatmul.mubr.f32.gmra.mrb[0].mxu0 %v5989
        %v6072 = vpop.f32.mrb[0].mxu0
        %v6073 = vadd.f32 0.0, %v6072
        %v6074 = vpop.f32.mrb[0].mxu0
        %6075 = vdwg.mxu0
        %v6076 = vadd.f32 %v5966, %v6058
        %v6077 = vadd.f32 %v5967, %v6063
        %v6078 = vadd.f32 %v5968, %v6068
        %v6079 = vadd.f32 %v5969, %v6073
        %s6080 = scalar_lea.vmem %s8, 64
        %v6081 = vld [vmem:[%s6080] sm:$0xff]
        %v6082 = vld [vmem:[%s6080 + $0x8] sm:$0xff]
        %v6083 = vld [vmem:[%s6080 + $0x10] sm:$0xff]
        %v6084 = vld [vmem:[%s6080 + $0x18] sm:$0xff]
        %6085 = vrot.lane.b32.xlu0 %v5860, 126
        %v6086 = vpop.permute.xlu0 %6085
        %v6089 = vsel %vm3567, %v6081, 0
        %v6092 = vsel %vm3567, %v6082, 0
        %v6095 = vsel %vm3567, %v6083, 0
        %v6098 = vsel %vm3567, %v6084, 0
        %6100 = vmatprep.subr.mxu0 0.0
        %6101 = vmatpush1.msra.mxu0 %v6086
        %6102 = vmatprep.subr.mxu0 0.0
        %6103 = vmatpush1.msra.mxu0 0.0
        %6104 = vmatprep.subr.mxu0 0.0
        %6105 = vmatpush1.msra.mxu0 0.0
        %6106 = vmatprep.subr.mxu0 0.0
        %6107 = vmatpush1.msra.mxu0 0.0
        %6108 = vmatprep.subr.mxu0 0.0
        %6109 = vmatpush1.msra.mxu0 0.0
        %6110 = vmatprep.subr.mxu0 0.0
        %6111 = vmatpush1.msra.mxu0 0.0
        %6112 = vmatprep.subr.mxu0 0.0
        %6113 = vmatpush1.msra.mxu0 0.0
        %6114 = vmatprep.subr.mxu0 0.0
        %6115 = vmatpush1.msra.mxu0 0.0
        %6116 = vmatprep.subr.mxu0 0.0
        %6117 = vmatpush1.msra.mxu0 0.0
        %6118 = vmatprep.subr.mxu0 0.0
        %6119 = vmatpush1.msra.mxu0 0.0
        %6120 = vmatprep.subr.mxu0 0.0
        %6121 = vmatpush1.msra.mxu0 0.0
        %6122 = vmatprep.subr.mxu0 0.0
        %6123 = vmatpush1.msra.mxu0 0.0
        %6124 = vmatprep.subr.mxu0 0.0
        %6125 = vmatpush1.msra.mxu0 0.0
        %6126 = vmatprep.subr.mxu0 0.0
        %6127 = vmatpush1.msra.mxu0 0.0
        %6128 = vmatprep.subr.mxu0 0.0
        %6129 = vmatpush1.msra.mxu0 0.0
        %6130 = vmatprep.subr.mxu0 0.0
        %6131 = vmatpush1.msra.mxu0 0.0
        %6132 = vmatprep.subr.mxu0 0.0
        %6133 = vmatpush1.msra.mxu0 0.0
        %6134 = vmatprep.subr.mxu0 0.0
        %6135 = vmatpush1.msra.mxu0 0.0
        %6136 = vmatprep.subr.mxu0 0.0
        %6137 = vmatpush1.msra.mxu0 0.0
        %6138 = vmatprep.subr.mxu0 0.0
        %6139 = vmatpush1.msra.mxu0 0.0
        %6140 = vmatprep.subr.mxu0 0.0
        %6141 = vmatpush1.msra.mxu0 0.0
        %6142 = vmatprep.subr.mxu0 0.0
        %6143 = vmatpush1.msra.mxu0 0.0
        %6144 = vmatprep.subr.mxu0 0.0
        %6145 = vmatpush1.msra.mxu0 0.0
        %6146 = vmatprep.subr.mxu0 0.0
        %6147 = vmatpush1.msra.mxu0 0.0
        %6148 = vmatprep.subr.mxu0 0.0
        %6149 = vmatpush1.msra.mxu0 0.0
        %6150 = vmatprep.subr.mxu0 0.0
        %6151 = vmatpush1.msra.mxu0 0.0
        %6152 = vmatprep.subr.mxu0 0.0
        %6153 = vmatpush1.msra.mxu0 0.0
        %6154 = vmatprep.subr.mxu0 0.0
        %6155 = vmatpush1.msra.mxu0 0.0
        %6156 = vmatprep.subr.mxu0 0.0
        %6157 = vmatpush1.msra.mxu0 0.0
        %6158 = vmatprep.subr.mxu0 0.0
        %6159 = vmatpush1.msra.mxu0 0.0
        %6160 = vmatprep.subr.mxu0 0.0
        %6161 = vmatpush1.msra.mxu0 0.0
        %6162 = vmatprep.subr.mxu0 0.0
        %6163 = vmatpush1.msra.mxu0 0.0
        %6164 = vmatprep.mubr.f32.mxu0 0.0
        %6165 = vmatmul.mubr.f32.gmra.mrb[0].mxu0 %v6089
        %v6166 = vpop.f32.mrb[0].mxu0
        %v6167 = vadd.f32 0.0, %v6166
        %v6168 = vpop.f32.mrb[0].mxu0
        %6169 = vmatprep.mubr.f32.mxu0 0.0
        %6170 = vmatmul.mubr.f32.gmra.mrb[0].mxu0 %v6092
        %v6171 = vpop.f32.mrb[0].mxu0
        %v6172 = vadd.f32 0.0, %v6171
        %v6173 = vpop.f32.mrb[0].mxu0
        %6174 = vmatprep.mubr.f32.mxu0 0.0
        %6175 = vmatmul.mubr.f32.gmra.mrb[0].mxu0 %v6095
        %v6176 = vpop.f32.mrb[0].mxu0
        %v6177 = vadd.f32 0.0, %v6176
        %v6178 = vpop.f32.mrb[0].mxu0
        %6179 = vmatprep.mubr.f32.mxu0 0.0
        %6180 = vmatmul.mubr.f32.gmra.mrb[0].mxu0 %v6098
        %v6181 = vpop.f32.mrb[0].mxu0
        %v6182 = vadd.f32 0.0, %v6181
        %v6183 = vpop.f32.mrb[0].mxu0
        %6184 = vdwg.mxu0
        %v6185 = vadd.f32 %v6076, %v6167
        %v6186 = vadd.f32 %v6077, %v6172
        %v6187 = vadd.f32 %v6078, %v6177
        %v6188 = vadd.f32 %v6079, %v6182
        %s6189 = scalar_lea.vmem %s8, 96
        %v6190 = vld [vmem:[%s6189] sm:$0xff]
        %v6191 = vld [vmem:[%s6189 + $0x8] sm:$0xff]
        %v6192 = vld [vmem:[%s6189 + $0x10] sm:$0xff]
        %v6193 = vld [vmem:[%s6189 + $0x18] sm:$0xff]
        %6194 = vrot.lane.b32.xlu0 %v5860, 125
        %v6195 = vpop.permute.xlu0 %6194
        %v6198 = vsel %vm3567, %v6190, 0
        %v6201 = vsel %vm3567, %v6191, 0
        %v6204 = vsel %vm3567, %v6192, 0
        %v6207 = vsel %vm3567, %v6193, 0
        %6209 = vmatprep.subr.mxu0 0.0
        %6210 = vmatpush1.msra.mxu0 %v6195
        %6211 = vmatprep.subr.mxu0 0.0
        %6212 = vmatpush1.msra.mxu0 0.0
        %6213 = vmatprep.subr.mxu0 0.0
        %6214 = vmatpush1.msra.mxu0 0.0
        %6215 = vmatprep.subr.mxu0 0.0
        %6216 = vmatpush1.msra.mxu0 0.0
        %6217 = vmatprep.subr.mxu0 0.0
        %6218 = vmatpush1.msra.mxu0 0.0
        %6219 = vmatprep.subr.mxu0 0.0
        %6220 = vmatpush1.msra.mxu0 0.0
        %6221 = vmatprep.subr.mxu0 0.0
        %6222 = vmatpush1.msra.mxu0 0.0
        %6223 = vmatprep.subr.mxu0 0.0
        %6224 = vmatpush1.msra.mxu0 0.0
        %6225 = vmatprep.subr.mxu0 0.0
        %6226 = vmatpush1.msra.mxu0 0.0
        %6227 = vmatprep.subr.mxu0 0.0
        %6228 = vmatpush1.msra.mxu0 0.0
        %6229 = vmatprep.subr.mxu0 0.0
        %6230 = vmatpush1.msra.mxu0 0.0
        %6231 = vmatprep.subr.mxu0 0.0
        %6232 = vmatpush1.msra.mxu0 0.0
        %6233 = vmatprep.subr.mxu0 0.0
        %6234 = vmatpush1.msra.mxu0 0.0
        %6235 = vmatprep.subr.mxu0 0.0
        %6236 = vmatpush1.msra.mxu0 0.0
        %6237 = vmatprep.subr.mxu0 0.0
        %6238 = vmatpush1.msra.mxu0 0.0
        %6239 = vmatprep.subr.mxu0 0.0
        %6240 = vmatpush1.msra.mxu0 0.0
        %6241 = vmatprep.subr.mxu0 0.0
        %6242 = vmatpush1.msra.mxu0 0.0
        %6243 = vmatprep.subr.mxu0 0.0
        %6244 = vmatpush1.msra.mxu0 0.0
        %6245 = vmatprep.subr.mxu0 0.0
        %6246 = vmatpush1.msra.mxu0 0.0
        %6247 = vmatprep.subr.mxu0 0.0
        %6248 = vmatpush1.msra.mxu0 0.0
        %6249 = vmatprep.subr.mxu0 0.0
        %6250 = vmatpush1.msra.mxu0 0.0
        %6251 = vmatprep.subr.mxu0 0.0
        %6252 = vmatpush1.msra.mxu0 0.0
        %6253 = vmatprep.subr.mxu0 0.0
        %6254 = vmatpush1.msra.mxu0 0.0
        %6255 = vmatprep.subr.mxu0 0.0
        %6256 = vmatpush1.msra.mxu0 0.0
        %6257 = vmatprep.subr.mxu0 0.0
        %6258 = vmatpush1.msra.mxu0 0.0
        %6259 = vmatprep.subr.mxu0 0.0
        %6260 = vmatpush1.msra.mxu0 0.0
        %6261 = vmatprep.subr.mxu0 0.0
        %6262 = vmatpush1.msra.mxu0 0.0
        %6263 = vmatprep.subr.mxu0 0.0
        %6264 = vmatpush1.msra.mxu0 0.0
        %6265 = vmatprep.subr.mxu0 0.0
        %6266 = vmatpush1.msra.mxu0 0.0
        %6267 = vmatprep.subr.mxu0 0.0
        %6268 = vmatpush1.msra.mxu0 0.0
        %6269 = vmatprep.subr.mxu0 0.0
        %6270 = vmatpush1.msra.mxu0 0.0
        %6271 = vmatprep.subr.mxu0 0.0
        %6272 = vmatpush1.msra.mxu0 0.0
        %6273 = vmatprep.mubr.f32.mxu0 0.0
        %6274 = vmatmul.mubr.f32.gmra.mrb[0].mxu0 %v6198
        %v6275 = vpop.f32.mrb[0].mxu0
        %v6276 = vadd.f32 0.0, %v6275
        %v6277 = vpop.f32.mrb[0].mxu0
        %6278 = vmatprep.mubr.f32.mxu0 0.0
        %6279 = vmatmul.mubr.f32.gmra.mrb[0].mxu0 %v6201
        %v6280 = vpop.f32.mrb[0].mxu0
        %v6281 = vadd.f32 0.0, %v6280
        %v6282 = vpop.f32.mrb[0].mxu0
        %6283 = vmatprep.mubr.f32.mxu0 0.0
        %6284 = vmatmul.mubr.f32.gmra.mrb[0].mxu0 %v6204
        %v6285 = vpop.f32.mrb[0].mxu0
        %v6286 = vadd.f32 0.0, %v6285
        %v6287 = vpop.f32.mrb[0].mxu0
        %6288 = vmatprep.mubr.f32.mxu0 0.0
        %6289 = vmatmul.mubr.f32.gmra.mrb[0].mxu0 %v6207
        %v6290 = vpop.f32.mrb[0].mxu0
        %v6291 = vadd.f32 0.0, %v6290
        %v6292 = vpop.f32.mrb[0].mxu0
        %6293 = vdwg.mxu0
        %v6294 = vadd.f32 %v6185, %v6276
        %v6295 = vadd.f32 %v6186, %v6281
        %v6296 = vadd.f32 %v6187, %v6286
        %v6297 = vadd.f32 %v6188, %v6291
        %v6298 = vmax.f32 %v6294, 0.0
        %v6299 = vmax.f32 %v6295, 0.0
        %v6300 = vmax.f32 %v6296, 0.0
        %v6301 = vmax.f32 %v6297, 0.0
        %v6302 = vld [vmem:[%s10] sm:$0x3f]
        %v6303 = vld [vmem:[%s11] sm:$0x3f]
        %vm6304 = vcmask 261120
        %v6306 = vsel %vm6304, %v6302, 0
        %6308 = vmatprep.subr.mxu0 0.0
        %6309 = vmatpush1.msra.mxu0 %v6298
        %6310 = vmatprep.subr.mxu0 0.0
        %6311 = vmatpush1.msra.mxu0 %v6299
        %6312 = vmatprep.subr.mxu0 0.0
        %6313 = vmatpush1.msra.mxu0 %v6300
        %6314 = vmatprep.subr.mxu0 0.0
        %6315 = vmatpush1.msra.mxu0 %v6301
        %6316 = vmatprep.subr.mxu0 0.0
        %6317 = vmatpush1.msra.mxu0 0.0
        %6318 = vmatprep.subr.mxu0 0.0
        %6319 = vmatpush1.msra.mxu0 0.0
        %6320 = vmatprep.subr.mxu0 0.0
        %6321 = vmatpush1.msra.mxu0 0.0
        %6322 = vmatprep.subr.mxu0 0.0
        %6323 = vmatpush1.msra.mxu0 0.0
        %6324 = vmatprep.subr.mxu0 0.0
        %6325 = vmatpush1.msra.mxu0 0.0
        %6326 = vmatprep.subr.mxu0 0.0
        %6327 = vmatpush1.msra.mxu0 0.0
        %6328 = vmatprep.subr.mxu0 0.0
        %6329 = vmatpush1.msra.mxu0 0.0
        %6330 = vmatprep.subr.mxu0 0.0
        %6331 = vmatpush1.msra.mxu0 0.0
        %6332 = vmatprep.subr.mxu0 0.0
        %6333 = vmatpush1.msra.mxu0 0.0
        %6334 = vmatprep.subr.mxu0 0.0
        %6335 = vmatpush1.msra.mxu0 0.0
        %6336 = vmatprep.subr.mxu0 0.0
        %6337 = vmatpush1.msra.mxu0 0.0
        %6338 = vmatprep.subr.mxu0 0.0
        %6339 = vmatpush1.msra.mxu0 0.0
        %6340 = vmatprep.subr.mxu0 0.0
        %6341 = vmatpush1.msra.mxu0 0.0
        %6342 = vmatprep.subr.mxu0 0.0
        %6343 = vmatpush1.msra.mxu0 0.0
        %6344 = vmatprep.subr.mxu0 0.0
        %6345 = vmatpush1.msra.mxu0 0.0
        %6346 = vmatprep.subr.mxu0 0.0
        %6347 = vmatpush1.msra.mxu0 0.0
        %6348 = vmatprep.subr.mxu0 0.0
        %6349 = vmatpush1.msra.mxu0 0.0
        %6350 = vmatprep.subr.mxu0 0.0
        %6351 = vmatpush1.msra.mxu0 0.0
        %6352 = vmatprep.subr.mxu0 0.0
        %6353 = vmatpush1.msra.mxu0 0.0
        %6354 = vmatprep.subr.mxu0 0.0
        %6355 = vmatpush1.msra.mxu0 0.0
        %6356 = vmatprep.subr.mxu0 0.0
        %6357 = vmatpush1.msra.mxu0 0.0
        %6358 = vmatprep.subr.mxu0 0.0
        %6359 = vmatpush1.msra.mxu0 0.0
        %6360 = vmatprep.subr.mxu0 0.0
        %6361 = vmatpush1.msra.mxu0 0.0
        %6362 = vmatprep.subr.mxu0 0.0
        %6363 = vmatpush1.msra.mxu0 0.0
        %6364 = vmatprep.subr.mxu0 0.0
        %6365 = vmatpush1.msra.mxu0 0.0
        %6366 = vmatprep.subr.mxu0 0.0
        %6367 = vmatpush1.msra.mxu0 0.0
        %6368 = vmatprep.subr.mxu0 0.0
        %6369 = vmatpush1.msra.mxu0 0.0
        %6370 = vmatprep.subr.mxu0 0.0
        %6371 = vmatpush1.msra.mxu0 0.0
        %6372 = vmatprep.mubr.f32.mxu0 0.0
        %6373 = vmatmul.mubr.f32.gmra.mrb[0].mxu0 %v6306
        %v6374 = vpop.f32.mrb[0].mxu0
        %v6375 = vadd.f32 %v6303, %v6374
        %v6376 = vpop.f32.mrb[0].mxu0
        %6377 = vdwg.mxu0
        %vm6378 = vcmask 5120
        %6379 = vst.msk [vmem:[%s441] sm:$0x3f] %vm6378, %v6375
        %p6380 = scmp.lt.s32.totalorder %s25, 1
        %s6381 = scalar_select %p6380, %s25, 1
        %s6382 = smul.addr %s6381, 8
        %s6383 = scalar_lea.vmem %s12, %s6382
        // Predicated region
        $region77: #{stn_forward.2} parent=67 // pred_check
          %p6384 = pneg %p300
        $region78: #{stn_forward.2} parent=67 // pred_check_branch
          %6386 = sbr.rel (%p6384) target = $region80
        $region79: #{stn_forward.2} parent=67 // pred_region
          _
        $region80: #{stn_forward.2} parent=67 // pred_fallthru
          _
      $region68: #{stn_forward.2} parent=5 // pred_fallthru
        _
      %p6387 = scmp.le.s32.totalorder 2, %s20
      // Predicated region
      $region81: #{stn_forward.2} parent=5 // pred_check
        %p6388 = pneg %p6387
      $region82: #{stn_forward.2} parent=5 // pred_check_branch
        %6390 = sbr.rel (%p6388) target = $region84
      $region83: #{stn_forward.2} parent=5 // pred_region
        %s6391 = ssub.s32 %s20, 2
        // Predicated region
        $region85: #{stn_forward.2} parent=83 // pred_check
          %p6392 = pneg %p306
        $region86: #{stn_forward.2} parent=83 // pred_check_branch
          %6394 = sbr.rel (%p6392) target = $region88
        $region87: #{stn_forward.2} parent=83 // pred_region
          %p6395 = scmp.lt.s32.totalorder %s26, 1
          %s6396 = scalar_select %p6395, %s26, 1
          %s6397 = smul.addr %s6396, 8
          %s6398 = scalar_lea.vmem %s12, %s6397
        $region88: #{stn_forward.2} parent=83 // pred_fallthru
          _
      $region84: #{stn_forward.2} parent=5 // pred_fallthru
        _
    $region6: #{stn_forward.2} parent=1 // loop_footer
      %s24 = sadd.s32 1, %s20
    $region7: #{stn_forward.2} parent=1 // loop_footer_branch
      %19 = sbr.rel target = $region3
    $region8: #{stn_forward.2} parent=1 // loop_exit
      _
    %6399 = vsyncpa [#allocation3], 1
    %s6400 = scalar_lea.sflag [#allocation3], 1
    %6401 = vsyncpa %s6400, 1
    %6402 = vsyncpa [#allocation5], 1

</llo_original>
